<compile_context>
chip_gen: v7x
topology: tpu7x:2x2x1
jax: 0.10.0
libtpu: 0.0.40
codegen_flags: <defaults>
</compile_context>

<pallas_src>
import functools

import jax
import jax.numpy as jnp
from jax import lax
from jax.experimental import pallas as pl
from jax.experimental.pallas import tpu as pltpu

VMEM = pltpu.MemorySpace.VMEM
_FULL = pl.BlockSpec(memory_space=VMEM)          # whole array resident in VMEM


# ---------------------------------------------------------------- Pallas kernels

def _conv_pool_kernel(p_ref, w_ref, b_ref, o_ref, *, Cout):
    """Fused conv-matmul + bias + 3-row maxpool + ReLU.

    p_ref: (1, Hp, (K+2)*Cin) bf16   pool-folded im2col patches for one batch column
    w_ref: ((K+2)*Cin, 3*Cout) bf16  conv weights replicated/shifted per pool offset
    b_ref: (1, 3*Cout) f32
    o_ref: (1, Hp, Cout) f32
    """
    acc = jnp.dot(p_ref[0], w_ref[...], preferred_element_type=jnp.float32)
    acc = acc + b_ref[...]                                   # (Hp, 3*Cout)
    m = jnp.maximum(jnp.maximum(acc[:, 0 * Cout:1 * Cout],
                                acc[:, 1 * Cout:2 * Cout]),
                    acc[:, 2 * Cout:3 * Cout])               # max over pool offsets
    o_ref[0] = jnp.maximum(m, 0.0)                           # ReLU (commutes with max)


def _lstm_cell(gates, c, Hh):
    """PyTorch LSTM cell update; gates laid out [i | f | g | o] along lanes."""
    i = jax.nn.sigmoid(gates[:, 0 * Hh:1 * Hh])
    f = jax.nn.sigmoid(gates[:, 1 * Hh:2 * Hh])
    g = jnp.tanh(gates[:, 2 * Hh:3 * Hh])
    o = jax.nn.sigmoid(gates[:, 3 * Hh:4 * Hh])
    c_new = f * c + i * g
    return o * jnp.tanh(c_new), c_new


def _bilstm_kernel(x_ref, wih_ref, b_ref, whhf_ref, whhb_ref, o_ref, xp_scr,
                   *, T, B, Hh):
    """Both BiLSTM directions in one kernel; returns final hidden states (B, 2*Hh).

    x_ref:   (T*B, In) time-major rows (row = t*B + b)
    wih_ref: (In, 8*Hh)  = [W_ih_fwd^T | W_ih_bwd^T]
    b_ref:   (1, 8*Hh)   = [b_fwd | b_bwd]  (b_ih + b_hh per direction)
    whh?_ref:(Hh, 4*Hh)  = W_hh^T per direction
    """
    G = 4 * Hh
    # one input-projection matmul for both directions
    xp_scr[...] = (jnp.dot(x_ref[...], wih_ref[...],
                           preferred_element_type=jnp.float32) + b_ref[...])

    def step(t, carry):
        hf, cf, hb, cb = carry
        xf = xp_scr[pl.ds(t * B, B)]                 # (B, 2G): fwd reads step t
        xb = xp_scr[pl.ds((T - 1 - t) * B, B)]       # bwd reads step T-1-t (no flip)
        gf = xf[:, :G] + jnp.dot(hf, whhf_ref[...], preferred_element_type=jnp.float32)
        gb = xb[:, G:] + jnp.dot(hb, whhb_ref[...], preferred_element_type=jnp.float32)
        hf, cf = _lstm_cell(gf, cf, Hh)
        hb, cb = _lstm_cell(gb, cb, Hh)
        return hf, cf, hb, cb

    z = jnp.zeros((B, Hh), jnp.float32)
    hf, cf, hb, cb = lax.fori_loop(0, T, step, (z, z, z, z), unroll=True)
    o_ref[...] = jnp.concatenate([hf, hb], axis=1)   # matches h_n[:2].permute(1,0,2).reshape


def _head_kernel(h1_ref, w1_ref, b1_ref, w2_ref, b2_ref, w3_ref, b3_ref,
                 wih2_ref, bi2_ref, whhf2_ref, whhb2_ref,
                 w4_ref, b4_ref, w5_ref, b5_ref, o_ref, xp_scr, *, B):
    """Fused tail: (BN-folded) net1 -> ReLU -> bilstm2 -> ReLU -> net2 -> (1, 9)."""
    f32 = jnp.float32
    # network1 (Dropouts identity in eval; BatchNorm folded into w1/b1)
    y = jnp.dot(h1_ref[...], w1_ref[...], preferred_element_type=f32) + b1_ref[...]
    y = jnp.dot(y, w2_ref[...], preferred_element_type=f32) + b2_ref[...]
    y = jnp.dot(y, w3_ref[...], preferred_element_type=f32) + b3_ref[...]   # (B, 16)
    y = jnp.maximum(y, 0.0)                                                  # relu2

    # bilstm2: batch=1, seq_len=B, hidden=64, both directions
    Hh = 64
    G = 4 * Hh
    xp_scr[...] = jnp.dot(y, wih2_ref[...], preferred_element_type=f32) + bi2_ref[...]

    def step(t, carry):
        hf, cf, hb, cb = carry
        xf = xp_scr[pl.ds(t, 1)]                     # (1, 2G)
        xb = xp_scr[pl.ds(B - 1 - t, 1)]
        gf = xf[:, :G] + jnp.dot(hf, whhf2_ref[...], preferred_element_type=f32)
        gb = xb[:, G:] + jnp.dot(hb, whhb2_ref[...], preferred_element_type=f32)
        hf, cf = _lstm_cell(gf, cf, Hh)
        hb, cb = _lstm_cell(gb, cb, Hh)
        return hf, cf, hb, cb

    z = jnp.zeros((1, Hh), f32)
    hf, cf, hb, cb = lax.fori_loop(0, B, step, (z, z, z, z), unroll=True)
    h2 = jnp.maximum(jnp.concatenate([hf, hb], axis=1), 0.0)   # (1, 128), relu2

    out = jnp.dot(h2, w4_ref[...], preferred_element_type=f32) + b4_ref[...]
    out = jnp.dot(out, w5_ref[...], preferred_element_type=f32) + b5_ref[...]
    o_ref[...] = out                                           # (1, 9)


# ---------------------------------------------------------------- wrappers

def conv_relu_pool(x, w, b):
    """Fused Conv2d((K,1)) + ReLU + MaxPool((3,1)) on channels-last x: (Bk, H, Cin)."""
    Bk, H, Cin = x.shape
    Cout, _, K = w.shape
    Hout = H - K + 1
    Hp = Hout // 3
    Kw = K + 2                      # input rows feeding one pooled output row

    # TODO(synk): the overlapping stride-3 window gather has no aligned in-kernel /
    # BlockSpec form, so this pool-folded im2col stays in XLA (host) glue.
    # p2[bk, h, j*Cin + c] = x[bk, 3*h + j, c]
    p2 = jnp.stack(
        [lax.slice_in_dim(x, j, j + 3 * (Hp - 1) + 1, stride=3, axis=1)
         for j in range(Kw)], axis=2)
    p2 = p2.reshape(Bk, Hp, Kw * Cin).astype(jnp.bfloat16)

    # Wcat[j*Cin + c, r*Cout + o] = w[o, c, j - r] for 0 <= j - r < K, else 0
    wbase = jnp.transpose(w, (2, 1, 0)).reshape(K * Cin, Cout)
    wcat = jnp.concatenate(
        [jnp.pad(wbase, ((r * Cin, (2 - r) * Cin), (0, 0))) for r in range(3)],
        axis=1).astype(jnp.bfloat16)                                # (Kw*Cin, 3*Cout)
    b3 = jnp.tile(b.reshape(1, Cout).astype(jnp.float32), (1, 3))   # (1, 3*Cout)

    return pl.pallas_call(
        functools.partial(_conv_pool_kernel, Cout=Cout),
        out_shape=jax.ShapeDtypeStruct((Bk, Hp, Cout), jnp.float32),
        grid=(Bk,),
        in_specs=[pl.BlockSpec((1, Hp, Kw * Cin), lambda i: (i, 0, 0)),
                  pl.BlockSpec((Kw * Cin, 3 * Cout), lambda i: (0, 0)),
                  pl.BlockSpec((1, 3 * Cout), lambda i: (0, 0))],
        out_specs=pl.BlockSpec((1, Hp, Cout), lambda i: (i, 0, 0)),
        compiler_params=pltpu.CompilerParams(
            dimension_semantics=("parallel",)),
    )(p2, wcat, b3)


def bilstm_fused(x2d, T, B, params):
    """x2d: (T*B, In) time-major.  Returns final hidden concat [fwd|bwd]: (B, 2*Hh)."""
    wih_f, whh_f, bih_f, bhh_f = params["fwd"]
    wih_b, whh_b, bih_b, bhh_b = params["bwd"]
    Hh = whh_f.shape[1]
    wih_cat = jnp.concatenate([wih_f.T, wih_b.T], axis=1)              # (In, 8*Hh)
    bias_cat = jnp.concatenate([bih_f + bhh_f, bih_b + bhh_b]).reshape(1, -1)
    return pl.pallas_call(
        functools.partial(_bilstm_kernel, T=T, B=B, Hh=Hh),
        out_shape=jax.ShapeDtypeStruct((B, 2 * Hh), jnp.float32),
        in_specs=[_FULL] * 5,
        out_specs=_FULL,
        scratch_shapes=[pltpu.VMEM((T * B, 8 * Hh), jnp.float32)],
    )(x2d, wih_cat, bias_cat, whh_f.T, whh_b.T)


def head_fused(h1, B, p):
    """Everything after bilstm1, as one kernel.  h1: (B, 512) -> (1, 9)."""
    gamma, beta, rmean, rvar = p["bn"]
    scale = gamma * lax.rsqrt(rvar + 1e-5)
    shift = beta - rmean * scale
    (w1, b1), (w2, b2), (w3, b3) = p["net1"]
    w1e = (w1 * scale[None, :]).T                  # BN folded into first Linear
    b1e = (w1 @ shift + b1).reshape(1, -1)

    lf = p["lstm2"]["fwd"]
    lb = p["lstm2"]["bwd"]
    wih2 = jnp.concatenate([lf[0].T, lb[0].T], axis=1)             # (16, 512)
    bi2 = jnp.concatenate([lf[2] + lf[3], lb[2] + lb[3]]).reshape(1, -1)

    (w4, b4), (w5, b5) = p["net2"]

    return pl.pallas_call(
        functools.partial(_head_kernel, B=B),
        out_shape=jax.ShapeDtypeStruct((1, 9), jnp.float32),
        in_specs=[_FULL] * 15,
        out_specs=_FULL,
        scratch_shapes=[pltpu.VMEM((B, 512), jnp.float32)],
    )(h1, w1e, b1e, w2.T, b2.reshape(1, -1), w3.T, b3.reshape(1, -1),
      wih2, bi2, lf[1].T, lb[1].T,
      w4.T, b4.reshape(1, -1), w5.T, b5.reshape(1, -1))


# ---------------------------------------------------------------- model forward

def forward(x_nchw, p):
    """Eval-mode forward; x_nchw: (B, 12, H, W) float32.  Returns (1, 9)."""
    B, C, H, W = x_nchw.shape
    # conv stages run channels-last; (b, w) columns are batch-like since kernels are (K,1)
    x = jnp.transpose(x_nchw, (0, 3, 2, 1)).reshape(B * W, H, C)     # (B*W, H, 12)

    for (w, b) in p["convs"]:                                        # conv1..conv6 fused
        x = conv_relu_pool(x, w, b)

    Bk, H6, C6 = x.shape                                             # C6 = 128
    # PyTorch: reshape(B,128,-1).permute(0,2,1) -> (B, T=H6*W, 128), t = h*W + w
    # dropout1 / relu1 are identity in eval (conv output already >= 0).
    T = H6 * W
    # time-major rows (t*B + b) for the fused BiLSTM kernel
    xseq = x.reshape(B, W, H6, C6).transpose(2, 1, 0, 3).reshape(T * B, C6)

    h1 = bilstm_fused(xseq, T, B, p["lstm1"])                        # (B, 512)
    return head_fused(h1, B, p)                                      # (1, 9)


# ---------------------------------------------------------------- params

def init_params(key):
    keys = iter(jax.random.split(key, 64))

    def u(shape, scale=0.1):
        return jax.random.uniform(next(keys), shape, jnp.float32, -scale, scale)

    p = {}
    conv_cfg = [(32, 12, 30), (64, 32, 10), (64, 64, 10),
                (64, 64, 5), (128, 64, 5), (128, 128, 3)]     # (Cout, Cin, K); kw=1 squeezed
    p["convs"] = [(u((co, ci, k)), u((co,))) for (co, ci, k) in conv_cfg]

    def lstm_p(in_dim, hid):
        return {"fwd": (u((4 * hid, in_dim)), u((4 * hid, hid)), u((4 * hid,)), u((4 * hid,))),
                "bwd": (u((4 * hid, in_dim)), u((4 * hid, hid)), u((4 * hid,)), u((4 * hid,)))}

    p["lstm1"] = lstm_p(128, 256)
    p["lstm2"] = lstm_p(16, 64)
    # BatchNorm1d(512): gamma, beta, running_mean, running_var (eval mode)
    p["bn"] = (1.0 + u((512,)), u((512,)), u((512,)), 1.0 + jnp.abs(u((512,))))
    p["net1"] = [(u((100, 512)), u((100,))), (u((60, 100)), u((60,))), (u((16, 60)), u((16,)))]
    p["net2"] = [(u((64, 128)), u((64,))), (u((9, 64)), u((9,)))]
    return p


if __name__ == "__main__":
    key = jax.random.PRNGKey(0)
    kp, kx = jax.random.split(key)
    params = init_params(kp)

    # Smallest H for which the conv/pool stack leaves >=1 temporal step is 1784.
    # (1784 ->1755/585 ->576/192 ->183/61 ->57/19 ->15/5 ->3/1)
    B, Cin, H, W = 2, 12, 1784, 1
    x = jax.random.normal(kx, (B, Cin, H, W), jnp.float32)

    out = jax.jit(forward)(x, params)
    out = jax.block_until_ready(out)
    assert out.shape == (1, 9) and out.dtype == jnp.float32
    print("KERNEL_OK")
</pallas_src>

<mosaic_0001>
module attributes {stable_mosaic.version = 11 : i64} {
  func.func @_conv_pool_kernel(%arg0: i32, %arg1: memref<1x585x384xbf16, #tpu.memory_space<vmem>>, %arg2: memref<384x96xbf16, #tpu.memory_space<vmem>>, %arg3: memref<1x96xf32, #tpu.memory_space<vmem>>, %arg4: memref<1x585x32xf32, #tpu.memory_space<vmem>>) attributes {dimension_semantics = [#tpu.dimension_semantics<parallel>], iteration_bounds = array<i64: 2>, scalar_prefetch = 0 : i64, scratch_operands = 0 : i64, tpu.core_type = #tpu.core_type<tc>, window_params = [{transform_indices = @transform_0, window_bounds = array<i64: 1, 585, 384>}, {pipeline_mode = #tpu.pipeline_mode<synchronous>, transform_indices = @transform_1, window_bounds = array<i64: 384, 96>}, {pipeline_mode = #tpu.pipeline_mode<synchronous>, transform_indices = @transform_2, window_bounds = array<i64: 1, 96>}, {transform_indices = @transform_3, window_bounds = array<i64: 1, 585, 32>}]} {
    %c0 = arith.constant 0 : index
    %c0_0 = arith.constant 0 : index
    %c0_1 = arith.constant 0 : index
    %0 = vector.load %arg1[%c0, %c0_0, %c0_1] : memref<1x585x384xbf16, #tpu.memory_space<vmem>>, vector<1x585x384xbf16>
    %1 = vector.shape_cast %0 : vector<1x585x384xbf16> to vector<585x384xbf16>
    %c0_2 = arith.constant 0 : index
    %c0_3 = arith.constant 0 : index
    %2 = vector.load %arg2[%c0_2, %c0_3] : memref<384x96xbf16, #tpu.memory_space<vmem>>, vector<384x96xbf16>
    %cst = arith.constant dense<0.000000e+00> : vector<585x96xf32>
    %3 = tpu.matmul %1, %2, %cst {dimension_numbers = #tpu.dot_dimension_numbers<[1], [0], [0], [1], [0, 0, 1, 1], [], []>} : vector<585x384xbf16>, vector<384x96xbf16>, vector<585x96xf32> -> vector<585x96xf32>
    %c0_4 = arith.constant 0 : index
    %c0_5 = arith.constant 0 : index
    %4 = vector.load %arg3[%c0_4, %c0_5] : memref<1x96xf32, #tpu.memory_space<vmem>>, vector<1x96xf32>
    %5 = vector.broadcast %4 : vector<1x96xf32> to vector<585x96xf32>
    %6 = arith.addf %3, %5 : vector<585x96xf32>
    %7 = vector.extract_strided_slice %6 {offsets = [0, 0], sizes = [585, 32], strides = [1, 1]} : vector<585x96xf32> to vector<585x32xf32>
    %8 = vector.extract_strided_slice %6 {offsets = [0, 32], sizes = [585, 32], strides = [1, 1]} : vector<585x96xf32> to vector<585x32xf32>
    %9 = arith.maximumf %7, %8 : vector<585x32xf32>
    %10 = vector.extract_strided_slice %6 {offsets = [0, 64], sizes = [585, 32], strides = [1, 1]} : vector<585x96xf32> to vector<585x32xf32>
    %11 = arith.maximumf %9, %10 : vector<585x32xf32>
    %cst_6 = arith.constant 0.000000e+00 : f32
    %12 = vector.broadcast %cst_6 : f32 to vector<585x32xf32>
    %13 = arith.maximumf %11, %12 : vector<585x32xf32>
    %c0_7 = arith.constant 0 : index
    %c0_8 = arith.constant 0 : index
    %c0_9 = arith.constant 0 : index
    %14 = vector.load %arg4[%c0_7, %c0_8, %c0_9] : memref<1x585x32xf32, #tpu.memory_space<vmem>>, vector<1x585x32xf32>
    %15 = vector.shape_cast %14 : vector<1x585x32xf32> to vector<585x32xf32>
    %16 = vector.shape_cast %13 : vector<585x32xf32> to vector<1x585x32xf32>
    tpu.vector_store %arg4[%c0_7, %c0_8, %c0_9], %16 {strides = array<i32>} : memref<1x585x32xf32, #tpu.memory_space<vmem>>, vector<1x585x32xf32>,
    return
  }
  func.func @transform_0(%arg0: i32) -> (i32, i32, i32) {
    %c0_i32 = arith.constant 0 : i32
    %c0_i32_0 = arith.constant 0 : i32
    %c0_i32_1 = arith.constant 0 : i32
    return %arg0, %c0_i32, %c0_i32_0 : i32, i32, i32
  }
  func.func @transform_1(%arg0: i32) -> (i32, i32) {
    %c0_i32 = arith.constant 0 : i32
    %c0_i32_0 = arith.constant 0 : i32
    %c0_i32_1 = arith.constant 0 : i32
    return %c0_i32, %c0_i32_0 : i32, i32
  }
  func.func @transform_2(%arg0: i32) -> (i32, i32) {
    %c0_i32 = arith.constant 0 : i32
    %c0_i32_0 = arith.constant 0 : i32
    %c0_i32_1 = arith.constant 0 : i32
    return %c0_i32, %c0_i32_0 : i32, i32
  }
  func.func @transform_3(%arg0: i32) -> (i32, i32, i32) {
    %c0_i32 = arith.constant 0 : i32
    %c0_i32_0 = arith.constant 0 : i32
    %c0_i32_1 = arith.constant 0 : i32
    return %arg0, %c0_i32, %c0_i32_0 : i32, i32, i32
  }
}

module attributes {stable_mosaic.version = 11 : i64} {
  func.func @_conv_pool_kernel(%arg0: i32, %arg1: memref<1x192x384xbf16, #tpu.memory_space<vmem>>, %arg2: memref<384x192xbf16, #tpu.memory_space<vmem>>, %arg3: memref<1x192xf32, #tpu.memory_space<vmem>>, %arg4: memref<1x192x64xf32, #tpu.memory_space<vmem>>) attributes {dimension_semantics = [#tpu.dimension_semantics<parallel>], iteration_bounds = array<i64: 2>, scalar_prefetch = 0 : i64, scratch_operands = 0 : i64, tpu.core_type = #tpu.core_type<tc>, window_params = [{transform_indices = @transform_0, window_bounds = array<i64: 1, 192, 384>}, {pipeline_mode = #tpu.pipeline_mode<synchronous>, transform_indices = @transform_1, window_bounds = array<i64: 384, 192>}, {pipeline_mode = #tpu.pipeline_mode<synchronous>, transform_indices = @transform_2, window_bounds = array<i64: 1, 192>}, {transform_indices = @transform_3, window_bounds = array<i64: 1, 192, 64>}]} {
    %c0 = arith.constant 0 : index
    %c0_0 = arith.constant 0 : index
    %c0_1 = arith.constant 0 : index
    %0 = vector.load %arg1[%c0, %c0_0, %c0_1] : memref<1x192x384xbf16, #tpu.memory_space<vmem>>, vector<1x192x384xbf16>
    %1 = vector.shape_cast %0 : vector<1x192x384xbf16> to vector<192x384xbf16>
    %c0_2 = arith.constant 0 : index
    %c0_3 = arith.constant 0 : index
    %2 = vector.load %arg2[%c0_2, %c0_3] : memref<384x192xbf16, #tpu.memory_space<vmem>>, vector<384x192xbf16>
    %cst = arith.constant dense<0.000000e+00> : vector<192x192xf32>
    %3 = tpu.matmul %1, %2, %cst {dimension_numbers = #tpu.dot_dimension_numbers<[1], [0], [0], [1], [0, 0, 1, 1], [], []>} : vector<192x384xbf16>, vector<384x192xbf16>, vector<192x192xf32> -> vector<192x192xf32>
    %c0_4 = arith.constant 0 : index
    %c0_5 = arith.constant 0 : index
    %4 = vector.load %arg3[%c0_4, %c0_5] : memref<1x192xf32, #tpu.memory_space<vmem>>, vector<1x192xf32>
    %5 = vector.broadcast %4 : vector<1x192xf32> to vector<192x192xf32>
    %6 = arith.addf %3, %5 : vector<192x192xf32>
    %7 = vector.extract_strided_slice %6 {offsets = [0, 0], sizes = [192, 64], strides = [1, 1]} : vector<192x192xf32> to vector<192x64xf32>
    %8 = vector.extract_strided_slice %6 {offsets = [0, 64], sizes = [192, 64], strides = [1, 1]} : vector<192x192xf32> to vector<192x64xf32>
    %9 = arith.maximumf %7, %8 : vector<192x64xf32>
    %10 = vector.extract_strided_slice %6 {offsets = [0, 128], sizes = [192, 64], strides = [1, 1]} : vector<192x192xf32> to vector<192x64xf32>
    %11 = arith.maximumf %9, %10 : vector<192x64xf32>
    %cst_6 = arith.constant 0.000000e+00 : f32
    %12 = vector.broadcast %cst_6 : f32 to vector<192x64xf32>
    %13 = arith.maximumf %11, %12 : vector<192x64xf32>
    %c0_7 = arith.constant 0 : index
    %c0_8 = arith.constant 0 : index
    %c0_9 = arith.constant 0 : index
    %14 = vector.load %arg4[%c0_7, %c0_8, %c0_9] : memref<1x192x64xf32, #tpu.memory_space<vmem>>, vector<1x192x64xf32>
    %15 = vector.shape_cast %14 : vector<1x192x64xf32> to vector<192x64xf32>
    %16 = vector.shape_cast %13 : vector<192x64xf32> to vector<1x192x64xf32>
    tpu.vector_store %arg4[%c0_7, %c0_8, %c0_9], %16 {strides = array<i32>} : memref<1x192x64xf32, #tpu.memory_space<vmem>>, vector<1x192x64xf32>,
    return
  }
  func.func @transform_0(%arg0: i32) -> (i32, i32, i32) {
    %c0_i32 = arith.constant 0 : i32
    %c0_i32_0 = arith.constant 0 : i32
    %c0_i32_1 = arith.constant 0 : i32
    return %arg0, %c0_i32, %c0_i32_0 : i32, i32, i32
  }
  func.func @transform_1(%arg0: i32) -> (i32, i32) {
    %c0_i32 = arith.constant 0 : i32
    %c0_i32_0 = arith.constant 0 : i32
    %c0_i32_1 = arith.constant 0 : i32
    return %c0_i32, %c0_i32_0 : i32, i32
  }
  func.func @transform_2(%arg0: i32) -> (i32, i32) {
    %c0_i32 = arith.constant 0 : i32
    %c0_i32_0 = arith.constant 0 : i32
    %c0_i32_1 = arith.constant 0 : i32
    return %c0_i32, %c0_i32_0 : i32, i32
  }
  func.func @transform_3(%arg0: i32) -> (i32, i32, i32) {
    %c0_i32 = arith.constant 0 : i32
    %c0_i32_0 = arith.constant 0 : i32
    %c0_i32_1 = arith.constant 0 : i32
    return %arg0, %c0_i32, %c0_i32_0 : i32, i32, i32
  }
}

module attributes {stable_mosaic.version = 11 : i64} {
  func.func @_conv_pool_kernel(%arg0: i32, %arg1: memref<1x61x768xbf16, #tpu.memory_space<vmem>>, %arg2: memref<768x192xbf16, #tpu.memory_space<vmem>>, %arg3: memref<1x192xf32, #tpu.memory_space<vmem>>, %arg4: memref<1x61x64xf32, #tpu.memory_space<vmem>>) attributes {dimension_semantics = [#tpu.dimension_semantics<parallel>], iteration_bounds = array<i64: 2>, scalar_prefetch = 0 : i64, scratch_operands = 0 : i64, tpu.core_type = #tpu.core_type<tc>, window_params = [{transform_indices = @transform_0, window_bounds = array<i64: 1, 61, 768>}, {pipeline_mode = #tpu.pipeline_mode<synchronous>, transform_indices = @transform_1, window_bounds = array<i64: 768, 192>}, {pipeline_mode = #tpu.pipeline_mode<synchronous>, transform_indices = @transform_2, window_bounds = array<i64: 1, 192>}, {transform_indices = @transform_3, window_bounds = array<i64: 1, 61, 64>}]} {
    %c0 = arith.constant 0 : index
    %c0_0 = arith.constant 0 : index
    %c0_1 = arith.constant 0 : index
    %0 = vector.load %arg1[%c0, %c0_0, %c0_1] : memref<1x61x768xbf16, #tpu.memory_space<vmem>>, vector<1x61x768xbf16>
    %1 = vector.shape_cast %0 : vector<1x61x768xbf16> to vector<61x768xbf16>
    %c0_2 = arith.constant 0 : index
    %c0_3 = arith.constant 0 : index
    %2 = vector.load %arg2[%c0_2, %c0_3] : memref<768x192xbf16, #tpu.memory_space<vmem>>, vector<768x192xbf16>
    %cst = arith.constant dense<0.000000e+00> : vector<61x192xf32>
    %3 = tpu.matmul %1, %2, %cst {dimension_numbers = #tpu.dot_dimension_numbers<[1], [0], [0], [1], [0, 0, 1, 1], [], []>} : vector<61x768xbf16>, vector<768x192xbf16>, vector<61x192xf32> -> vector<61x192xf32>
    %c0_4 = arith.constant 0 : index
    %c0_5 = arith.constant 0 : index
    %4 = vector.load %arg3[%c0_4, %c0_5] : memref<1x192xf32, #tpu.memory_space<vmem>>, vector<1x192xf32>
    %5 = vector.broadcast %4 : vector<1x192xf32> to vector<61x192xf32>
    %6 = arith.addf %3, %5 : vector<61x192xf32>
    %7 = vector.extract_strided_slice %6 {offsets = [0, 0], sizes = [61, 64], strides = [1, 1]} : vector<61x192xf32> to vector<61x64xf32>
    %8 = vector.extract_strided_slice %6 {offsets = [0, 64], sizes = [61, 64], strides = [1, 1]} : vector<61x192xf32> to vector<61x64xf32>
    %9 = arith.maximumf %7, %8 : vector<61x64xf32>
    %10 = vector.extract_strided_slice %6 {offsets = [0, 128], sizes = [61, 64], strides = [1, 1]} : vector<61x192xf32> to vector<61x64xf32>
    %11 = arith.maximumf %9, %10 : vector<61x64xf32>
    %cst_6 = arith.constant 0.000000e+00 : f32
    %12 = vector.broadcast %cst_6 : f32 to vector<61x64xf32>
    %13 = arith.maximumf %11, %12 : vector<61x64xf32>
    %c0_7 = arith.constant 0 : index
    %c0_8 = arith.constant 0 : index
    %c0_9 = arith.constant 0 : index
    %14 = vector.load %arg4[%c0_7, %c0_8, %c0_9] : memref<1x61x64xf32, #tpu.memory_space<vmem>>, vector<1x61x64xf32>
    %15 = vector.shape_cast %14 : vector<1x61x64xf32> to vector<61x64xf32>
    %16 = vector.shape_cast %13 : vector<61x64xf32> to vector<1x61x64xf32>
    tpu.vector_store %arg4[%c0_7, %c0_8, %c0_9], %16 {strides = array<i32>} : memref<1x61x64xf32, #tpu.memory_space<vmem>>, vector<1x61x64xf32>,
    return
  }
  func.func @transform_0(%arg0: i32) -> (i32, i32, i32) {
    %c0_i32 = arith.constant 0 : i32
    %c0_i32_0 = arith.constant 0 : i32
    %c0_i32_1 = arith.constant 0 : i32
    return %arg0, %c0_i32, %c0_i32_0 : i32, i32, i32
  }
  func.func @transform_1(%arg0: i32) -> (i32, i32) {
    %c0_i32 = arith.constant 0 : i32
    %c0_i32_0 = arith.constant 0 : i32
    %c0_i32_1 = arith.constant 0 : i32
    return %c0_i32, %c0_i32_0 : i32, i32
  }
  func.func @transform_2(%arg0: i32) -> (i32, i32) {
    %c0_i32 = arith.constant 0 : i32
    %c0_i32_0 = arith.constant 0 : i32
    %c0_i32_1 = arith.constant 0 : i32
    return %c0_i32, %c0_i32_0 : i32, i32
  }
  func.func @transform_3(%arg0: i32) -> (i32, i32, i32) {
    %c0_i32 = arith.constant 0 : i32
    %c0_i32_0 = arith.constant 0 : i32
    %c0_i32_1 = arith.constant 0 : i32
    return %arg0, %c0_i32, %c0_i32_0 : i32, i32, i32
  }
}

module attributes {stable_mosaic.version = 11 : i64} {
  func.func @_conv_pool_kernel(%arg0: i32, %arg1: memref<1x19x448xbf16, #tpu.memory_space<vmem>>, %arg2: memref<448x192xbf16, #tpu.memory_space<vmem>>, %arg3: memref<1x192xf32, #tpu.memory_space<vmem>>, %arg4: memref<1x19x64xf32, #tpu.memory_space<vmem>>) attributes {dimension_semantics = [#tpu.dimension_semantics<parallel>], iteration_bounds = array<i64: 2>, scalar_prefetch = 0 : i64, scratch_operands = 0 : i64, tpu.core_type = #tpu.core_type<tc>, window_params = [{transform_indices = @transform_0, window_bounds = array<i64: 1, 19, 448>}, {pipeline_mode = #tpu.pipeline_mode<synchronous>, transform_indices = @transform_1, window_bounds = array<i64: 448, 192>}, {pipeline_mode = #tpu.pipeline_mode<synchronous>, transform_indices = @transform_2, window_bounds = array<i64: 1, 192>}, {transform_indices = @transform_3, window_bounds = array<i64: 1, 19, 64>}]} {
    %c0 = arith.constant 0 : index
    %c0_0 = arith.constant 0 : index
    %c0_1 = arith.constant 0 : index
    %0 = vector.load %arg1[%c0, %c0_0, %c0_1] : memref<1x19x448xbf16, #tpu.memory_space<vmem>>, vector<1x19x448xbf16>
    %1 = vector.shape_cast %0 : vector<1x19x448xbf16> to vector<19x448xbf16>
    %c0_2 = arith.constant 0 : index
    %c0_3 = arith.constant 0 : index
    %2 = vector.load %arg2[%c0_2, %c0_3] : memref<448x192xbf16, #tpu.memory_space<vmem>>, vector<448x192xbf16>
    %cst = arith.constant dense<0.000000e+00> : vector<19x192xf32>
    %3 = tpu.matmul %1, %2, %cst {dimension_numbers = #tpu.dot_dimension_numbers<[1], [0], [0], [1], [0, 0, 1, 1], [], []>} : vector<19x448xbf16>, vector<448x192xbf16>, vector<19x192xf32> -> vector<19x192xf32>
    %c0_4 = arith.constant 0 : index
    %c0_5 = arith.constant 0 : index
    %4 = vector.load %arg3[%c0_4, %c0_5] : memref<1x192xf32, #tpu.memory_space<vmem>>, vector<1x192xf32>
    %5 = vector.broadcast %4 : vector<1x192xf32> to vector<19x192xf32>
    %6 = arith.addf %3, %5 : vector<19x192xf32>
    %7 = vector.extract_strided_slice %6 {offsets = [0, 0], sizes = [19, 64], strides = [1, 1]} : vector<19x192xf32> to vector<19x64xf32>
    %8 = vector.extract_strided_slice %6 {offsets = [0, 64], sizes = [19, 64], strides = [1, 1]} : vector<19x192xf32> to vector<19x64xf32>
    %9 = arith.maximumf %7, %8 : vector<19x64xf32>
    %10 = vector.extract_strided_slice %6 {offsets = [0, 128], sizes = [19, 64], strides = [1, 1]} : vector<19x192xf32> to vector<19x64xf32>
    %11 = arith.maximumf %9, %10 : vector<19x64xf32>
    %cst_6 = arith.constant 0.000000e+00 : f32
    %12 = vector.broadcast %cst_6 : f32 to vector<19x64xf32>
    %13 = arith.maximumf %11, %12 : vector<19x64xf32>
    %c0_7 = arith.constant 0 : index
    %c0_8 = arith.constant 0 : index
    %c0_9 = arith.constant 0 : index
    %14 = vector.load %arg4[%c0_7, %c0_8, %c0_9] : memref<1x19x64xf32, #tpu.memory_space<vmem>>, vector<1x19x64xf32>
    %15 = vector.shape_cast %14 : vector<1x19x64xf32> to vector<19x64xf32>
    %16 = vector.shape_cast %13 : vector<19x64xf32> to vector<1x19x64xf32>
    tpu.vector_store %arg4[%c0_7, %c0_8, %c0_9], %16 {strides = array<i32>} : memref<1x19x64xf32, #tpu.memory_space<vmem>>, vector<1x19x64xf32>,
    return
  }
  func.func @transform_0(%arg0: i32) -> (i32, i32, i32) {
    %c0_i32 = arith.constant 0 : i32
    %c0_i32_0 = arith.constant 0 : i32
    %c0_i32_1 = arith.constant 0 : i32
    return %arg0, %c0_i32, %c0_i32_0 : i32, i32, i32
  }
  func.func @transform_1(%arg0: i32) -> (i32, i32) {
    %c0_i32 = arith.constant 0 : i32
    %c0_i32_0 = arith.constant 0 : i32
    %c0_i32_1 = arith.constant 0 : i32
    return %c0_i32, %c0_i32_0 : i32, i32
  }
  func.func @transform_2(%arg0: i32) -> (i32, i32) {
    %c0_i32 = arith.constant 0 : i32
    %c0_i32_0 = arith.constant 0 : i32
    %c0_i32_1 = arith.constant 0 : i32
    return %c0_i32, %c0_i32_0 : i32, i32
  }
  func.func @transform_3(%arg0: i32) -> (i32, i32, i32) {
    %c0_i32 = arith.constant 0 : i32
    %c0_i32_0 = arith.constant 0 : i32
    %c0_i32_1 = arith.constant 0 : i32
    return %arg0, %c0_i32, %c0_i32_0 : i32, i32, i32
  }
}

module attributes {stable_mosaic.version = 11 : i64} {
  func.func @_conv_pool_kernel(%arg0: i32, %arg1: memref<1x5x448xbf16, #tpu.memory_space<vmem>>, %arg2: memref<448x384xbf16, #tpu.memory_space<vmem>>, %arg3: memref<1x384xf32, #tpu.memory_space<vmem>>, %arg4: memref<1x5x128xf32, #tpu.memory_space<vmem>>) attributes {dimension_semantics = [#tpu.dimension_semantics<parallel>], iteration_bounds = array<i64: 2>, scalar_prefetch = 0 : i64, scratch_operands = 0 : i64, tpu.core_type = #tpu.core_type<tc>, window_params = [{transform_indices = @transform_0, window_bounds = array<i64: 1, 5, 448>}, {pipeline_mode = #tpu.pipeline_mode<synchronous>, transform_indices = @transform_1, window_bounds = array<i64: 448, 384>}, {pipeline_mode = #tpu.pipeline_mode<synchronous>, transform_indices = @transform_2, window_bounds = array<i64: 1, 384>}, {transform_indices = @transform_3, window_bounds = array<i64: 1, 5, 128>}]} {
    %c0 = arith.constant 0 : index
    %c0_0 = arith.constant 0 : index
    %c0_1 = arith.constant 0 : index
    %0 = vector.load %arg1[%c0, %c0_0, %c0_1] : memref<1x5x448xbf16, #tpu.memory_space<vmem>>, vector<1x5x448xbf16>
    %1 = vector.shape_cast %0 : vector<1x5x448xbf16> to vector<5x448xbf16>
    %c0_2 = arith.constant 0 : index
    %c0_3 = arith.constant 0 : index
    %2 = vector.load %arg2[%c0_2, %c0_3] : memref<448x384xbf16, #tpu.memory_space<vmem>>, vector<448x384xbf16>
    %cst = arith.constant dense<0.000000e+00> : vector<5x384xf32>
    %3 = tpu.matmul %1, %2, %cst {dimension_numbers = #tpu.dot_dimension_numbers<[1], [0], [0], [1], [0, 0, 1, 1], [], []>} : vector<5x448xbf16>, vector<448x384xbf16>, vector<5x384xf32> -> vector<5x384xf32>
    %c0_4 = arith.constant 0 : index
    %c0_5 = arith.constant 0 : index
    %4 = vector.load %arg3[%c0_4, %c0_5] : memref<1x384xf32, #tpu.memory_space<vmem>>, vector<1x384xf32>
    %5 = vector.broadcast %4 : vector<1x384xf32> to vector<5x384xf32>
    %6 = arith.addf %3, %5 : vector<5x384xf32>
    %7 = vector.extract_strided_slice %6 {offsets = [0, 0], sizes = [5, 128], strides = [1, 1]} : vector<5x384xf32> to vector<5x128xf32>
    %8 = vector.extract_strided_slice %6 {offsets = [0, 128], sizes = [5, 128], strides = [1, 1]} : vector<5x384xf32> to vector<5x128xf32>
    %9 = arith.maximumf %7, %8 : vector<5x128xf32>
    %10 = vector.extract_strided_slice %6 {offsets = [0, 256], sizes = [5, 128], strides = [1, 1]} : vector<5x384xf32> to vector<5x128xf32>
    %11 = arith.maximumf %9, %10 : vector<5x128xf32>
    %cst_6 = arith.constant 0.000000e+00 : f32
    %12 = vector.broadcast %cst_6 : f32 to vector<5x128xf32>
    %13 = arith.maximumf %11, %12 : vector<5x128xf32>
    %c0_7 = arith.constant 0 : index
    %c0_8 = arith.constant 0 : index
    %c0_9 = arith.constant 0 : index
    %14 = vector.load %arg4[%c0_7, %c0_8, %c0_9] : memref<1x5x128xf32, #tpu.memory_space<vmem>>, vector<1x5x128xf32>
    %15 = vector.shape_cast %14 : vector<1x5x128xf32> to vector<5x128xf32>
    %16 = vector.shape_cast %13 : vector<5x128xf32> to vector<1x5x128xf32>
    tpu.vector_store %arg4[%c0_7, %c0_8, %c0_9], %16 {strides = array<i32>} : memref<1x5x128xf32, #tpu.memory_space<vmem>>, vector<1x5x128xf32>,
    return
  }
  func.func @transform_0(%arg0: i32) -> (i32, i32, i32) {
    %c0_i32 = arith.constant 0 : i32
    %c0_i32_0 = arith.constant 0 : i32
    %c0_i32_1 = arith.constant 0 : i32
    return %arg0, %c0_i32, %c0_i32_0 : i32, i32, i32
  }
  func.func @transform_1(%arg0: i32) -> (i32, i32) {
    %c0_i32 = arith.constant 0 : i32
    %c0_i32_0 = arith.constant 0 : i32
    %c0_i32_1 = arith.constant 0 : i32
    return %c0_i32, %c0_i32_0 : i32, i32
  }
  func.func @transform_2(%arg0: i32) -> (i32, i32) {
    %c0_i32 = arith.constant 0 : i32
    %c0_i32_0 = arith.constant 0 : i32
    %c0_i32_1 = arith.constant 0 : i32
    return %c0_i32, %c0_i32_0 : i32, i32
  }
  func.func @transform_3(%arg0: i32) -> (i32, i32, i32) {
    %c0_i32 = arith.constant 0 : i32
    %c0_i32_0 = arith.constant 0 : i32
    %c0_i32_1 = arith.constant 0 : i32
    return %arg0, %c0_i32, %c0_i32_0 : i32, i32, i32
  }
}

module attributes {stable_mosaic.version = 11 : i64} {
  func.func @_conv_pool_kernel(%arg0: i32, %arg1: memref<1x1x640xbf16, #tpu.memory_space<vmem>>, %arg2: memref<640x384xbf16, #tpu.memory_space<vmem>>, %arg3: memref<1x384xf32, #tpu.memory_space<vmem>>, %arg4: memref<1x1x128xf32, #tpu.memory_space<vmem>>) attributes {dimension_semantics = [#tpu.dimension_semantics<parallel>], iteration_bounds = array<i64: 2>, scalar_prefetch = 0 : i64, scratch_operands = 0 : i64, tpu.core_type = #tpu.core_type<tc>, window_params = [{transform_indices = @transform_0, window_bounds = array<i64: 1, 1, 640>}, {pipeline_mode = #tpu.pipeline_mode<synchronous>, transform_indices = @transform_1, window_bounds = array<i64: 640, 384>}, {pipeline_mode = #tpu.pipeline_mode<synchronous>, transform_indices = @transform_2, window_bounds = array<i64: 1, 384>}, {transform_indices = @transform_3, window_bounds = array<i64: 1, 1, 128>}]} {
    %c0 = arith.constant 0 : index
    %c0_0 = arith.constant 0 : index
    %c0_1 = arith.constant 0 : index
    %0 = vector.load %arg1[%c0, %c0_0, %c0_1] : memref<1x1x640xbf16, #tpu.memory_space<vmem>>, vector<1x1x640xbf16>
    %1 = vector.shape_cast %0 : vector<1x1x640xbf16> to vector<1x640xbf16>
    %c0_2 = arith.constant 0 : index
    %c0_3 = arith.constant 0 : index
    %2 = vector.load %arg2[%c0_2, %c0_3] : memref<640x384xbf16, #tpu.memory_space<vmem>>, vector<640x384xbf16>
    %cst = arith.constant dense<0.000000e+00> : vector<1x384xf32>
    %3 = tpu.matmul %1, %2, %cst {dimension_numbers = #tpu.dot_dimension_numbers<[1], [0], [0], [1], [0, 0, 1, 1], [], []>} : vector<1x640xbf16>, vector<640x384xbf16>, vector<1x384xf32> -> vector<1x384xf32>
    %c0_4 = arith.constant 0 : index
    %c0_5 = arith.constant 0 : index
    %4 = vector.load %arg3[%c0_4, %c0_5] : memref<1x384xf32, #tpu.memory_space<vmem>>, vector<1x384xf32>
    %5 = arith.addf %3, %4 : vector<1x384xf32>
    %6 = vector.extract_strided_slice %5 {offsets = [0, 0], sizes = [1, 128], strides = [1, 1]} : vector<1x384xf32> to vector<1x128xf32>
    %7 = vector.extract_strided_slice %5 {offsets = [0, 128], sizes = [1, 128], strides = [1, 1]} : vector<1x384xf32> to vector<1x128xf32>
    %8 = arith.maximumf %6, %7 : vector<1x128xf32>
    %9 = vector.extract_strided_slice %5 {offsets = [0, 256], sizes = [1, 128], strides = [1, 1]} : vector<1x384xf32> to vector<1x128xf32>
    %10 = arith.maximumf %8, %9 : vector<1x128xf32>
    %cst_6 = arith.constant 0.000000e+00 : f32
    %11 = vector.broadcast %cst_6 : f32 to vector<1x128xf32>
    %12 = arith.maximumf %10, %11 : vector<1x128xf32>
    %c0_7 = arith.constant 0 : index
    %c0_8 = arith.constant 0 : index
    %c0_9 = arith.constant 0 : index
    %13 = vector.load %arg4[%c0_7, %c0_8, %c0_9] : memref<1x1x128xf32, #tpu.memory_space<vmem>>, vector<1x1x128xf32>
    %14 = vector.shape_cast %13 : vector<1x1x128xf32> to vector<1x128xf32>
    %15 = vector.shape_cast %12 : vector<1x128xf32> to vector<1x1x128xf32>
    tpu.vector_store %arg4[%c0_7, %c0_8, %c0_9], %15 {strides = array<i32>} : memref<1x1x128xf32, #tpu.memory_space<vmem>>, vector<1x1x128xf32>,
    return
  }
  func.func @transform_0(%arg0: i32) -> (i32, i32, i32) {
    %c0_i32 = arith.constant 0 : i32
    %c0_i32_0 = arith.constant 0 : i32
    %c0_i32_1 = arith.constant 0 : i32
    return %arg0, %c0_i32, %c0_i32_0 : i32, i32, i32
  }
  func.func @transform_1(%arg0: i32) -> (i32, i32) {
    %c0_i32 = arith.constant 0 : i32
    %c0_i32_0 = arith.constant 0 : i32
    %c0_i32_1 = arith.constant 0 : i32
    return %c0_i32, %c0_i32_0 : i32, i32
  }
  func.func @transform_2(%arg0: i32) -> (i32, i32) {
    %c0_i32 = arith.constant 0 : i32
    %c0_i32_0 = arith.constant 0 : i32
    %c0_i32_1 = arith.constant 0 : i32
    return %c0_i32, %c0_i32_0 : i32, i32
  }
  func.func @transform_3(%arg0: i32) -> (i32, i32, i32) {
    %c0_i32 = arith.constant 0 : i32
    %c0_i32_0 = arith.constant 0 : i32
    %c0_i32_1 = arith.constant 0 : i32
    return %arg0, %c0_i32, %c0_i32_0 : i32, i32, i32
  }
}

module attributes {stable_mosaic.version = 11 : i64} {
  func.func @_bilstm_kernel(%arg0: memref<2x128xf32, #tpu.memory_space<vmem>>, %arg1: memref<128x2048xf32, #tpu.memory_space<vmem>>, %arg2: memref<1x2048xf32, #tpu.memory_space<vmem>>, %arg3: memref<256x1024xf32, #tpu.memory_space<vmem>>, %arg4: memref<256x1024xf32, #tpu.memory_space<vmem>>, %arg5: memref<2x512xf32, #tpu.memory_space<vmem>>, %arg6: memref<2x2048xf32, #tpu.memory_space<vmem>>) attributes {dimension_semantics = [], scalar_prefetch = 0 : i64, scratch_operands = 1 : i64, tpu.core_type = #tpu.core_type<tc>} {
    %c0 = arith.constant 0 : index
    %c0_0 = arith.constant 0 : index
    %0 = vector.load %arg0[%c0, %c0_0] : memref<2x128xf32, #tpu.memory_space<vmem>>, vector<2x128xf32>
    %c0_1 = arith.constant 0 : index
    %c0_2 = arith.constant 0 : index
    %1 = vector.load %arg1[%c0_1, %c0_2] : memref<128x2048xf32, #tpu.memory_space<vmem>>, vector<128x2048xf32>
    %cst = arith.constant dense<0.000000e+00> : vector<2x2048xf32>
    %2 = tpu.matmul %0, %1, %cst {dimension_numbers = #tpu.dot_dimension_numbers<[1], [0], [0], [1], [0, 0, 1, 1], [], []>} : vector<2x128xf32>, vector<128x2048xf32>, vector<2x2048xf32> -> vector<2x2048xf32>
    %c0_3 = arith.constant 0 : index
    %c0_4 = arith.constant 0 : index
    %3 = vector.load %arg2[%c0_3, %c0_4] : memref<1x2048xf32, #tpu.memory_space<vmem>>, vector<1x2048xf32>
    %4 = vector.broadcast %3 : vector<1x2048xf32> to vector<2x2048xf32>
    %5 = arith.addf %2, %4 : vector<2x2048xf32>
    %c0_5 = arith.constant 0 : index
    %c0_6 = arith.constant 0 : index
    %6 = vector.load %arg6[%c0_5, %c0_6] : memref<2x2048xf32, #tpu.memory_space<vmem>>, vector<2x2048xf32>
    tpu.vector_store %arg6[%c0_5, %c0_6], %5 {strides = array<i32>} : memref<2x2048xf32, #tpu.memory_space<vmem>>, vector<2x2048xf32>,
    %cst_7 = arith.constant 0.000000e+00 : f32
    %7 = vector.broadcast %cst_7 : f32 to vector<2x256xf32>
    %c0_i32 = arith.constant 0 : i32
    %c2_i32 = arith.constant 2 : i32
    %8 = arith.muli %c0_i32, %c2_i32 : i32
    %9 = arith.index_cast %8 : i32 to index
    %c0_8 = arith.constant 0 : index
    %10 = vector.load %arg6[%9, %c0_8] : memref<2x2048xf32, #tpu.memory_space<vmem>>, vector<2x2048xf32>
    %c0_i32_9 = arith.constant 0 : i32
    %11 = arith.subi %c0_i32_9, %c0_i32 : i32
    %c2_i32_10 = arith.constant 2 : i32
    %12 = arith.muli %11, %c2_i32_10 : i32
    %13 = arith.index_cast %12 : i32 to index
    %c0_11 = arith.constant 0 : index
    %14 = vector.load %arg6[%13, %c0_11] : memref<2x2048xf32, #tpu.memory_space<vmem>>, vector<2x2048xf32>
    %15 = vector.extract_strided_slice %10 {offsets = [0, 0], sizes = [2, 1024], strides = [1, 1]} : vector<2x2048xf32> to vector<2x1024xf32>
    %c0_12 = arith.constant 0 : index
    %c0_13 = arith.constant 0 : index
    %16 = vector.load %arg3[%c0_12, %c0_13] : memref<256x1024xf32, #tpu.memory_space<vmem>>, vector<256x1024xf32>
    %cst_14 = arith.constant dense<0.000000e+00> : vector<2x1024xf32>
    %17 = tpu.matmul %7, %16, %cst_14 {dimension_numbers = #tpu.dot_dimension_numbers<[1], [0], [0], [1], [0, 0, 1, 1], [], []>} : vector<2x256xf32>, vector<256x1024xf32>, vector<2x1024xf32> -> vector<2x1024xf32>
    %18 = arith.addf %15, %17 : vector<2x1024xf32>
    %19 = vector.extract_strided_slice %14 {offsets = [0, 1024], sizes = [2, 1024], strides = [1, 1]} : vector<2x2048xf32> to vector<2x1024xf32>
    %c0_15 = arith.constant 0 : index
    %c0_16 = arith.constant 0 : index
    %20 = vector.load %arg4[%c0_15, %c0_16] : memref<256x1024xf32, #tpu.memory_space<vmem>>, vector<256x1024xf32>
    %cst_17 = arith.constant dense<0.000000e+00> : vector<2x1024xf32>
    %21 = tpu.matmul %7, %20, %cst_17 {dimension_numbers = #tpu.dot_dimension_numbers<[1], [0], [0], [1], [0, 0, 1, 1], [], []>} : vector<2x256xf32>, vector<256x1024xf32>, vector<2x1024xf32> -> vector<2x1024xf32>
    %22 = arith.addf %19, %21 : vector<2x1024xf32>
    %23 = vector.extract_strided_slice %18 {offsets = [0, 0], sizes = [2, 256], strides = [1, 1]} : vector<2x1024xf32> to vector<2x256xf32>
    %24 = arith.negf %23 : vector<2x256xf32>
    %25 = math.exp %24 : vector<2x256xf32>
    %cst_18 = arith.constant 1.000000e+00 : f32
    %26 = vector.broadcast %cst_18 : f32 to vector<2x256xf32>
    %27 = arith.addf %26, %25 : vector<2x256xf32>
    %28 = arith.divf %26, %27 : vector<2x256xf32>
    %29 = vector.extract_strided_slice %18 {offsets = [0, 256], sizes = [2, 256], strides = [1, 1]} : vector<2x1024xf32> to vector<2x256xf32>
    %30 = arith.negf %29 : vector<2x256xf32>
    %31 = math.exp %30 : vector<2x256xf32>
    %cst_19 = arith.constant 1.000000e+00 : f32
    %32 = vector.broadcast %cst_19 : f32 to vector<2x256xf32>
    %33 = arith.addf %32, %31 : vector<2x256xf32>
    %34 = arith.divf %32, %33 : vector<2x256xf32>
    %35 = vector.extract_strided_slice %18 {offsets = [0, 512], sizes = [2, 256], strides = [1, 1]} : vector<2x1024xf32> to vector<2x256xf32>
    %36 = math.tanh %35 : vector<2x256xf32>
    %37 = vector.extract_strided_slice %18 {offsets = [0, 768], sizes = [2, 256], strides = [1, 1]} : vector<2x1024xf32> to vector<2x256xf32>
    %38 = arith.negf %37 : vector<2x256xf32>
    %39 = math.exp %38 : vector<2x256xf32>
    %cst_20 = arith.constant 1.000000e+00 : f32
    %40 = vector.broadcast %cst_20 : f32 to vector<2x256xf32>
    %41 = arith.addf %40, %39 : vector<2x256xf32>
    %42 = arith.divf %40, %41 : vector<2x256xf32>
    %43 = arith.mulf %34, %7 : vector<2x256xf32>
    %44 = arith.mulf %28, %36 : vector<2x256xf32>
    %45 = arith.addf %43, %44 : vector<2x256xf32>
    %46 = math.tanh %45 : vector<2x256xf32>
    %47 = arith.mulf %42, %46 : vector<2x256xf32>
    %48 = vector.extract_strided_slice %22 {offsets = [0, 0], sizes = [2, 256], strides = [1, 1]} : vector<2x1024xf32> to vector<2x256xf32>
    %49 = arith.negf %48 : vector<2x256xf32>
    %50 = math.exp %49 : vector<2x256xf32>
    %cst_21 = arith.constant 1.000000e+00 : f32
    %51 = vector.broadcast %cst_21 : f32 to vector<2x256xf32>
    %52 = arith.addf %51, %50 : vector<2x256xf32>
    %53 = arith.divf %51, %52 : vector<2x256xf32>
    %54 = vector.extract_strided_slice %22 {offsets = [0, 256], sizes = [2, 256], strides = [1, 1]} : vector<2x1024xf32> to vector<2x256xf32>
    %55 = arith.negf %54 : vector<2x256xf32>
    %56 = math.exp %55 : vector<2x256xf32>
    %cst_22 = arith.constant 1.000000e+00 : f32
    %57 = vector.broadcast %cst_22 : f32 to vector<2x256xf32>
    %58 = arith.addf %57, %56 : vector<2x256xf32>
    %59 = arith.divf %57, %58 : vector<2x256xf32>
    %60 = vector.extract_strided_slice %22 {offsets = [0, 512], sizes = [2, 256], strides = [1, 1]} : vector<2x1024xf32> to vector<2x256xf32>
    %61 = math.tanh %60 : vector<2x256xf32>
    %62 = vector.extract_strided_slice %22 {offsets = [0, 768], sizes = [2, 256], strides = [1, 1]} : vector<2x1024xf32> to vector<2x256xf32>
    %63 = arith.negf %62 : vector<2x256xf32>
    %64 = math.exp %63 : vector<2x256xf32>
    %cst_23 = arith.constant 1.000000e+00 : f32
    %65 = vector.broadcast %cst_23 : f32 to vector<2x256xf32>
    %66 = arith.addf %65, %64 : vector<2x256xf32>
    %67 = arith.divf %65, %66 : vector<2x256xf32>
    %68 = arith.mulf %59, %7 : vector<2x256xf32>
    %69 = arith.mulf %53, %61 : vector<2x256xf32>
    %70 = arith.addf %68, %69 : vector<2x256xf32>
    %71 = math.tanh %70 : vector<2x256xf32>
    %72 = arith.mulf %67, %71 : vector<2x256xf32>
    %c1_i32 = arith.constant 1 : i32
    %73 = tpu.concatenate %47, %72 in 1 : vector<2x256xf32>, vector<2x256xf32> -> vector<2x512xf32>
    %c0_24 = arith.constant 0 : index
    %c0_25 = arith.constant 0 : index
    %74 = vector.load %arg5[%c0_24, %c0_25] : memref<2x512xf32, #tpu.memory_space<vmem>>, vector<2x512xf32>
    tpu.vector_store %arg5[%c0_24, %c0_25], %73 {strides = array<i32>} : memref<2x512xf32, #tpu.memory_space<vmem>>, vector<2x512xf32>,
    return
  }
}

module attributes {stable_mosaic.version = 11 : i64} {
  func.func @_head_kernel(%arg0: memref<2x512xf32, #tpu.memory_space<vmem>>, %arg1: memref<512x100xf32, #tpu.memory_space<vmem>>, %arg2: memref<1x100xf32, #tpu.memory_space<vmem>>, %arg3: memref<100x60xf32, #tpu.memory_space<vmem>>, %arg4: memref<1x60xf32, #tpu.memory_space<vmem>>, %arg5: memref<60x16xf32, #tpu.memory_space<vmem>>, %arg6: memref<1x16xf32, #tpu.memory_space<vmem>>, %arg7: memref<16x512xf32, #tpu.memory_space<vmem>>, %arg8: memref<1x512xf32, #tpu.memory_space<vmem>>, %arg9: memref<64x256xf32, #tpu.memory_space<vmem>>, %arg10: memref<64x256xf32, #tpu.memory_space<vmem>>, %arg11: memref<128x64xf32, #tpu.memory_space<vmem>>, %arg12: memref<1x64xf32, #tpu.memory_space<vmem>>, %arg13: memref<64x9xf32, #tpu.memory_space<vmem>>, %arg14: memref<1x9xf32, #tpu.memory_space<vmem>>, %arg15: memref<1x9xf32, #tpu.memory_space<vmem>>, %arg16: memref<2x512xf32, #tpu.memory_space<vmem>>) attributes {dimension_semantics = [], scalar_prefetch = 0 : i64, scratch_operands = 1 : i64, tpu.core_type = #tpu.core_type<tc>} {
    %c0 = arith.constant 0 : index
    %c0_0 = arith.constant 0 : index
    %0 = vector.load %arg0[%c0, %c0_0] : memref<2x512xf32, #tpu.memory_space<vmem>>, vector<2x512xf32>
    %c0_1 = arith.constant 0 : index
    %c0_2 = arith.constant 0 : index
    %1 = vector.load %arg1[%c0_1, %c0_2] : memref<512x100xf32, #tpu.memory_space<vmem>>, vector<512x100xf32>
    %cst = arith.constant dense<0.000000e+00> : vector<2x100xf32>
    %2 = tpu.matmul %0, %1, %cst {dimension_numbers = #tpu.dot_dimension_numbers<[1], [0], [0], [1], [0, 0, 1, 1], [], []>} : vector<2x512xf32>, vector<512x100xf32>, vector<2x100xf32> -> vector<2x100xf32>
    %c0_3 = arith.constant 0 : index
    %c0_4 = arith.constant 0 : index
    %3 = vector.load %arg2[%c0_3, %c0_4] : memref<1x100xf32, #tpu.memory_space<vmem>>, vector<1x100xf32>
    %4 = vector.broadcast %3 : vector<1x100xf32> to vector<2x100xf32>
    %5 = arith.addf %2, %4 : vector<2x100xf32>
    %c0_5 = arith.constant 0 : index
    %c0_6 = arith.constant 0 : index
    %6 = vector.load %arg3[%c0_5, %c0_6] : memref<100x60xf32, #tpu.memory_space<vmem>>, vector<100x60xf32>
    %cst_7 = arith.constant dense<0.000000e+00> : vector<2x60xf32>
    %7 = tpu.matmul %5, %6, %cst_7 {dimension_numbers = #tpu.dot_dimension_numbers<[1], [0], [0], [1], [0, 0, 1, 1], [], []>} : vector<2x100xf32>, vector<100x60xf32>, vector<2x60xf32> -> vector<2x60xf32>
    %c0_8 = arith.constant 0 : index
    %c0_9 = arith.constant 0 : index
    %8 = vector.load %arg4[%c0_8, %c0_9] : memref<1x60xf32, #tpu.memory_space<vmem>>, vector<1x60xf32>
    %9 = vector.broadcast %8 : vector<1x60xf32> to vector<2x60xf32>
    %10 = arith.addf %7, %9 : vector<2x60xf32>
    %c0_10 = arith.constant 0 : index
    %c0_11 = arith.constant 0 : index
    %11 = vector.load %arg5[%c0_10, %c0_11] : memref<60x16xf32, #tpu.memory_space<vmem>>, vector<60x16xf32>
    %cst_12 = arith.constant dense<0.000000e+00> : vector<2x16xf32>
    %12 = tpu.matmul %10, %11, %cst_12 {dimension_numbers = #tpu.dot_dimension_numbers<[1], [0], [0], [1], [0, 0, 1, 1], [], []>} : vector<2x60xf32>, vector<60x16xf32>, vector<2x16xf32> -> vector<2x16xf32>
    %c0_13 = arith.constant 0 : index
    %c0_14 = arith.constant 0 : index
    %13 = vector.load %arg6[%c0_13, %c0_14] : memref<1x16xf32, #tpu.memory_space<vmem>>, vector<1x16xf32>
    %14 = vector.broadcast %13 : vector<1x16xf32> to vector<2x16xf32>
    %15 = arith.addf %12, %14 : vector<2x16xf32>
    %cst_15 = arith.constant 0.000000e+00 : f32
    %16 = vector.broadcast %cst_15 : f32 to vector<2x16xf32>
    %17 = arith.maximumf %15, %16 : vector<2x16xf32>
    %c0_16 = arith.constant 0 : index
    %c0_17 = arith.constant 0 : index
    %18 = vector.load %arg7[%c0_16, %c0_17] : memref<16x512xf32, #tpu.memory_space<vmem>>, vector<16x512xf32>
    %cst_18 = arith.constant dense<0.000000e+00> : vector<2x512xf32>
    %19 = tpu.matmul %17, %18, %cst_18 {dimension_numbers = #tpu.dot_dimension_numbers<[1], [0], [0], [1], [0, 0, 1, 1], [], []>} : vector<2x16xf32>, vector<16x512xf32>, vector<2x512xf32> -> vector<2x512xf32>
    %c0_19 = arith.constant 0 : index
    %c0_20 = arith.constant 0 : index
    %20 = vector.load %arg8[%c0_19, %c0_20] : memref<1x512xf32, #tpu.memory_space<vmem>>, vector<1x512xf32>
    %21 = vector.broadcast %20 : vector<1x512xf32> to vector<2x512xf32>
    %22 = arith.addf %19, %21 : vector<2x512xf32>
    %c0_21 = arith.constant 0 : index
    %c0_22 = arith.constant 0 : index
    %23 = vector.load %arg16[%c0_21, %c0_22] : memref<2x512xf32, #tpu.memory_space<vmem>>, vector<2x512xf32>
    tpu.vector_store %arg16[%c0_21, %c0_22], %22 {strides = array<i32>} : memref<2x512xf32, #tpu.memory_space<vmem>>, vector<2x512xf32>,
    %cst_23 = arith.constant 0.000000e+00 : f32
    %24 = vector.broadcast %cst_23 : f32 to vector<1x64xf32>
    %c0_i32 = arith.constant 0 : i32
    %25 = arith.index_cast %c0_i32 : i32 to index
    %c0_24 = arith.constant 0 : index
    %26 = vector.load %arg16[%25, %c0_24] : memref<2x512xf32, #tpu.memory_space<vmem>>, vector<1x512xf32>
    %c1_i32 = arith.constant 1 : i32
    %27 = arith.subi %c1_i32, %c0_i32 : i32
    %28 = arith.index_cast %27 : i32 to index
    %c0_25 = arith.constant 0 : index
    %29 = vector.load %arg16[%28, %c0_25] : memref<2x512xf32, #tpu.memory_space<vmem>>, vector<1x512xf32>
    %30 = vector.extract_strided_slice %26 {offsets = [0, 0], sizes = [1, 256], strides = [1, 1]} : vector<1x512xf32> to vector<1x256xf32>
    %c0_26 = arith.constant 0 : index
    %c0_27 = arith.constant 0 : index
    %31 = vector.load %arg9[%c0_26, %c0_27] : memref<64x256xf32, #tpu.memory_space<vmem>>, vector<64x256xf32>
    %cst_28 = arith.constant dense<0.000000e+00> : vector<1x256xf32>
    %32 = tpu.matmul %24, %31, %cst_28 {dimension_numbers = #tpu.dot_dimension_numbers<[1], [0], [0], [1], [0, 0, 1, 1], [], []>} : vector<1x64xf32>, vector<64x256xf32>, vector<1x256xf32> -> vector<1x256xf32>
    %33 = arith.addf %30, %32 : vector<1x256xf32>
    %34 = vector.extract_strided_slice %29 {offsets = [0, 256], sizes = [1, 256], strides = [1, 1]} : vector<1x512xf32> to vector<1x256xf32>
    %c0_29 = arith.constant 0 : index
    %c0_30 = arith.constant 0 : index
    %35 = vector.load %arg10[%c0_29, %c0_30] : memref<64x256xf32, #tpu.memory_space<vmem>>, vector<64x256xf32>
    %cst_31 = arith.constant dense<0.000000e+00> : vector<1x256xf32>
    %36 = tpu.matmul %24, %35, %cst_31 {dimension_numbers = #tpu.dot_dimension_numbers<[1], [0], [0], [1], [0, 0, 1, 1], [], []>} : vector<1x64xf32>, vector<64x256xf32>, vector<1x256xf32> -> vector<1x256xf32>
    %37 = arith.addf %34, %36 : vector<1x256xf32>
    %38 = vector.extract_strided_slice %33 {offsets = [0, 0], sizes = [1, 64], strides = [1, 1]} : vector<1x256xf32> to vector<1x64xf32>
    %39 = arith.negf %38 : vector<1x64xf32>
    %40 = math.exp %39 : vector<1x64xf32>
    %cst_32 = arith.constant 1.000000e+00 : f32
    %41 = vector.broadcast %cst_32 : f32 to vector<1x64xf32>
    %42 = arith.addf %41, %40 : vector<1x64xf32>
    %43 = arith.divf %41, %42 : vector<1x64xf32>
    %44 = vector.extract_strided_slice %33 {offsets = [0, 64], sizes = [1, 64], strides = [1, 1]} : vector<1x256xf32> to vector<1x64xf32>
    %45 = arith.negf %44 : vector<1x64xf32>
    %46 = math.exp %45 : vector<1x64xf32>
    %cst_33 = arith.constant 1.000000e+00 : f32
    %47 = vector.broadcast %cst_33 : f32 to vector<1x64xf32>
    %48 = arith.addf %47, %46 : vector<1x64xf32>
    %49 = arith.divf %47, %48 : vector<1x64xf32>
    %50 = vector.extract_strided_slice %33 {offsets = [0, 128], sizes = [1, 64], strides = [1, 1]} : vector<1x256xf32> to vector<1x64xf32>
    %51 = math.tanh %50 : vector<1x64xf32>
    %52 = vector.extract_strided_slice %33 {offsets = [0, 192], sizes = [1, 64], strides = [1, 1]} : vector<1x256xf32> to vector<1x64xf32>
    %53 = arith.negf %52 : vector<1x64xf32>
    %54 = math.exp %53 : vector<1x64xf32>
    %cst_34 = arith.constant 1.000000e+00 : f32
    %55 = vector.broadcast %cst_34 : f32 to vector<1x64xf32>
    %56 = arith.addf %55, %54 : vector<1x64xf32>
    %57 = arith.divf %55, %56 : vector<1x64xf32>
    %58 = arith.mulf %49, %24 : vector<1x64xf32>
    %59 = arith.mulf %43, %51 : vector<1x64xf32>
    %60 = arith.addf %58, %59 : vector<1x64xf32>
    %61 = math.tanh %60 : vector<1x64xf32>
    %62 = arith.mulf %57, %61 : vector<1x64xf32>
    %63 = vector.extract_strided_slice %37 {offsets = [0, 0], sizes = [1, 64], strides = [1, 1]} : vector<1x256xf32> to vector<1x64xf32>
    %64 = arith.negf %63 : vector<1x64xf32>
    %65 = math.exp %64 : vector<1x64xf32>
    %cst_35 = arith.constant 1.000000e+00 : f32
    %66 = vector.broadcast %cst_35 : f32 to vector<1x64xf32>
    %67 = arith.addf %66, %65 : vector<1x64xf32>
    %68 = arith.divf %66, %67 : vector<1x64xf32>
    %69 = vector.extract_strided_slice %37 {offsets = [0, 64], sizes = [1, 64], strides = [1, 1]} : vector<1x256xf32> to vector<1x64xf32>
    %70 = arith.negf %69 : vector<1x64xf32>
    %71 = math.exp %70 : vector<1x64xf32>
    %cst_36 = arith.constant 1.000000e+00 : f32
    %72 = vector.broadcast %cst_36 : f32 to vector<1x64xf32>
    %73 = arith.addf %72, %71 : vector<1x64xf32>
    %74 = arith.divf %72, %73 : vector<1x64xf32>
    %75 = vector.extract_strided_slice %37 {offsets = [0, 128], sizes = [1, 64], strides = [1, 1]} : vector<1x256xf32> to vector<1x64xf32>
    %76 = math.tanh %75 : vector<1x64xf32>
    %77 = vector.extract_strided_slice %37 {offsets = [0, 192], sizes = [1, 64], strides = [1, 1]} : vector<1x256xf32> to vector<1x64xf32>
    %78 = arith.negf %77 : vector<1x64xf32>
    %79 = math.exp %78 : vector<1x64xf32>
    %cst_37 = arith.constant 1.000000e+00 : f32
    %80 = vector.broadcast %cst_37 : f32 to vector<1x64xf32>
    %81 = arith.addf %80, %79 : vector<1x64xf32>
    %82 = arith.divf %80, %81 : vector<1x64xf32>
    %83 = arith.mulf %74, %24 : vector<1x64xf32>
    %84 = arith.mulf %68, %76 : vector<1x64xf32>
    %85 = arith.addf %83, %84 : vector<1x64xf32>
    %86 = math.tanh %85 : vector<1x64xf32>
    %87 = arith.mulf %82, %86 : vector<1x64xf32>
    %c1_i32_38 = arith.constant 1 : i32
    %88 = arith.index_cast %c1_i32_38 : i32 to index
    %c0_39 = arith.constant 0 : index
    %89 = vector.load %arg16[%88, %c0_39] : memref<2x512xf32, #tpu.memory_space<vmem>>, vector<1x512xf32>
    %c1_i32_40 = arith.constant 1 : i32
    %90 = arith.subi %c1_i32_40, %c1_i32_38 : i32
    %91 = arith.index_cast %90 : i32 to index
    %c0_41 = arith.constant 0 : index
    %92 = vector.load %arg16[%91, %c0_41] : memref<2x512xf32, #tpu.memory_space<vmem>>, vector<1x512xf32>
    %93 = vector.extract_strided_slice %89 {offsets = [0, 0], sizes = [1, 256], strides = [1, 1]} : vector<1x512xf32> to vector<1x256xf32>
    %c0_42 = arith.constant 0 : index
    %c0_43 = arith.constant 0 : index
    %94 = vector.load %arg9[%c0_42, %c0_43] : memref<64x256xf32, #tpu.memory_space<vmem>>, vector<64x256xf32>
    %cst_44 = arith.constant dense<0.000000e+00> : vector<1x256xf32>
    %95 = tpu.matmul %62, %94, %cst_44 {dimension_numbers = #tpu.dot_dimension_numbers<[1], [0], [0], [1], [0, 0, 1, 1], [], []>} : vector<1x64xf32>, vector<64x256xf32>, vector<1x256xf32> -> vector<1x256xf32>
    %96 = arith.addf %93, %95 : vector<1x256xf32>
    %97 = vector.extract_strided_slice %92 {offsets = [0, 256], sizes = [1, 256], strides = [1, 1]} : vector<1x512xf32> to vector<1x256xf32>
    %c0_45 = arith.constant 0 : index
    %c0_46 = arith.constant 0 : index
    %98 = vector.load %arg10[%c0_45, %c0_46] : memref<64x256xf32, #tpu.memory_space<vmem>>, vector<64x256xf32>
    %cst_47 = arith.constant dense<0.000000e+00> : vector<1x256xf32>
    %99 = tpu.matmul %87, %98, %cst_47 {dimension_numbers = #tpu.dot_dimension_numbers<[1], [0], [0], [1], [0, 0, 1, 1], [], []>} : vector<1x64xf32>, vector<64x256xf32>, vector<1x256xf32> -> vector<1x256xf32>
    %100 = arith.addf %97, %99 : vector<1x256xf32>
    %101 = vector.extract_strided_slice %96 {offsets = [0, 0], sizes = [1, 64], strides = [1, 1]} : vector<1x256xf32> to vector<1x64xf32>
    %102 = arith.negf %101 : vector<1x64xf32>
    %103 = math.exp %102 : vector<1x64xf32>
    %cst_48 = arith.constant 1.000000e+00 : f32
    %104 = vector.broadcast %cst_48 : f32 to vector<1x64xf32>
    %105 = arith.addf %104, %103 : vector<1x64xf32>
    %106 = arith.divf %104, %105 : vector<1x64xf32>
    %107 = vector.extract_strided_slice %96 {offsets = [0, 64], sizes = [1, 64], strides = [1, 1]} : vector<1x256xf32> to vector<1x64xf32>
    %108 = arith.negf %107 : vector<1x64xf32>
    %109 = math.exp %108 : vector<1x64xf32>
    %cst_49 = arith.constant 1.000000e+00 : f32
    %110 = vector.broadcast %cst_49 : f32 to vector<1x64xf32>
    %111 = arith.addf %110, %109 : vector<1x64xf32>
    %112 = arith.divf %110, %111 : vector<1x64xf32>
    %113 = vector.extract_strided_slice %96 {offsets = [0, 128], sizes = [1, 64], strides = [1, 1]} : vector<1x256xf32> to vector<1x64xf32>
    %114 = math.tanh %113 : vector<1x64xf32>
    %115 = vector.extract_strided_slice %96 {offsets = [0, 192], sizes = [1, 64], strides = [1, 1]} : vector<1x256xf32> to vector<1x64xf32>
    %116 = arith.negf %115 : vector<1x64xf32>
    %117 = math.exp %116 : vector<1x64xf32>
    %cst_50 = arith.constant 1.000000e+00 : f32
    %118 = vector.broadcast %cst_50 : f32 to vector<1x64xf32>
    %119 = arith.addf %118, %117 : vector<1x64xf32>
    %120 = arith.divf %118, %119 : vector<1x64xf32>
    %121 = arith.mulf %112, %60 : vector<1x64xf32>
    %122 = arith.mulf %106, %114 : vector<1x64xf32>
    %123 = arith.addf %121, %122 : vector<1x64xf32>
    %124 = math.tanh %123 : vector<1x64xf32>
    %125 = arith.mulf %120, %124 : vector<1x64xf32>
    %126 = vector.extract_strided_slice %100 {offsets = [0, 0], sizes = [1, 64], strides = [1, 1]} : vector<1x256xf32> to vector<1x64xf32>
    %127 = arith.negf %126 : vector<1x64xf32>
    %128 = math.exp %127 : vector<1x64xf32>
    %cst_51 = arith.constant 1.000000e+00 : f32
    %129 = vector.broadcast %cst_51 : f32 to vector<1x64xf32>
    %130 = arith.addf %129, %128 : vector<1x64xf32>
    %131 = arith.divf %129, %130 : vector<1x64xf32>
    %132 = vector.extract_strided_slice %100 {offsets = [0, 64], sizes = [1, 64], strides = [1, 1]} : vector<1x256xf32> to vector<1x64xf32>
    %133 = arith.negf %132 : vector<1x64xf32>
    %134 = math.exp %133 : vector<1x64xf32>
    %cst_52 = arith.constant 1.000000e+00 : f32
    %135 = vector.broadcast %cst_52 : f32 to vector<1x64xf32>
    %136 = arith.addf %135, %134 : vector<1x64xf32>
    %137 = arith.divf %135, %136 : vector<1x64xf32>
    %138 = vector.extract_strided_slice %100 {offsets = [0, 128], sizes = [1, 64], strides = [1, 1]} : vector<1x256xf32> to vector<1x64xf32>
    %139 = math.tanh %138 : vector<1x64xf32>
    %140 = vector.extract_strided_slice %100 {offsets = [0, 192], sizes = [1, 64], strides = [1, 1]} : vector<1x256xf32> to vector<1x64xf32>
    %141 = arith.negf %140 : vector<1x64xf32>
    %142 = math.exp %141 : vector<1x64xf32>
    %cst_53 = arith.constant 1.000000e+00 : f32
    %143 = vector.broadcast %cst_53 : f32 to vector<1x64xf32>
    %144 = arith.addf %143, %142 : vector<1x64xf32>
    %145 = arith.divf %143, %144 : vector<1x64xf32>
    %146 = arith.mulf %137, %85 : vector<1x64xf32>
    %147 = arith.mulf %131, %139 : vector<1x64xf32>
    %148 = arith.addf %146, %147 : vector<1x64xf32>
    %149 = math.tanh %148 : vector<1x64xf32>
    %150 = arith.mulf %145, %149 : vector<1x64xf32>
    %c2_i32 = arith.constant 2 : i32
    %151 = tpu.concatenate %125, %150 in 1 : vector<1x64xf32>, vector<1x64xf32> -> vector<1x128xf32>
    %cst_54 = arith.constant 0.000000e+00 : f32
    %152 = vector.broadcast %cst_54 : f32 to vector<1x128xf32>
    %153 = arith.maximumf %151, %152 : vector<1x128xf32>
    %c0_55 = arith.constant 0 : index
    %c0_56 = arith.constant 0 : index
    %154 = vector.load %arg11[%c0_55, %c0_56] : memref<128x64xf32, #tpu.memory_space<vmem>>, vector<128x64xf32>
    %cst_57 = arith.constant dense<0.000000e+00> : vector<1x64xf32>
    %155 = tpu.matmul %153, %154, %cst_57 {dimension_numbers = #tpu.dot_dimension_numbers<[1], [0], [0], [1], [0, 0, 1, 1], [], []>} : vector<1x128xf32>, vector<128x64xf32>, vector<1x64xf32> -> vector<1x64xf32>
    %c0_58 = arith.constant 0 : index
    %c0_59 = arith.constant 0 : index
    %156 = vector.load %arg12[%c0_58, %c0_59] : memref<1x64xf32, #tpu.memory_space<vmem>>, vector<1x64xf32>
    %157 = arith.addf %155, %156 : vector<1x64xf32>
    %c0_60 = arith.constant 0 : index
    %c0_61 = arith.constant 0 : index
    %158 = vector.load %arg13[%c0_60, %c0_61] : memref<64x9xf32, #tpu.memory_space<vmem>>, vector<64x9xf32>
    %cst_62 = arith.constant dense<0.000000e+00> : vector<1x9xf32>
    %159 = tpu.matmul %157, %158, %cst_62 {dimension_numbers = #tpu.dot_dimension_numbers<[1], [0], [0], [1], [0, 0, 1, 1], [], []>} : vector<1x64xf32>, vector<64x9xf32>, vector<1x9xf32> -> vector<1x9xf32>
    %c0_63 = arith.constant 0 : index
    %c0_64 = arith.constant 0 : index
    %160 = vector.load %arg14[%c0_63, %c0_64] : memref<1x9xf32, #tpu.memory_space<vmem>>, vector<1x9xf32>
    %161 = arith.addf %159, %160 : vector<1x9xf32>
    %c0_65 = arith.constant 0 : index
    %c0_66 = arith.constant 0 : index
    %162 = vector.load %arg15[%c0_65, %c0_66] : memref<1x9xf32, #tpu.memory_space<vmem>>, vector<1x9xf32>
    tpu.vector_store %arg15[%c0_65, %c0_66], %161 {strides = array<i32>} : memref<1x9xf32, #tpu.memory_space<vmem>>, vector<1x9xf32>,
    return
  }
}

</mosaic_0001>

<llo_original>
// kernel: forward.8
$region0: #{forward.8}
  #allocation0 [shape = 'u32[]', space=smem, size = 0x4, offset = 0x4, fixed_abs, tag = 'smem constant byte address 0x4 - core index']
  #allocation1 [shape = 'u32[144,128]{1,0:T(1,128)}', space=vmem, size = 0x12000, scoped, tag = 'internal scratch']
  %s0 = inlined_call_operand.vmem [shape: bf16[2,585,384], index: 0, kind: input, shape index: {}]
  %s1 = inlined_call_operand.vmem [shape: bf16[384,96], index: 1, kind: input, shape index: {}]
  %s2 = inlined_call_operand.vmem [shape: f32[1,96], index: 2, kind: input, shape index: {}]
  %s3 = inlined_call_operand.vmem [shape: f32[2,585,32], index: 3, kind: output, shape index: {}]
  %s4 = sld [smem:[#allocation0]]
  $region45: #{forward.8} parent=0
    _
  %s6 = ssub.s32 1, %s4
  %s7 = scalar_select 0, %s6, %s4
  loop: start=0, step=1, limit=4
  $region2: #{forward.8} parent=0 // loop_pre_header
    _
  $region3: #{forward.8} parent=0 // loop_header
    %s9 = sphi 0, %s13
    %p10 = scmp.ge.s32.totalorder %s9, 4
    %s19 = sphi 0, %s21
    %s22 = sphi 0, %s19
    %s23 = sphi 0, %s22
    %s39 = sphi 0, %s23
    %s43 = sphi 0, %s43
    %s45 = sphi 0, %s43
    %s46 = sphi 0, %s45
    %s60 = sphi 0, %s46
    %s64 = sphi 0, %s64
    %s66 = sphi 0, %s64
    %s67 = sphi 0, %s66
    %s81 = sphi 0, %s67
    %s87 = sphi 0, %s89
    %s90 = sphi 0, %s87
    %s91 = sphi 0, %s90
    %s107 = sphi 0, %s91
  $region4: #{forward.8} parent=0 // loop_header_branch
    %12 = sbr.rel (%p10) target = $region8
  $region5: #{forward.8} parent=0 // loop_body
    %s14 = ssub.s32 %s9, 1
    %s15 = ssub.s32 %s9, 2
    %s16 = sadd.s32 %s9, 1
    %s17 = ssub.s32 %s9, %s16
    %p18 = scmp.eq.s32.totalorder %s17, 0
    %s20 = sadd.s32 %s19, 1
    %s21 = scalar_select %p18, %s19, %s20
    %p24 = pneg %p18
    %p25 = scmp.eq.s32.totalorder %s9, 1
    %p26 = por %p24, %p25
    %p27 = scmp.ne.s32.totalorder %s19, %s22
    %p28 = scmp.eq.s32.totalorder %s9, 0
    %p29 = por %p27, %p28
    %p30 = scmp.ne.s32.totalorder %s19, %s22
    %p31 = scmp.eq.s32.totalorder %s14, 1
    %p32 = por %p30, %p31
    %p33 = scmp.ne.s32.totalorder %s22, %s23
    %p34 = scmp.eq.s32.totalorder %s14, 0
    %p35 = por %p33, %p34
    %p36 = scmp.ne.s32.totalorder %s22, %s23
    %p37 = scmp.eq.s32.totalorder %s15, 1
    %p38 = por %p36, %p37
    %p40 = scmp.ne.s32.totalorder %s23, %s39
    %p41 = scmp.eq.s32.totalorder %s15, 0
    %p42 = por %p40, %p41
    %s44 = sadd.s32 %s43, 1
    %p47 = scmp.eq.s32.totalorder %s9, 1
    %p48 = scmp.ne.s32.totalorder %s43, %s45
    %p49 = scmp.eq.s32.totalorder %s9, 0
    %p50 = por %p48, %p49
    %p51 = scmp.ne.s32.totalorder %s43, %s45
    %p52 = scmp.eq.s32.totalorder %s14, 1
    %p53 = por %p51, %p52
    %p54 = scmp.ne.s32.totalorder %s45, %s46
    %p55 = scmp.eq.s32.totalorder %s14, 0
    %p56 = por %p54, %p55
    %p57 = scmp.ne.s32.totalorder %s45, %s46
    %p58 = scmp.eq.s32.totalorder %s15, 1
    %p59 = por %p57, %p58
    %p61 = scmp.ne.s32.totalorder %s46, %s60
    %p62 = scmp.eq.s32.totalorder %s15, 0
    %p63 = por %p61, %p62
    %s65 = sadd.s32 %s64, 1
    %p68 = scmp.eq.s32.totalorder %s9, 1
    %p69 = scmp.ne.s32.totalorder %s64, %s66
    %p70 = scmp.eq.s32.totalorder %s9, 0
    %p71 = por %p69, %p70
    %p72 = scmp.ne.s32.totalorder %s64, %s66
    %p73 = scmp.eq.s32.totalorder %s14, 1
    %p74 = por %p72, %p73
    %p75 = scmp.ne.s32.totalorder %s66, %s67
    %p76 = scmp.eq.s32.totalorder %s14, 0
    %p77 = por %p75, %p76
    %p78 = scmp.ne.s32.totalorder %s66, %s67
    %p79 = scmp.eq.s32.totalorder %s15, 1
    %p80 = por %p78, %p79
    %p82 = scmp.ne.s32.totalorder %s67, %s81
    %p83 = scmp.eq.s32.totalorder %s15, 0
    %p84 = por %p82, %p83
    %s85 = ssub.s32 %s9, %s16
    %p86 = scmp.eq.s32.totalorder %s85, 0
    %s88 = sadd.s32 %s87, 1
    %s89 = scalar_select %p86, %s87, %s88
    %p92 = pneg %p86
    %p93 = scmp.eq.s32.totalorder %s9, 1
    %p94 = por %p92, %p93
    %p95 = scmp.ne.s32.totalorder %s87, %s90
    %p96 = scmp.eq.s32.totalorder %s9, 0
    %p97 = por %p95, %p96
    %p98 = scmp.ne.s32.totalorder %s87, %s90
    %p99 = scmp.eq.s32.totalorder %s14, 1
    %p100 = por %p98, %p99
    %p101 = scmp.ne.s32.totalorder %s90, %s91
    %p102 = scmp.eq.s32.totalorder %s14, 0
    %p103 = por %p101, %p102
    %p104 = scmp.ne.s32.totalorder %s90, %s91
    %p105 = scmp.eq.s32.totalorder %s15, 1
    %p106 = por %p104, %p105
    %p108 = scmp.ne.s32.totalorder %s91, %s107
    %p109 = scmp.eq.s32.totalorder %s15, 0
    %p110 = por %p108, %p109
    %p111 = scmp.le.s32.totalorder 1, %s9
    %p112 = scmp.lt.s32.totalorder %s9, 3
    %p113 = pnand %p111, %p112
    %p114 = pneg %p113
    // Predicated region
    $region9: #{forward.8} parent=5 // pred_check
      _
    $region10: #{forward.8} parent=5 // pred_check_branch
      %116 = sbr.rel (%p113) target = $region12
    $region11: #{forward.8} parent=5 // pred_region
      %s117 = ssub.s32 %s9, 1
      // Predicated region
      $region13: #{forward.8} parent=11 // pred_check
        %p118 = pneg %p56
      $region14: #{forward.8} parent=11 // pred_check_branch
        %120 = sbr.rel (%p118) target = $region16
      $region15: #{forward.8} parent=11 // pred_region
        _
      $region16: #{forward.8} parent=11 // pred_fallthru
        _
      // Predicated region
      $region17: #{forward.8} parent=11 // pred_check
        %p121 = pneg %p77
      $region18: #{forward.8} parent=11 // pred_check_branch
        %123 = sbr.rel (%p121) target = $region20
      $region19: #{forward.8} parent=11 // pred_region
        _
      $region20: #{forward.8} parent=11 // pred_fallthru
        _
    $region12: #{forward.8} parent=5 // pred_fallthru
      _
    %p124 = scmp.lt.s32.totalorder %s9, 2
    // Predicated region
    $region21: #{forward.8} parent=5 // pred_check
      %p125 = pneg %p124
    $region22: #{forward.8} parent=5 // pred_check_branch
      %127 = sbr.rel (%p125) target = $region24
    $region23: #{forward.8} parent=5 // pred_region
      // Predicated region
      $region25: #{forward.8} parent=23 // pred_check
        %p128 = pneg %p29
      $region26: #{forward.8} parent=23 // pred_check_branch
        %130 = sbr.rel (%p128) target = $region28
      $region27: #{forward.8} parent=23 // pred_region
        %p131 = scmp.lt.s32.totalorder %s9, 1
        %s132 = scalar_select %p131, %s9, 1
        %s133 = smul.addr %s132, 222
        %s134 = smul.addr %s133, 4
        %s135 = scalar_lea.vmem %s0, %s134
      $region28: #{forward.8} parent=23 // pred_fallthru
        _
    $region24: #{forward.8} parent=5 // pred_fallthru
      _
    %p136 = scmp.le.s32.totalorder 1, %s9
    %p137 = scmp.lt.s32.totalorder %s9, 3
    %p138 = pnand %p136, %p137
    %p139 = pneg %p138
    // Predicated region
    $region29: #{forward.8} parent=5 // pred_check
      _
    $region30: #{forward.8} parent=5 // pred_check_branch
      %141 = sbr.rel (%p138) target = $region32
    $region31: #{forward.8} parent=5 // pred_region
      %s142 = ssub.s32 %s9, 1
      %p143 = scmp.lt.s32.totalorder %s14, 1
      %s144 = scalar_select %p143, %s14, 1
      %s145 = smul.addr %s144, 222
      %s146 = smul.addr %s145, 4
      %s147 = scalar_lea.vmem %s0, %s146
      %p148 = pneg %p35
      %p149 = pneg %p32
      %p150 = pneg %p56
      %p151 = pneg %p53
      %p152 = pneg %p77
      %p153 = pneg %p74
      %p154 = pneg %p103
      %p155 = pneg %p100
      %p156 = scmp.lt.s32.totalorder %s14, 1
      %s157 = scalar_select %p156, %s14, 1
      %s158 = smul.addr %s157, 74
      %s159 = smul.addr %s158, 8
      %s160 = scalar_lea.vmem %s3, %s159
      %p161 = scmp.lt.s32.totalorder %s14, 1
      %s162 = scalar_select %p161, %s14, 1
      %s163 = smul.addr %s162, 222
      %s164 = smul.addr %s163, 4
      %s165 = scalar_lea.vmem %s0, %s164
      %p166 = scmp.lt.s32.totalorder %s14, 1
      %s167 = scalar_select %p166, %s14, 1
      %s168 = smul.addr %s167, 74
      %s169 = smul.addr %s168, 8
      %s170 = scalar_lea.vmem %s3, %s169
      %v172 = vld [vmem:[%s165] sm:$0xff]
      %v173 = vld [vmem:[%s165 + $0x8] sm:$0xf]
      %v174 = vld [vmem:[%s165 + $0xc] sm:$0xff]
      %v175 = vld [vmem:[%s165 + $0x14] sm:$0xf]
      %v176 = vld [vmem:[%s165 + $0x18] sm:$0xff]
      %v177 = vld [vmem:[%s165 + $0x20] sm:$0xf]
      %v178 = vld [vmem:[%s165 + $0x24] sm:$0xff]
      %v179 = vld [vmem:[%s165 + $0x2c] sm:$0xf]
      %v180 = vld [vmem:[%s165 + $0x30] sm:$0xff]
      %v181 = vld [vmem:[%s165 + $0x38] sm:$0xf]
      %v182 = vld [vmem:[%s165 + $0x3c] sm:$0xff]
      %v183 = vld [vmem:[%s165 + $0x44] sm:$0xf]
      %v184 = vld [vmem:[%s165 + $0x48] sm:$0xff]
      %v185 = vld [vmem:[%s165 + $0x50] sm:$0xf]
      %v186 = vld [vmem:[%s165 + $0x54] sm:$0xff]
      %v187 = vld [vmem:[%s165 + $0x5c] sm:$0xf]
      %v188 = vld [vmem:[%s165 + $0x60] sm:$0xff]
      %v189 = vld [vmem:[%s165 + $0x68] sm:$0xf]
      %v190 = vld [vmem:[%s165 + $0x6c] sm:$0xff]
      %v191 = vld [vmem:[%s165 + $0x74] sm:$0xf]
      %v192 = vld [vmem:[%s165 + $0x78] sm:$0xff]
      %v193 = vld [vmem:[%s165 + $0x80] sm:$0xf]
      %v194 = vld [vmem:[%s165 + $0x84] sm:$0xff]
      %v195 = vld [vmem:[%s165 + $0x8c] sm:$0xf]
      %v196 = vld [vmem:[%s165 + $0x90] sm:$0xff]
      %v197 = vld [vmem:[%s165 + $0x98] sm:$0xf]
      %v198 = vld [vmem:[%s165 + $0x9c] sm:$0xff]
      %v199 = vld [vmem:[%s165 + $0xa4] sm:$0xf]
      %v200 = vld [vmem:[%s165 + $0xa8] sm:$0xff]
      %v201 = vld [vmem:[%s165 + $0xb0] sm:$0xf]
      %v202 = vld [vmem:[%s165 + $0xb4] sm:$0xff]
      %v203 = vld [vmem:[%s165 + $0xbc] sm:$0xf]
      %v204 = vld [vmem:[%s165 + $0xc0] sm:$0xff]
      %v205 = vld [vmem:[%s165 + $0xc8] sm:$0xf]
      %v206 = vld [vmem:[%s165 + $0xcc] sm:$0xff]
      %v207 = vld [vmem:[%s165 + $0xd4] sm:$0xf]
      %v208 = vld [vmem:[%s165 + $0xd8] sm:$0xff]
      %v209 = vld [vmem:[%s165 + $0xe0] sm:$0xf]
      %v210 = vld [vmem:[%s165 + $0xe4] sm:$0xff]
      %v211 = vld [vmem:[%s165 + $0xec] sm:$0xf]
      %v212 = vld [vmem:[%s165 + $0xf0] sm:$0xff]
      %v213 = vld [vmem:[%s165 + $0xf8] sm:$0xf]
      %v214 = vld [vmem:[%s165 + $0xfc] sm:$0xff]
      %v215 = vld [vmem:[%s165 + $0x104] sm:$0xf]
      %v216 = vld [vmem:[%s165 + $0x108] sm:$0xff]
      %v217 = vld [vmem:[%s165 + $0x110] sm:$0xf]
      %v218 = vld [vmem:[%s165 + $0x114] sm:$0xff]
      %v219 = vld [vmem:[%s165 + $0x11c] sm:$0xf]
      %v220 = vld [vmem:[%s165 + $0x120] sm:$0xff]
      %v221 = vld [vmem:[%s165 + $0x128] sm:$0xf]
      %v222 = vld [vmem:[%s165 + $0x12c] sm:$0xff]
      %v223 = vld [vmem:[%s165 + $0x134] sm:$0xf]
      %v224 = vld [vmem:[%s165 + $0x138] sm:$0xff]
      %v225 = vld [vmem:[%s165 + $0x140] sm:$0xf]
      %v226 = vld [vmem:[%s165 + $0x144] sm:$0xff]
      %v227 = vld [vmem:[%s165 + $0x14c] sm:$0xf]
      %v228 = vld [vmem:[%s165 + $0x150] sm:$0xff]
      %v229 = vld [vmem:[%s165 + $0x158] sm:$0xf]
      %v230 = vld [vmem:[%s165 + $0x15c] sm:$0xff]
      %v231 = vld [vmem:[%s165 + $0x164] sm:$0xf]
      %v232 = vld [vmem:[%s165 + $0x168] sm:$0xff]
      %v233 = vld [vmem:[%s165 + $0x170] sm:$0xf]
      %v234 = vld [vmem:[%s165 + $0x174] sm:$0xff]
      %v235 = vld [vmem:[%s165 + $0x17c] sm:$0xf]
      %v236 = vld [vmem:[%s165 + $0x180] sm:$0xff]
      %v237 = vld [vmem:[%s165 + $0x188] sm:$0xf]
      %v238 = vld [vmem:[%s165 + $0x18c] sm:$0xff]
      %v239 = vld [vmem:[%s165 + $0x194] sm:$0xf]
      %v240 = vld [vmem:[%s165 + $0x198] sm:$0xff]
      %v241 = vld [vmem:[%s165 + $0x1a0] sm:$0xf]
      %v242 = vld [vmem:[%s165 + $0x1a4] sm:$0xff]
      %v243 = vld [vmem:[%s165 + $0x1ac] sm:$0xf]
      %v244 = vld [vmem:[%s165 + $0x1b0] sm:$0xff]
      %v245 = vld [vmem:[%s165 + $0x1b8] sm:$0xf]
      %v246 = vld [vmem:[%s165 + $0x1bc] sm:$0xff]
      %v247 = vld [vmem:[%s165 + $0x1c4] sm:$0xf]
      %v248 = vld [vmem:[%s165 + $0x1c8] sm:$0xff]
      %v249 = vld [vmem:[%s165 + $0x1d0] sm:$0xf]
      %v250 = vld [vmem:[%s165 + $0x1d4] sm:$0xff]
      %v251 = vld [vmem:[%s165 + $0x1dc] sm:$0xf]
      %v252 = vld [vmem:[%s165 + $0x1e0] sm:$0xff]
      %v253 = vld [vmem:[%s165 + $0x1e8] sm:$0xf]
      %v254 = vld [vmem:[%s165 + $0x1ec] sm:$0xff]
      %v255 = vld [vmem:[%s165 + $0x1f4] sm:$0xf]
      %v256 = vld [vmem:[%s165 + $0x1f8] sm:$0xff]
      %v257 = vld [vmem:[%s165 + $0x200] sm:$0xf]
      %v258 = vld [vmem:[%s165 + $0x204] sm:$0xff]
      %v259 = vld [vmem:[%s165 + $0x20c] sm:$0xf]
      %v260 = vld [vmem:[%s165 + $0x210] sm:$0xff]
      %v261 = vld [vmem:[%s165 + $0x218] sm:$0xf]
      %v262 = vld [vmem:[%s165 + $0x21c] sm:$0xff]
      %v263 = vld [vmem:[%s165 + $0x224] sm:$0xf]
      %v264 = vld [vmem:[%s165 + $0x228] sm:$0xff]
      %v265 = vld [vmem:[%s165 + $0x230] sm:$0xf]
      %v266 = vld [vmem:[%s165 + $0x234] sm:$0xff]
      %v267 = vld [vmem:[%s165 + $0x23c] sm:$0xf]
      %v268 = vld [vmem:[%s165 + $0x240] sm:$0xff]
      %v269 = vld [vmem:[%s165 + $0x248] sm:$0xf]
      %v270 = vld [vmem:[%s165 + $0x24c] sm:$0xff]
      %v271 = vld [vmem:[%s165 + $0x254] sm:$0xf]
      %v272 = vld [vmem:[%s165 + $0x258] sm:$0xff]
      %v273 = vld [vmem:[%s165 + $0x260] sm:$0xf]
      %v274 = vld [vmem:[%s165 + $0x264] sm:$0xff]
      %v275 = vld [vmem:[%s165 + $0x26c] sm:$0xf]
      %v276 = vld [vmem:[%s165 + $0x270] sm:$0xff]
      %v277 = vld [vmem:[%s165 + $0x278] sm:$0xf]
      %v278 = vld [vmem:[%s165 + $0x27c] sm:$0xff]
      %v279 = vld [vmem:[%s165 + $0x284] sm:$0xf]
      %v280 = vld [vmem:[%s165 + $0x288] sm:$0xff]
      %v281 = vld [vmem:[%s165 + $0x290] sm:$0xf]
      %v282 = vld [vmem:[%s165 + $0x294] sm:$0xff]
      %v283 = vld [vmem:[%s165 + $0x29c] sm:$0xf]
      %v284 = vld [vmem:[%s165 + $0x2a0] sm:$0xff]
      %v285 = vld [vmem:[%s165 + $0x2a8] sm:$0xf]
      %v286 = vld [vmem:[%s165 + $0x2ac] sm:$0xff]
      %v287 = vld [vmem:[%s165 + $0x2b4] sm:$0xf]
      %v288 = vld [vmem:[%s165 + $0x2b8] sm:$0xff]
      %v289 = vld [vmem:[%s165 + $0x2c0] sm:$0xf]
      %v290 = vld [vmem:[%s165 + $0x2c4] sm:$0xff]
      %v291 = vld [vmem:[%s165 + $0x2cc] sm:$0xf]
      %v292 = vld [vmem:[%s165 + $0x2d0] sm:$0xff]
      %v293 = vld [vmem:[%s165 + $0x2d8] sm:$0xf]
      %v294 = vld [vmem:[%s165 + $0x2dc] sm:$0xff]
      %v295 = vld [vmem:[%s165 + $0x2e4] sm:$0xf]
      %v296 = vld [vmem:[%s165 + $0x2e8] sm:$0xff]
      %v297 = vld [vmem:[%s165 + $0x2f0] sm:$0xf]
      %v298 = vld [vmem:[%s165 + $0x2f4] sm:$0xff]
      %v299 = vld [vmem:[%s165 + $0x2fc] sm:$0xf]
      %v300 = vld [vmem:[%s165 + $0x300] sm:$0xff]
      %v301 = vld [vmem:[%s165 + $0x308] sm:$0xf]
      %v302 = vld [vmem:[%s165 + $0x30c] sm:$0xff]
      %v303 = vld [vmem:[%s165 + $0x314] sm:$0xf]
      %v304 = vld [vmem:[%s165 + $0x318] sm:$0xff]
      %v305 = vld [vmem:[%s165 + $0x320] sm:$0xf]
      %v306 = vld [vmem:[%s165 + $0x324] sm:$0xff]
      %v307 = vld [vmem:[%s165 + $0x32c] sm:$0xf]
      %v308 = vld [vmem:[%s165 + $0x330] sm:$0xff]
      %v309 = vld [vmem:[%s165 + $0x338] sm:$0xf]
      %v310 = vld [vmem:[%s165 + $0x33c] sm:$0xff]
      %v311 = vld [vmem:[%s165 + $0x344] sm:$0xf]
      %v312 = vld [vmem:[%s165 + $0x348] sm:$0xff]
      %v313 = vld [vmem:[%s165 + $0x350] sm:$0xf]
      %v314 = vld [vmem:[%s165 + $0x354] sm:$0xff]
      %v315 = vld [vmem:[%s165 + $0x35c] sm:$0xf]
      %v316 = vld [vmem:[%s165 + $0x360] sm:$0xff]
      %v317 = vld [vmem:[%s165 + $0x368] sm:$0xf]
      %v318 = vld [vmem:[%s165 + $0x36c] sm:$0x11]
      %v319 = vld [vmem:[%s165 + $0x374] sm:$0x1]
      %v320 = vld [vmem:[%s1] sm:$0xf]
      %v321 = vld [vmem:[%s1 + $0x4] sm:$0xf]
      %v322 = vld [vmem:[%s1 + $0x8] sm:$0xf]
      %v323 = vld [vmem:[%s1 + $0xc] sm:$0xf]
      %v324 = vld [vmem:[%s1 + $0x10] sm:$0xf]
      %v325 = vld [vmem:[%s1 + $0x14] sm:$0xf]
      %v326 = vld [vmem:[%s1 + $0x18] sm:$0xf]
      %v327 = vld [vmem:[%s1 + $0x1c] sm:$0xf]
      %v328 = vld [vmem:[%s1 + $0x20] sm:$0xf]
      %v329 = vld [vmem:[%s1 + $0x24] sm:$0xf]
      %v330 = vld [vmem:[%s1 + $0x28] sm:$0xf]
      %v331 = vld [vmem:[%s1 + $0x2c] sm:$0xf]
      %v332 = vld [vmem:[%s1 + $0x30] sm:$0xf]
      %v333 = vld [vmem:[%s1 + $0x34] sm:$0xf]
      %v334 = vld [vmem:[%s1 + $0x38] sm:$0xf]
      %v335 = vld [vmem:[%s1 + $0x3c] sm:$0xf]
      %v336 = vld [vmem:[%s1 + $0x40] sm:$0xf]
      %v337 = vld [vmem:[%s1 + $0x44] sm:$0xf]
      %v338 = vld [vmem:[%s1 + $0x48] sm:$0xf]
      %v339 = vld [vmem:[%s1 + $0x4c] sm:$0xf]
      %v340 = vld [vmem:[%s1 + $0x50] sm:$0xf]
      %v341 = vld [vmem:[%s1 + $0x54] sm:$0xf]
      %v342 = vld [vmem:[%s1 + $0x58] sm:$0xf]
      %v343 = vld [vmem:[%s1 + $0x5c] sm:$0xf]
      %v344 = vld [vmem:[%s1 + $0x60] sm:$0xf]
      %v345 = vld [vmem:[%s1 + $0x64] sm:$0xf]
      %v346 = vld [vmem:[%s1 + $0x68] sm:$0xf]
      %v347 = vld [vmem:[%s1 + $0x6c] sm:$0xf]
      %v348 = vld [vmem:[%s1 + $0x70] sm:$0xf]
      %v349 = vld [vmem:[%s1 + $0x74] sm:$0xf]
      %v350 = vld [vmem:[%s1 + $0x78] sm:$0xf]
      %v351 = vld [vmem:[%s1 + $0x7c] sm:$0xf]
      %v352 = vld [vmem:[%s1 + $0x80] sm:$0xf]
      %v353 = vld [vmem:[%s1 + $0x84] sm:$0xf]
      %v354 = vld [vmem:[%s1 + $0x88] sm:$0xf]
      %v355 = vld [vmem:[%s1 + $0x8c] sm:$0xf]
      %v356 = vld [vmem:[%s1 + $0x90] sm:$0xf]
      %v357 = vld [vmem:[%s1 + $0x94] sm:$0xf]
      %v358 = vld [vmem:[%s1 + $0x98] sm:$0xf]
      %v359 = vld [vmem:[%s1 + $0x9c] sm:$0xf]
      %v360 = vld [vmem:[%s1 + $0xa0] sm:$0xf]
      %v361 = vld [vmem:[%s1 + $0xa4] sm:$0xf]
      %v362 = vld [vmem:[%s1 + $0xa8] sm:$0xf]
      %v363 = vld [vmem:[%s1 + $0xac] sm:$0xf]
      %v364 = vld [vmem:[%s1 + $0xb0] sm:$0xf]
      %v365 = vld [vmem:[%s1 + $0xb4] sm:$0xf]
      %v366 = vld [vmem:[%s1 + $0xb8] sm:$0xf]
      %v367 = vld [vmem:[%s1 + $0xbc] sm:$0xf]
      %v368 = vld [vmem:[%s2] sm:$0x1]
      %v370 = vlaneseq
      %v371 = vshrl.u32 %v370, 7
      %v372 = vsub.s32 0, %v371
      %v373 = vrot.slane %v368, %v372
      %v523 = vunpack.c.l.b16 %v172
      %v524 = vunpack.c.h.b16 %v172
      %v525 = vunpack.c.l.b16 %v173
      %v526 = vunpack.c.l.b16 %v174
      %v527 = vunpack.c.h.b16 %v174
      %v528 = vunpack.c.l.b16 %v175
      %v529 = vunpack.c.l.b16 %v176
      %v530 = vunpack.c.h.b16 %v176
      %v531 = vunpack.c.l.b16 %v177
      %v532 = vunpack.c.l.b16 %v178
      %v533 = vunpack.c.h.b16 %v178
      %v534 = vunpack.c.l.b16 %v179
      %v535 = vunpack.c.l.b16 %v180
      %v536 = vunpack.c.h.b16 %v180
      %v537 = vunpack.c.l.b16 %v181
      %v538 = vunpack.c.l.b16 %v182
      %v539 = vunpack.c.h.b16 %v182
      %v540 = vunpack.c.l.b16 %v183
      %v541 = vunpack.c.l.b16 %v184
      %v542 = vunpack.c.h.b16 %v184
      %v543 = vunpack.c.l.b16 %v185
      %v544 = vunpack.c.l.b16 %v186
      %v545 = vunpack.c.h.b16 %v186
      %v546 = vunpack.c.l.b16 %v187
      %v547 = vunpack.c.l.b16 %v188
      %v548 = vunpack.c.h.b16 %v188
      %v549 = vunpack.c.l.b16 %v189
      %v550 = vunpack.c.l.b16 %v190
      %v551 = vunpack.c.h.b16 %v190
      %v552 = vunpack.c.l.b16 %v191
      %v553 = vunpack.c.l.b16 %v192
      %v554 = vunpack.c.h.b16 %v192
      %v555 = vunpack.c.l.b16 %v193
      %v556 = vunpack.c.l.b16 %v194
      %v557 = vunpack.c.h.b16 %v194
      %v558 = vunpack.c.l.b16 %v195
      %v559 = vunpack.c.l.b16 %v196
      %v560 = vunpack.c.h.b16 %v196
      %v561 = vunpack.c.l.b16 %v197
      %v562 = vunpack.c.l.b16 %v198
      %v563 = vunpack.c.h.b16 %v198
      %v564 = vunpack.c.l.b16 %v199
      %v565 = vunpack.c.l.b16 %v200
      %v566 = vunpack.c.h.b16 %v200
      %v567 = vunpack.c.l.b16 %v201
      %v568 = vunpack.c.l.b16 %v202
      %v569 = vunpack.c.h.b16 %v202
      %v570 = vunpack.c.l.b16 %v203
      %v571 = vunpack.c.l.b16 %v204
      %v572 = vunpack.c.h.b16 %v204
      %v573 = vunpack.c.l.b16 %v205
      %v574 = vunpack.c.l.b16 %v206
      %v575 = vunpack.c.h.b16 %v206
      %v576 = vunpack.c.l.b16 %v207
      %v577 = vunpack.c.l.b16 %v208
      %v578 = vunpack.c.h.b16 %v208
      %v579 = vunpack.c.l.b16 %v209
      %v580 = vunpack.c.l.b16 %v210
      %v581 = vunpack.c.h.b16 %v210
      %v582 = vunpack.c.l.b16 %v211
      %v583 = vunpack.c.l.b16 %v212
      %v584 = vunpack.c.h.b16 %v212
      %v585 = vunpack.c.l.b16 %v213
      %v586 = vunpack.c.l.b16 %v214
      %v587 = vunpack.c.h.b16 %v214
      %v588 = vunpack.c.l.b16 %v215
      %v589 = vunpack.c.l.b16 %v216
      %v590 = vunpack.c.h.b16 %v216
      %v591 = vunpack.c.l.b16 %v217
      %v592 = vunpack.c.l.b16 %v218
      %v593 = vunpack.c.h.b16 %v218
      %v594 = vunpack.c.l.b16 %v219
      %v595 = vunpack.c.l.b16 %v220
      %v596 = vunpack.c.h.b16 %v220
      %v597 = vunpack.c.l.b16 %v221
      %v598 = vunpack.c.l.b16 %v222
      %v599 = vunpack.c.h.b16 %v222
      %v600 = vunpack.c.l.b16 %v223
      %v601 = vunpack.c.l.b16 %v224
      %v602 = vunpack.c.h.b16 %v224
      %v603 = vunpack.c.l.b16 %v225
      %v604 = vunpack.c.l.b16 %v226
      %v605 = vunpack.c.h.b16 %v226
      %v606 = vunpack.c.l.b16 %v227
      %v607 = vunpack.c.l.b16 %v228
      %v608 = vunpack.c.h.b16 %v228
      %v609 = vunpack.c.l.b16 %v229
      %v610 = vunpack.c.l.b16 %v230
      %v611 = vunpack.c.h.b16 %v230
      %v612 = vunpack.c.l.b16 %v231
      %v613 = vunpack.c.l.b16 %v232
      %v614 = vunpack.c.h.b16 %v232
      %v615 = vunpack.c.l.b16 %v233
      %v616 = vunpack.c.l.b16 %v234
      %v617 = vunpack.c.h.b16 %v234
      %v618 = vunpack.c.l.b16 %v235
      %v619 = vunpack.c.l.b16 %v236
      %v620 = vunpack.c.h.b16 %v236
      %v621 = vunpack.c.l.b16 %v237
      %v622 = vunpack.c.l.b16 %v238
      %v623 = vunpack.c.h.b16 %v238
      %v624 = vunpack.c.l.b16 %v239
      %v625 = vunpack.c.l.b16 %v240
      %v626 = vunpack.c.h.b16 %v240
      %v627 = vunpack.c.l.b16 %v241
      %v628 = vunpack.c.l.b16 %v242
      %v629 = vunpack.c.h.b16 %v242
      %v630 = vunpack.c.l.b16 %v243
      %v631 = vunpack.c.l.b16 %v244
      %v632 = vunpack.c.h.b16 %v244
      %v633 = vunpack.c.l.b16 %v245
      %v634 = vunpack.c.l.b16 %v246
      %v635 = vunpack.c.h.b16 %v246
      %v636 = vunpack.c.l.b16 %v247
      %v637 = vunpack.c.l.b16 %v248
      %v638 = vunpack.c.h.b16 %v248
      %v639 = vunpack.c.l.b16 %v249
      %v640 = vunpack.c.l.b16 %v250
      %v641 = vunpack.c.h.b16 %v250
      %v642 = vunpack.c.l.b16 %v251
      %v643 = vunpack.c.l.b16 %v252
      %v644 = vunpack.c.h.b16 %v252
      %v645 = vunpack.c.l.b16 %v253
      %v646 = vunpack.c.l.b16 %v254
      %v647 = vunpack.c.h.b16 %v254
      %v648 = vunpack.c.l.b16 %v255
      %v649 = vunpack.c.l.b16 %v256
      %v650 = vunpack.c.h.b16 %v256
      %v651 = vunpack.c.l.b16 %v257
      %v652 = vunpack.c.l.b16 %v258
      %v653 = vunpack.c.h.b16 %v258
      %v654 = vunpack.c.l.b16 %v259
      %v655 = vunpack.c.l.b16 %v260
      %v656 = vunpack.c.h.b16 %v260
      %v657 = vunpack.c.l.b16 %v261
      %v658 = vunpack.c.l.b16 %v262
      %v659 = vunpack.c.h.b16 %v262
      %v660 = vunpack.c.l.b16 %v263
      %v661 = vunpack.c.l.b16 %v264
      %v662 = vunpack.c.h.b16 %v264
      %v663 = vunpack.c.l.b16 %v265
      %v664 = vunpack.c.l.b16 %v266
      %v665 = vunpack.c.h.b16 %v266
      %v666 = vunpack.c.l.b16 %v267
      %v667 = vunpack.c.l.b16 %v268
      %v668 = vunpack.c.h.b16 %v268
      %v669 = vunpack.c.l.b16 %v269
      %v670 = vunpack.c.l.b16 %v270
      %v671 = vunpack.c.h.b16 %v270
      %v672 = vunpack.c.l.b16 %v271
      %v673 = vunpack.c.l.b16 %v272
      %v674 = vunpack.c.h.b16 %v272
      %v675 = vunpack.c.l.b16 %v273
      %v676 = vunpack.c.l.b16 %v274
      %v677 = vunpack.c.h.b16 %v274
      %v678 = vunpack.c.l.b16 %v275
      %v679 = vunpack.c.l.b16 %v276
      %v680 = vunpack.c.h.b16 %v276
      %v681 = vunpack.c.l.b16 %v277
      %v682 = vunpack.c.l.b16 %v278
      %v683 = vunpack.c.h.b16 %v278
      %v684 = vunpack.c.l.b16 %v279
      %v685 = vunpack.c.l.b16 %v280
      %v686 = vunpack.c.h.b16 %v280
      %v687 = vunpack.c.l.b16 %v281
      %v688 = vunpack.c.l.b16 %v282
      %v689 = vunpack.c.h.b16 %v282
      %v690 = vunpack.c.l.b16 %v283
      %v691 = vunpack.c.l.b16 %v284
      %v692 = vunpack.c.h.b16 %v284
      %v693 = vunpack.c.l.b16 %v285
      %v694 = vunpack.c.l.b16 %v286
      %v695 = vunpack.c.h.b16 %v286
      %v696 = vunpack.c.l.b16 %v287
      %v697 = vunpack.c.l.b16 %v288
      %v698 = vunpack.c.h.b16 %v288
      %v699 = vunpack.c.l.b16 %v289
      %v700 = vunpack.c.l.b16 %v290
      %v701 = vunpack.c.h.b16 %v290
      %v702 = vunpack.c.l.b16 %v291
      %v703 = vunpack.c.l.b16 %v292
      %v704 = vunpack.c.h.b16 %v292
      %v705 = vunpack.c.l.b16 %v293
      %v706 = vunpack.c.l.b16 %v294
      %v707 = vunpack.c.h.b16 %v294
      %v708 = vunpack.c.l.b16 %v295
      %v709 = vunpack.c.l.b16 %v296
      %v710 = vunpack.c.h.b16 %v296
      %v711 = vunpack.c.l.b16 %v297
      %v712 = vunpack.c.l.b16 %v298
      %v713 = vunpack.c.h.b16 %v298
      %v714 = vunpack.c.l.b16 %v299
      %v715 = vunpack.c.l.b16 %v300
      %v716 = vunpack.c.h.b16 %v300
      %v717 = vunpack.c.l.b16 %v301
      %v718 = vunpack.c.l.b16 %v302
      %v719 = vunpack.c.h.b16 %v302
      %v720 = vunpack.c.l.b16 %v303
      %v721 = vunpack.c.l.b16 %v304
      %v722 = vunpack.c.h.b16 %v304
      %v723 = vunpack.c.l.b16 %v305
      %v724 = vunpack.c.l.b16 %v306
      %v725 = vunpack.c.h.b16 %v306
      %v726 = vunpack.c.l.b16 %v307
      %v727 = vunpack.c.l.b16 %v308
      %v728 = vunpack.c.h.b16 %v308
      %v729 = vunpack.c.l.b16 %v309
      %v730 = vunpack.c.l.b16 %v310
      %v731 = vunpack.c.h.b16 %v310
      %v732 = vunpack.c.l.b16 %v311
      %v733 = vunpack.c.l.b16 %v312
      %v734 = vunpack.c.h.b16 %v312
      %v735 = vunpack.c.l.b16 %v313
      %v736 = vunpack.c.l.b16 %v314
      %v737 = vunpack.c.h.b16 %v314
      %v738 = vunpack.c.l.b16 %v315
      %v739 = vunpack.c.l.b16 %v316
      %v740 = vunpack.c.h.b16 %v316
      %v741 = vunpack.c.l.b16 %v317
      %v742 = vunpack.c.l.b16 %v318
      %v743 = vunpack.c.h.b16 %v318
      %v744 = vunpack.c.l.b16 %v319
      %v745 = vpack.c.b16 %v526, %v523
      %v746 = vpack.c.b16 %v527, %v524
      %v747 = vpack.c.b16 %v528, %v525
      %v748 = vpack.c.b16 %v532, %v529
      %v749 = vpack.c.b16 %v533, %v530
      %v750 = vpack.c.b16 %v534, %v531
      %v751 = vpack.c.b16 %v538, %v535
      %v752 = vpack.c.b16 %v539, %v536
      %v753 = vpack.c.b16 %v540, %v537
      %v754 = vpack.c.b16 %v544, %v541
      %v755 = vpack.c.b16 %v545, %v542
      %v756 = vpack.c.b16 %v546, %v543
      %v757 = vpack.c.b16 %v550, %v547
      %v758 = vpack.c.b16 %v551, %v548
      %v759 = vpack.c.b16 %v552, %v549
      %v760 = vpack.c.b16 %v556, %v553
      %v761 = vpack.c.b16 %v557, %v554
      %v762 = vpack.c.b16 %v558, %v555
      %v763 = vpack.c.b16 %v562, %v559
      %v764 = vpack.c.b16 %v563, %v560
      %v765 = vpack.c.b16 %v564, %v561
      %v766 = vpack.c.b16 %v568, %v565
      %v767 = vpack.c.b16 %v569, %v566
      %v768 = vpack.c.b16 %v570, %v567
      %v769 = vpack.c.b16 %v574, %v571
      %v770 = vpack.c.b16 %v575, %v572
      %v771 = vpack.c.b16 %v576, %v573
      %v772 = vpack.c.b16 %v580, %v577
      %v773 = vpack.c.b16 %v581, %v578
      %v774 = vpack.c.b16 %v582, %v579
      %v775 = vpack.c.b16 %v586, %v583
      %v776 = vpack.c.b16 %v587, %v584
      %v777 = vpack.c.b16 %v588, %v585
      %v778 = vpack.c.b16 %v592, %v589
      %v779 = vpack.c.b16 %v593, %v590
      %v780 = vpack.c.b16 %v594, %v591
      %v781 = vpack.c.b16 %v598, %v595
      %v782 = vpack.c.b16 %v599, %v596
      %v783 = vpack.c.b16 %v600, %v597
      %v784 = vpack.c.b16 %v604, %v601
      %v785 = vpack.c.b16 %v605, %v602
      %v786 = vpack.c.b16 %v606, %v603
      %v787 = vpack.c.b16 %v610, %v607
      %v788 = vpack.c.b16 %v611, %v608
      %v789 = vpack.c.b16 %v612, %v609
      %v790 = vpack.c.b16 %v616, %v613
      %v791 = vpack.c.b16 %v617, %v614
      %v792 = vpack.c.b16 %v618, %v615
      %v793 = vpack.c.b16 %v622, %v619
      %v794 = vpack.c.b16 %v623, %v620
      %v795 = vpack.c.b16 %v624, %v621
      %v796 = vpack.c.b16 %v628, %v625
      %v797 = vpack.c.b16 %v629, %v626
      %v798 = vpack.c.b16 %v630, %v627
      %v799 = vpack.c.b16 %v634, %v631
      %v800 = vpack.c.b16 %v635, %v632
      %v801 = vpack.c.b16 %v636, %v633
      %v802 = vpack.c.b16 %v640, %v637
      %v803 = vpack.c.b16 %v641, %v638
      %v804 = vpack.c.b16 %v642, %v639
      %v805 = vpack.c.b16 %v646, %v643
      %v806 = vpack.c.b16 %v647, %v644
      %v807 = vpack.c.b16 %v648, %v645
      %v808 = vpack.c.b16 %v652, %v649
      %v809 = vpack.c.b16 %v653, %v650
      %v810 = vpack.c.b16 %v654, %v651
      %v811 = vpack.c.b16 %v658, %v655
      %v812 = vpack.c.b16 %v659, %v656
      %v813 = vpack.c.b16 %v660, %v657
      %v814 = vpack.c.b16 %v664, %v661
      %v815 = vpack.c.b16 %v665, %v662
      %v816 = vpack.c.b16 %v666, %v663
      %v817 = vpack.c.b16 %v670, %v667
      %v818 = vpack.c.b16 %v671, %v668
      %v819 = vpack.c.b16 %v672, %v669
      %v820 = vpack.c.b16 %v676, %v673
      %v821 = vpack.c.b16 %v677, %v674
      %v822 = vpack.c.b16 %v678, %v675
      %v823 = vpack.c.b16 %v682, %v679
      %v824 = vpack.c.b16 %v683, %v680
      %v825 = vpack.c.b16 %v684, %v681
      %v826 = vpack.c.b16 %v688, %v685
      %v827 = vpack.c.b16 %v689, %v686
      %v828 = vpack.c.b16 %v690, %v687
      %v829 = vpack.c.b16 %v694, %v691
      %v830 = vpack.c.b16 %v695, %v692
      %v831 = vpack.c.b16 %v696, %v693
      %v832 = vpack.c.b16 %v700, %v697
      %v833 = vpack.c.b16 %v701, %v698
      %v834 = vpack.c.b16 %v702, %v699
      %v835 = vpack.c.b16 %v706, %v703
      %v836 = vpack.c.b16 %v707, %v704
      %v837 = vpack.c.b16 %v708, %v705
      %v838 = vpack.c.b16 %v712, %v709
      %v839 = vpack.c.b16 %v713, %v710
      %v840 = vpack.c.b16 %v714, %v711
      %v841 = vpack.c.b16 %v718, %v715
      %v842 = vpack.c.b16 %v719, %v716
      %v843 = vpack.c.b16 %v720, %v717
      %v844 = vpack.c.b16 %v724, %v721
      %v845 = vpack.c.b16 %v725, %v722
      %v846 = vpack.c.b16 %v726, %v723
      %v847 = vpack.c.b16 %v730, %v727
      %v848 = vpack.c.b16 %v731, %v728
      %v849 = vpack.c.b16 %v732, %v729
      %v850 = vpack.c.b16 %v736, %v733
      %v851 = vpack.c.b16 %v737, %v734
      %v852 = vpack.c.b16 %v738, %v735
      %v853 = vpack.c.b16 %v742, %v739
      %v854 = vpack.c.b16 %v743, %v740
      %v855 = vpack.c.b16 %v744, %v741
      %v1015 = vunpack.c.l.b16 %v320
      %v1016 = vunpack.c.l.b16 %v321
      %v1017 = vunpack.c.l.b16 %v322
      %v1018 = vunpack.c.l.b16 %v323
      %v1019 = vunpack.c.l.b16 %v324
      %v1020 = vunpack.c.l.b16 %v325
      %v1021 = vunpack.c.l.b16 %v326
      %v1022 = vunpack.c.l.b16 %v327
      %v1023 = vunpack.c.l.b16 %v328
      %v1024 = vunpack.c.l.b16 %v329
      %v1025 = vunpack.c.l.b16 %v330
      %v1026 = vunpack.c.l.b16 %v331
      %v1027 = vunpack.c.l.b16 %v332
      %v1028 = vunpack.c.l.b16 %v333
      %v1029 = vunpack.c.l.b16 %v334
      %v1030 = vunpack.c.l.b16 %v335
      %v1031 = vunpack.c.l.b16 %v336
      %v1032 = vunpack.c.l.b16 %v337
      %v1033 = vunpack.c.l.b16 %v338
      %v1034 = vunpack.c.l.b16 %v339
      %v1035 = vunpack.c.l.b16 %v340
      %v1036 = vunpack.c.l.b16 %v341
      %v1037 = vunpack.c.l.b16 %v342
      %v1038 = vunpack.c.l.b16 %v343
      %v1039 = vunpack.c.l.b16 %v344
      %v1040 = vunpack.c.l.b16 %v345
      %v1041 = vunpack.c.l.b16 %v346
      %v1042 = vunpack.c.l.b16 %v347
      %v1043 = vunpack.c.l.b16 %v348
      %v1044 = vunpack.c.l.b16 %v349
      %v1045 = vunpack.c.l.b16 %v350
      %v1046 = vunpack.c.l.b16 %v351
      %v1047 = vunpack.c.l.b16 %v352
      %v1048 = vunpack.c.l.b16 %v353
      %v1049 = vunpack.c.l.b16 %v354
      %v1050 = vunpack.c.l.b16 %v355
      %v1051 = vunpack.c.l.b16 %v356
      %v1052 = vunpack.c.l.b16 %v357
      %v1053 = vunpack.c.l.b16 %v358
      %v1054 = vunpack.c.l.b16 %v359
      %v1055 = vunpack.c.l.b16 %v360
      %v1056 = vunpack.c.l.b16 %v361
      %v1057 = vunpack.c.l.b16 %v362
      %v1058 = vunpack.c.l.b16 %v363
      %v1059 = vunpack.c.l.b16 %v364
      %v1060 = vunpack.c.l.b16 %v365
      %v1061 = vunpack.c.l.b16 %v366
      %v1062 = vunpack.c.l.b16 %v367
      %v1063 = vpack.c.b16 %v1016, %v1015
      %v1064 = vpack.c.b16 %v1018, %v1017
      %v1065 = vpack.c.b16 %v1020, %v1019
      %v1066 = vpack.c.b16 %v1022, %v1021
      %v1067 = vpack.c.b16 %v1024, %v1023
      %v1068 = vpack.c.b16 %v1026, %v1025
      %v1069 = vpack.c.b16 %v1028, %v1027
      %v1070 = vpack.c.b16 %v1030, %v1029
      %v1071 = vpack.c.b16 %v1032, %v1031
      %v1072 = vpack.c.b16 %v1034, %v1033
      %v1073 = vpack.c.b16 %v1036, %v1035
      %v1074 = vpack.c.b16 %v1038, %v1037
      %v1075 = vpack.c.b16 %v1040, %v1039
      %v1076 = vpack.c.b16 %v1042, %v1041
      %v1077 = vpack.c.b16 %v1044, %v1043
      %v1078 = vpack.c.b16 %v1046, %v1045
      %v1079 = vpack.c.b16 %v1048, %v1047
      %v1080 = vpack.c.b16 %v1050, %v1049
      %v1081 = vpack.c.b16 %v1052, %v1051
      %v1082 = vpack.c.b16 %v1054, %v1053
      %v1083 = vpack.c.b16 %v1056, %v1055
      %v1084 = vpack.c.b16 %v1058, %v1057
      %v1085 = vpack.c.b16 %v1060, %v1059
      %v1086 = vpack.c.b16 %v1062, %v1061
      %1111 = vmatprep.subr.bf16.mxu0 0
      %1112 = vmatpush1.bf16.msra.mxu0 %v1063
      %1113 = vmatprep.subr.bf16.mxu0 0
      %1114 = vmatpush1.bf16.msra.mxu0 %v1064
      %1115 = vmatprep.subr.bf16.mxu0 0
      %1116 = vmatpush1.bf16.msra.mxu0 %v1065
      %1117 = vmatprep.subr.bf16.mxu0 0
      %1118 = vmatpush1.bf16.msra.mxu0 %v1066
      %1119 = vmatprep.subr.bf16.mxu0 0
      %1120 = vmatpush1.bf16.msra.mxu0 %v1067
      %1121 = vmatprep.subr.bf16.mxu0 0
      %1122 = vmatpush1.bf16.msra.mxu0 %v1068
      %1123 = vmatprep.subr.bf16.mxu0 0
      %1124 = vmatpush1.bf16.msra.mxu0 %v1069
      %1125 = vmatprep.subr.bf16.mxu0 0
      %1126 = vmatpush1.bf16.msra.mxu0 %v1070
      %1127 = vmatprep.subr.bf16.mxu0 0
      %1128 = vmatpush1.bf16.msra.mxu0 %v1071
      %1129 = vmatprep.subr.bf16.mxu0 0
      %1130 = vmatpush1.bf16.msra.mxu0 %v1072
      %1131 = vmatprep.subr.bf16.mxu0 0
      %1132 = vmatpush1.bf16.msra.mxu0 %v1073
      %1133 = vmatprep.subr.bf16.mxu0 0
      %1134 = vmatpush1.bf16.msra.mxu0 %v1074
      %1135 = vmatprep.subr.bf16.mxu0 0
      %1136 = vmatpush1.bf16.msra.mxu0 %v1075
      %1137 = vmatprep.subr.bf16.mxu0 0
      %1138 = vmatpush1.bf16.msra.mxu0 %v1076
      %1139 = vmatprep.subr.bf16.mxu0 0
      %1140 = vmatpush1.bf16.msra.mxu0 %v1077
      %1141 = vmatprep.subr.bf16.mxu0 0
      %1142 = vmatpush1.bf16.msra.mxu0 %v1078
      %1143 = vmatprep.mubr.bf16.mxu0 %v746
      %1144 = vmatmul.mubr.bf16.gmra.mrb[0].mxu0 %v745
      %v1145 = vpop.f32.mrb[0].mxu0
      %v1146 = vadd.f32 %v373, %v1145
      %v1147 = vpop.f32.mrb[0].mxu0
      %v1148 = vpop.f32.mrb[0].mxu0
      %v1149 = vadd.f32 %v373, %v1148
      %v1150 = vpop.f32.mrb[0].mxu0
      %1151 = vmatprep.mubr.bf16.mxu0 %v749
      %1152 = vmatmul.mubr.bf16.gmra.mrb[0].mxu0 %v748
      %v1153 = vpop.f32.mrb[0].mxu0
      %v1154 = vadd.f32 %v373, %v1153
      %v1155 = vpop.f32.mrb[0].mxu0
      %v1156 = vpop.f32.mrb[0].mxu0
      %v1157 = vadd.f32 %v373, %v1156
      %v1158 = vpop.f32.mrb[0].mxu0
      %1159 = vmatprep.mubr.bf16.mxu0 %v752
      %1160 = vmatmul.mubr.bf16.gmra.mrb[0].mxu0 %v751
      %v1161 = vpop.f32.mrb[0].mxu0
      %v1162 = vadd.f32 %v373, %v1161
      %v1163 = vpop.f32.mrb[0].mxu0
      %v1164 = vpop.f32.mrb[0].mxu0
      %v1165 = vadd.f32 %v373, %v1164
      %v1166 = vpop.f32.mrb[0].mxu0
      %1167 = vmatprep.mubr.bf16.mxu0 %v755
      %1168 = vmatmul.mubr.bf16.gmra.mrb[0].mxu0 %v754
      %v1169 = vpop.f32.mrb[0].mxu0
      %v1170 = vadd.f32 %v373, %v1169
      %v1171 = vpop.f32.mrb[0].mxu0
      %v1172 = vpop.f32.mrb[0].mxu0
      %v1173 = vadd.f32 %v373, %v1172
      %v1174 = vpop.f32.mrb[0].mxu0
      %1175 = vmatprep.mubr.bf16.mxu0 %v758
      %1176 = vmatmul.mubr.bf16.gmra.mrb[0].mxu0 %v757
      %v1177 = vpop.f32.mrb[0].mxu0
      %v1178 = vadd.f32 %v373, %v1177
      %v1179 = vpop.f32.mrb[0].mxu0
      %v1180 = vpop.f32.mrb[0].mxu0
      %v1181 = vadd.f32 %v373, %v1180
      %v1182 = vpop.f32.mrb[0].mxu0
      %1183 = vmatprep.mubr.bf16.mxu0 %v761
      %1184 = vmatmul.mubr.bf16.gmra.mrb[0].mxu0 %v760
      %v1185 = vpop.f32.mrb[0].mxu0
      %v1186 = vadd.f32 %v373, %v1185
      %v1187 = vpop.f32.mrb[0].mxu0
      %v1188 = vpop.f32.mrb[0].mxu0
      %v1189 = vadd.f32 %v373, %v1188
      %v1190 = vpop.f32.mrb[0].mxu0
      %1191 = vmatprep.mubr.bf16.mxu0 %v764
      %1192 = vmatmul.mubr.bf16.gmra.mrb[0].mxu0 %v763
      %v1193 = vpop.f32.mrb[0].mxu0
      %v1194 = vadd.f32 %v373, %v1193
      %v1195 = vpop.f32.mrb[0].mxu0
      %v1196 = vpop.f32.mrb[0].mxu0
      %v1197 = vadd.f32 %v373, %v1196
      %v1198 = vpop.f32.mrb[0].mxu0
      %1199 = vmatprep.mubr.bf16.mxu0 %v767
      %1200 = vmatmul.mubr.bf16.gmra.mrb[0].mxu0 %v766
      %v1201 = vpop.f32.mrb[0].mxu0
      %v1202 = vadd.f32 %v373, %v1201
      %v1203 = vpop.f32.mrb[0].mxu0
      %v1204 = vpop.f32.mrb[0].mxu0
      %v1205 = vadd.f32 %v373, %v1204
      %v1206 = vpop.f32.mrb[0].mxu0
      %1207 = vmatprep.mubr.bf16.mxu0 %v770
      %1208 = vmatmul.mubr.bf16.gmra.mrb[0].mxu0 %v769
      %v1209 = vpop.f32.mrb[0].mxu0
      %v1210 = vadd.f32 %v373, %v1209
      %v1211 = vpop.f32.mrb[0].mxu0
      %v1212 = vpop.f32.mrb[0].mxu0
      %v1213 = vadd.f32 %v373, %v1212
      %v1214 = vpop.f32.mrb[0].mxu0
      %1215 = vmatprep.mubr.bf16.mxu0 %v773
      %1216 = vmatmul.mubr.bf16.gmra.mrb[0].mxu0 %v772
      %v1217 = vpop.f32.mrb[0].mxu0
      %v1218 = vadd.f32 %v373, %v1217
      %v1219 = vpop.f32.mrb[0].mxu0
      %v1220 = vpop.f32.mrb[0].mxu0
      %v1221 = vadd.f32 %v373, %v1220
      %v1222 = vpop.f32.mrb[0].mxu0
      %1223 = vmatprep.mubr.bf16.mxu0 %v776
      %1224 = vmatmul.mubr.bf16.gmra.mrb[0].mxu0 %v775
      %v1225 = vpop.f32.mrb[0].mxu0
      %v1226 = vadd.f32 %v373, %v1225
      %v1227 = vpop.f32.mrb[0].mxu0
      %v1228 = vpop.f32.mrb[0].mxu0
      %v1229 = vadd.f32 %v373, %v1228
      %v1230 = vpop.f32.mrb[0].mxu0
      %1231 = vmatprep.mubr.bf16.mxu0 %v779
      %1232 = vmatmul.mubr.bf16.gmra.mrb[0].mxu0 %v778
      %v1233 = vpop.f32.mrb[0].mxu0
      %v1234 = vadd.f32 %v373, %v1233
      %v1235 = vpop.f32.mrb[0].mxu0
      %v1236 = vpop.f32.mrb[0].mxu0
      %v1237 = vadd.f32 %v373, %v1236
      %v1238 = vpop.f32.mrb[0].mxu0
      %1239 = vmatprep.mubr.bf16.mxu0 %v782
      %1240 = vmatmul.mubr.bf16.gmra.mrb[0].mxu0 %v781
      %v1241 = vpop.f32.mrb[0].mxu0
      %v1242 = vadd.f32 %v373, %v1241
      %v1243 = vpop.f32.mrb[0].mxu0
      %v1244 = vpop.f32.mrb[0].mxu0
      %v1245 = vadd.f32 %v373, %v1244
      %v1246 = vpop.f32.mrb[0].mxu0
      %1247 = vmatprep.mubr.bf16.mxu0 %v785
      %1248 = vmatmul.mubr.bf16.gmra.mrb[0].mxu0 %v784
      %v1249 = vpop.f32.mrb[0].mxu0
      %v1250 = vadd.f32 %v373, %v1249
      %v1251 = vpop.f32.mrb[0].mxu0
      %v1252 = vpop.f32.mrb[0].mxu0
      %v1253 = vadd.f32 %v373, %v1252
      %v1254 = vpop.f32.mrb[0].mxu0
      %1255 = vmatprep.mubr.bf16.mxu0 %v788
      %1256 = vmatmul.mubr.bf16.gmra.mrb[0].mxu0 %v787
      %v1257 = vpop.f32.mrb[0].mxu0
      %v1258 = vadd.f32 %v373, %v1257
      %v1259 = vpop.f32.mrb[0].mxu0
      %v1260 = vpop.f32.mrb[0].mxu0
      %v1261 = vadd.f32 %v373, %v1260
      %v1262 = vpop.f32.mrb[0].mxu0
      %1263 = vmatprep.mubr.bf16.mxu0 %v791
      %1264 = vmatmul.mubr.bf16.gmra.mrb[0].mxu0 %v790
      %v1265 = vpop.f32.mrb[0].mxu0
      %v1266 = vadd.f32 %v373, %v1265
      %v1267 = vpop.f32.mrb[0].mxu0
      %v1268 = vpop.f32.mrb[0].mxu0
      %v1269 = vadd.f32 %v373, %v1268
      %v1270 = vpop.f32.mrb[0].mxu0
      %1271 = vmatprep.mubr.bf16.mxu0 %v794
      %1272 = vmatmul.mubr.bf16.gmra.mrb[0].mxu0 %v793
      %v1273 = vpop.f32.mrb[0].mxu0
      %v1274 = vadd.f32 %v373, %v1273
      %v1275 = vpop.f32.mrb[0].mxu0
      %v1276 = vpop.f32.mrb[0].mxu0
      %v1277 = vadd.f32 %v373, %v1276
      %v1278 = vpop.f32.mrb[0].mxu0
      %1279 = vmatprep.mubr.bf16.mxu0 %v797
      %1280 = vmatmul.mubr.bf16.gmra.mrb[0].mxu0 %v796
      %v1281 = vpop.f32.mrb[0].mxu0
      %v1282 = vadd.f32 %v373, %v1281
      %v1283 = vpop.f32.mrb[0].mxu0
      %v1284 = vpop.f32.mrb[0].mxu0
      %v1285 = vadd.f32 %v373, %v1284
      %v1286 = vpop.f32.mrb[0].mxu0
      %1287 = vmatprep.mubr.bf16.mxu0 %v800
      %1288 = vmatmul.mubr.bf16.gmra.mrb[0].mxu0 %v799
      %v1289 = vpop.f32.mrb[0].mxu0
      %v1290 = vadd.f32 %v373, %v1289
      %v1291 = vpop.f32.mrb[0].mxu0
      %v1292 = vpop.f32.mrb[0].mxu0
      %v1293 = vadd.f32 %v373, %v1292
      %v1294 = vpop.f32.mrb[0].mxu0
      %1295 = vmatprep.mubr.bf16.mxu0 %v803
      %1296 = vmatmul.mubr.bf16.gmra.mrb[0].mxu0 %v802
      %v1297 = vpop.f32.mrb[0].mxu0
      %v1298 = vadd.f32 %v373, %v1297
      %v1299 = vpop.f32.mrb[0].mxu0
      %v1300 = vpop.f32.mrb[0].mxu0
      %v1301 = vadd.f32 %v373, %v1300
      %v1302 = vpop.f32.mrb[0].mxu0
      %1303 = vmatprep.mubr.bf16.mxu0 %v806
      %1304 = vmatmul.mubr.bf16.gmra.mrb[0].mxu0 %v805
      %v1305 = vpop.f32.mrb[0].mxu0
      %v1306 = vadd.f32 %v373, %v1305
      %v1307 = vpop.f32.mrb[0].mxu0
      %v1308 = vpop.f32.mrb[0].mxu0
      %v1309 = vadd.f32 %v373, %v1308
      %v1310 = vpop.f32.mrb[0].mxu0
      %1311 = vmatprep.mubr.bf16.mxu0 %v809
      %1312 = vmatmul.mubr.bf16.gmra.mrb[0].mxu0 %v808
      %v1313 = vpop.f32.mrb[0].mxu0
      %v1314 = vadd.f32 %v373, %v1313
      %v1315 = vpop.f32.mrb[0].mxu0
      %v1316 = vpop.f32.mrb[0].mxu0
      %v1317 = vadd.f32 %v373, %v1316
      %v1318 = vpop.f32.mrb[0].mxu0
      %1319 = vmatprep.mubr.bf16.mxu0 %v812
      %1320 = vmatmul.mubr.bf16.gmra.mrb[0].mxu0 %v811
      %v1321 = vpop.f32.mrb[0].mxu0
      %v1322 = vadd.f32 %v373, %v1321
      %v1323 = vpop.f32.mrb[0].mxu0
      %v1324 = vpop.f32.mrb[0].mxu0
      %v1325 = vadd.f32 %v373, %v1324
      %v1326 = vpop.f32.mrb[0].mxu0
      %1327 = vmatprep.mubr.bf16.mxu0 %v815
      %1328 = vmatmul.mubr.bf16.gmra.mrb[0].mxu0 %v814
      %v1329 = vpop.f32.mrb[0].mxu0
      %v1330 = vadd.f32 %v373, %v1329
      %v1331 = vpop.f32.mrb[0].mxu0
      %v1332 = vpop.f32.mrb[0].mxu0
      %v1333 = vadd.f32 %v373, %v1332
      %v1334 = vpop.f32.mrb[0].mxu0
      %1335 = vmatprep.mubr.bf16.mxu0 %v818
      %1336 = vmatmul.mubr.bf16.gmra.mrb[0].mxu0 %v817
      %v1337 = vpop.f32.mrb[0].mxu0
      %v1338 = vadd.f32 %v373, %v1337
      %v1339 = vpop.f32.mrb[0].mxu0
      %v1340 = vpop.f32.mrb[0].mxu0
      %v1341 = vadd.f32 %v373, %v1340
      %v1342 = vpop.f32.mrb[0].mxu0
      %1343 = vmatprep.mubr.bf16.mxu0 %v821
      %1344 = vmatmul.mubr.bf16.gmra.mrb[0].mxu0 %v820
      %v1345 = vpop.f32.mrb[0].mxu0
      %v1346 = vadd.f32 %v373, %v1345
      %v1347 = vpop.f32.mrb[0].mxu0
      %v1348 = vpop.f32.mrb[0].mxu0
      %v1349 = vadd.f32 %v373, %v1348
      %v1350 = vpop.f32.mrb[0].mxu0
      %1351 = vmatprep.mubr.bf16.mxu0 %v824
      %1352 = vmatmul.mubr.bf16.gmra.mrb[0].mxu0 %v823
      %v1353 = vpop.f32.mrb[0].mxu0
      %v1354 = vadd.f32 %v373, %v1353
      %v1355 = vpop.f32.mrb[0].mxu0
      %v1356 = vpop.f32.mrb[0].mxu0
      %v1357 = vadd.f32 %v373, %v1356
      %v1358 = vpop.f32.mrb[0].mxu0
      %1359 = vmatprep.mubr.bf16.mxu0 %v827
      %1360 = vmatmul.mubr.bf16.gmra.mrb[0].mxu0 %v826
      %v1361 = vpop.f32.mrb[0].mxu0
      %v1362 = vadd.f32 %v373, %v1361
      %v1363 = vpop.f32.mrb[0].mxu0
      %v1364 = vpop.f32.mrb[0].mxu0
      %v1365 = vadd.f32 %v373, %v1364
      %v1366 = vpop.f32.mrb[0].mxu0
      %1367 = vmatprep.mubr.bf16.mxu0 %v830
      %1368 = vmatmul.mubr.bf16.gmra.mrb[0].mxu0 %v829
      %v1369 = vpop.f32.mrb[0].mxu0
      %v1370 = vadd.f32 %v373, %v1369
      %v1371 = vpop.f32.mrb[0].mxu0
      %v1372 = vpop.f32.mrb[0].mxu0
      %v1373 = vadd.f32 %v373, %v1372
      %v1374 = vpop.f32.mrb[0].mxu0
      %1375 = vmatprep.mubr.bf16.mxu0 %v833
      %1376 = vmatmul.mubr.bf16.gmra.mrb[0].mxu0 %v832
      %v1377 = vpop.f32.mrb[0].mxu0
      %v1378 = vadd.f32 %v373, %v1377
      %v1379 = vpop.f32.mrb[0].mxu0
      %v1380 = vpop.f32.mrb[0].mxu0
      %v1381 = vadd.f32 %v373, %v1380
      %v1382 = vpop.f32.mrb[0].mxu0
      %1383 = vmatprep.mubr.bf16.mxu0 %v836
      %1384 = vmatmul.mubr.bf16.gmra.mrb[0].mxu0 %v835
      %v1385 = vpop.f32.mrb[0].mxu0
      %v1386 = vadd.f32 %v373, %v1385
      %v1387 = vpop.f32.mrb[0].mxu0
      %v1388 = vpop.f32.mrb[0].mxu0
      %v1389 = vadd.f32 %v373, %v1388
      %v1390 = vpop.f32.mrb[0].mxu0
      %1391 = vmatprep.mubr.bf16.mxu0 %v839
      %1392 = vmatmul.mubr.bf16.gmra.mrb[0].mxu0 %v838
      %v1393 = vpop.f32.mrb[0].mxu0
      %v1394 = vadd.f32 %v373, %v1393
      %v1395 = vpop.f32.mrb[0].mxu0
      %v1396 = vpop.f32.mrb[0].mxu0
      %v1397 = vadd.f32 %v373, %v1396
      %v1398 = vpop.f32.mrb[0].mxu0
      %1399 = vmatprep.mubr.bf16.mxu0 %v842
      %1400 = vmatmul.mubr.bf16.gmra.mrb[0].mxu0 %v841
      %v1401 = vpop.f32.mrb[0].mxu0
      %v1402 = vadd.f32 %v373, %v1401
      %v1403 = vpop.f32.mrb[0].mxu0
      %v1404 = vpop.f32.mrb[0].mxu0
      %v1405 = vadd.f32 %v373, %v1404
      %v1406 = vpop.f32.mrb[0].mxu0
      %1407 = vmatprep.mubr.bf16.mxu0 %v845
      %1408 = vmatmul.mubr.bf16.gmra.mrb[0].mxu0 %v844
      %v1409 = vpop.f32.mrb[0].mxu0
      %v1410 = vadd.f32 %v373, %v1409
      %v1411 = vpop.f32.mrb[0].mxu0
      %v1412 = vpop.f32.mrb[0].mxu0
      %v1413 = vadd.f32 %v373, %v1412
      %v1414 = vpop.f32.mrb[0].mxu0
      %1415 = vmatprep.mubr.bf16.mxu0 %v848
      %1416 = vmatmul.mubr.bf16.gmra.mrb[0].mxu0 %v847
      %v1417 = vpop.f32.mrb[0].mxu0
      %v1418 = vadd.f32 %v373, %v1417
      %v1419 = vpop.f32.mrb[0].mxu0
      %v1420 = vpop.f32.mrb[0].mxu0
      %v1421 = vadd.f32 %v373, %v1420
      %v1422 = vpop.f32.mrb[0].mxu0
      %1423 = vmatprep.mubr.bf16.mxu0 %v851
      %1424 = vmatmul.mubr.bf16.gmra.mrb[0].mxu0 %v850
      %v1425 = vpop.f32.mrb[0].mxu0
      %v1426 = vadd.f32 %v373, %v1425
      %v1427 = vpop.f32.mrb[0].mxu0
      %v1428 = vpop.f32.mrb[0].mxu0
      %v1429 = vadd.f32 %v373, %v1428
      %v1430 = vpop.f32.mrb[0].mxu0
      %1431 = vmatprep.mubr.bf16.mxu0 %v854
      %1432 = vmatmul.mubr.bf16.gmra.mrb[0].mxu0 %v853
      %v1433 = vpop.f32.mrb[0].mxu0
      %v1434 = vadd.f32 %v373, %v1433
      %v1435 = vpop.f32.mrb[0].mxu0
      %v1436 = vpop.f32.mrb[0].mxu0
      %v1437 = vadd.f32 %v373, %v1436
      %v1438 = vpop.f32.mrb[0].mxu0
      %1439 = vdwg.mxu0
      %1440 = vmatprep.subr.bf16.mxu0 0
      %1441 = vmatpush1.bf16.msra.mxu0 %v1079
      %1442 = vmatprep.subr.bf16.mxu0 0
      %1443 = vmatpush1.bf16.msra.mxu0 %v1080
      %1444 = vmatprep.subr.bf16.mxu0 0
      %1445 = vmatpush1.bf16.msra.mxu0 %v1081
      %1446 = vmatprep.subr.bf16.mxu0 0
      %1447 = vmatpush1.bf16.msra.mxu0 %v1082
      %1448 = vmatprep.subr.bf16.mxu0 0
      %1449 = vmatpush1.bf16.msra.mxu0 %v1083
      %1450 = vmatprep.subr.bf16.mxu0 0
      %1451 = vmatpush1.bf16.msra.mxu0 %v1084
      %1452 = vmatprep.subr.bf16.mxu0 0
      %1453 = vmatpush1.bf16.msra.mxu0 %v1085
      %1454 = vmatprep.subr.bf16.mxu0 0
      %1455 = vmatpush1.bf16.msra.mxu0 %v1086
      %1456 = vmatprep.subr.bf16.mxu0 0
      %1457 = vmatpush1.bf16.msra.mxu0 0
      %1458 = vmatprep.subr.bf16.mxu0 0
      %1459 = vmatpush1.bf16.msra.mxu0 0
      %1460 = vmatprep.subr.bf16.mxu0 0
      %1461 = vmatpush1.bf16.msra.mxu0 0
      %1462 = vmatprep.subr.bf16.mxu0 0
      %1463 = vmatpush1.bf16.msra.mxu0 0
      %1464 = vmatprep.subr.bf16.mxu0 0
      %1465 = vmatpush1.bf16.msra.mxu0 0
      %1466 = vmatprep.subr.bf16.mxu0 0
      %1467 = vmatpush1.bf16.msra.mxu0 0
      %1468 = vmatprep.subr.bf16.mxu0 0
      %1469 = vmatpush1.bf16.msra.mxu0 0
      %1470 = vmatprep.subr.bf16.mxu0 0
      %1471 = vmatpush1.bf16.msra.mxu0 0
      %1472 = vmatprep.mubr.bf16.mxu0 0
      %1473 = vmatmul.mubr.bf16.gmra.mrb[0].mxu0 %v747
      %v1474 = vpop.f32.mrb[0].mxu0
      %v1475 = vadd.f32 %v1146, %v1474
      %v1476 = vpop.f32.mrb[0].mxu0
      %v1477 = vpop.f32.mrb[0].mxu0
      %v1478 = vadd.f32 %v1149, %v1477
      %v1479 = vpop.f32.mrb[0].mxu0
      %1480 = vmatprep.mubr.bf16.mxu0 0
      %1481 = vmatmul.mubr.bf16.gmra.mrb[0].mxu0 %v750
      %v1482 = vpop.f32.mrb[0].mxu0
      %v1483 = vadd.f32 %v1154, %v1482
      %v1484 = vpop.f32.mrb[0].mxu0
      %v1485 = vpop.f32.mrb[0].mxu0
      %v1486 = vadd.f32 %v1157, %v1485
      %v1487 = vpop.f32.mrb[0].mxu0
      %1488 = vmatprep.mubr.bf16.mxu0 0
      %1489 = vmatmul.mubr.bf16.gmra.mrb[0].mxu0 %v753
      %v1490 = vpop.f32.mrb[0].mxu0
      %v1491 = vadd.f32 %v1162, %v1490
      %v1492 = vpop.f32.mrb[0].mxu0
      %v1493 = vpop.f32.mrb[0].mxu0
      %v1494 = vadd.f32 %v1165, %v1493
      %v1495 = vpop.f32.mrb[0].mxu0
      %1496 = vmatprep.mubr.bf16.mxu0 0
      %1497 = vmatmul.mubr.bf16.gmra.mrb[0].mxu0 %v756
      %v1498 = vpop.f32.mrb[0].mxu0
      %v1499 = vadd.f32 %v1170, %v1498
      %v1500 = vpop.f32.mrb[0].mxu0
      %v1501 = vpop.f32.mrb[0].mxu0
      %v1502 = vadd.f32 %v1173, %v1501
      %v1503 = vpop.f32.mrb[0].mxu0
      %1504 = vmatprep.mubr.bf16.mxu0 0
      %1505 = vmatmul.mubr.bf16.gmra.mrb[0].mxu0 %v759
      %v1506 = vpop.f32.mrb[0].mxu0
      %v1507 = vadd.f32 %v1178, %v1506
      %v1508 = vpop.f32.mrb[0].mxu0
      %v1509 = vpop.f32.mrb[0].mxu0
      %v1510 = vadd.f32 %v1181, %v1509
      %v1511 = vpop.f32.mrb[0].mxu0
      %1512 = vmatprep.mubr.bf16.mxu0 0
      %1513 = vmatmul.mubr.bf16.gmra.mrb[0].mxu0 %v762
      %v1514 = vpop.f32.mrb[0].mxu0
      %v1515 = vadd.f32 %v1186, %v1514
      %v1516 = vpop.f32.mrb[0].mxu0
      %v1517 = vpop.f32.mrb[0].mxu0
      %v1518 = vadd.f32 %v1189, %v1517
      %v1519 = vpop.f32.mrb[0].mxu0
      %1520 = vmatprep.mubr.bf16.mxu0 0
      %1521 = vmatmul.mubr.bf16.gmra.mrb[0].mxu0 %v765
      %v1522 = vpop.f32.mrb[0].mxu0
      %v1523 = vadd.f32 %v1194, %v1522
      %v1524 = vpop.f32.mrb[0].mxu0
      %v1525 = vpop.f32.mrb[0].mxu0
      %v1526 = vadd.f32 %v1197, %v1525
      %v1527 = vpop.f32.mrb[0].mxu0
      %1528 = vmatprep.mubr.bf16.mxu0 0
      %1529 = vmatmul.mubr.bf16.gmra.mrb[0].mxu0 %v768
      %v1530 = vpop.f32.mrb[0].mxu0
      %v1531 = vadd.f32 %v1202, %v1530
      %v1532 = vpop.f32.mrb[0].mxu0
      %v1533 = vpop.f32.mrb[0].mxu0
      %v1534 = vadd.f32 %v1205, %v1533
      %v1535 = vpop.f32.mrb[0].mxu0
      %1536 = vmatprep.mubr.bf16.mxu0 0
      %1537 = vmatmul.mubr.bf16.gmra.mrb[0].mxu0 %v771
      %v1538 = vpop.f32.mrb[0].mxu0
      %v1539 = vadd.f32 %v1210, %v1538
      %v1540 = vpop.f32.mrb[0].mxu0
      %v1541 = vpop.f32.mrb[0].mxu0
      %v1542 = vadd.f32 %v1213, %v1541
      %v1543 = vpop.f32.mrb[0].mxu0
      %1544 = vmatprep.mubr.bf16.mxu0 0
      %1545 = vmatmul.mubr.bf16.gmra.mrb[0].mxu0 %v774
      %v1546 = vpop.f32.mrb[0].mxu0
      %v1547 = vadd.f32 %v1218, %v1546
      %v1548 = vpop.f32.mrb[0].mxu0
      %v1549 = vpop.f32.mrb[0].mxu0
      %v1550 = vadd.f32 %v1221, %v1549
      %v1551 = vpop.f32.mrb[0].mxu0
      %1552 = vmatprep.mubr.bf16.mxu0 0
      %1553 = vmatmul.mubr.bf16.gmra.mrb[0].mxu0 %v777
      %v1554 = vpop.f32.mrb[0].mxu0
      %v1555 = vadd.f32 %v1226, %v1554
      %v1556 = vpop.f32.mrb[0].mxu0
      %v1557 = vpop.f32.mrb[0].mxu0
      %v1558 = vadd.f32 %v1229, %v1557
      %v1559 = vpop.f32.mrb[0].mxu0
      %1560 = vmatprep.mubr.bf16.mxu0 0
      %1561 = vmatmul.mubr.bf16.gmra.mrb[0].mxu0 %v780
      %v1562 = vpop.f32.mrb[0].mxu0
      %v1563 = vadd.f32 %v1234, %v1562
      %v1564 = vpop.f32.mrb[0].mxu0
      %v1565 = vpop.f32.mrb[0].mxu0
      %v1566 = vadd.f32 %v1237, %v1565
      %v1567 = vpop.f32.mrb[0].mxu0
      %1568 = vmatprep.mubr.bf16.mxu0 0
      %1569 = vmatmul.mubr.bf16.gmra.mrb[0].mxu0 %v783
      %v1570 = vpop.f32.mrb[0].mxu0
      %v1571 = vadd.f32 %v1242, %v1570
      %v1572 = vpop.f32.mrb[0].mxu0
      %v1573 = vpop.f32.mrb[0].mxu0
      %v1574 = vadd.f32 %v1245, %v1573
      %v1575 = vpop.f32.mrb[0].mxu0
      %1576 = vmatprep.mubr.bf16.mxu0 0
      %1577 = vmatmul.mubr.bf16.gmra.mrb[0].mxu0 %v786
      %v1578 = vpop.f32.mrb[0].mxu0
      %v1579 = vadd.f32 %v1250, %v1578
      %v1580 = vpop.f32.mrb[0].mxu0
      %v1581 = vpop.f32.mrb[0].mxu0
      %v1582 = vadd.f32 %v1253, %v1581
      %v1583 = vpop.f32.mrb[0].mxu0
      %1584 = vmatprep.mubr.bf16.mxu0 0
      %1585 = vmatmul.mubr.bf16.gmra.mrb[0].mxu0 %v789
      %v1586 = vpop.f32.mrb[0].mxu0
      %v1587 = vadd.f32 %v1258, %v1586
      %v1588 = vpop.f32.mrb[0].mxu0
      %v1589 = vpop.f32.mrb[0].mxu0
      %v1590 = vadd.f32 %v1261, %v1589
      %v1591 = vpop.f32.mrb[0].mxu0
      %1592 = vmatprep.mubr.bf16.mxu0 0
      %1593 = vmatmul.mubr.bf16.gmra.mrb[0].mxu0 %v792
      %v1594 = vpop.f32.mrb[0].mxu0
      %v1595 = vadd.f32 %v1266, %v1594
      %v1596 = vpop.f32.mrb[0].mxu0
      %v1597 = vpop.f32.mrb[0].mxu0
      %v1598 = vadd.f32 %v1269, %v1597
      %v1599 = vpop.f32.mrb[0].mxu0
      %1600 = vmatprep.mubr.bf16.mxu0 0
      %1601 = vmatmul.mubr.bf16.gmra.mrb[0].mxu0 %v795
      %v1602 = vpop.f32.mrb[0].mxu0
      %v1603 = vadd.f32 %v1274, %v1602
      %v1604 = vpop.f32.mrb[0].mxu0
      %v1605 = vpop.f32.mrb[0].mxu0
      %v1606 = vadd.f32 %v1277, %v1605
      %v1607 = vpop.f32.mrb[0].mxu0
      %1608 = vmatprep.mubr.bf16.mxu0 0
      %1609 = vmatmul.mubr.bf16.gmra.mrb[0].mxu0 %v798
      %v1610 = vpop.f32.mrb[0].mxu0
      %v1611 = vadd.f32 %v1282, %v1610
      %v1612 = vpop.f32.mrb[0].mxu0
      %v1613 = vpop.f32.mrb[0].mxu0
      %v1614 = vadd.f32 %v1285, %v1613
      %v1615 = vpop.f32.mrb[0].mxu0
      %1616 = vmatprep.mubr.bf16.mxu0 0
      %1617 = vmatmul.mubr.bf16.gmra.mrb[0].mxu0 %v801
      %v1618 = vpop.f32.mrb[0].mxu0
      %v1619 = vadd.f32 %v1290, %v1618
      %v1620 = vpop.f32.mrb[0].mxu0
      %v1621 = vpop.f32.mrb[0].mxu0
      %v1622 = vadd.f32 %v1293, %v1621
      %v1623 = vpop.f32.mrb[0].mxu0
      %1624 = vmatprep.mubr.bf16.mxu0 0
      %1625 = vmatmul.mubr.bf16.gmra.mrb[0].mxu0 %v804
      %v1626 = vpop.f32.mrb[0].mxu0
      %v1627 = vadd.f32 %v1298, %v1626
      %v1628 = vpop.f32.mrb[0].mxu0
      %v1629 = vpop.f32.mrb[0].mxu0
      %v1630 = vadd.f32 %v1301, %v1629
      %v1631 = vpop.f32.mrb[0].mxu0
      %1632 = vmatprep.mubr.bf16.mxu0 0
      %1633 = vmatmul.mubr.bf16.gmra.mrb[0].mxu0 %v807
      %v1634 = vpop.f32.mrb[0].mxu0
      %v1635 = vadd.f32 %v1306, %v1634
      %v1636 = vpop.f32.mrb[0].mxu0
      %v1637 = vpop.f32.mrb[0].mxu0
      %v1638 = vadd.f32 %v1309, %v1637
      %v1639 = vpop.f32.mrb[0].mxu0
      %1640 = vmatprep.mubr.bf16.mxu0 0
      %1641 = vmatmul.mubr.bf16.gmra.mrb[0].mxu0 %v810
      %v1642 = vpop.f32.mrb[0].mxu0
      %v1643 = vadd.f32 %v1314, %v1642
      %v1644 = vpop.f32.mrb[0].mxu0
      %v1645 = vpop.f32.mrb[0].mxu0
      %v1646 = vadd.f32 %v1317, %v1645
      %v1647 = vpop.f32.mrb[0].mxu0
      %1648 = vmatprep.mubr.bf16.mxu0 0
      %1649 = vmatmul.mubr.bf16.gmra.mrb[0].mxu0 %v813
      %v1650 = vpop.f32.mrb[0].mxu0
      %v1651 = vadd.f32 %v1322, %v1650
      %v1652 = vpop.f32.mrb[0].mxu0
      %v1653 = vpop.f32.mrb[0].mxu0
      %v1654 = vadd.f32 %v1325, %v1653
      %v1655 = vpop.f32.mrb[0].mxu0
      %1656 = vmatprep.mubr.bf16.mxu0 0
      %1657 = vmatmul.mubr.bf16.gmra.mrb[0].mxu0 %v816
      %v1658 = vpop.f32.mrb[0].mxu0
      %v1659 = vadd.f32 %v1330, %v1658
      %v1660 = vpop.f32.mrb[0].mxu0
      %v1661 = vpop.f32.mrb[0].mxu0
      %v1662 = vadd.f32 %v1333, %v1661
      %v1663 = vpop.f32.mrb[0].mxu0
      %1664 = vmatprep.mubr.bf16.mxu0 0
      %1665 = vmatmul.mubr.bf16.gmra.mrb[0].mxu0 %v819
      %v1666 = vpop.f32.mrb[0].mxu0
      %v1667 = vadd.f32 %v1338, %v1666
      %v1668 = vpop.f32.mrb[0].mxu0
      %v1669 = vpop.f32.mrb[0].mxu0
      %v1670 = vadd.f32 %v1341, %v1669
      %v1671 = vpop.f32.mrb[0].mxu0
      %1672 = vmatprep.mubr.bf16.mxu0 0
      %1673 = vmatmul.mubr.bf16.gmra.mrb[0].mxu0 %v822
      %v1674 = vpop.f32.mrb[0].mxu0
      %v1675 = vadd.f32 %v1346, %v1674
      %v1676 = vpop.f32.mrb[0].mxu0
      %v1677 = vpop.f32.mrb[0].mxu0
      %v1678 = vadd.f32 %v1349, %v1677
      %v1679 = vpop.f32.mrb[0].mxu0
      %1680 = vmatprep.mubr.bf16.mxu0 0
      %1681 = vmatmul.mubr.bf16.gmra.mrb[0].mxu0 %v825
      %v1682 = vpop.f32.mrb[0].mxu0
      %v1683 = vadd.f32 %v1354, %v1682
      %v1684 = vpop.f32.mrb[0].mxu0
      %v1685 = vpop.f32.mrb[0].mxu0
      %v1686 = vadd.f32 %v1357, %v1685
      %v1687 = vpop.f32.mrb[0].mxu0
      %1688 = vmatprep.mubr.bf16.mxu0 0
      %1689 = vmatmul.mubr.bf16.gmra.mrb[0].mxu0 %v828
      %v1690 = vpop.f32.mrb[0].mxu0
      %v1691 = vadd.f32 %v1362, %v1690
      %v1692 = vpop.f32.mrb[0].mxu0
      %v1693 = vpop.f32.mrb[0].mxu0
      %v1694 = vadd.f32 %v1365, %v1693
      %v1695 = vpop.f32.mrb[0].mxu0
      %1696 = vmatprep.mubr.bf16.mxu0 0
      %1697 = vmatmul.mubr.bf16.gmra.mrb[0].mxu0 %v831
      %v1698 = vpop.f32.mrb[0].mxu0
      %v1699 = vadd.f32 %v1370, %v1698
      %v1700 = vpop.f32.mrb[0].mxu0
      %v1701 = vpop.f32.mrb[0].mxu0
      %v1702 = vadd.f32 %v1373, %v1701
      %v1703 = vpop.f32.mrb[0].mxu0
      %1704 = vmatprep.mubr.bf16.mxu0 0
      %1705 = vmatmul.mubr.bf16.gmra.mrb[0].mxu0 %v834
      %v1706 = vpop.f32.mrb[0].mxu0
      %v1707 = vadd.f32 %v1378, %v1706
      %v1708 = vpop.f32.mrb[0].mxu0
      %v1709 = vpop.f32.mrb[0].mxu0
      %v1710 = vadd.f32 %v1381, %v1709
      %v1711 = vpop.f32.mrb[0].mxu0
      %1712 = vmatprep.mubr.bf16.mxu0 0
      %1713 = vmatmul.mubr.bf16.gmra.mrb[0].mxu0 %v837
      %v1714 = vpop.f32.mrb[0].mxu0
      %v1715 = vadd.f32 %v1386, %v1714
      %v1716 = vpop.f32.mrb[0].mxu0
      %v1717 = vpop.f32.mrb[0].mxu0
      %v1718 = vadd.f32 %v1389, %v1717
      %v1719 = vpop.f32.mrb[0].mxu0
      %1720 = vmatprep.mubr.bf16.mxu0 0
      %1721 = vmatmul.mubr.bf16.gmra.mrb[0].mxu0 %v840
      %v1722 = vpop.f32.mrb[0].mxu0
      %v1723 = vadd.f32 %v1394, %v1722
      %v1724 = vpop.f32.mrb[0].mxu0
      %v1725 = vpop.f32.mrb[0].mxu0
      %v1726 = vadd.f32 %v1397, %v1725
      %v1727 = vpop.f32.mrb[0].mxu0
      %1728 = vmatprep.mubr.bf16.mxu0 0
      %1729 = vmatmul.mubr.bf16.gmra.mrb[0].mxu0 %v843
      %v1730 = vpop.f32.mrb[0].mxu0
      %v1731 = vadd.f32 %v1402, %v1730
      %v1732 = vpop.f32.mrb[0].mxu0
      %v1733 = vpop.f32.mrb[0].mxu0
      %v1734 = vadd.f32 %v1405, %v1733
      %v1735 = vpop.f32.mrb[0].mxu0
      %1736 = vmatprep.mubr.bf16.mxu0 0
      %1737 = vmatmul.mubr.bf16.gmra.mrb[0].mxu0 %v846
      %v1738 = vpop.f32.mrb[0].mxu0
      %v1739 = vadd.f32 %v1410, %v1738
      %v1740 = vpop.f32.mrb[0].mxu0
      %v1741 = vpop.f32.mrb[0].mxu0
      %v1742 = vadd.f32 %v1413, %v1741
      %v1743 = vpop.f32.mrb[0].mxu0
      %1744 = vmatprep.mubr.bf16.mxu0 0
      %1745 = vmatmul.mubr.bf16.gmra.mrb[0].mxu0 %v849
      %v1746 = vpop.f32.mrb[0].mxu0
      %v1747 = vadd.f32 %v1418, %v1746
      %v1748 = vpop.f32.mrb[0].mxu0
      %v1749 = vpop.f32.mrb[0].mxu0
      %v1750 = vadd.f32 %v1421, %v1749
      %v1751 = vpop.f32.mrb[0].mxu0
      %1752 = vmatprep.mubr.bf16.mxu0 0
      %1753 = vmatmul.mubr.bf16.gmra.mrb[0].mxu0 %v852
      %v1754 = vpop.f32.mrb[0].mxu0
      %v1755 = vadd.f32 %v1426, %v1754
      %v1756 = vpop.f32.mrb[0].mxu0
      %v1757 = vpop.f32.mrb[0].mxu0
      %v1758 = vadd.f32 %v1429, %v1757
      %v1759 = vpop.f32.mrb[0].mxu0
      %1760 = vmatprep.mubr.bf16.mxu0 0
      %1761 = vmatmul.mubr.bf16.gmra.mrb[0].mxu0 %v855
      %v1762 = vpop.f32.mrb[0].mxu0
      %v1763 = vadd.f32 %v1434, %v1762
      %v1764 = vpop.f32.mrb[0].mxu0
      %v1765 = vpop.f32.mrb[0].mxu0
      %v1766 = vadd.f32 %v1437, %v1765
      %v1767 = vpop.f32.mrb[0].mxu0
      %1768 = vdwg.mxu0
      %1843 = vrot.lane.b32.xlu0 %v1475, 96
      %v1844 = vpop.permute.xlu0 %1843
      %1845 = vrot.lane.b32.xlu0 %v1478, 96
      %v1846 = vpop.permute.xlu0 %1845
      %1847 = vrot.lane.b32.xlu0 %v1483, 96
      %v1848 = vpop.permute.xlu0 %1847
      %1849 = vrot.lane.b32.xlu0 %v1486, 96
      %v1850 = vpop.permute.xlu0 %1849
      %1851 = vrot.lane.b32.xlu0 %v1491, 96
      %v1852 = vpop.permute.xlu0 %1851
      %1853 = vrot.lane.b32.xlu0 %v1494, 96
      %v1854 = vpop.permute.xlu0 %1853
      %1855 = vrot.lane.b32.xlu0 %v1499, 96
      %v1856 = vpop.permute.xlu0 %1855
      %1857 = vrot.lane.b32.xlu0 %v1502, 96
      %v1858 = vpop.permute.xlu0 %1857
      %1859 = vrot.lane.b32.xlu0 %v1507, 96
      %v1860 = vpop.permute.xlu0 %1859
      %1861 = vrot.lane.b32.xlu0 %v1510, 96
      %v1862 = vpop.permute.xlu0 %1861
      %1863 = vrot.lane.b32.xlu0 %v1515, 96
      %v1864 = vpop.permute.xlu0 %1863
      %1865 = vrot.lane.b32.xlu0 %v1518, 96
      %v1866 = vpop.permute.xlu0 %1865
      %1867 = vrot.lane.b32.xlu0 %v1523, 96
      %v1868 = vpop.permute.xlu0 %1867
      %1869 = vrot.lane.b32.xlu0 %v1526, 96
      %v1870 = vpop.permute.xlu0 %1869
      %1871 = vrot.lane.b32.xlu0 %v1531, 96
      %v1872 = vpop.permute.xlu0 %1871
      %1873 = vrot.lane.b32.xlu0 %v1534, 96
      %v1874 = vpop.permute.xlu0 %1873
      %1875 = vrot.lane.b32.xlu0 %v1539, 96
      %v1876 = vpop.permute.xlu0 %1875
      %1877 = vrot.lane.b32.xlu0 %v1542, 96
      %v1878 = vpop.permute.xlu0 %1877
      %1879 = vrot.lane.b32.xlu0 %v1547, 96
      %v1880 = vpop.permute.xlu0 %1879
      %1881 = vrot.lane.b32.xlu0 %v1550, 96
      %v1882 = vpop.permute.xlu0 %1881
      %1883 = vrot.lane.b32.xlu0 %v1555, 96
      %v1884 = vpop.permute.xlu0 %1883
      %1885 = vrot.lane.b32.xlu0 %v1558, 96
      %v1886 = vpop.permute.xlu0 %1885
      %1887 = vrot.lane.b32.xlu0 %v1563, 96
      %v1888 = vpop.permute.xlu0 %1887
      %1889 = vrot.lane.b32.xlu0 %v1566, 96
      %v1890 = vpop.permute.xlu0 %1889
      %1891 = vrot.lane.b32.xlu0 %v1571, 96
      %v1892 = vpop.permute.xlu0 %1891
      %1893 = vrot.lane.b32.xlu0 %v1574, 96
      %v1894 = vpop.permute.xlu0 %1893
      %1895 = vrot.lane.b32.xlu0 %v1579, 96
      %v1896 = vpop.permute.xlu0 %1895
      %1897 = vrot.lane.b32.xlu0 %v1582, 96
      %v1898 = vpop.permute.xlu0 %1897
      %1899 = vrot.lane.b32.xlu0 %v1587, 96
      %v1900 = vpop.permute.xlu0 %1899
      %1901 = vrot.lane.b32.xlu0 %v1590, 96
      %v1902 = vpop.permute.xlu0 %1901
      %1903 = vrot.lane.b32.xlu0 %v1595, 96
      %v1904 = vpop.permute.xlu0 %1903
      %1905 = vrot.lane.b32.xlu0 %v1598, 96
      %v1906 = vpop.permute.xlu0 %1905
      %1907 = vrot.lane.b32.xlu0 %v1603, 96
      %v1908 = vpop.permute.xlu0 %1907
      %1909 = vrot.lane.b32.xlu0 %v1606, 96
      %v1910 = vpop.permute.xlu0 %1909
      %1911 = vrot.lane.b32.xlu0 %v1611, 96
      %v1912 = vpop.permute.xlu0 %1911
      %1913 = vrot.lane.b32.xlu0 %v1614, 96
      %v1914 = vpop.permute.xlu0 %1913
      %1915 = vrot.lane.b32.xlu0 %v1619, 96
      %v1916 = vpop.permute.xlu0 %1915
      %1917 = vrot.lane.b32.xlu0 %v1622, 96
      %v1918 = vpop.permute.xlu0 %1917
      %1919 = vrot.lane.b32.xlu0 %v1627, 96
      %v1920 = vpop.permute.xlu0 %1919
      %1921 = vrot.lane.b32.xlu0 %v1630, 96
      %v1922 = vpop.permute.xlu0 %1921
      %1923 = vrot.lane.b32.xlu0 %v1635, 96
      %v1924 = vpop.permute.xlu0 %1923
      %1925 = vrot.lane.b32.xlu0 %v1638, 96
      %v1926 = vpop.permute.xlu0 %1925
      %1927 = vrot.lane.b32.xlu0 %v1643, 96
      %v1928 = vpop.permute.xlu0 %1927
      %1929 = vrot.lane.b32.xlu0 %v1646, 96
      %v1930 = vpop.permute.xlu0 %1929
      %1931 = vrot.lane.b32.xlu0 %v1651, 96
      %v1932 = vpop.permute.xlu0 %1931
      %1933 = vrot.lane.b32.xlu0 %v1654, 96
      %v1934 = vpop.permute.xlu0 %1933
      %1935 = vrot.lane.b32.xlu0 %v1659, 96
      %v1936 = vpop.permute.xlu0 %1935
      %1937 = vrot.lane.b32.xlu0 %v1662, 96
      %v1938 = vpop.permute.xlu0 %1937
      %1939 = vrot.lane.b32.xlu0 %v1667, 96
      %v1940 = vpop.permute.xlu0 %1939
      %1941 = vrot.lane.b32.xlu0 %v1670, 96
      %v1942 = vpop.permute.xlu0 %1941
      %1943 = vrot.lane.b32.xlu0 %v1675, 96
      %v1944 = vpop.permute.xlu0 %1943
      %1945 = vrot.lane.b32.xlu0 %v1678, 96
      %v1946 = vpop.permute.xlu0 %1945
      %1947 = vrot.lane.b32.xlu0 %v1683, 96
      %v1948 = vpop.permute.xlu0 %1947
      %1949 = vrot.lane.b32.xlu0 %v1686, 96
      %v1950 = vpop.permute.xlu0 %1949
      %1951 = vrot.lane.b32.xlu0 %v1691, 96
      %v1952 = vpop.permute.xlu0 %1951
      %1953 = vrot.lane.b32.xlu0 %v1694, 96
      %v1954 = vpop.permute.xlu0 %1953
      %1955 = vrot.lane.b32.xlu0 %v1699, 96
      %v1956 = vpop.permute.xlu0 %1955
      %1957 = vrot.lane.b32.xlu0 %v1702, 96
      %v1958 = vpop.permute.xlu0 %1957
      %1959 = vrot.lane.b32.xlu0 %v1707, 96
      %v1960 = vpop.permute.xlu0 %1959
      %1961 = vrot.lane.b32.xlu0 %v1710, 96
      %v1962 = vpop.permute.xlu0 %1961
      %1963 = vrot.lane.b32.xlu0 %v1715, 96
      %v1964 = vpop.permute.xlu0 %1963
      %1965 = vrot.lane.b32.xlu0 %v1718, 96
      %v1966 = vpop.permute.xlu0 %1965
      %1967 = vrot.lane.b32.xlu0 %v1723, 96
      %v1968 = vpop.permute.xlu0 %1967
      %1969 = vrot.lane.b32.xlu0 %v1726, 96
      %v1970 = vpop.permute.xlu0 %1969
      %1971 = vrot.lane.b32.xlu0 %v1731, 96
      %v1972 = vpop.permute.xlu0 %1971
      %1973 = vrot.lane.b32.xlu0 %v1734, 96
      %v1974 = vpop.permute.xlu0 %1973
      %1975 = vrot.lane.b32.xlu0 %v1739, 96
      %v1976 = vpop.permute.xlu0 %1975
      %1977 = vrot.lane.b32.xlu0 %v1742, 96
      %v1978 = vpop.permute.xlu0 %1977
      %1979 = vrot.lane.b32.xlu0 %v1747, 96
      %v1980 = vpop.permute.xlu0 %1979
      %1981 = vrot.lane.b32.xlu0 %v1750, 96
      %v1982 = vpop.permute.xlu0 %1981
      %1983 = vrot.lane.b32.xlu0 %v1755, 96
      %v1984 = vpop.permute.xlu0 %1983
      %1985 = vrot.lane.b32.xlu0 %v1758, 96
      %v1986 = vpop.permute.xlu0 %1985
      %1987 = vrot.lane.b32.xlu0 %v1763, 96
      %v1988 = vpop.permute.xlu0 %1987
      %1989 = vrot.lane.b32.xlu0 %v1766, 96
      %v1990 = vpop.permute.xlu0 %1989
      %v2065 = vmax.f32 %v1475, %v1844
      %v2066 = vmax.f32 %v1478, %v1846
      %v2067 = vmax.f32 %v1483, %v1848
      %v2068 = vmax.f32 %v1486, %v1850
      %v2069 = vmax.f32 %v1491, %v1852
      %v2070 = vmax.f32 %v1494, %v1854
      %v2071 = vmax.f32 %v1499, %v1856
      %v2072 = vmax.f32 %v1502, %v1858
      %v2073 = vmax.f32 %v1507, %v1860
      %v2074 = vmax.f32 %v1510, %v1862
      %v2075 = vmax.f32 %v1515, %v1864
      %v2076 = vmax.f32 %v1518, %v1866
      %v2077 = vmax.f32 %v1523, %v1868
      %v2078 = vmax.f32 %v1526, %v1870
      %v2079 = vmax.f32 %v1531, %v1872
      %v2080 = vmax.f32 %v1534, %v1874
      %v2081 = vmax.f32 %v1539, %v1876
      %v2082 = vmax.f32 %v1542, %v1878
      %v2083 = vmax.f32 %v1547, %v1880
      %v2084 = vmax.f32 %v1550, %v1882
      %v2085 = vmax.f32 %v1555, %v1884
      %v2086 = vmax.f32 %v1558, %v1886
      %v2087 = vmax.f32 %v1563, %v1888
      %v2088 = vmax.f32 %v1566, %v1890
      %v2089 = vmax.f32 %v1571, %v1892
      %v2090 = vmax.f32 %v1574, %v1894
      %v2091 = vmax.f32 %v1579, %v1896
      %v2092 = vmax.f32 %v1582, %v1898
      %v2093 = vmax.f32 %v1587, %v1900
      %v2094 = vmax.f32 %v1590, %v1902
      %v2095 = vmax.f32 %v1595, %v1904
      %v2096 = vmax.f32 %v1598, %v1906
      %v2097 = vmax.f32 %v1603, %v1908
      %v2098 = vmax.f32 %v1606, %v1910
      %v2099 = vmax.f32 %v1611, %v1912
      %v2100 = vmax.f32 %v1614, %v1914
      %v2101 = vmax.f32 %v1619, %v1916
      %v2102 = vmax.f32 %v1622, %v1918
      %v2103 = vmax.f32 %v1627, %v1920
      %v2104 = vmax.f32 %v1630, %v1922
      %v2105 = vmax.f32 %v1635, %v1924
      %v2106 = vmax.f32 %v1638, %v1926
      %v2107 = vmax.f32 %v1643, %v1928
      %v2108 = vmax.f32 %v1646, %v1930
      %v2109 = vmax.f32 %v1651, %v1932
      %v2110 = vmax.f32 %v1654, %v1934
      %v2111 = vmax.f32 %v1659, %v1936
      %v2112 = vmax.f32 %v1662, %v1938
      %v2113 = vmax.f32 %v1667, %v1940
      %v2114 = vmax.f32 %v1670, %v1942
      %v2115 = vmax.f32 %v1675, %v1944
      %v2116 = vmax.f32 %v1678, %v1946
      %v2117 = vmax.f32 %v1683, %v1948
      %v2118 = vmax.f32 %v1686, %v1950
      %v2119 = vmax.f32 %v1691, %v1952
      %v2120 = vmax.f32 %v1694, %v1954
      %v2121 = vmax.f32 %v1699, %v1956
      %v2122 = vmax.f32 %v1702, %v1958
      %v2123 = vmax.f32 %v1707, %v1960
      %v2124 = vmax.f32 %v1710, %v1962
      %v2125 = vmax.f32 %v1715, %v1964
      %v2126 = vmax.f32 %v1718, %v1966
      %v2127 = vmax.f32 %v1723, %v1968
      %v2128 = vmax.f32 %v1726, %v1970
      %v2129 = vmax.f32 %v1731, %v1972
      %v2130 = vmax.f32 %v1734, %v1974
      %v2131 = vmax.f32 %v1739, %v1976
      %v2132 = vmax.f32 %v1742, %v1978
      %v2133 = vmax.f32 %v1747, %v1980
      %v2134 = vmax.f32 %v1750, %v1982
      %v2135 = vmax.f32 %v1755, %v1984
      %v2136 = vmax.f32 %v1758, %v1986
      %v2137 = vmax.f32 %v1763, %v1988
      %v2138 = vmax.f32 %v1766, %v1990
      %2139 = vrot.lane.b32.xlu0 %v1475, 64
      %v2140 = vpop.permute.xlu0 %2139
      %2141 = vrot.lane.b32.xlu0 %v1478, 64
      %v2142 = vpop.permute.xlu0 %2141
      %2143 = vrot.lane.b32.xlu0 %v1483, 64
      %v2144 = vpop.permute.xlu0 %2143
      %2145 = vrot.lane.b32.xlu0 %v1486, 64
      %v2146 = vpop.permute.xlu0 %2145
      %2147 = vrot.lane.b32.xlu0 %v1491, 64
      %v2148 = vpop.permute.xlu0 %2147
      %2149 = vrot.lane.b32.xlu0 %v1494, 64
      %v2150 = vpop.permute.xlu0 %2149
      %2151 = vrot.lane.b32.xlu0 %v1499, 64
      %v2152 = vpop.permute.xlu0 %2151
      %2153 = vrot.lane.b32.xlu0 %v1502, 64
      %v2154 = vpop.permute.xlu0 %2153
      %2155 = vrot.lane.b32.xlu0 %v1507, 64
      %v2156 = vpop.permute.xlu0 %2155
      %2157 = vrot.lane.b32.xlu0 %v1510, 64
      %v2158 = vpop.permute.xlu0 %2157
      %2159 = vrot.lane.b32.xlu0 %v1515, 64
      %v2160 = vpop.permute.xlu0 %2159
      %2161 = vrot.lane.b32.xlu0 %v1518, 64
      %v2162 = vpop.permute.xlu0 %2161
      %2163 = vrot.lane.b32.xlu0 %v1523, 64
      %v2164 = vpop.permute.xlu0 %2163
      %2165 = vrot.lane.b32.xlu0 %v1526, 64
      %v2166 = vpop.permute.xlu0 %2165
      %2167 = vrot.lane.b32.xlu0 %v1531, 64
      %v2168 = vpop.permute.xlu0 %2167
      %2169 = vrot.lane.b32.xlu0 %v1534, 64
      %v2170 = vpop.permute.xlu0 %2169
      %2171 = vrot.lane.b32.xlu0 %v1539, 64
      %v2172 = vpop.permute.xlu0 %2171
      %2173 = vrot.lane.b32.xlu0 %v1542, 64
      %v2174 = vpop.permute.xlu0 %2173
      %2175 = vrot.lane.b32.xlu0 %v1547, 64
      %v2176 = vpop.permute.xlu0 %2175
      %2177 = vrot.lane.b32.xlu0 %v1550, 64
      %v2178 = vpop.permute.xlu0 %2177
      %2179 = vrot.lane.b32.xlu0 %v1555, 64
      %v2180 = vpop.permute.xlu0 %2179
      %2181 = vrot.lane.b32.xlu0 %v1558, 64
      %v2182 = vpop.permute.xlu0 %2181
      %2183 = vrot.lane.b32.xlu0 %v1563, 64
      %v2184 = vpop.permute.xlu0 %2183
      %2185 = vrot.lane.b32.xlu0 %v1566, 64
      %v2186 = vpop.permute.xlu0 %2185
      %2187 = vrot.lane.b32.xlu0 %v1571, 64
      %v2188 = vpop.permute.xlu0 %2187
      %2189 = vrot.lane.b32.xlu0 %v1574, 64
      %v2190 = vpop.permute.xlu0 %2189
      %2191 = vrot.lane.b32.xlu0 %v1579, 64
      %v2192 = vpop.permute.xlu0 %2191
      %2193 = vrot.lane.b32.xlu0 %v1582, 64
      %v2194 = vpop.permute.xlu0 %2193
      %2195 = vrot.lane.b32.xlu0 %v1587, 64
      %v2196 = vpop.permute.xlu0 %2195
      %2197 = vrot.lane.b32.xlu0 %v1590, 64
      %v2198 = vpop.permute.xlu0 %2197
      %2199 = vrot.lane.b32.xlu0 %v1595, 64
      %v2200 = vpop.permute.xlu0 %2199
      %2201 = vrot.lane.b32.xlu0 %v1598, 64
      %v2202 = vpop.permute.xlu0 %2201
      %2203 = vrot.lane.b32.xlu0 %v1603, 64
      %v2204 = vpop.permute.xlu0 %2203
      %2205 = vrot.lane.b32.xlu0 %v1606, 64
      %v2206 = vpop.permute.xlu0 %2205
      %2207 = vrot.lane.b32.xlu0 %v1611, 64
      %v2208 = vpop.permute.xlu0 %2207
      %2209 = vrot.lane.b32.xlu0 %v1614, 64
      %v2210 = vpop.permute.xlu0 %2209
      %2211 = vrot.lane.b32.xlu0 %v1619, 64
      %v2212 = vpop.permute.xlu0 %2211
      %2213 = vrot.lane.b32.xlu0 %v1622, 64
      %v2214 = vpop.permute.xlu0 %2213
      %2215 = vrot.lane.b32.xlu0 %v1627, 64
      %v2216 = vpop.permute.xlu0 %2215
      %2217 = vrot.lane.b32.xlu0 %v1630, 64
      %v2218 = vpop.permute.xlu0 %2217
      %2219 = vrot.lane.b32.xlu0 %v1635, 64
      %v2220 = vpop.permute.xlu0 %2219
      %2221 = vrot.lane.b32.xlu0 %v1638, 64
      %v2222 = vpop.permute.xlu0 %2221
      %2223 = vrot.lane.b32.xlu0 %v1643, 64
      %v2224 = vpop.permute.xlu0 %2223
      %2225 = vrot.lane.b32.xlu0 %v1646, 64
      %v2226 = vpop.permute.xlu0 %2225
      %2227 = vrot.lane.b32.xlu0 %v1651, 64
      %v2228 = vpop.permute.xlu0 %2227
      %2229 = vrot.lane.b32.xlu0 %v1654, 64
      %v2230 = vpop.permute.xlu0 %2229
      %2231 = vrot.lane.b32.xlu0 %v1659, 64
      %v2232 = vpop.permute.xlu0 %2231
      %2233 = vrot.lane.b32.xlu0 %v1662, 64
      %v2234 = vpop.permute.xlu0 %2233
      %2235 = vrot.lane.b32.xlu0 %v1667, 64
      %v2236 = vpop.permute.xlu0 %2235
      %2237 = vrot.lane.b32.xlu0 %v1670, 64
      %v2238 = vpop.permute.xlu0 %2237
      %2239 = vrot.lane.b32.xlu0 %v1675, 64
      %v2240 = vpop.permute.xlu0 %2239
      %2241 = vrot.lane.b32.xlu0 %v1678, 64
      %v2242 = vpop.permute.xlu0 %2241
      %2243 = vrot.lane.b32.xlu0 %v1683, 64
      %v2244 = vpop.permute.xlu0 %2243
      %2245 = vrot.lane.b32.xlu0 %v1686, 64
      %v2246 = vpop.permute.xlu0 %2245
      %2247 = vrot.lane.b32.xlu0 %v1691, 64
      %v2248 = vpop.permute.xlu0 %2247
      %2249 = vrot.lane.b32.xlu0 %v1694, 64
      %v2250 = vpop.permute.xlu0 %2249
      %2251 = vrot.lane.b32.xlu0 %v1699, 64
      %v2252 = vpop.permute.xlu0 %2251
      %2253 = vrot.lane.b32.xlu0 %v1702, 64
      %v2254 = vpop.permute.xlu0 %2253
      %2255 = vrot.lane.b32.xlu0 %v1707, 64
      %v2256 = vpop.permute.xlu0 %2255
      %2257 = vrot.lane.b32.xlu0 %v1710, 64
      %v2258 = vpop.permute.xlu0 %2257
      %2259 = vrot.lane.b32.xlu0 %v1715, 64
      %v2260 = vpop.permute.xlu0 %2259
      %2261 = vrot.lane.b32.xlu0 %v1718, 64
      %v2262 = vpop.permute.xlu0 %2261
      %2263 = vrot.lane.b32.xlu0 %v1723, 64
      %v2264 = vpop.permute.xlu0 %2263
      %2265 = vrot.lane.b32.xlu0 %v1726, 64
      %v2266 = vpop.permute.xlu0 %2265
      %2267 = vrot.lane.b32.xlu0 %v1731, 64
      %v2268 = vpop.permute.xlu0 %2267
      %2269 = vrot.lane.b32.xlu0 %v1734, 64
      %v2270 = vpop.permute.xlu0 %2269
      %2271 = vrot.lane.b32.xlu0 %v1739, 64
      %v2272 = vpop.permute.xlu0 %2271
      %2273 = vrot.lane.b32.xlu0 %v1742, 64
      %v2274 = vpop.permute.xlu0 %2273
      %2275 = vrot.lane.b32.xlu0 %v1747, 64
      %v2276 = vpop.permute.xlu0 %2275
      %2277 = vrot.lane.b32.xlu0 %v1750, 64
      %v2278 = vpop.permute.xlu0 %2277
      %2279 = vrot.lane.b32.xlu0 %v1755, 64
      %v2280 = vpop.permute.xlu0 %2279
      %2281 = vrot.lane.b32.xlu0 %v1758, 64
      %v2282 = vpop.permute.xlu0 %2281
      %2283 = vrot.lane.b32.xlu0 %v1763, 64
      %v2284 = vpop.permute.xlu0 %2283
      %2285 = vrot.lane.b32.xlu0 %v1766, 64
      %v2286 = vpop.permute.xlu0 %2285
      %v2361 = vmax.f32 %v2065, %v2140
      %v2362 = vmax.f32 %v2066, %v2142
      %v2363 = vmax.f32 %v2067, %v2144
      %v2364 = vmax.f32 %v2068, %v2146
      %v2365 = vmax.f32 %v2069, %v2148
      %v2366 = vmax.f32 %v2070, %v2150
      %v2367 = vmax.f32 %v2071, %v2152
      %v2368 = vmax.f32 %v2072, %v2154
      %v2369 = vmax.f32 %v2073, %v2156
      %v2370 = vmax.f32 %v2074, %v2158
      %v2371 = vmax.f32 %v2075, %v2160
      %v2372 = vmax.f32 %v2076, %v2162
      %v2373 = vmax.f32 %v2077, %v2164
      %v2374 = vmax.f32 %v2078, %v2166
      %v2375 = vmax.f32 %v2079, %v2168
      %v2376 = vmax.f32 %v2080, %v2170
      %v2377 = vmax.f32 %v2081, %v2172
      %v2378 = vmax.f32 %v2082, %v2174
      %v2379 = vmax.f32 %v2083, %v2176
      %v2380 = vmax.f32 %v2084, %v2178
      %v2381 = vmax.f32 %v2085, %v2180
      %v2382 = vmax.f32 %v2086, %v2182
      %v2383 = vmax.f32 %v2087, %v2184
      %v2384 = vmax.f32 %v2088, %v2186
      %v2385 = vmax.f32 %v2089, %v2188
      %v2386 = vmax.f32 %v2090, %v2190
      %v2387 = vmax.f32 %v2091, %v2192
      %v2388 = vmax.f32 %v2092, %v2194
      %v2389 = vmax.f32 %v2093, %v2196
      %v2390 = vmax.f32 %v2094, %v2198
      %v2391 = vmax.f32 %v2095, %v2200
      %v2392 = vmax.f32 %v2096, %v2202
      %v2393 = vmax.f32 %v2097, %v2204
      %v2394 = vmax.f32 %v2098, %v2206
      %v2395 = vmax.f32 %v2099, %v2208
      %v2396 = vmax.f32 %v2100, %v2210
      %v2397 = vmax.f32 %v2101, %v2212
      %v2398 = vmax.f32 %v2102, %v2214
      %v2399 = vmax.f32 %v2103, %v2216
      %v2400 = vmax.f32 %v2104, %v2218
      %v2401 = vmax.f32 %v2105, %v2220
      %v2402 = vmax.f32 %v2106, %v2222
      %v2403 = vmax.f32 %v2107, %v2224
      %v2404 = vmax.f32 %v2108, %v2226
      %v2405 = vmax.f32 %v2109, %v2228
      %v2406 = vmax.f32 %v2110, %v2230
      %v2407 = vmax.f32 %v2111, %v2232
      %v2408 = vmax.f32 %v2112, %v2234
      %v2409 = vmax.f32 %v2113, %v2236
      %v2410 = vmax.f32 %v2114, %v2238
      %v2411 = vmax.f32 %v2115, %v2240
      %v2412 = vmax.f32 %v2116, %v2242
      %v2413 = vmax.f32 %v2117, %v2244
      %v2414 = vmax.f32 %v2118, %v2246
      %v2415 = vmax.f32 %v2119, %v2248
      %v2416 = vmax.f32 %v2120, %v2250
      %v2417 = vmax.f32 %v2121, %v2252
      %v2418 = vmax.f32 %v2122, %v2254
      %v2419 = vmax.f32 %v2123, %v2256
      %v2420 = vmax.f32 %v2124, %v2258
      %v2421 = vmax.f32 %v2125, %v2260
      %v2422 = vmax.f32 %v2126, %v2262
      %v2423 = vmax.f32 %v2127, %v2264
      %v2424 = vmax.f32 %v2128, %v2266
      %v2425 = vmax.f32 %v2129, %v2268
      %v2426 = vmax.f32 %v2130, %v2270
      %v2427 = vmax.f32 %v2131, %v2272
      %v2428 = vmax.f32 %v2132, %v2274
      %v2429 = vmax.f32 %v2133, %v2276
      %v2430 = vmax.f32 %v2134, %v2278
      %v2431 = vmax.f32 %v2135, %v2280
      %v2432 = vmax.f32 %v2136, %v2282
      %v2433 = vmax.f32 %v2137, %v2284
      %v2434 = vmax.f32 %v2138, %v2286
      %v2435 = vmax.f32 %v2361, 0.0
      %v2436 = vmax.f32 %v2362, 0.0
      %v2437 = vmax.f32 %v2363, 0.0
      %v2438 = vmax.f32 %v2364, 0.0
      %v2439 = vmax.f32 %v2365, 0.0
      %v2440 = vmax.f32 %v2366, 0.0
      %v2441 = vmax.f32 %v2367, 0.0
      %v2442 = vmax.f32 %v2368, 0.0
      %v2443 = vmax.f32 %v2369, 0.0
      %v2444 = vmax.f32 %v2370, 0.0
      %v2445 = vmax.f32 %v2371, 0.0
      %v2446 = vmax.f32 %v2372, 0.0
      %v2447 = vmax.f32 %v2373, 0.0
      %v2448 = vmax.f32 %v2374, 0.0
      %v2449 = vmax.f32 %v2375, 0.0
      %v2450 = vmax.f32 %v2376, 0.0
      %v2451 = vmax.f32 %v2377, 0.0
      %v2452 = vmax.f32 %v2378, 0.0
      %v2453 = vmax.f32 %v2379, 0.0
      %v2454 = vmax.f32 %v2380, 0.0
      %v2455 = vmax.f32 %v2381, 0.0
      %v2456 = vmax.f32 %v2382, 0.0
      %v2457 = vmax.f32 %v2383, 0.0
      %v2458 = vmax.f32 %v2384, 0.0
      %v2459 = vmax.f32 %v2385, 0.0
      %v2460 = vmax.f32 %v2386, 0.0
      %v2461 = vmax.f32 %v2387, 0.0
      %v2462 = vmax.f32 %v2388, 0.0
      %v2463 = vmax.f32 %v2389, 0.0
      %v2464 = vmax.f32 %v2390, 0.0
      %v2465 = vmax.f32 %v2391, 0.0
      %v2466 = vmax.f32 %v2392, 0.0
      %v2467 = vmax.f32 %v2393, 0.0
      %v2468 = vmax.f32 %v2394, 0.0
      %v2469 = vmax.f32 %v2395, 0.0
      %v2470 = vmax.f32 %v2396, 0.0
      %v2471 = vmax.f32 %v2397, 0.0
      %v2472 = vmax.f32 %v2398, 0.0
      %v2473 = vmax.f32 %v2399, 0.0
      %v2474 = vmax.f32 %v2400, 0.0
      %v2475 = vmax.f32 %v2401, 0.0
      %v2476 = vmax.f32 %v2402, 0.0
      %v2477 = vmax.f32 %v2403, 0.0
      %v2478 = vmax.f32 %v2404, 0.0
      %v2479 = vmax.f32 %v2405, 0.0
      %v2480 = vmax.f32 %v2406, 0.0
      %v2481 = vmax.f32 %v2407, 0.0
      %v2482 = vmax.f32 %v2408, 0.0
      %v2483 = vmax.f32 %v2409, 0.0
      %v2484 = vmax.f32 %v2410, 0.0
      %v2485 = vmax.f32 %v2411, 0.0
      %v2486 = vmax.f32 %v2412, 0.0
      %v2487 = vmax.f32 %v2413, 0.0
      %v2488 = vmax.f32 %v2414, 0.0
      %v2489 = vmax.f32 %v2415, 0.0
      %v2490 = vmax.f32 %v2416, 0.0
      %v2491 = vmax.f32 %v2417, 0.0
      %v2492 = vmax.f32 %v2418, 0.0
      %v2493 = vmax.f32 %v2419, 0.0
      %v2494 = vmax.f32 %v2420, 0.0
      %v2495 = vmax.f32 %v2421, 0.0
      %v2496 = vmax.f32 %v2422, 0.0
      %v2497 = vmax.f32 %v2423, 0.0
      %v2498 = vmax.f32 %v2424, 0.0
      %v2499 = vmax.f32 %v2425, 0.0
      %v2500 = vmax.f32 %v2426, 0.0
      %v2501 = vmax.f32 %v2427, 0.0
      %v2502 = vmax.f32 %v2428, 0.0
      %v2503 = vmax.f32 %v2429, 0.0
      %v2504 = vmax.f32 %v2430, 0.0
      %v2505 = vmax.f32 %v2431, 0.0
      %v2506 = vmax.f32 %v2432, 0.0
      %v2507 = vmax.f32 %v2433, 0.0
      %v2508 = vmax.f32 %v2434, 0.0
      %vm2509 = vcmask 261120
      %2510 = vst.msk [vmem:[%s170] sm:$0xff] %vm2509, %v2435
      %2511 = vst.msk [vmem:[%s170 + $0x8] sm:$0xff] %vm2509, %v2436
      %2512 = vst.msk [vmem:[%s170 + $0x10] sm:$0xff] %vm2509, %v2437
      %2513 = vst.msk [vmem:[%s170 + $0x18] sm:$0xff] %vm2509, %v2438
      %2514 = vst.msk [vmem:[%s170 + $0x20] sm:$0xff] %vm2509, %v2439
      %2515 = vst.msk [vmem:[%s170 + $0x28] sm:$0xff] %vm2509, %v2440
      %2516 = vst.msk [vmem:[%s170 + $0x30] sm:$0xff] %vm2509, %v2441
      %2517 = vst.msk [vmem:[%s170 + $0x38] sm:$0xff] %vm2509, %v2442
      %2518 = vst.msk [vmem:[%s170 + $0x40] sm:$0xff] %vm2509, %v2443
      %2519 = vst.msk [vmem:[%s170 + $0x48] sm:$0xff] %vm2509, %v2444
      %2520 = vst.msk [vmem:[%s170 + $0x50] sm:$0xff] %vm2509, %v2445
      %2521 = vst.msk [vmem:[%s170 + $0x58] sm:$0xff] %vm2509, %v2446
      %2522 = vst.msk [vmem:[%s170 + $0x60] sm:$0xff] %vm2509, %v2447
      %2523 = vst.msk [vmem:[%s170 + $0x68] sm:$0xff] %vm2509, %v2448
      %2524 = vst.msk [vmem:[%s170 + $0x70] sm:$0xff] %vm2509, %v2449
      %2525 = vst.msk [vmem:[%s170 + $0x78] sm:$0xff] %vm2509, %v2450
      %2526 = vst.msk [vmem:[%s170 + $0x80] sm:$0xff] %vm2509, %v2451
      %2527 = vst.msk [vmem:[%s170 + $0x88] sm:$0xff] %vm2509, %v2452
      %2528 = vst.msk [vmem:[%s170 + $0x90] sm:$0xff] %vm2509, %v2453
      %2529 = vst.msk [vmem:[%s170 + $0x98] sm:$0xff] %vm2509, %v2454
      %2530 = vst.msk [vmem:[%s170 + $0xa0] sm:$0xff] %vm2509, %v2455
      %2531 = vst.msk [vmem:[%s170 + $0xa8] sm:$0xff] %vm2509, %v2456
      %2532 = vst.msk [vmem:[%s170 + $0xb0] sm:$0xff] %vm2509, %v2457
      %2533 = vst.msk [vmem:[%s170 + $0xb8] sm:$0xff] %vm2509, %v2458
      %2534 = vst.msk [vmem:[%s170 + $0xc0] sm:$0xff] %vm2509, %v2459
      %2535 = vst.msk [vmem:[%s170 + $0xc8] sm:$0xff] %vm2509, %v2460
      %2536 = vst.msk [vmem:[%s170 + $0xd0] sm:$0xff] %vm2509, %v2461
      %2537 = vst.msk [vmem:[%s170 + $0xd8] sm:$0xff] %vm2509, %v2462
      %2538 = vst.msk [vmem:[%s170 + $0xe0] sm:$0xff] %vm2509, %v2463
      %2539 = vst.msk [vmem:[%s170 + $0xe8] sm:$0xff] %vm2509, %v2464
      %2540 = vst.msk [vmem:[%s170 + $0xf0] sm:$0xff] %vm2509, %v2465
      %2541 = vst.msk [vmem:[%s170 + $0xf8] sm:$0xff] %vm2509, %v2466
      %2542 = vst.msk [vmem:[%s170 + $0x100] sm:$0xff] %vm2509, %v2467
      %2543 = vst.msk [vmem:[%s170 + $0x108] sm:$0xff] %vm2509, %v2468
      %2544 = vst.msk [vmem:[%s170 + $0x110] sm:$0xff] %vm2509, %v2469
      %2545 = vst.msk [vmem:[%s170 + $0x118] sm:$0xff] %vm2509, %v2470
      %2546 = vst.msk [vmem:[%s170 + $0x120] sm:$0xff] %vm2509, %v2471
      %2547 = vst.msk [vmem:[%s170 + $0x128] sm:$0xff] %vm2509, %v2472
      %2548 = vst.msk [vmem:[%s170 + $0x130] sm:$0xff] %vm2509, %v2473
      %2549 = vst.msk [vmem:[%s170 + $0x138] sm:$0xff] %vm2509, %v2474
      %2550 = vst.msk [vmem:[%s170 + $0x140] sm:$0xff] %vm2509, %v2475
      %2551 = vst.msk [vmem:[%s170 + $0x148] sm:$0xff] %vm2509, %v2476
      %2552 = vst.msk [vmem:[%s170 + $0x150] sm:$0xff] %vm2509, %v2477
      %2553 = vst.msk [vmem:[%s170 + $0x158] sm:$0xff] %vm2509, %v2478
      %2554 = vst.msk [vmem:[%s170 + $0x160] sm:$0xff] %vm2509, %v2479
      %2555 = vst.msk [vmem:[%s170 + $0x168] sm:$0xff] %vm2509, %v2480
      %2556 = vst.msk [vmem:[%s170 + $0x170] sm:$0xff] %vm2509, %v2481
      %2557 = vst.msk [vmem:[%s170 + $0x178] sm:$0xff] %vm2509, %v2482
      %2558 = vst.msk [vmem:[%s170 + $0x180] sm:$0xff] %vm2509, %v2483
      %2559 = vst.msk [vmem:[%s170 + $0x188] sm:$0xff] %vm2509, %v2484
      %2560 = vst.msk [vmem:[%s170 + $0x190] sm:$0xff] %vm2509, %v2485
      %2561 = vst.msk [vmem:[%s170 + $0x198] sm:$0xff] %vm2509, %v2486
      %2562 = vst.msk [vmem:[%s170 + $0x1a0] sm:$0xff] %vm2509, %v2487
      %2563 = vst.msk [vmem:[%s170 + $0x1a8] sm:$0xff] %vm2509, %v2488
      %2564 = vst.msk [vmem:[%s170 + $0x1b0] sm:$0xff] %vm2509, %v2489
      %2565 = vst.msk [vmem:[%s170 + $0x1b8] sm:$0xff] %vm2509, %v2490
      %2566 = vst.msk [vmem:[%s170 + $0x1c0] sm:$0xff] %vm2509, %v2491
      %2567 = vst.msk [vmem:[%s170 + $0x1c8] sm:$0xff] %vm2509, %v2492
      %2568 = vst.msk [vmem:[%s170 + $0x1d0] sm:$0xff] %vm2509, %v2493
      %2569 = vst.msk [vmem:[%s170 + $0x1d8] sm:$0xff] %vm2509, %v2494
      %2570 = vst.msk [vmem:[%s170 + $0x1e0] sm:$0xff] %vm2509, %v2495
      %2571 = vst.msk [vmem:[%s170 + $0x1e8] sm:$0xff] %vm2509, %v2496
      %2572 = vst.msk [vmem:[%s170 + $0x1f0] sm:$0xff] %vm2509, %v2497
      %2573 = vst.msk [vmem:[%s170 + $0x1f8] sm:$0xff] %vm2509, %v2498
      %2574 = vst.msk [vmem:[%s170 + $0x200] sm:$0xff] %vm2509, %v2499
      %2575 = vst.msk [vmem:[%s170 + $0x208] sm:$0xff] %vm2509, %v2500
      %2576 = vst.msk [vmem:[%s170 + $0x210] sm:$0xff] %vm2509, %v2501
      %2577 = vst.msk [vmem:[%s170 + $0x218] sm:$0xff] %vm2509, %v2502
      %2578 = vst.msk [vmem:[%s170 + $0x220] sm:$0xff] %vm2509, %v2503
      %2579 = vst.msk [vmem:[%s170 + $0x228] sm:$0xff] %vm2509, %v2504
      %2580 = vst.msk [vmem:[%s170 + $0x230] sm:$0xff] %vm2509, %v2505
      %2581 = vst.msk [vmem:[%s170 + $0x238] sm:$0xff] %vm2509, %v2506
      %2582 = vst.msk [vmem:[%s170 + $0x240] sm:$0xff] %vm2509, %v2507
      %vm2583 = vcmask 253952
      %2584 = vst.msk [vmem:[%s170 + $0x248] sm:$0x1] %vm2583, %v2508
      %p2585 = scmp.lt.s32.totalorder %s14, 1
      %s2586 = scalar_select %p2585, %s14, 1
      %s2587 = smul.addr %s2586, 74
      %s2588 = smul.addr %s2587, 8
      %s2589 = scalar_lea.vmem %s3, %s2588
      // Predicated region
      $region33: #{forward.8} parent=31 // pred_check
        %p2590 = pneg %p100
      $region34: #{forward.8} parent=31 // pred_check_branch
        %2592 = sbr.rel (%p2590) target = $region36
      $region35: #{forward.8} parent=31 // pred_region
        _
      $region36: #{forward.8} parent=31 // pred_fallthru
        _
    $region32: #{forward.8} parent=5 // pred_fallthru
      _
    %p2593 = scmp.le.s32.totalorder 2, %s9
    // Predicated region
    $region37: #{forward.8} parent=5 // pred_check
      %p2594 = pneg %p2593
    $region38: #{forward.8} parent=5 // pred_check_branch
      %2596 = sbr.rel (%p2594) target = $region40
    $region39: #{forward.8} parent=5 // pred_region
      %s2597 = ssub.s32 %s9, 2
      // Predicated region
      $region41: #{forward.8} parent=39 // pred_check
        %p2598 = pneg %p106
      $region42: #{forward.8} parent=39 // pred_check_branch
        %2600 = sbr.rel (%p2598) target = $region44
      $region43: #{forward.8} parent=39 // pred_region
        %p2601 = scmp.lt.s32.totalorder %s15, 1
        %s2602 = scalar_select %p2601, %s15, 1
        %s2603 = smul.addr %s2602, 74
        %s2604 = smul.addr %s2603, 8
        %s2605 = scalar_lea.vmem %s3, %s2604
      $region44: #{forward.8} parent=39 // pred_fallthru
        _
    $region40: #{forward.8} parent=5 // pred_fallthru
      _
  $region6: #{forward.8} parent=0 // loop_footer
    %s13 = sadd.s32 1, %s9
  $region7: #{forward.8} parent=0 // loop_footer_branch
    %8 = sbr.rel target = $region3
  $region8: #{forward.8} parent=0 // loop_exit
    _

// kernel: forward.9
$region0: #{forward.9}
  #allocation0 [shape = 'u32[]', space=smem, size = 0x4, offset = 0x4, fixed_abs, tag = 'smem constant byte address 0x4 - core index']
  #allocation1 [shape = 'u32[144,128]{1,0:T(1,128)}', space=vmem, size = 0x12000, scoped, tag = 'internal scratch']
  %s0 = inlined_call_operand.vmem [shape: bf16[2,192,384], index: 0, kind: input, shape index: {}]
  %s1 = inlined_call_operand.vmem [shape: bf16[384,192], index: 1, kind: input, shape index: {}]
  %s2 = inlined_call_operand.vmem [shape: f32[1,192], index: 2, kind: input, shape index: {}]
  %s3 = inlined_call_operand.vmem [shape: f32[2,192,64], index: 3, kind: output, shape index: {}]
  %s4 = sld [smem:[#allocation0]]
  $region45: #{forward.9} parent=0
    _
  %s6 = ssub.s32 1, %s4
  %s7 = scalar_select 0, %s6, %s4
  loop: start=0, step=1, limit=4
  $region2: #{forward.9} parent=0 // loop_pre_header
    _
  $region3: #{forward.9} parent=0 // loop_header
    %s9 = sphi 0, %s13
    %p10 = scmp.ge.s32.totalorder %s9, 4
    %s19 = sphi 0, %s21
    %s22 = sphi 0, %s19
    %s23 = sphi 0, %s22
    %s39 = sphi 0, %s23
    %s43 = sphi 0, %s43
    %s45 = sphi 0, %s43
    %s46 = sphi 0, %s45
    %s60 = sphi 0, %s46
    %s64 = sphi 0, %s64
    %s66 = sphi 0, %s64
    %s67 = sphi 0, %s66
    %s81 = sphi 0, %s67
    %s87 = sphi 0, %s89
    %s90 = sphi 0, %s87
    %s91 = sphi 0, %s90
    %s107 = sphi 0, %s91
  $region4: #{forward.9} parent=0 // loop_header_branch
    %12 = sbr.rel (%p10) target = $region8
  $region5: #{forward.9} parent=0 // loop_body
    %s14 = ssub.s32 %s9, 1
    %s15 = ssub.s32 %s9, 2
    %s16 = sadd.s32 %s9, 1
    %s17 = ssub.s32 %s9, %s16
    %p18 = scmp.eq.s32.totalorder %s17, 0
    %s20 = sadd.s32 %s19, 1
    %s21 = scalar_select %p18, %s19, %s20
    %p24 = pneg %p18
    %p25 = scmp.eq.s32.totalorder %s9, 1
    %p26 = por %p24, %p25
    %p27 = scmp.ne.s32.totalorder %s19, %s22
    %p28 = scmp.eq.s32.totalorder %s9, 0
    %p29 = por %p27, %p28
    %p30 = scmp.ne.s32.totalorder %s19, %s22
    %p31 = scmp.eq.s32.totalorder %s14, 1
    %p32 = por %p30, %p31
    %p33 = scmp.ne.s32.totalorder %s22, %s23
    %p34 = scmp.eq.s32.totalorder %s14, 0
    %p35 = por %p33, %p34
    %p36 = scmp.ne.s32.totalorder %s22, %s23
    %p37 = scmp.eq.s32.totalorder %s15, 1
    %p38 = por %p36, %p37
    %p40 = scmp.ne.s32.totalorder %s23, %s39
    %p41 = scmp.eq.s32.totalorder %s15, 0
    %p42 = por %p40, %p41
    %s44 = sadd.s32 %s43, 1
    %p47 = scmp.eq.s32.totalorder %s9, 1
    %p48 = scmp.ne.s32.totalorder %s43, %s45
    %p49 = scmp.eq.s32.totalorder %s9, 0
    %p50 = por %p48, %p49
    %p51 = scmp.ne.s32.totalorder %s43, %s45
    %p52 = scmp.eq.s32.totalorder %s14, 1
    %p53 = por %p51, %p52
    %p54 = scmp.ne.s32.totalorder %s45, %s46
    %p55 = scmp.eq.s32.totalorder %s14, 0
    %p56 = por %p54, %p55
    %p57 = scmp.ne.s32.totalorder %s45, %s46
    %p58 = scmp.eq.s32.totalorder %s15, 1
    %p59 = por %p57, %p58
    %p61 = scmp.ne.s32.totalorder %s46, %s60
    %p62 = scmp.eq.s32.totalorder %s15, 0
    %p63 = por %p61, %p62
    %s65 = sadd.s32 %s64, 1
    %p68 = scmp.eq.s32.totalorder %s9, 1
    %p69 = scmp.ne.s32.totalorder %s64, %s66
    %p70 = scmp.eq.s32.totalorder %s9, 0
    %p71 = por %p69, %p70
    %p72 = scmp.ne.s32.totalorder %s64, %s66
    %p73 = scmp.eq.s32.totalorder %s14, 1
    %p74 = por %p72, %p73
    %p75 = scmp.ne.s32.totalorder %s66, %s67
    %p76 = scmp.eq.s32.totalorder %s14, 0
    %p77 = por %p75, %p76
    %p78 = scmp.ne.s32.totalorder %s66, %s67
    %p79 = scmp.eq.s32.totalorder %s15, 1
    %p80 = por %p78, %p79
    %p82 = scmp.ne.s32.totalorder %s67, %s81
    %p83 = scmp.eq.s32.totalorder %s15, 0
    %p84 = por %p82, %p83
    %s85 = ssub.s32 %s9, %s16
    %p86 = scmp.eq.s32.totalorder %s85, 0
    %s88 = sadd.s32 %s87, 1
    %s89 = scalar_select %p86, %s87, %s88
    %p92 = pneg %p86
    %p93 = scmp.eq.s32.totalorder %s9, 1
    %p94 = por %p92, %p93
    %p95 = scmp.ne.s32.totalorder %s87, %s90
    %p96 = scmp.eq.s32.totalorder %s9, 0
    %p97 = por %p95, %p96
    %p98 = scmp.ne.s32.totalorder %s87, %s90
    %p99 = scmp.eq.s32.totalorder %s14, 1
    %p100 = por %p98, %p99
    %p101 = scmp.ne.s32.totalorder %s90, %s91
    %p102 = scmp.eq.s32.totalorder %s14, 0
    %p103 = por %p101, %p102
    %p104 = scmp.ne.s32.totalorder %s90, %s91
    %p105 = scmp.eq.s32.totalorder %s15, 1
    %p106 = por %p104, %p105
    %p108 = scmp.ne.s32.totalorder %s91, %s107
    %p109 = scmp.eq.s32.totalorder %s15, 0
    %p110 = por %p108, %p109
    %p111 = scmp.le.s32.totalorder 1, %s9
    %p112 = scmp.lt.s32.totalorder %s9, 3
    %p113 = pnand %p111, %p112
    %p114 = pneg %p113
    // Predicated region
    $region9: #{forward.9} parent=5 // pred_check
      _
    $region10: #{forward.9} parent=5 // pred_check_branch
      %116 = sbr.rel (%p113) target = $region12
    $region11: #{forward.9} parent=5 // pred_region
      %s117 = ssub.s32 %s9, 1
      // Predicated region
      $region13: #{forward.9} parent=11 // pred_check
        %p118 = pneg %p56
      $region14: #{forward.9} parent=11 // pred_check_branch
        %120 = sbr.rel (%p118) target = $region16
      $region15: #{forward.9} parent=11 // pred_region
        _
      $region16: #{forward.9} parent=11 // pred_fallthru
        _
      // Predicated region
      $region17: #{forward.9} parent=11 // pred_check
        %p121 = pneg %p77
      $region18: #{forward.9} parent=11 // pred_check_branch
        %123 = sbr.rel (%p121) target = $region20
      $region19: #{forward.9} parent=11 // pred_region
        _
      $region20: #{forward.9} parent=11 // pred_fallthru
        _
    $region12: #{forward.9} parent=5 // pred_fallthru
      _
    %p124 = scmp.lt.s32.totalorder %s9, 2
    // Predicated region
    $region21: #{forward.9} parent=5 // pred_check
      %p125 = pneg %p124
    $region22: #{forward.9} parent=5 // pred_check_branch
      %127 = sbr.rel (%p125) target = $region24
    $region23: #{forward.9} parent=5 // pred_region
      // Predicated region
      $region25: #{forward.9} parent=23 // pred_check
        %p128 = pneg %p29
      $region26: #{forward.9} parent=23 // pred_check_branch
        %130 = sbr.rel (%p128) target = $region28
      $region27: #{forward.9} parent=23 // pred_region
        %p131 = scmp.lt.s32.totalorder %s9, 1
        %s132 = scalar_select %p131, %s9, 1
        %s133 = smul.addr %s132, 72
        %s134 = smul.addr %s133, 4
        %s135 = scalar_lea.vmem %s0, %s134
      $region28: #{forward.9} parent=23 // pred_fallthru
        _
    $region24: #{forward.9} parent=5 // pred_fallthru
      _
    %p136 = scmp.le.s32.totalorder 1, %s9
    %p137 = scmp.lt.s32.totalorder %s9, 3
    %p138 = pnand %p136, %p137
    %p139 = pneg %p138
    // Predicated region
    $region29: #{forward.9} parent=5 // pred_check
      _
    $region30: #{forward.9} parent=5 // pred_check_branch
      %141 = sbr.rel (%p138) target = $region32
    $region31: #{forward.9} parent=5 // pred_region
      %s142 = ssub.s32 %s9, 1
      %p143 = scmp.lt.s32.totalorder %s14, 1
      %s144 = scalar_select %p143, %s14, 1
      %s145 = smul.addr %s144, 72
      %s146 = smul.addr %s145, 4
      %s147 = scalar_lea.vmem %s0, %s146
      %p148 = pneg %p35
      %p149 = pneg %p32
      %p150 = pneg %p56
      %p151 = pneg %p53
      %p152 = pneg %p77
      %p153 = pneg %p74
      %p154 = pneg %p103
      %p155 = pneg %p100
      %p156 = scmp.lt.s32.totalorder %s14, 1
      %s157 = scalar_select %p156, %s14, 1
      %s158 = smul.addr %s157, 24
      %s159 = smul.addr %s158, 8
      %s160 = scalar_lea.vmem %s3, %s159
      %p161 = scmp.lt.s32.totalorder %s14, 1
      %s162 = scalar_select %p161, %s14, 1
      %s163 = smul.addr %s162, 72
      %s164 = smul.addr %s163, 4
      %s165 = scalar_lea.vmem %s0, %s164
      %p166 = scmp.lt.s32.totalorder %s14, 1
      %s167 = scalar_select %p166, %s14, 1
      %s168 = smul.addr %s167, 24
      %s169 = smul.addr %s168, 8
      %s170 = scalar_lea.vmem %s3, %s169
      %v172 = vld [vmem:[%s165] sm:$0xff]
      %v173 = vld [vmem:[%s165 + $0x8] sm:$0xf]
      %v174 = vld [vmem:[%s165 + $0xc] sm:$0xff]
      %v175 = vld [vmem:[%s165 + $0x14] sm:$0xf]
      %v176 = vld [vmem:[%s165 + $0x18] sm:$0xff]
      %v177 = vld [vmem:[%s165 + $0x20] sm:$0xf]
      %v178 = vld [vmem:[%s165 + $0x24] sm:$0xff]
      %v179 = vld [vmem:[%s165 + $0x2c] sm:$0xf]
      %v180 = vld [vmem:[%s165 + $0x30] sm:$0xff]
      %v181 = vld [vmem:[%s165 + $0x38] sm:$0xf]
      %v182 = vld [vmem:[%s165 + $0x3c] sm:$0xff]
      %v183 = vld [vmem:[%s165 + $0x44] sm:$0xf]
      %v184 = vld [vmem:[%s165 + $0x48] sm:$0xff]
      %v185 = vld [vmem:[%s165 + $0x50] sm:$0xf]
      %v186 = vld [vmem:[%s165 + $0x54] sm:$0xff]
      %v187 = vld [vmem:[%s165 + $0x5c] sm:$0xf]
      %v188 = vld [vmem:[%s165 + $0x60] sm:$0xff]
      %v189 = vld [vmem:[%s165 + $0x68] sm:$0xf]
      %v190 = vld [vmem:[%s165 + $0x6c] sm:$0xff]
      %v191 = vld [vmem:[%s165 + $0x74] sm:$0xf]
      %v192 = vld [vmem:[%s165 + $0x78] sm:$0xff]
      %v193 = vld [vmem:[%s165 + $0x80] sm:$0xf]
      %v194 = vld [vmem:[%s165 + $0x84] sm:$0xff]
      %v195 = vld [vmem:[%s165 + $0x8c] sm:$0xf]
      %v196 = vld [vmem:[%s165 + $0x90] sm:$0xff]
      %v197 = vld [vmem:[%s165 + $0x98] sm:$0xf]
      %v198 = vld [vmem:[%s165 + $0x9c] sm:$0xff]
      %v199 = vld [vmem:[%s165 + $0xa4] sm:$0xf]
      %v200 = vld [vmem:[%s165 + $0xa8] sm:$0xff]
      %v201 = vld [vmem:[%s165 + $0xb0] sm:$0xf]
      %v202 = vld [vmem:[%s165 + $0xb4] sm:$0xff]
      %v203 = vld [vmem:[%s165 + $0xbc] sm:$0xf]
      %v204 = vld [vmem:[%s165 + $0xc0] sm:$0xff]
      %v205 = vld [vmem:[%s165 + $0xc8] sm:$0xf]
      %v206 = vld [vmem:[%s165 + $0xcc] sm:$0xff]
      %v207 = vld [vmem:[%s165 + $0xd4] sm:$0xf]
      %v208 = vld [vmem:[%s165 + $0xd8] sm:$0xff]
      %v209 = vld [vmem:[%s165 + $0xe0] sm:$0xf]
      %v210 = vld [vmem:[%s165 + $0xe4] sm:$0xff]
      %v211 = vld [vmem:[%s165 + $0xec] sm:$0xf]
      %v212 = vld [vmem:[%s165 + $0xf0] sm:$0xff]
      %v213 = vld [vmem:[%s165 + $0xf8] sm:$0xf]
      %v214 = vld [vmem:[%s165 + $0xfc] sm:$0xff]
      %v215 = vld [vmem:[%s165 + $0x104] sm:$0xf]
      %v216 = vld [vmem:[%s165 + $0x108] sm:$0xff]
      %v217 = vld [vmem:[%s165 + $0x110] sm:$0xf]
      %v218 = vld [vmem:[%s165 + $0x114] sm:$0xff]
      %v219 = vld [vmem:[%s165 + $0x11c] sm:$0xf]
      %v220 = vld [vmem:[%s1] sm:$0xff]
      %v221 = vld [vmem:[%s1 + $0x8] sm:$0xff]
      %v222 = vld [vmem:[%s1 + $0x10] sm:$0xff]
      %v223 = vld [vmem:[%s1 + $0x18] sm:$0xff]
      %v224 = vld [vmem:[%s1 + $0x20] sm:$0xff]
      %v225 = vld [vmem:[%s1 + $0x28] sm:$0xff]
      %v226 = vld [vmem:[%s1 + $0x30] sm:$0xff]
      %v227 = vld [vmem:[%s1 + $0x38] sm:$0xff]
      %v228 = vld [vmem:[%s1 + $0x40] sm:$0xff]
      %v229 = vld [vmem:[%s1 + $0x48] sm:$0xff]
      %v230 = vld [vmem:[%s1 + $0x50] sm:$0xff]
      %v231 = vld [vmem:[%s1 + $0x58] sm:$0xff]
      %v232 = vld [vmem:[%s1 + $0x60] sm:$0xff]
      %v233 = vld [vmem:[%s1 + $0x68] sm:$0xff]
      %v234 = vld [vmem:[%s1 + $0x70] sm:$0xff]
      %v235 = vld [vmem:[%s1 + $0x78] sm:$0xff]
      %v236 = vld [vmem:[%s1 + $0x80] sm:$0xff]
      %v237 = vld [vmem:[%s1 + $0x88] sm:$0xff]
      %v238 = vld [vmem:[%s1 + $0x90] sm:$0xff]
      %v239 = vld [vmem:[%s1 + $0x98] sm:$0xff]
      %v240 = vld [vmem:[%s1 + $0xa0] sm:$0xff]
      %v241 = vld [vmem:[%s1 + $0xa8] sm:$0xff]
      %v242 = vld [vmem:[%s1 + $0xb0] sm:$0xff]
      %v243 = vld [vmem:[%s1 + $0xb8] sm:$0xff]
      %v244 = vld [vmem:[%s1 + $0xc0] sm:$0xff]
      %v245 = vld [vmem:[%s1 + $0xc8] sm:$0xff]
      %v246 = vld [vmem:[%s1 + $0xd0] sm:$0xff]
      %v247 = vld [vmem:[%s1 + $0xd8] sm:$0xff]
      %v248 = vld [vmem:[%s1 + $0xe0] sm:$0xff]
      %v249 = vld [vmem:[%s1 + $0xe8] sm:$0xff]
      %v250 = vld [vmem:[%s1 + $0xf0] sm:$0xff]
      %v251 = vld [vmem:[%s1 + $0xf8] sm:$0xff]
      %v252 = vld [vmem:[%s1 + $0x100] sm:$0xff]
      %v253 = vld [vmem:[%s1 + $0x108] sm:$0xff]
      %v254 = vld [vmem:[%s1 + $0x110] sm:$0xff]
      %v255 = vld [vmem:[%s1 + $0x118] sm:$0xff]
      %v256 = vld [vmem:[%s1 + $0x120] sm:$0xff]
      %v257 = vld [vmem:[%s1 + $0x128] sm:$0xff]
      %v258 = vld [vmem:[%s1 + $0x130] sm:$0xff]
      %v259 = vld [vmem:[%s1 + $0x138] sm:$0xff]
      %v260 = vld [vmem:[%s1 + $0x140] sm:$0xff]
      %v261 = vld [vmem:[%s1 + $0x148] sm:$0xff]
      %v262 = vld [vmem:[%s1 + $0x150] sm:$0xff]
      %v263 = vld [vmem:[%s1 + $0x158] sm:$0xff]
      %v264 = vld [vmem:[%s1 + $0x160] sm:$0xff]
      %v265 = vld [vmem:[%s1 + $0x168] sm:$0xff]
      %v266 = vld [vmem:[%s1 + $0x170] sm:$0xff]
      %v267 = vld [vmem:[%s1 + $0x178] sm:$0xff]
      %v268 = vld [vmem:[%s2] sm:$0x3]
      %v270 = vlaneseq
      %v271 = vshrl.u32 %v270, 7
      %v272 = vsub.s32 0, %v271
      %v273 = vrot.slane %v268, %v272
      %v274 = vlaneseq
      %v275 = vshrl.u32 %v274, 7
      %v276 = vsub.s32 1, %v275
      %v277 = vrot.slane %v268, %v276
      %v328 = vunpack.c.l.b16 %v172
      %v329 = vunpack.c.h.b16 %v172
      %v330 = vunpack.c.l.b16 %v173
      %v331 = vunpack.c.l.b16 %v174
      %v332 = vunpack.c.h.b16 %v174
      %v333 = vunpack.c.l.b16 %v175
      %v334 = vunpack.c.l.b16 %v176
      %v335 = vunpack.c.h.b16 %v176
      %v336 = vunpack.c.l.b16 %v177
      %v337 = vunpack.c.l.b16 %v178
      %v338 = vunpack.c.h.b16 %v178
      %v339 = vunpack.c.l.b16 %v179
      %v340 = vunpack.c.l.b16 %v180
      %v341 = vunpack.c.h.b16 %v180
      %v342 = vunpack.c.l.b16 %v181
      %v343 = vunpack.c.l.b16 %v182
      %v344 = vunpack.c.h.b16 %v182
      %v345 = vunpack.c.l.b16 %v183
      %v346 = vunpack.c.l.b16 %v184
      %v347 = vunpack.c.h.b16 %v184
      %v348 = vunpack.c.l.b16 %v185
      %v349 = vunpack.c.l.b16 %v186
      %v350 = vunpack.c.h.b16 %v186
      %v351 = vunpack.c.l.b16 %v187
      %v352 = vunpack.c.l.b16 %v188
      %v353 = vunpack.c.h.b16 %v188
      %v354 = vunpack.c.l.b16 %v189
      %v355 = vunpack.c.l.b16 %v190
      %v356 = vunpack.c.h.b16 %v190
      %v357 = vunpack.c.l.b16 %v191
      %v358 = vunpack.c.l.b16 %v192
      %v359 = vunpack.c.h.b16 %v192
      %v360 = vunpack.c.l.b16 %v193
      %v361 = vunpack.c.l.b16 %v194
      %v362 = vunpack.c.h.b16 %v194
      %v363 = vunpack.c.l.b16 %v195
      %v364 = vunpack.c.l.b16 %v196
      %v365 = vunpack.c.h.b16 %v196
      %v366 = vunpack.c.l.b16 %v197
      %v367 = vunpack.c.l.b16 %v198
      %v368 = vunpack.c.h.b16 %v198
      %v369 = vunpack.c.l.b16 %v199
      %v370 = vunpack.c.l.b16 %v200
      %v371 = vunpack.c.h.b16 %v200
      %v372 = vunpack.c.l.b16 %v201
      %v373 = vunpack.c.l.b16 %v202
      %v374 = vunpack.c.h.b16 %v202
      %v375 = vunpack.c.l.b16 %v203
      %v376 = vunpack.c.l.b16 %v204
      %v377 = vunpack.c.h.b16 %v204
      %v378 = vunpack.c.l.b16 %v205
      %v379 = vunpack.c.l.b16 %v206
      %v380 = vunpack.c.h.b16 %v206
      %v381 = vunpack.c.l.b16 %v207
      %v382 = vunpack.c.l.b16 %v208
      %v383 = vunpack.c.h.b16 %v208
      %v384 = vunpack.c.l.b16 %v209
      %v385 = vunpack.c.l.b16 %v210
      %v386 = vunpack.c.h.b16 %v210
      %v387 = vunpack.c.l.b16 %v211
      %v388 = vunpack.c.l.b16 %v212
      %v389 = vunpack.c.h.b16 %v212
      %v390 = vunpack.c.l.b16 %v213
      %v391 = vunpack.c.l.b16 %v214
      %v392 = vunpack.c.h.b16 %v214
      %v393 = vunpack.c.l.b16 %v215
      %v394 = vunpack.c.l.b16 %v216
      %v395 = vunpack.c.h.b16 %v216
      %v396 = vunpack.c.l.b16 %v217
      %v397 = vunpack.c.l.b16 %v218
      %v398 = vunpack.c.h.b16 %v218
      %v399 = vunpack.c.l.b16 %v219
      %v400 = vpack.c.b16 %v331, %v328
      %v401 = vpack.c.b16 %v332, %v329
      %v402 = vpack.c.b16 %v333, %v330
      %v403 = vpack.c.b16 %v337, %v334
      %v404 = vpack.c.b16 %v338, %v335
      %v405 = vpack.c.b16 %v339, %v336
      %v406 = vpack.c.b16 %v343, %v340
      %v407 = vpack.c.b16 %v344, %v341
      %v408 = vpack.c.b16 %v345, %v342
      %v409 = vpack.c.b16 %v349, %v346
      %v410 = vpack.c.b16 %v350, %v347
      %v411 = vpack.c.b16 %v351, %v348
      %v412 = vpack.c.b16 %v355, %v352
      %v413 = vpack.c.b16 %v356, %v353
      %v414 = vpack.c.b16 %v357, %v354
      %v415 = vpack.c.b16 %v361, %v358
      %v416 = vpack.c.b16 %v362, %v359
      %v417 = vpack.c.b16 %v363, %v360
      %v418 = vpack.c.b16 %v367, %v364
      %v419 = vpack.c.b16 %v368, %v365
      %v420 = vpack.c.b16 %v369, %v366
      %v421 = vpack.c.b16 %v373, %v370
      %v422 = vpack.c.b16 %v374, %v371
      %v423 = vpack.c.b16 %v375, %v372
      %v424 = vpack.c.b16 %v379, %v376
      %v425 = vpack.c.b16 %v380, %v377
      %v426 = vpack.c.b16 %v381, %v378
      %v427 = vpack.c.b16 %v385, %v382
      %v428 = vpack.c.b16 %v386, %v383
      %v429 = vpack.c.b16 %v387, %v384
      %v430 = vpack.c.b16 %v391, %v388
      %v431 = vpack.c.b16 %v392, %v389
      %v432 = vpack.c.b16 %v393, %v390
      %v433 = vpack.c.b16 %v397, %v394
      %v434 = vpack.c.b16 %v398, %v395
      %v435 = vpack.c.b16 %v399, %v396
      %v520 = vunpack.c.l.b16 %v220
      %v521 = vunpack.c.h.b16 %v220
      %v522 = vunpack.c.l.b16 %v221
      %v523 = vunpack.c.h.b16 %v221
      %v524 = vunpack.c.l.b16 %v222
      %v525 = vunpack.c.h.b16 %v222
      %v526 = vunpack.c.l.b16 %v223
      %v527 = vunpack.c.h.b16 %v223
      %v528 = vunpack.c.l.b16 %v224
      %v529 = vunpack.c.h.b16 %v224
      %v530 = vunpack.c.l.b16 %v225
      %v531 = vunpack.c.h.b16 %v225
      %v532 = vunpack.c.l.b16 %v226
      %v533 = vunpack.c.h.b16 %v226
      %v534 = vunpack.c.l.b16 %v227
      %v535 = vunpack.c.h.b16 %v227
      %v536 = vunpack.c.l.b16 %v228
      %v537 = vunpack.c.h.b16 %v228
      %v538 = vunpack.c.l.b16 %v229
      %v539 = vunpack.c.h.b16 %v229
      %v540 = vunpack.c.l.b16 %v230
      %v541 = vunpack.c.h.b16 %v230
      %v542 = vunpack.c.l.b16 %v231
      %v543 = vunpack.c.h.b16 %v231
      %v544 = vunpack.c.l.b16 %v232
      %v545 = vunpack.c.h.b16 %v232
      %v546 = vunpack.c.l.b16 %v233
      %v547 = vunpack.c.h.b16 %v233
      %v548 = vunpack.c.l.b16 %v234
      %v549 = vunpack.c.h.b16 %v234
      %v550 = vunpack.c.l.b16 %v235
      %v551 = vunpack.c.h.b16 %v235
      %v552 = vunpack.c.l.b16 %v236
      %v553 = vunpack.c.h.b16 %v236
      %v554 = vunpack.c.l.b16 %v237
      %v555 = vunpack.c.h.b16 %v237
      %v556 = vunpack.c.l.b16 %v238
      %v557 = vunpack.c.h.b16 %v238
      %v558 = vunpack.c.l.b16 %v239
      %v559 = vunpack.c.h.b16 %v239
      %v560 = vunpack.c.l.b16 %v240
      %v561 = vunpack.c.h.b16 %v240
      %v562 = vunpack.c.l.b16 %v241
      %v563 = vunpack.c.h.b16 %v241
      %v564 = vunpack.c.l.b16 %v242
      %v565 = vunpack.c.h.b16 %v242
      %v566 = vunpack.c.l.b16 %v243
      %v567 = vunpack.c.h.b16 %v243
      %v568 = vunpack.c.l.b16 %v244
      %v569 = vunpack.c.h.b16 %v244
      %v570 = vunpack.c.l.b16 %v245
      %v571 = vunpack.c.h.b16 %v245
      %v572 = vunpack.c.l.b16 %v246
      %v573 = vunpack.c.h.b16 %v246
      %v574 = vunpack.c.l.b16 %v247
      %v575 = vunpack.c.h.b16 %v247
      %v576 = vunpack.c.l.b16 %v248
      %v577 = vunpack.c.h.b16 %v248
      %v578 = vunpack.c.l.b16 %v249
      %v579 = vunpack.c.h.b16 %v249
      %v580 = vunpack.c.l.b16 %v250
      %v581 = vunpack.c.h.b16 %v250
      %v582 = vunpack.c.l.b16 %v251
      %v583 = vunpack.c.h.b16 %v251
      %v584 = vunpack.c.l.b16 %v252
      %v585 = vunpack.c.h.b16 %v252
      %v586 = vunpack.c.l.b16 %v253
      %v587 = vunpack.c.h.b16 %v253
      %v588 = vunpack.c.l.b16 %v254
      %v589 = vunpack.c.h.b16 %v254
      %v590 = vunpack.c.l.b16 %v255
      %v591 = vunpack.c.h.b16 %v255
      %v592 = vunpack.c.l.b16 %v256
      %v593 = vunpack.c.h.b16 %v256
      %v594 = vunpack.c.l.b16 %v257
      %v595 = vunpack.c.h.b16 %v257
      %v596 = vunpack.c.l.b16 %v258
      %v597 = vunpack.c.h.b16 %v258
      %v598 = vunpack.c.l.b16 %v259
      %v599 = vunpack.c.h.b16 %v259
      %v600 = vunpack.c.l.b16 %v260
      %v601 = vunpack.c.h.b16 %v260
      %v602 = vunpack.c.l.b16 %v261
      %v603 = vunpack.c.h.b16 %v261
      %v604 = vunpack.c.l.b16 %v262
      %v605 = vunpack.c.h.b16 %v262
      %v606 = vunpack.c.l.b16 %v263
      %v607 = vunpack.c.h.b16 %v263
      %v608 = vunpack.c.l.b16 %v264
      %v609 = vunpack.c.h.b16 %v264
      %v610 = vunpack.c.l.b16 %v265
      %v611 = vunpack.c.h.b16 %v265
      %v612 = vunpack.c.l.b16 %v266
      %v613 = vunpack.c.h.b16 %v266
      %v614 = vunpack.c.l.b16 %v267
      %v615 = vunpack.c.h.b16 %v267
      %v616 = vpack.c.b16 %v522, %v520
      %v617 = vpack.c.b16 %v523, %v521
      %v618 = vpack.c.b16 %v526, %v524
      %v619 = vpack.c.b16 %v527, %v525
      %v620 = vpack.c.b16 %v530, %v528
      %v621 = vpack.c.b16 %v531, %v529
      %v622 = vpack.c.b16 %v534, %v532
      %v623 = vpack.c.b16 %v535, %v533
      %v624 = vpack.c.b16 %v538, %v536
      %v625 = vpack.c.b16 %v539, %v537
      %v626 = vpack.c.b16 %v542, %v540
      %v627 = vpack.c.b16 %v543, %v541
      %v628 = vpack.c.b16 %v546, %v544
      %v629 = vpack.c.b16 %v547, %v545
      %v630 = vpack.c.b16 %v550, %v548
      %v631 = vpack.c.b16 %v551, %v549
      %v632 = vpack.c.b16 %v554, %v552
      %v633 = vpack.c.b16 %v555, %v553
      %v634 = vpack.c.b16 %v558, %v556
      %v635 = vpack.c.b16 %v559, %v557
      %v636 = vpack.c.b16 %v562, %v560
      %v637 = vpack.c.b16 %v563, %v561
      %v638 = vpack.c.b16 %v566, %v564
      %v639 = vpack.c.b16 %v567, %v565
      %v640 = vpack.c.b16 %v570, %v568
      %v641 = vpack.c.b16 %v571, %v569
      %v642 = vpack.c.b16 %v574, %v572
      %v643 = vpack.c.b16 %v575, %v573
      %v644 = vpack.c.b16 %v578, %v576
      %v645 = vpack.c.b16 %v579, %v577
      %v646 = vpack.c.b16 %v582, %v580
      %v647 = vpack.c.b16 %v583, %v581
      %v648 = vpack.c.b16 %v586, %v584
      %v649 = vpack.c.b16 %v587, %v585
      %v650 = vpack.c.b16 %v590, %v588
      %v651 = vpack.c.b16 %v591, %v589
      %v652 = vpack.c.b16 %v594, %v592
      %v653 = vpack.c.b16 %v595, %v593
      %v654 = vpack.c.b16 %v598, %v596
      %v655 = vpack.c.b16 %v599, %v597
      %v656 = vpack.c.b16 %v602, %v600
      %v657 = vpack.c.b16 %v603, %v601
      %v658 = vpack.c.b16 %v606, %v604
      %v659 = vpack.c.b16 %v607, %v605
      %v660 = vpack.c.b16 %v610, %v608
      %v661 = vpack.c.b16 %v611, %v609
      %v662 = vpack.c.b16 %v614, %v612
      %v663 = vpack.c.b16 %v615, %v613
      %712 = vmatprep.subr.bf16.mxu0 %v617
      %713 = vmatpush1.bf16.msra.mxu0 %v616
      %714 = vmatprep.subr.bf16.mxu0 %v619
      %715 = vmatpush1.bf16.msra.mxu0 %v618
      %716 = vmatprep.subr.bf16.mxu0 %v621
      %717 = vmatpush1.bf16.msra.mxu0 %v620
      %718 = vmatprep.subr.bf16.mxu0 %v623
      %719 = vmatpush1.bf16.msra.mxu0 %v622
      %720 = vmatprep.subr.bf16.mxu0 %v625
      %721 = vmatpush1.bf16.msra.mxu0 %v624
      %722 = vmatprep.subr.bf16.mxu0 %v627
      %723 = vmatpush1.bf16.msra.mxu0 %v626
      %724 = vmatprep.subr.bf16.mxu0 %v629
      %725 = vmatpush1.bf16.msra.mxu0 %v628
      %726 = vmatprep.subr.bf16.mxu0 %v631
      %727 = vmatpush1.bf16.msra.mxu0 %v630
      %728 = vmatprep.subr.bf16.mxu0 %v633
      %729 = vmatpush1.bf16.msra.mxu0 %v632
      %730 = vmatprep.subr.bf16.mxu0 %v635
      %731 = vmatpush1.bf16.msra.mxu0 %v634
      %732 = vmatprep.subr.bf16.mxu0 %v637
      %733 = vmatpush1.bf16.msra.mxu0 %v636
      %734 = vmatprep.subr.bf16.mxu0 %v639
      %735 = vmatpush1.bf16.msra.mxu0 %v638
      %736 = vmatprep.subr.bf16.mxu0 %v641
      %737 = vmatpush1.bf16.msra.mxu0 %v640
      %738 = vmatprep.subr.bf16.mxu0 %v643
      %739 = vmatpush1.bf16.msra.mxu0 %v642
      %740 = vmatprep.subr.bf16.mxu0 %v645
      %741 = vmatpush1.bf16.msra.mxu0 %v644
      %742 = vmatprep.subr.bf16.mxu0 %v647
      %743 = vmatpush1.bf16.msra.mxu0 %v646
      %744 = vmatprep.mubr.bf16.mxu0 %v401
      %745 = vmatmul.mubr.bf16.gmra.mrb[0].mxu0 %v400
      %v746 = vpop.f32.mrb[0].mxu0
      %v747 = vadd.f32 %v273, %v746
      %v748 = vpop.f32.mrb[0].mxu0
      %v749 = vadd.f32 %v277, %v748
      %v750 = vpop.f32.mrb[0].mxu0
      %v751 = vadd.f32 %v273, %v750
      %v752 = vpop.f32.mrb[0].mxu0
      %v753 = vadd.f32 %v277, %v752
      %754 = vmatprep.mubr.bf16.mxu0 %v404
      %755 = vmatmul.mubr.bf16.gmra.mrb[0].mxu0 %v403
      %v756 = vpop.f32.mrb[0].mxu0
      %v757 = vadd.f32 %v273, %v756
      %v758 = vpop.f32.mrb[0].mxu0
      %v759 = vadd.f32 %v277, %v758
      %v760 = vpop.f32.mrb[0].mxu0
      %v761 = vadd.f32 %v273, %v760
      %v762 = vpop.f32.mrb[0].mxu0
      %v763 = vadd.f32 %v277, %v762
      %764 = vmatprep.mubr.bf16.mxu0 %v407
      %765 = vmatmul.mubr.bf16.gmra.mrb[0].mxu0 %v406
      %v766 = vpop.f32.mrb[0].mxu0
      %v767 = vadd.f32 %v273, %v766
      %v768 = vpop.f32.mrb[0].mxu0
      %v769 = vadd.f32 %v277, %v768
      %v770 = vpop.f32.mrb[0].mxu0
      %v771 = vadd.f32 %v273, %v770
      %v772 = vpop.f32.mrb[0].mxu0
      %v773 = vadd.f32 %v277, %v772
      %774 = vmatprep.mubr.bf16.mxu0 %v410
      %775 = vmatmul.mubr.bf16.gmra.mrb[0].mxu0 %v409
      %v776 = vpop.f32.mrb[0].mxu0
      %v777 = vadd.f32 %v273, %v776
      %v778 = vpop.f32.mrb[0].mxu0
      %v779 = vadd.f32 %v277, %v778
      %v780 = vpop.f32.mrb[0].mxu0
      %v781 = vadd.f32 %v273, %v780
      %v782 = vpop.f32.mrb[0].mxu0
      %v783 = vadd.f32 %v277, %v782
      %784 = vmatprep.mubr.bf16.mxu0 %v413
      %785 = vmatmul.mubr.bf16.gmra.mrb[0].mxu0 %v412
      %v786 = vpop.f32.mrb[0].mxu0
      %v787 = vadd.f32 %v273, %v786
      %v788 = vpop.f32.mrb[0].mxu0
      %v789 = vadd.f32 %v277, %v788
      %v790 = vpop.f32.mrb[0].mxu0
      %v791 = vadd.f32 %v273, %v790
      %v792 = vpop.f32.mrb[0].mxu0
      %v793 = vadd.f32 %v277, %v792
      %794 = vmatprep.mubr.bf16.mxu0 %v416
      %795 = vmatmul.mubr.bf16.gmra.mrb[0].mxu0 %v415
      %v796 = vpop.f32.mrb[0].mxu0
      %v797 = vadd.f32 %v273, %v796
      %v798 = vpop.f32.mrb[0].mxu0
      %v799 = vadd.f32 %v277, %v798
      %v800 = vpop.f32.mrb[0].mxu0
      %v801 = vadd.f32 %v273, %v800
      %v802 = vpop.f32.mrb[0].mxu0
      %v803 = vadd.f32 %v277, %v802
      %804 = vmatprep.mubr.bf16.mxu0 %v419
      %805 = vmatmul.mubr.bf16.gmra.mrb[0].mxu0 %v418
      %v806 = vpop.f32.mrb[0].mxu0
      %v807 = vadd.f32 %v273, %v806
      %v808 = vpop.f32.mrb[0].mxu0
      %v809 = vadd.f32 %v277, %v808
      %v810 = vpop.f32.mrb[0].mxu0
      %v811 = vadd.f32 %v273, %v810
      %v812 = vpop.f32.mrb[0].mxu0
      %v813 = vadd.f32 %v277, %v812
      %814 = vmatprep.mubr.bf16.mxu0 %v422
      %815 = vmatmul.mubr.bf16.gmra.mrb[0].mxu0 %v421
      %v816 = vpop.f32.mrb[0].mxu0
      %v817 = vadd.f32 %v273, %v816
      %v818 = vpop.f32.mrb[0].mxu0
      %v819 = vadd.f32 %v277, %v818
      %v820 = vpop.f32.mrb[0].mxu0
      %v821 = vadd.f32 %v273, %v820
      %v822 = vpop.f32.mrb[0].mxu0
      %v823 = vadd.f32 %v277, %v822
      %824 = vmatprep.mubr.bf16.mxu0 %v425
      %825 = vmatmul.mubr.bf16.gmra.mrb[0].mxu0 %v424
      %v826 = vpop.f32.mrb[0].mxu0
      %v827 = vadd.f32 %v273, %v826
      %v828 = vpop.f32.mrb[0].mxu0
      %v829 = vadd.f32 %v277, %v828
      %v830 = vpop.f32.mrb[0].mxu0
      %v831 = vadd.f32 %v273, %v830
      %v832 = vpop.f32.mrb[0].mxu0
      %v833 = vadd.f32 %v277, %v832
      %834 = vmatprep.mubr.bf16.mxu0 %v428
      %835 = vmatmul.mubr.bf16.gmra.mrb[0].mxu0 %v427
      %v836 = vpop.f32.mrb[0].mxu0
      %v837 = vadd.f32 %v273, %v836
      %v838 = vpop.f32.mrb[0].mxu0
      %v839 = vadd.f32 %v277, %v838
      %v840 = vpop.f32.mrb[0].mxu0
      %v841 = vadd.f32 %v273, %v840
      %v842 = vpop.f32.mrb[0].mxu0
      %v843 = vadd.f32 %v277, %v842
      %844 = vmatprep.mubr.bf16.mxu0 %v431
      %845 = vmatmul.mubr.bf16.gmra.mrb[0].mxu0 %v430
      %v846 = vpop.f32.mrb[0].mxu0
      %v847 = vadd.f32 %v273, %v846
      %v848 = vpop.f32.mrb[0].mxu0
      %v849 = vadd.f32 %v277, %v848
      %v850 = vpop.f32.mrb[0].mxu0
      %v851 = vadd.f32 %v273, %v850
      %v852 = vpop.f32.mrb[0].mxu0
      %v853 = vadd.f32 %v277, %v852
      %854 = vmatprep.mubr.bf16.mxu0 %v434
      %855 = vmatmul.mubr.bf16.gmra.mrb[0].mxu0 %v433
      %v856 = vpop.f32.mrb[0].mxu0
      %v857 = vadd.f32 %v273, %v856
      %v858 = vpop.f32.mrb[0].mxu0
      %v859 = vadd.f32 %v277, %v858
      %v860 = vpop.f32.mrb[0].mxu0
      %v861 = vadd.f32 %v273, %v860
      %v862 = vpop.f32.mrb[0].mxu0
      %v863 = vadd.f32 %v277, %v862
      %864 = vdwg.mxu0
      %865 = vmatprep.subr.bf16.mxu0 %v649
      %866 = vmatpush1.bf16.msra.mxu0 %v648
      %867 = vmatprep.subr.bf16.mxu0 %v651
      %868 = vmatpush1.bf16.msra.mxu0 %v650
      %869 = vmatprep.subr.bf16.mxu0 %v653
      %870 = vmatpush1.bf16.msra.mxu0 %v652
      %871 = vmatprep.subr.bf16.mxu0 %v655
      %872 = vmatpush1.bf16.msra.mxu0 %v654
      %873 = vmatprep.subr.bf16.mxu0 %v657
      %874 = vmatpush1.bf16.msra.mxu0 %v656
      %875 = vmatprep.subr.bf16.mxu0 %v659
      %876 = vmatpush1.bf16.msra.mxu0 %v658
      %877 = vmatprep.subr.bf16.mxu0 %v661
      %878 = vmatpush1.bf16.msra.mxu0 %v660
      %879 = vmatprep.subr.bf16.mxu0 %v663
      %880 = vmatpush1.bf16.msra.mxu0 %v662
      %881 = vmatprep.subr.bf16.mxu0 0
      %882 = vmatpush1.bf16.msra.mxu0 0
      %883 = vmatprep.subr.bf16.mxu0 0
      %884 = vmatpush1.bf16.msra.mxu0 0
      %885 = vmatprep.subr.bf16.mxu0 0
      %886 = vmatpush1.bf16.msra.mxu0 0
      %887 = vmatprep.subr.bf16.mxu0 0
      %888 = vmatpush1.bf16.msra.mxu0 0
      %889 = vmatprep.subr.bf16.mxu0 0
      %890 = vmatpush1.bf16.msra.mxu0 0
      %891 = vmatprep.subr.bf16.mxu0 0
      %892 = vmatpush1.bf16.msra.mxu0 0
      %893 = vmatprep.subr.bf16.mxu0 0
      %894 = vmatpush1.bf16.msra.mxu0 0
      %895 = vmatprep.subr.bf16.mxu0 0
      %896 = vmatpush1.bf16.msra.mxu0 0
      %897 = vmatprep.mubr.bf16.mxu0 0
      %898 = vmatmul.mubr.bf16.gmra.mrb[0].mxu0 %v402
      %v899 = vpop.f32.mrb[0].mxu0
      %v900 = vadd.f32 %v747, %v899
      %v901 = vpop.f32.mrb[0].mxu0
      %v902 = vadd.f32 %v749, %v901
      %v903 = vpop.f32.mrb[0].mxu0
      %v904 = vadd.f32 %v751, %v903
      %v905 = vpop.f32.mrb[0].mxu0
      %v906 = vadd.f32 %v753, %v905
      %907 = vmatprep.mubr.bf16.mxu0 0
      %908 = vmatmul.mubr.bf16.gmra.mrb[0].mxu0 %v405
      %v909 = vpop.f32.mrb[0].mxu0
      %v910 = vadd.f32 %v757, %v909
      %v911 = vpop.f32.mrb[0].mxu0
      %v912 = vadd.f32 %v759, %v911
      %v913 = vpop.f32.mrb[0].mxu0
      %v914 = vadd.f32 %v761, %v913
      %v915 = vpop.f32.mrb[0].mxu0
      %v916 = vadd.f32 %v763, %v915
      %917 = vmatprep.mubr.bf16.mxu0 0
      %918 = vmatmul.mubr.bf16.gmra.mrb[0].mxu0 %v408
      %v919 = vpop.f32.mrb[0].mxu0
      %v920 = vadd.f32 %v767, %v919
      %v921 = vpop.f32.mrb[0].mxu0
      %v922 = vadd.f32 %v769, %v921
      %v923 = vpop.f32.mrb[0].mxu0
      %v924 = vadd.f32 %v771, %v923
      %v925 = vpop.f32.mrb[0].mxu0
      %v926 = vadd.f32 %v773, %v925
      %927 = vmatprep.mubr.bf16.mxu0 0
      %928 = vmatmul.mubr.bf16.gmra.mrb[0].mxu0 %v411
      %v929 = vpop.f32.mrb[0].mxu0
      %v930 = vadd.f32 %v777, %v929
      %v931 = vpop.f32.mrb[0].mxu0
      %v932 = vadd.f32 %v779, %v931
      %v933 = vpop.f32.mrb[0].mxu0
      %v934 = vadd.f32 %v781, %v933
      %v935 = vpop.f32.mrb[0].mxu0
      %v936 = vadd.f32 %v783, %v935
      %937 = vmatprep.mubr.bf16.mxu0 0
      %938 = vmatmul.mubr.bf16.gmra.mrb[0].mxu0 %v414
      %v939 = vpop.f32.mrb[0].mxu0
      %v940 = vadd.f32 %v787, %v939
      %v941 = vpop.f32.mrb[0].mxu0
      %v942 = vadd.f32 %v789, %v941
      %v943 = vpop.f32.mrb[0].mxu0
      %v944 = vadd.f32 %v791, %v943
      %v945 = vpop.f32.mrb[0].mxu0
      %v946 = vadd.f32 %v793, %v945
      %947 = vmatprep.mubr.bf16.mxu0 0
      %948 = vmatmul.mubr.bf16.gmra.mrb[0].mxu0 %v417
      %v949 = vpop.f32.mrb[0].mxu0
      %v950 = vadd.f32 %v797, %v949
      %v951 = vpop.f32.mrb[0].mxu0
      %v952 = vadd.f32 %v799, %v951
      %v953 = vpop.f32.mrb[0].mxu0
      %v954 = vadd.f32 %v801, %v953
      %v955 = vpop.f32.mrb[0].mxu0
      %v956 = vadd.f32 %v803, %v955
      %957 = vmatprep.mubr.bf16.mxu0 0
      %958 = vmatmul.mubr.bf16.gmra.mrb[0].mxu0 %v420
      %v959 = vpop.f32.mrb[0].mxu0
      %v960 = vadd.f32 %v807, %v959
      %v961 = vpop.f32.mrb[0].mxu0
      %v962 = vadd.f32 %v809, %v961
      %v963 = vpop.f32.mrb[0].mxu0
      %v964 = vadd.f32 %v811, %v963
      %v965 = vpop.f32.mrb[0].mxu0
      %v966 = vadd.f32 %v813, %v965
      %967 = vmatprep.mubr.bf16.mxu0 0
      %968 = vmatmul.mubr.bf16.gmra.mrb[0].mxu0 %v423
      %v969 = vpop.f32.mrb[0].mxu0
      %v970 = vadd.f32 %v817, %v969
      %v971 = vpop.f32.mrb[0].mxu0
      %v972 = vadd.f32 %v819, %v971
      %v973 = vpop.f32.mrb[0].mxu0
      %v974 = vadd.f32 %v821, %v973
      %v975 = vpop.f32.mrb[0].mxu0
      %v976 = vadd.f32 %v823, %v975
      %977 = vmatprep.mubr.bf16.mxu0 0
      %978 = vmatmul.mubr.bf16.gmra.mrb[0].mxu0 %v426
      %v979 = vpop.f32.mrb[0].mxu0
      %v980 = vadd.f32 %v827, %v979
      %v981 = vpop.f32.mrb[0].mxu0
      %v982 = vadd.f32 %v829, %v981
      %v983 = vpop.f32.mrb[0].mxu0
      %v984 = vadd.f32 %v831, %v983
      %v985 = vpop.f32.mrb[0].mxu0
      %v986 = vadd.f32 %v833, %v985
      %987 = vmatprep.mubr.bf16.mxu0 0
      %988 = vmatmul.mubr.bf16.gmra.mrb[0].mxu0 %v429
      %v989 = vpop.f32.mrb[0].mxu0
      %v990 = vadd.f32 %v837, %v989
      %v991 = vpop.f32.mrb[0].mxu0
      %v992 = vadd.f32 %v839, %v991
      %v993 = vpop.f32.mrb[0].mxu0
      %v994 = vadd.f32 %v841, %v993
      %v995 = vpop.f32.mrb[0].mxu0
      %v996 = vadd.f32 %v843, %v995
      %997 = vmatprep.mubr.bf16.mxu0 0
      %998 = vmatmul.mubr.bf16.gmra.mrb[0].mxu0 %v432
      %v999 = vpop.f32.mrb[0].mxu0
      %v1000 = vadd.f32 %v847, %v999
      %v1001 = vpop.f32.mrb[0].mxu0
      %v1002 = vadd.f32 %v849, %v1001
      %v1003 = vpop.f32.mrb[0].mxu0
      %v1004 = vadd.f32 %v851, %v1003
      %v1005 = vpop.f32.mrb[0].mxu0
      %v1006 = vadd.f32 %v853, %v1005
      %1007 = vmatprep.mubr.bf16.mxu0 0
      %1008 = vmatmul.mubr.bf16.gmra.mrb[0].mxu0 %v435
      %v1009 = vpop.f32.mrb[0].mxu0
      %v1010 = vadd.f32 %v857, %v1009
      %v1011 = vpop.f32.mrb[0].mxu0
      %v1012 = vadd.f32 %v859, %v1011
      %v1013 = vpop.f32.mrb[0].mxu0
      %v1014 = vadd.f32 %v861, %v1013
      %v1015 = vpop.f32.mrb[0].mxu0
      %v1016 = vadd.f32 %v863, %v1015
      %1017 = vdwg.mxu0
      %1042 = vrot.lane.b32.xlu0 %v900, 64
      %v1043 = vpop.permute.xlu0 %1042
      %1044 = vrot.lane.b32.xlu0 %v904, 64
      %v1045 = vpop.permute.xlu0 %1044
      %1046 = vrot.lane.b32.xlu0 %v910, 64
      %v1047 = vpop.permute.xlu0 %1046
      %1048 = vrot.lane.b32.xlu0 %v914, 64
      %v1049 = vpop.permute.xlu0 %1048
      %1050 = vrot.lane.b32.xlu0 %v920, 64
      %v1051 = vpop.permute.xlu0 %1050
      %1052 = vrot.lane.b32.xlu0 %v924, 64
      %v1053 = vpop.permute.xlu0 %1052
      %1054 = vrot.lane.b32.xlu0 %v930, 64
      %v1055 = vpop.permute.xlu0 %1054
      %1056 = vrot.lane.b32.xlu0 %v934, 64
      %v1057 = vpop.permute.xlu0 %1056
      %1058 = vrot.lane.b32.xlu0 %v940, 64
      %v1059 = vpop.permute.xlu0 %1058
      %1060 = vrot.lane.b32.xlu0 %v944, 64
      %v1061 = vpop.permute.xlu0 %1060
      %1062 = vrot.lane.b32.xlu0 %v950, 64
      %v1063 = vpop.permute.xlu0 %1062
      %1064 = vrot.lane.b32.xlu0 %v954, 64
      %v1065 = vpop.permute.xlu0 %1064
      %1066 = vrot.lane.b32.xlu0 %v960, 64
      %v1067 = vpop.permute.xlu0 %1066
      %1068 = vrot.lane.b32.xlu0 %v964, 64
      %v1069 = vpop.permute.xlu0 %1068
      %1070 = vrot.lane.b32.xlu0 %v970, 64
      %v1071 = vpop.permute.xlu0 %1070
      %1072 = vrot.lane.b32.xlu0 %v974, 64
      %v1073 = vpop.permute.xlu0 %1072
      %1074 = vrot.lane.b32.xlu0 %v980, 64
      %v1075 = vpop.permute.xlu0 %1074
      %1076 = vrot.lane.b32.xlu0 %v984, 64
      %v1077 = vpop.permute.xlu0 %1076
      %1078 = vrot.lane.b32.xlu0 %v990, 64
      %v1079 = vpop.permute.xlu0 %1078
      %1080 = vrot.lane.b32.xlu0 %v994, 64
      %v1081 = vpop.permute.xlu0 %1080
      %1082 = vrot.lane.b32.xlu0 %v1000, 64
      %v1083 = vpop.permute.xlu0 %1082
      %1084 = vrot.lane.b32.xlu0 %v1004, 64
      %v1085 = vpop.permute.xlu0 %1084
      %1086 = vrot.lane.b32.xlu0 %v1010, 64
      %v1087 = vpop.permute.xlu0 %1086
      %1088 = vrot.lane.b32.xlu0 %v1014, 64
      %v1089 = vpop.permute.xlu0 %1088
      %v1114 = vmax.f32 %v900, %v1043
      %v1115 = vmax.f32 %v904, %v1045
      %v1116 = vmax.f32 %v910, %v1047
      %v1117 = vmax.f32 %v914, %v1049
      %v1118 = vmax.f32 %v920, %v1051
      %v1119 = vmax.f32 %v924, %v1053
      %v1120 = vmax.f32 %v930, %v1055
      %v1121 = vmax.f32 %v934, %v1057
      %v1122 = vmax.f32 %v940, %v1059
      %v1123 = vmax.f32 %v944, %v1061
      %v1124 = vmax.f32 %v950, %v1063
      %v1125 = vmax.f32 %v954, %v1065
      %v1126 = vmax.f32 %v960, %v1067
      %v1127 = vmax.f32 %v964, %v1069
      %v1128 = vmax.f32 %v970, %v1071
      %v1129 = vmax.f32 %v974, %v1073
      %v1130 = vmax.f32 %v980, %v1075
      %v1131 = vmax.f32 %v984, %v1077
      %v1132 = vmax.f32 %v990, %v1079
      %v1133 = vmax.f32 %v994, %v1081
      %v1134 = vmax.f32 %v1000, %v1083
      %v1135 = vmax.f32 %v1004, %v1085
      %v1136 = vmax.f32 %v1010, %v1087
      %v1137 = vmax.f32 %v1014, %v1089
      %v1138 = vmax.f32 %v1114, %v902
      %v1139 = vmax.f32 %v1115, %v906
      %v1140 = vmax.f32 %v1116, %v912
      %v1141 = vmax.f32 %v1117, %v916
      %v1142 = vmax.f32 %v1118, %v922
      %v1143 = vmax.f32 %v1119, %v926
      %v1144 = vmax.f32 %v1120, %v932
      %v1145 = vmax.f32 %v1121, %v936
      %v1146 = vmax.f32 %v1122, %v942
      %v1147 = vmax.f32 %v1123, %v946
      %v1148 = vmax.f32 %v1124, %v952
      %v1149 = vmax.f32 %v1125, %v956
      %v1150 = vmax.f32 %v1126, %v962
      %v1151 = vmax.f32 %v1127, %v966
      %v1152 = vmax.f32 %v1128, %v972
      %v1153 = vmax.f32 %v1129, %v976
      %v1154 = vmax.f32 %v1130, %v982
      %v1155 = vmax.f32 %v1131, %v986
      %v1156 = vmax.f32 %v1132, %v992
      %v1157 = vmax.f32 %v1133, %v996
      %v1158 = vmax.f32 %v1134, %v1002
      %v1159 = vmax.f32 %v1135, %v1006
      %v1160 = vmax.f32 %v1136, %v1012
      %v1161 = vmax.f32 %v1137, %v1016
      %v1162 = vmax.f32 %v1138, 0.0
      %v1163 = vmax.f32 %v1139, 0.0
      %v1164 = vmax.f32 %v1140, 0.0
      %v1165 = vmax.f32 %v1141, 0.0
      %v1166 = vmax.f32 %v1142, 0.0
      %v1167 = vmax.f32 %v1143, 0.0
      %v1168 = vmax.f32 %v1144, 0.0
      %v1169 = vmax.f32 %v1145, 0.0
      %v1170 = vmax.f32 %v1146, 0.0
      %v1171 = vmax.f32 %v1147, 0.0
      %v1172 = vmax.f32 %v1148, 0.0
      %v1173 = vmax.f32 %v1149, 0.0
      %v1174 = vmax.f32 %v1150, 0.0
      %v1175 = vmax.f32 %v1151, 0.0
      %v1176 = vmax.f32 %v1152, 0.0
      %v1177 = vmax.f32 %v1153, 0.0
      %v1178 = vmax.f32 %v1154, 0.0
      %v1179 = vmax.f32 %v1155, 0.0
      %v1180 = vmax.f32 %v1156, 0.0
      %v1181 = vmax.f32 %v1157, 0.0
      %v1182 = vmax.f32 %v1158, 0.0
      %v1183 = vmax.f32 %v1159, 0.0
      %v1184 = vmax.f32 %v1160, 0.0
      %v1185 = vmax.f32 %v1161, 0.0
      %vm1186 = vcmask 523264
      %1187 = vst.msk [vmem:[%s170] sm:$0xff] %vm1186, %v1162
      %1188 = vst.msk [vmem:[%s170 + $0x8] sm:$0xff] %vm1186, %v1163
      %1189 = vst.msk [vmem:[%s170 + $0x10] sm:$0xff] %vm1186, %v1164
      %1190 = vst.msk [vmem:[%s170 + $0x18] sm:$0xff] %vm1186, %v1165
      %1191 = vst.msk [vmem:[%s170 + $0x20] sm:$0xff] %vm1186, %v1166
      %1192 = vst.msk [vmem:[%s170 + $0x28] sm:$0xff] %vm1186, %v1167
      %1193 = vst.msk [vmem:[%s170 + $0x30] sm:$0xff] %vm1186, %v1168
      %1194 = vst.msk [vmem:[%s170 + $0x38] sm:$0xff] %vm1186, %v1169
      %1195 = vst.msk [vmem:[%s170 + $0x40] sm:$0xff] %vm1186, %v1170
      %1196 = vst.msk [vmem:[%s170 + $0x48] sm:$0xff] %vm1186, %v1171
      %1197 = vst.msk [vmem:[%s170 + $0x50] sm:$0xff] %vm1186, %v1172
      %1198 = vst.msk [vmem:[%s170 + $0x58] sm:$0xff] %vm1186, %v1173
      %1199 = vst.msk [vmem:[%s170 + $0x60] sm:$0xff] %vm1186, %v1174
      %1200 = vst.msk [vmem:[%s170 + $0x68] sm:$0xff] %vm1186, %v1175
      %1201 = vst.msk [vmem:[%s170 + $0x70] sm:$0xff] %vm1186, %v1176
      %1202 = vst.msk [vmem:[%s170 + $0x78] sm:$0xff] %vm1186, %v1177
      %1203 = vst.msk [vmem:[%s170 + $0x80] sm:$0xff] %vm1186, %v1178
      %1204 = vst.msk [vmem:[%s170 + $0x88] sm:$0xff] %vm1186, %v1179
      %1205 = vst.msk [vmem:[%s170 + $0x90] sm:$0xff] %vm1186, %v1180
      %1206 = vst.msk [vmem:[%s170 + $0x98] sm:$0xff] %vm1186, %v1181
      %1207 = vst.msk [vmem:[%s170 + $0xa0] sm:$0xff] %vm1186, %v1182
      %1208 = vst.msk [vmem:[%s170 + $0xa8] sm:$0xff] %vm1186, %v1183
      %1209 = vst.msk [vmem:[%s170 + $0xb0] sm:$0xff] %vm1186, %v1184
      %1210 = vst.msk [vmem:[%s170 + $0xb8] sm:$0xff] %vm1186, %v1185
      %p1211 = scmp.lt.s32.totalorder %s14, 1
      %s1212 = scalar_select %p1211, %s14, 1
      %s1213 = smul.addr %s1212, 24
      %s1214 = smul.addr %s1213, 8
      %s1215 = scalar_lea.vmem %s3, %s1214
      // Predicated region
      $region33: #{forward.9} parent=31 // pred_check
        %p1216 = pneg %p100
      $region34: #{forward.9} parent=31 // pred_check_branch
        %1218 = sbr.rel (%p1216) target = $region36
      $region35: #{forward.9} parent=31 // pred_region
        _
      $region36: #{forward.9} parent=31 // pred_fallthru
        _
    $region32: #{forward.9} parent=5 // pred_fallthru
      _
    %p1219 = scmp.le.s32.totalorder 2, %s9
    // Predicated region
    $region37: #{forward.9} parent=5 // pred_check
      %p1220 = pneg %p1219
    $region38: #{forward.9} parent=5 // pred_check_branch
      %1222 = sbr.rel (%p1220) target = $region40
    $region39: #{forward.9} parent=5 // pred_region
      %s1223 = ssub.s32 %s9, 2
      // Predicated region
      $region41: #{forward.9} parent=39 // pred_check
        %p1224 = pneg %p106
      $region42: #{forward.9} parent=39 // pred_check_branch
        %1226 = sbr.rel (%p1224) target = $region44
      $region43: #{forward.9} parent=39 // pred_region
        %p1227 = scmp.lt.s32.totalorder %s15, 1
        %s1228 = scalar_select %p1227, %s15, 1
        %s1229 = smul.addr %s1228, 24
        %s1230 = smul.addr %s1229, 8
        %s1231 = scalar_lea.vmem %s3, %s1230
      $region44: #{forward.9} parent=39 // pred_fallthru
        _
    $region40: #{forward.9} parent=5 // pred_fallthru
      _
  $region6: #{forward.9} parent=0 // loop_footer
    %s13 = sadd.s32 1, %s9
  $region7: #{forward.9} parent=0 // loop_footer_branch
    %8 = sbr.rel target = $region3
  $region8: #{forward.9} parent=0 // loop_exit
    _

// kernel: forward.10
$region0: #{forward.10}
  #allocation0 [shape = 'u32[]', space=smem, size = 0x4, offset = 0x4, fixed_abs, tag = 'smem constant byte address 0x4 - core index']
  #allocation1 [shape = 'u32[144,128]{1,0:T(1,128)}', space=vmem, size = 0x12000, scoped, tag = 'internal scratch']
  %s0 = inlined_call_operand.vmem [shape: bf16[2,61,768], index: 0, kind: input, shape index: {}]
  %s1 = inlined_call_operand.vmem [shape: bf16[768,192], index: 1, kind: input, shape index: {}]
  %s2 = inlined_call_operand.vmem [shape: f32[1,192], index: 2, kind: input, shape index: {}]
  %s3 = inlined_call_operand.vmem [shape: f32[2,61,64], index: 3, kind: output, shape index: {}]
  %s4 = sld [smem:[#allocation0]]
  $region45: #{forward.10} parent=0
    _
  %s6 = ssub.s32 1, %s4
  %s7 = scalar_select 0, %s6, %s4
  loop: start=0, step=1, limit=4
  $region2: #{forward.10} parent=0 // loop_pre_header
    _
  $region3: #{forward.10} parent=0 // loop_header
    %s9 = sphi 0, %s13
    %p10 = scmp.ge.s32.totalorder %s9, 4
    %s19 = sphi 0, %s21
    %s22 = sphi 0, %s19
    %s23 = sphi 0, %s22
    %s39 = sphi 0, %s23
    %s43 = sphi 0, %s43
    %s45 = sphi 0, %s43
    %s46 = sphi 0, %s45
    %s60 = sphi 0, %s46
    %s64 = sphi 0, %s64
    %s66 = sphi 0, %s64
    %s67 = sphi 0, %s66
    %s81 = sphi 0, %s67
    %s87 = sphi 0, %s89
    %s90 = sphi 0, %s87
    %s91 = sphi 0, %s90
    %s107 = sphi 0, %s91
  $region4: #{forward.10} parent=0 // loop_header_branch
    %12 = sbr.rel (%p10) target = $region8
  $region5: #{forward.10} parent=0 // loop_body
    %s14 = ssub.s32 %s9, 1
    %s15 = ssub.s32 %s9, 2
    %s16 = sadd.s32 %s9, 1
    %s17 = ssub.s32 %s9, %s16
    %p18 = scmp.eq.s32.totalorder %s17, 0
    %s20 = sadd.s32 %s19, 1
    %s21 = scalar_select %p18, %s19, %s20
    %p24 = pneg %p18
    %p25 = scmp.eq.s32.totalorder %s9, 1
    %p26 = por %p24, %p25
    %p27 = scmp.ne.s32.totalorder %s19, %s22
    %p28 = scmp.eq.s32.totalorder %s9, 0
    %p29 = por %p27, %p28
    %p30 = scmp.ne.s32.totalorder %s19, %s22
    %p31 = scmp.eq.s32.totalorder %s14, 1
    %p32 = por %p30, %p31
    %p33 = scmp.ne.s32.totalorder %s22, %s23
    %p34 = scmp.eq.s32.totalorder %s14, 0
    %p35 = por %p33, %p34
    %p36 = scmp.ne.s32.totalorder %s22, %s23
    %p37 = scmp.eq.s32.totalorder %s15, 1
    %p38 = por %p36, %p37
    %p40 = scmp.ne.s32.totalorder %s23, %s39
    %p41 = scmp.eq.s32.totalorder %s15, 0
    %p42 = por %p40, %p41
    %s44 = sadd.s32 %s43, 1
    %p47 = scmp.eq.s32.totalorder %s9, 1
    %p48 = scmp.ne.s32.totalorder %s43, %s45
    %p49 = scmp.eq.s32.totalorder %s9, 0
    %p50 = por %p48, %p49
    %p51 = scmp.ne.s32.totalorder %s43, %s45
    %p52 = scmp.eq.s32.totalorder %s14, 1
    %p53 = por %p51, %p52
    %p54 = scmp.ne.s32.totalorder %s45, %s46
    %p55 = scmp.eq.s32.totalorder %s14, 0
    %p56 = por %p54, %p55
    %p57 = scmp.ne.s32.totalorder %s45, %s46
    %p58 = scmp.eq.s32.totalorder %s15, 1
    %p59 = por %p57, %p58
    %p61 = scmp.ne.s32.totalorder %s46, %s60
    %p62 = scmp.eq.s32.totalorder %s15, 0
    %p63 = por %p61, %p62
    %s65 = sadd.s32 %s64, 1
    %p68 = scmp.eq.s32.totalorder %s9, 1
    %p69 = scmp.ne.s32.totalorder %s64, %s66
    %p70 = scmp.eq.s32.totalorder %s9, 0
    %p71 = por %p69, %p70
    %p72 = scmp.ne.s32.totalorder %s64, %s66
    %p73 = scmp.eq.s32.totalorder %s14, 1
    %p74 = por %p72, %p73
    %p75 = scmp.ne.s32.totalorder %s66, %s67
    %p76 = scmp.eq.s32.totalorder %s14, 0
    %p77 = por %p75, %p76
    %p78 = scmp.ne.s32.totalorder %s66, %s67
    %p79 = scmp.eq.s32.totalorder %s15, 1
    %p80 = por %p78, %p79
    %p82 = scmp.ne.s32.totalorder %s67, %s81
    %p83 = scmp.eq.s32.totalorder %s15, 0
    %p84 = por %p82, %p83
    %s85 = ssub.s32 %s9, %s16
    %p86 = scmp.eq.s32.totalorder %s85, 0
    %s88 = sadd.s32 %s87, 1
    %s89 = scalar_select %p86, %s87, %s88
    %p92 = pneg %p86
    %p93 = scmp.eq.s32.totalorder %s9, 1
    %p94 = por %p92, %p93
    %p95 = scmp.ne.s32.totalorder %s87, %s90
    %p96 = scmp.eq.s32.totalorder %s9, 0
    %p97 = por %p95, %p96
    %p98 = scmp.ne.s32.totalorder %s87, %s90
    %p99 = scmp.eq.s32.totalorder %s14, 1
    %p100 = por %p98, %p99
    %p101 = scmp.ne.s32.totalorder %s90, %s91
    %p102 = scmp.eq.s32.totalorder %s14, 0
    %p103 = por %p101, %p102
    %p104 = scmp.ne.s32.totalorder %s90, %s91
    %p105 = scmp.eq.s32.totalorder %s15, 1
    %p106 = por %p104, %p105
    %p108 = scmp.ne.s32.totalorder %s91, %s107
    %p109 = scmp.eq.s32.totalorder %s15, 0
    %p110 = por %p108, %p109
    %p111 = scmp.le.s32.totalorder 1, %s9
    %p112 = scmp.lt.s32.totalorder %s9, 3
    %p113 = pnand %p111, %p112
    %p114 = pneg %p113
    // Predicated region
    $region9: #{forward.10} parent=5 // pred_check
      _
    $region10: #{forward.10} parent=5 // pred_check_branch
      %116 = sbr.rel (%p113) target = $region12
    $region11: #{forward.10} parent=5 // pred_region
      %s117 = ssub.s32 %s9, 1
      // Predicated region
      $region13: #{forward.10} parent=11 // pred_check
        %p118 = pneg %p56
      $region14: #{forward.10} parent=11 // pred_check_branch
        %120 = sbr.rel (%p118) target = $region16
      $region15: #{forward.10} parent=11 // pred_region
        _
      $region16: #{forward.10} parent=11 // pred_fallthru
        _
      // Predicated region
      $region17: #{forward.10} parent=11 // pred_check
        %p121 = pneg %p77
      $region18: #{forward.10} parent=11 // pred_check_branch
        %123 = sbr.rel (%p121) target = $region20
      $region19: #{forward.10} parent=11 // pred_region
        _
      $region20: #{forward.10} parent=11 // pred_fallthru
        _
    $region12: #{forward.10} parent=5 // pred_fallthru
      _
    %p124 = scmp.lt.s32.totalorder %s9, 2
    // Predicated region
    $region21: #{forward.10} parent=5 // pred_check
      %p125 = pneg %p124
    $region22: #{forward.10} parent=5 // pred_check_branch
      %127 = sbr.rel (%p125) target = $region24
    $region23: #{forward.10} parent=5 // pred_region
      // Predicated region
      $region25: #{forward.10} parent=23 // pred_check
        %p128 = pneg %p29
      $region26: #{forward.10} parent=23 // pred_check_branch
        %130 = sbr.rel (%p128) target = $region28
      $region27: #{forward.10} parent=23 // pred_region
        %p131 = scmp.lt.s32.totalorder %s9, 1
        %s132 = scalar_select %p131, %s9, 1
        %s133 = smul.addr %s132, 48
        %s134 = smul.addr %s133, 4
        %s135 = scalar_lea.vmem %s0, %s134
      $region28: #{forward.10} parent=23 // pred_fallthru
        _
    $region24: #{forward.10} parent=5 // pred_fallthru
      _
    %p136 = scmp.le.s32.totalorder 1, %s9
    %p137 = scmp.lt.s32.totalorder %s9, 3
    %p138 = pnand %p136, %p137
    %p139 = pneg %p138
    // Predicated region
    $region29: #{forward.10} parent=5 // pred_check
      _
    $region30: #{forward.10} parent=5 // pred_check_branch
      %141 = sbr.rel (%p138) target = $region32
    $region31: #{forward.10} parent=5 // pred_region
      %s142 = ssub.s32 %s9, 1
      %p143 = scmp.lt.s32.totalorder %s14, 1
      %s144 = scalar_select %p143, %s14, 1
      %s145 = smul.addr %s144, 48
      %s146 = smul.addr %s145, 4
      %s147 = scalar_lea.vmem %s0, %s146
      %p148 = pneg %p35
      %p149 = pneg %p32
      %p150 = pneg %p56
      %p151 = pneg %p53
      %p152 = pneg %p77
      %p153 = pneg %p74
      %p154 = pneg %p103
      %p155 = pneg %p100
      %p156 = scmp.lt.s32.totalorder %s14, 1
      %s157 = scalar_select %p156, %s14, 1
      %s158 = smul.addr %s157, 8
      %s159 = smul.addr %s158, 8
      %s160 = scalar_lea.vmem %s3, %s159
      %p161 = scmp.lt.s32.totalorder %s14, 1
      %s162 = scalar_select %p161, %s14, 1
      %s163 = smul.addr %s162, 48
      %s164 = smul.addr %s163, 4
      %s165 = scalar_lea.vmem %s0, %s164
      %p166 = scmp.lt.s32.totalorder %s14, 1
      %s167 = scalar_select %p166, %s14, 1
      %s168 = smul.addr %s167, 8
      %s169 = smul.addr %s168, 8
      %s170 = scalar_lea.vmem %s3, %s169
      %v171 = vld [vmem:[%s165] sm:$0xff]
      %v172 = vld [vmem:[%s165 + $0x8] sm:$0xff]
      %v173 = vld [vmem:[%s165 + $0x10] sm:$0xff]
      %v174 = vld [vmem:[%s165 + $0x18] sm:$0xff]
      %v175 = vld [vmem:[%s165 + $0x20] sm:$0xff]
      %v176 = vld [vmem:[%s165 + $0x28] sm:$0xff]
      %v177 = vld [vmem:[%s165 + $0x30] sm:$0xff]
      %v178 = vld [vmem:[%s165 + $0x38] sm:$0xff]
      %v179 = vld [vmem:[%s165 + $0x40] sm:$0xff]
      %v180 = vld [vmem:[%s165 + $0x48] sm:$0xff]
      %v181 = vld [vmem:[%s165 + $0x50] sm:$0xff]
      %v182 = vld [vmem:[%s165 + $0x58] sm:$0xff]
      %v183 = vld [vmem:[%s165 + $0x60] sm:$0xff]
      %v184 = vld [vmem:[%s165 + $0x68] sm:$0xff]
      %v185 = vld [vmem:[%s165 + $0x70] sm:$0xff]
      %v186 = vld [vmem:[%s165 + $0x78] sm:$0xff]
      %v187 = vld [vmem:[%s165 + $0x80] sm:$0xff]
      %v188 = vld [vmem:[%s165 + $0x88] sm:$0xff]
      %v189 = vld [vmem:[%s165 + $0x90] sm:$0xff]
      %v190 = vld [vmem:[%s165 + $0x98] sm:$0xff]
      %v191 = vld [vmem:[%s165 + $0xa0] sm:$0xff]
      %v192 = vld [vmem:[%s165 + $0xa8] sm:$0x77]
      %v193 = vld [vmem:[%s165 + $0xb0] sm:$0x77]
      %v194 = vld [vmem:[%s165 + $0xb8] sm:$0x77]
      %v195 = vld [vmem:[%s1] sm:$0xff]
      %v196 = vld [vmem:[%s1 + $0x8] sm:$0xff]
      %v197 = vld [vmem:[%s1 + $0x10] sm:$0xff]
      %v198 = vld [vmem:[%s1 + $0x18] sm:$0xff]
      %v199 = vld [vmem:[%s1 + $0x20] sm:$0xff]
      %v200 = vld [vmem:[%s1 + $0x28] sm:$0xff]
      %v201 = vld [vmem:[%s1 + $0x30] sm:$0xff]
      %v202 = vld [vmem:[%s1 + $0x38] sm:$0xff]
      %v203 = vld [vmem:[%s1 + $0x40] sm:$0xff]
      %v204 = vld [vmem:[%s1 + $0x48] sm:$0xff]
      %v205 = vld [vmem:[%s1 + $0x50] sm:$0xff]
      %v206 = vld [vmem:[%s1 + $0x58] sm:$0xff]
      %v207 = vld [vmem:[%s1 + $0x60] sm:$0xff]
      %v208 = vld [vmem:[%s1 + $0x68] sm:$0xff]
      %v209 = vld [vmem:[%s1 + $0x70] sm:$0xff]
      %v210 = vld [vmem:[%s1 + $0x78] sm:$0xff]
      %v211 = vld [vmem:[%s1 + $0x80] sm:$0xff]
      %v212 = vld [vmem:[%s1 + $0x88] sm:$0xff]
      %v213 = vld [vmem:[%s1 + $0x90] sm:$0xff]
      %v214 = vld [vmem:[%s1 + $0x98] sm:$0xff]
      %v215 = vld [vmem:[%s1 + $0xa0] sm:$0xff]
      %v216 = vld [vmem:[%s1 + $0xa8] sm:$0xff]
      %v217 = vld [vmem:[%s1 + $0xb0] sm:$0xff]
      %v218 = vld [vmem:[%s1 + $0xb8] sm:$0xff]
      %v219 = vld [vmem:[%s1 + $0xc0] sm:$0xff]
      %v220 = vld [vmem:[%s1 + $0xc8] sm:$0xff]
      %v221 = vld [vmem:[%s1 + $0xd0] sm:$0xff]
      %v222 = vld [vmem:[%s1 + $0xd8] sm:$0xff]
      %v223 = vld [vmem:[%s1 + $0xe0] sm:$0xff]
      %v224 = vld [vmem:[%s1 + $0xe8] sm:$0xff]
      %v225 = vld [vmem:[%s1 + $0xf0] sm:$0xff]
      %v226 = vld [vmem:[%s1 + $0xf8] sm:$0xff]
      %v227 = vld [vmem:[%s1 + $0x100] sm:$0xff]
      %v228 = vld [vmem:[%s1 + $0x108] sm:$0xff]
      %v229 = vld [vmem:[%s1 + $0x110] sm:$0xff]
      %v230 = vld [vmem:[%s1 + $0x118] sm:$0xff]
      %v231 = vld [vmem:[%s1 + $0x120] sm:$0xff]
      %v232 = vld [vmem:[%s1 + $0x128] sm:$0xff]
      %v233 = vld [vmem:[%s1 + $0x130] sm:$0xff]
      %v234 = vld [vmem:[%s1 + $0x138] sm:$0xff]
      %v235 = vld [vmem:[%s1 + $0x140] sm:$0xff]
      %v236 = vld [vmem:[%s1 + $0x148] sm:$0xff]
      %v237 = vld [vmem:[%s1 + $0x150] sm:$0xff]
      %v238 = vld [vmem:[%s1 + $0x158] sm:$0xff]
      %v239 = vld [vmem:[%s1 + $0x160] sm:$0xff]
      %v240 = vld [vmem:[%s1 + $0x168] sm:$0xff]
      %v241 = vld [vmem:[%s1 + $0x170] sm:$0xff]
      %v242 = vld [vmem:[%s1 + $0x178] sm:$0xff]
      %v243 = vld [vmem:[%s1 + $0x180] sm:$0xff]
      %v244 = vld [vmem:[%s1 + $0x188] sm:$0xff]
      %v245 = vld [vmem:[%s1 + $0x190] sm:$0xff]
      %v246 = vld [vmem:[%s1 + $0x198] sm:$0xff]
      %v247 = vld [vmem:[%s1 + $0x1a0] sm:$0xff]
      %v248 = vld [vmem:[%s1 + $0x1a8] sm:$0xff]
      %v249 = vld [vmem:[%s1 + $0x1b0] sm:$0xff]
      %v250 = vld [vmem:[%s1 + $0x1b8] sm:$0xff]
      %v251 = vld [vmem:[%s1 + $0x1c0] sm:$0xff]
      %v252 = vld [vmem:[%s1 + $0x1c8] sm:$0xff]
      %v253 = vld [vmem:[%s1 + $0x1d0] sm:$0xff]
      %v254 = vld [vmem:[%s1 + $0x1d8] sm:$0xff]
      %v255 = vld [vmem:[%s1 + $0x1e0] sm:$0xff]
      %v256 = vld [vmem:[%s1 + $0x1e8] sm:$0xff]
      %v257 = vld [vmem:[%s1 + $0x1f0] sm:$0xff]
      %v258 = vld [vmem:[%s1 + $0x1f8] sm:$0xff]
      %v259 = vld [vmem:[%s1 + $0x200] sm:$0xff]
      %v260 = vld [vmem:[%s1 + $0x208] sm:$0xff]
      %v261 = vld [vmem:[%s1 + $0x210] sm:$0xff]
      %v262 = vld [vmem:[%s1 + $0x218] sm:$0xff]
      %v263 = vld [vmem:[%s1 + $0x220] sm:$0xff]
      %v264 = vld [vmem:[%s1 + $0x228] sm:$0xff]
      %v265 = vld [vmem:[%s1 + $0x230] sm:$0xff]
      %v266 = vld [vmem:[%s1 + $0x238] sm:$0xff]
      %v267 = vld [vmem:[%s1 + $0x240] sm:$0xff]
      %v268 = vld [vmem:[%s1 + $0x248] sm:$0xff]
      %v269 = vld [vmem:[%s1 + $0x250] sm:$0xff]
      %v270 = vld [vmem:[%s1 + $0x258] sm:$0xff]
      %v271 = vld [vmem:[%s1 + $0x260] sm:$0xff]
      %v272 = vld [vmem:[%s1 + $0x268] sm:$0xff]
      %v273 = vld [vmem:[%s1 + $0x270] sm:$0xff]
      %v274 = vld [vmem:[%s1 + $0x278] sm:$0xff]
      %v275 = vld [vmem:[%s1 + $0x280] sm:$0xff]
      %v276 = vld [vmem:[%s1 + $0x288] sm:$0xff]
      %v277 = vld [vmem:[%s1 + $0x290] sm:$0xff]
      %v278 = vld [vmem:[%s1 + $0x298] sm:$0xff]
      %v279 = vld [vmem:[%s1 + $0x2a0] sm:$0xff]
      %v280 = vld [vmem:[%s1 + $0x2a8] sm:$0xff]
      %v281 = vld [vmem:[%s1 + $0x2b0] sm:$0xff]
      %v282 = vld [vmem:[%s1 + $0x2b8] sm:$0xff]
      %v283 = vld [vmem:[%s1 + $0x2c0] sm:$0xff]
      %v284 = vld [vmem:[%s1 + $0x2c8] sm:$0xff]
      %v285 = vld [vmem:[%s1 + $0x2d0] sm:$0xff]
      %v286 = vld [vmem:[%s1 + $0x2d8] sm:$0xff]
      %v287 = vld [vmem:[%s1 + $0x2e0] sm:$0xff]
      %v288 = vld [vmem:[%s1 + $0x2e8] sm:$0xff]
      %v289 = vld [vmem:[%s1 + $0x2f0] sm:$0xff]
      %v290 = vld [vmem:[%s1 + $0x2f8] sm:$0xff]
      %v291 = vld [vmem:[%s2] sm:$0x3]
      %v293 = vlaneseq
      %v294 = vshrl.u32 %v293, 7
      %v295 = vsub.s32 0, %v294
      %v296 = vrot.slane %v291, %v295
      %v297 = vlaneseq
      %v298 = vshrl.u32 %v297, 7
      %v299 = vsub.s32 1, %v298
      %v300 = vrot.slane %v291, %v299
      %v327 = vunpack.c.l.b16 %v171
      %v328 = vunpack.c.h.b16 %v171
      %v329 = vunpack.c.l.b16 %v172
      %v330 = vunpack.c.h.b16 %v172
      %v331 = vunpack.c.l.b16 %v173
      %v332 = vunpack.c.h.b16 %v173
      %v333 = vunpack.c.l.b16 %v174
      %v334 = vunpack.c.h.b16 %v174
      %v335 = vunpack.c.l.b16 %v175
      %v336 = vunpack.c.h.b16 %v175
      %v337 = vunpack.c.l.b16 %v176
      %v338 = vunpack.c.h.b16 %v176
      %v339 = vunpack.c.l.b16 %v177
      %v340 = vunpack.c.h.b16 %v177
      %v341 = vunpack.c.l.b16 %v178
      %v342 = vunpack.c.h.b16 %v178
      %v343 = vunpack.c.l.b16 %v179
      %v344 = vunpack.c.h.b16 %v179
      %v345 = vunpack.c.l.b16 %v180
      %v346 = vunpack.c.h.b16 %v180
      %v347 = vunpack.c.l.b16 %v181
      %v348 = vunpack.c.h.b16 %v181
      %v349 = vunpack.c.l.b16 %v182
      %v350 = vunpack.c.h.b16 %v182
      %v351 = vunpack.c.l.b16 %v183
      %v352 = vunpack.c.h.b16 %v183
      %v353 = vunpack.c.l.b16 %v184
      %v354 = vunpack.c.h.b16 %v184
      %v355 = vunpack.c.l.b16 %v185
      %v356 = vunpack.c.h.b16 %v185
      %v357 = vunpack.c.l.b16 %v186
      %v358 = vunpack.c.h.b16 %v186
      %v359 = vunpack.c.l.b16 %v187
      %v360 = vunpack.c.h.b16 %v187
      %v361 = vunpack.c.l.b16 %v188
      %v362 = vunpack.c.h.b16 %v188
      %v363 = vunpack.c.l.b16 %v189
      %v364 = vunpack.c.h.b16 %v189
      %v365 = vunpack.c.l.b16 %v190
      %v366 = vunpack.c.h.b16 %v190
      %v367 = vunpack.c.l.b16 %v191
      %v368 = vunpack.c.h.b16 %v191
      %v369 = vunpack.c.l.b16 %v192
      %v370 = vunpack.c.h.b16 %v192
      %v371 = vunpack.c.l.b16 %v193
      %v372 = vunpack.c.h.b16 %v193
      %v373 = vunpack.c.l.b16 %v194
      %v374 = vunpack.c.h.b16 %v194
      %v375 = vpack.c.b16 %v333, %v327
      %v376 = vpack.c.b16 %v334, %v328
      %v377 = vpack.c.b16 %v335, %v329
      %v378 = vpack.c.b16 %v336, %v330
      %v379 = vpack.c.b16 %v337, %v331
      %v380 = vpack.c.b16 %v338, %v332
      %v381 = vpack.c.b16 %v345, %v339
      %v382 = vpack.c.b16 %v346, %v340
      %v383 = vpack.c.b16 %v347, %v341
      %v384 = vpack.c.b16 %v348, %v342
      %v385 = vpack.c.b16 %v349, %v343
      %v386 = vpack.c.b16 %v350, %v344
      %v387 = vpack.c.b16 %v357, %v351
      %v388 = vpack.c.b16 %v358, %v352
      %v389 = vpack.c.b16 %v359, %v353
      %v390 = vpack.c.b16 %v360, %v354
      %v391 = vpack.c.b16 %v361, %v355
      %v392 = vpack.c.b16 %v362, %v356
      %v393 = vpack.c.b16 %v369, %v363
      %v394 = vpack.c.b16 %v370, %v364
      %v395 = vpack.c.b16 %v371, %v365
      %v396 = vpack.c.b16 %v372, %v366
      %v397 = vpack.c.b16 %v373, %v367
      %v398 = vpack.c.b16 %v374, %v368
      %v519 = vunpack.c.l.b16 %v195
      %v520 = vunpack.c.h.b16 %v195
      %v521 = vunpack.c.l.b16 %v196
      %v522 = vunpack.c.h.b16 %v196
      %v523 = vunpack.c.l.b16 %v197
      %v524 = vunpack.c.h.b16 %v197
      %v525 = vunpack.c.l.b16 %v198
      %v526 = vunpack.c.h.b16 %v198
      %v527 = vunpack.c.l.b16 %v199
      %v528 = vunpack.c.h.b16 %v199
      %v529 = vunpack.c.l.b16 %v200
      %v530 = vunpack.c.h.b16 %v200
      %v531 = vunpack.c.l.b16 %v201
      %v532 = vunpack.c.h.b16 %v201
      %v533 = vunpack.c.l.b16 %v202
      %v534 = vunpack.c.h.b16 %v202
      %v535 = vunpack.c.l.b16 %v203
      %v536 = vunpack.c.h.b16 %v203
      %v537 = vunpack.c.l.b16 %v204
      %v538 = vunpack.c.h.b16 %v204
      %v539 = vunpack.c.l.b16 %v205
      %v540 = vunpack.c.h.b16 %v205
      %v541 = vunpack.c.l.b16 %v206
      %v542 = vunpack.c.h.b16 %v206
      %v543 = vunpack.c.l.b16 %v207
      %v544 = vunpack.c.h.b16 %v207
      %v545 = vunpack.c.l.b16 %v208
      %v546 = vunpack.c.h.b16 %v208
      %v547 = vunpack.c.l.b16 %v209
      %v548 = vunpack.c.h.b16 %v209
      %v549 = vunpack.c.l.b16 %v210
      %v550 = vunpack.c.h.b16 %v210
      %v551 = vunpack.c.l.b16 %v211
      %v552 = vunpack.c.h.b16 %v211
      %v553 = vunpack.c.l.b16 %v212
      %v554 = vunpack.c.h.b16 %v212
      %v555 = vunpack.c.l.b16 %v213
      %v556 = vunpack.c.h.b16 %v213
      %v557 = vunpack.c.l.b16 %v214
      %v558 = vunpack.c.h.b16 %v214
      %v559 = vunpack.c.l.b16 %v215
      %v560 = vunpack.c.h.b16 %v215
      %v561 = vunpack.c.l.b16 %v216
      %v562 = vunpack.c.h.b16 %v216
      %v563 = vunpack.c.l.b16 %v217
      %v564 = vunpack.c.h.b16 %v217
      %v565 = vunpack.c.l.b16 %v218
      %v566 = vunpack.c.h.b16 %v218
      %v567 = vunpack.c.l.b16 %v219
      %v568 = vunpack.c.h.b16 %v219
      %v569 = vunpack.c.l.b16 %v220
      %v570 = vunpack.c.h.b16 %v220
      %v571 = vunpack.c.l.b16 %v221
      %v572 = vunpack.c.h.b16 %v221
      %v573 = vunpack.c.l.b16 %v222
      %v574 = vunpack.c.h.b16 %v222
      %v575 = vunpack.c.l.b16 %v223
      %v576 = vunpack.c.h.b16 %v223
      %v577 = vunpack.c.l.b16 %v224
      %v578 = vunpack.c.h.b16 %v224
      %v579 = vunpack.c.l.b16 %v225
      %v580 = vunpack.c.h.b16 %v225
      %v581 = vunpack.c.l.b16 %v226
      %v582 = vunpack.c.h.b16 %v226
      %v583 = vunpack.c.l.b16 %v227
      %v584 = vunpack.c.h.b16 %v227
      %v585 = vunpack.c.l.b16 %v228
      %v586 = vunpack.c.h.b16 %v228
      %v587 = vunpack.c.l.b16 %v229
      %v588 = vunpack.c.h.b16 %v229
      %v589 = vunpack.c.l.b16 %v230
      %v590 = vunpack.c.h.b16 %v230
      %v591 = vunpack.c.l.b16 %v231
      %v592 = vunpack.c.h.b16 %v231
      %v593 = vunpack.c.l.b16 %v232
      %v594 = vunpack.c.h.b16 %v232
      %v595 = vunpack.c.l.b16 %v233
      %v596 = vunpack.c.h.b16 %v233
      %v597 = vunpack.c.l.b16 %v234
      %v598 = vunpack.c.h.b16 %v234
      %v599 = vunpack.c.l.b16 %v235
      %v600 = vunpack.c.h.b16 %v235
      %v601 = vunpack.c.l.b16 %v236
      %v602 = vunpack.c.h.b16 %v236
      %v603 = vunpack.c.l.b16 %v237
      %v604 = vunpack.c.h.b16 %v237
      %v605 = vunpack.c.l.b16 %v238
      %v606 = vunpack.c.h.b16 %v238
      %v607 = vunpack.c.l.b16 %v239
      %v608 = vunpack.c.h.b16 %v239
      %v609 = vunpack.c.l.b16 %v240
      %v610 = vunpack.c.h.b16 %v240
      %v611 = vunpack.c.l.b16 %v241
      %v612 = vunpack.c.h.b16 %v241
      %v613 = vunpack.c.l.b16 %v242
      %v614 = vunpack.c.h.b16 %v242
      %v615 = vunpack.c.l.b16 %v243
      %v616 = vunpack.c.h.b16 %v243
      %v617 = vunpack.c.l.b16 %v244
      %v618 = vunpack.c.h.b16 %v244
      %v619 = vunpack.c.l.b16 %v245
      %v620 = vunpack.c.h.b16 %v245
      %v621 = vunpack.c.l.b16 %v246
      %v622 = vunpack.c.h.b16 %v246
      %v623 = vunpack.c.l.b16 %v247
      %v624 = vunpack.c.h.b16 %v247
      %v625 = vunpack.c.l.b16 %v248
      %v626 = vunpack.c.h.b16 %v248
      %v627 = vunpack.c.l.b16 %v249
      %v628 = vunpack.c.h.b16 %v249
      %v629 = vunpack.c.l.b16 %v250
      %v630 = vunpack.c.h.b16 %v250
      %v631 = vunpack.c.l.b16 %v251
      %v632 = vunpack.c.h.b16 %v251
      %v633 = vunpack.c.l.b16 %v252
      %v634 = vunpack.c.h.b16 %v252
      %v635 = vunpack.c.l.b16 %v253
      %v636 = vunpack.c.h.b16 %v253
      %v637 = vunpack.c.l.b16 %v254
      %v638 = vunpack.c.h.b16 %v254
      %v639 = vunpack.c.l.b16 %v255
      %v640 = vunpack.c.h.b16 %v255
      %v641 = vunpack.c.l.b16 %v256
      %v642 = vunpack.c.h.b16 %v256
      %v643 = vunpack.c.l.b16 %v257
      %v644 = vunpack.c.h.b16 %v257
      %v645 = vunpack.c.l.b16 %v258
      %v646 = vunpack.c.h.b16 %v258
      %v647 = vunpack.c.l.b16 %v259
      %v648 = vunpack.c.h.b16 %v259
      %v649 = vunpack.c.l.b16 %v260
      %v650 = vunpack.c.h.b16 %v260
      %v651 = vunpack.c.l.b16 %v261
      %v652 = vunpack.c.h.b16 %v261
      %v653 = vunpack.c.l.b16 %v262
      %v654 = vunpack.c.h.b16 %v262
      %v655 = vunpack.c.l.b16 %v263
      %v656 = vunpack.c.h.b16 %v263
      %v657 = vunpack.c.l.b16 %v264
      %v658 = vunpack.c.h.b16 %v264
      %v659 = vunpack.c.l.b16 %v265
      %v660 = vunpack.c.h.b16 %v265
      %v661 = vunpack.c.l.b16 %v266
      %v662 = vunpack.c.h.b16 %v266
      %v663 = vunpack.c.l.b16 %v267
      %v664 = vunpack.c.h.b16 %v267
      %v665 = vunpack.c.l.b16 %v268
      %v666 = vunpack.c.h.b16 %v268
      %v667 = vunpack.c.l.b16 %v269
      %v668 = vunpack.c.h.b16 %v269
      %v669 = vunpack.c.l.b16 %v270
      %v670 = vunpack.c.h.b16 %v270
      %v671 = vunpack.c.l.b16 %v271
      %v672 = vunpack.c.h.b16 %v271
      %v673 = vunpack.c.l.b16 %v272
      %v674 = vunpack.c.h.b16 %v272
      %v675 = vunpack.c.l.b16 %v273
      %v676 = vunpack.c.h.b16 %v273
      %v677 = vunpack.c.l.b16 %v274
      %v678 = vunpack.c.h.b16 %v274
      %v679 = vunpack.c.l.b16 %v275
      %v680 = vunpack.c.h.b16 %v275
      %v681 = vunpack.c.l.b16 %v276
      %v682 = vunpack.c.h.b16 %v276
      %v683 = vunpack.c.l.b16 %v277
      %v684 = vunpack.c.h.b16 %v277
      %v685 = vunpack.c.l.b16 %v278
      %v686 = vunpack.c.h.b16 %v278
      %v687 = vunpack.c.l.b16 %v279
      %v688 = vunpack.c.h.b16 %v279
      %v689 = vunpack.c.l.b16 %v280
      %v690 = vunpack.c.h.b16 %v280
      %v691 = vunpack.c.l.b16 %v281
      %v692 = vunpack.c.h.b16 %v281
      %v693 = vunpack.c.l.b16 %v282
      %v694 = vunpack.c.h.b16 %v282
      %v695 = vunpack.c.l.b16 %v283
      %v696 = vunpack.c.h.b16 %v283
      %v697 = vunpack.c.l.b16 %v284
      %v698 = vunpack.c.h.b16 %v284
      %v699 = vunpack.c.l.b16 %v285
      %v700 = vunpack.c.h.b16 %v285
      %v701 = vunpack.c.l.b16 %v286
      %v702 = vunpack.c.h.b16 %v286
      %v703 = vunpack.c.l.b16 %v287
      %v704 = vunpack.c.h.b16 %v287
      %v705 = vunpack.c.l.b16 %v288
      %v706 = vunpack.c.h.b16 %v288
      %v707 = vunpack.c.l.b16 %v289
      %v708 = vunpack.c.h.b16 %v289
      %v709 = vunpack.c.l.b16 %v290
      %v710 = vunpack.c.h.b16 %v290
      %v711 = vpack.c.b16 %v521, %v519
      %v712 = vpack.c.b16 %v522, %v520
      %v713 = vpack.c.b16 %v525, %v523
      %v714 = vpack.c.b16 %v526, %v524
      %v715 = vpack.c.b16 %v529, %v527
      %v716 = vpack.c.b16 %v530, %v528
      %v717 = vpack.c.b16 %v533, %v531
      %v718 = vpack.c.b16 %v534, %v532
      %v719 = vpack.c.b16 %v537, %v535
      %v720 = vpack.c.b16 %v538, %v536
      %v721 = vpack.c.b16 %v541, %v539
      %v722 = vpack.c.b16 %v542, %v540
      %v723 = vpack.c.b16 %v545, %v543
      %v724 = vpack.c.b16 %v546, %v544
      %v725 = vpack.c.b16 %v549, %v547
      %v726 = vpack.c.b16 %v550, %v548
      %v727 = vpack.c.b16 %v553, %v551
      %v728 = vpack.c.b16 %v554, %v552
      %v729 = vpack.c.b16 %v557, %v555
      %v730 = vpack.c.b16 %v558, %v556
      %v731 = vpack.c.b16 %v561, %v559
      %v732 = vpack.c.b16 %v562, %v560
      %v733 = vpack.c.b16 %v565, %v563
      %v734 = vpack.c.b16 %v566, %v564
      %v735 = vpack.c.b16 %v569, %v567
      %v736 = vpack.c.b16 %v570, %v568
      %v737 = vpack.c.b16 %v573, %v571
      %v738 = vpack.c.b16 %v574, %v572
      %v739 = vpack.c.b16 %v577, %v575
      %v740 = vpack.c.b16 %v578, %v576
      %v741 = vpack.c.b16 %v581, %v579
      %v742 = vpack.c.b16 %v582, %v580
      %v743 = vpack.c.b16 %v585, %v583
      %v744 = vpack.c.b16 %v586, %v584
      %v745 = vpack.c.b16 %v589, %v587
      %v746 = vpack.c.b16 %v590, %v588
      %v747 = vpack.c.b16 %v593, %v591
      %v748 = vpack.c.b16 %v594, %v592
      %v749 = vpack.c.b16 %v597, %v595
      %v750 = vpack.c.b16 %v598, %v596
      %v751 = vpack.c.b16 %v601, %v599
      %v752 = vpack.c.b16 %v602, %v600
      %v753 = vpack.c.b16 %v605, %v603
      %v754 = vpack.c.b16 %v606, %v604
      %v755 = vpack.c.b16 %v609, %v607
      %v756 = vpack.c.b16 %v610, %v608
      %v757 = vpack.c.b16 %v613, %v611
      %v758 = vpack.c.b16 %v614, %v612
      %v759 = vpack.c.b16 %v617, %v615
      %v760 = vpack.c.b16 %v618, %v616
      %v761 = vpack.c.b16 %v621, %v619
      %v762 = vpack.c.b16 %v622, %v620
      %v763 = vpack.c.b16 %v625, %v623
      %v764 = vpack.c.b16 %v626, %v624
      %v765 = vpack.c.b16 %v629, %v627
      %v766 = vpack.c.b16 %v630, %v628
      %v767 = vpack.c.b16 %v633, %v631
      %v768 = vpack.c.b16 %v634, %v632
      %v769 = vpack.c.b16 %v637, %v635
      %v770 = vpack.c.b16 %v638, %v636
      %v771 = vpack.c.b16 %v641, %v639
      %v772 = vpack.c.b16 %v642, %v640
      %v773 = vpack.c.b16 %v645, %v643
      %v774 = vpack.c.b16 %v646, %v644
      %v775 = vpack.c.b16 %v649, %v647
      %v776 = vpack.c.b16 %v650, %v648
      %v777 = vpack.c.b16 %v653, %v651
      %v778 = vpack.c.b16 %v654, %v652
      %v779 = vpack.c.b16 %v657, %v655
      %v780 = vpack.c.b16 %v658, %v656
      %v781 = vpack.c.b16 %v661, %v659
      %v782 = vpack.c.b16 %v662, %v660
      %v783 = vpack.c.b16 %v665, %v663
      %v784 = vpack.c.b16 %v666, %v664
      %v785 = vpack.c.b16 %v669, %v667
      %v786 = vpack.c.b16 %v670, %v668
      %v787 = vpack.c.b16 %v673, %v671
      %v788 = vpack.c.b16 %v674, %v672
      %v789 = vpack.c.b16 %v677, %v675
      %v790 = vpack.c.b16 %v678, %v676
      %v791 = vpack.c.b16 %v681, %v679
      %v792 = vpack.c.b16 %v682, %v680
      %v793 = vpack.c.b16 %v685, %v683
      %v794 = vpack.c.b16 %v686, %v684
      %v795 = vpack.c.b16 %v689, %v687
      %v796 = vpack.c.b16 %v690, %v688
      %v797 = vpack.c.b16 %v693, %v691
      %v798 = vpack.c.b16 %v694, %v692
      %v799 = vpack.c.b16 %v697, %v695
      %v800 = vpack.c.b16 %v698, %v696
      %v801 = vpack.c.b16 %v701, %v699
      %v802 = vpack.c.b16 %v702, %v700
      %v803 = vpack.c.b16 %v705, %v703
      %v804 = vpack.c.b16 %v706, %v704
      %v805 = vpack.c.b16 %v709, %v707
      %v806 = vpack.c.b16 %v710, %v708
      %903 = vmatprep.subr.bf16.mxu0 %v712
      %904 = vmatpush1.bf16.msra.mxu0 %v711
      %905 = vmatprep.subr.bf16.mxu0 %v714
      %906 = vmatpush1.bf16.msra.mxu0 %v713
      %907 = vmatprep.subr.bf16.mxu0 %v716
      %908 = vmatpush1.bf16.msra.mxu0 %v715
      %909 = vmatprep.subr.bf16.mxu0 %v718
      %910 = vmatpush1.bf16.msra.mxu0 %v717
      %911 = vmatprep.subr.bf16.mxu0 %v720
      %912 = vmatpush1.bf16.msra.mxu0 %v719
      %913 = vmatprep.subr.bf16.mxu0 %v722
      %914 = vmatpush1.bf16.msra.mxu0 %v721
      %915 = vmatprep.subr.bf16.mxu0 %v724
      %916 = vmatpush1.bf16.msra.mxu0 %v723
      %917 = vmatprep.subr.bf16.mxu0 %v726
      %918 = vmatpush1.bf16.msra.mxu0 %v725
      %919 = vmatprep.subr.bf16.mxu0 %v728
      %920 = vmatpush1.bf16.msra.mxu0 %v727
      %921 = vmatprep.subr.bf16.mxu0 %v730
      %922 = vmatpush1.bf16.msra.mxu0 %v729
      %923 = vmatprep.subr.bf16.mxu0 %v732
      %924 = vmatpush1.bf16.msra.mxu0 %v731
      %925 = vmatprep.subr.bf16.mxu0 %v734
      %926 = vmatpush1.bf16.msra.mxu0 %v733
      %927 = vmatprep.subr.bf16.mxu0 %v736
      %928 = vmatpush1.bf16.msra.mxu0 %v735
      %929 = vmatprep.subr.bf16.mxu0 %v738
      %930 = vmatpush1.bf16.msra.mxu0 %v737
      %931 = vmatprep.subr.bf16.mxu0 %v740
      %932 = vmatpush1.bf16.msra.mxu0 %v739
      %933 = vmatprep.subr.bf16.mxu0 %v742
      %934 = vmatpush1.bf16.msra.mxu0 %v741
      %935 = vmatprep.mubr.bf16.mxu0 %v376
      %936 = vmatmul.mubr.bf16.gmra.mrb[0].mxu0 %v375
      %v937 = vpop.f32.mrb[0].mxu0
      %v938 = vadd.f32 %v296, %v937
      %v939 = vpop.f32.mrb[0].mxu0
      %v940 = vadd.f32 %v300, %v939
      %v941 = vpop.f32.mrb[0].mxu0
      %v942 = vadd.f32 %v296, %v941
      %v943 = vpop.f32.mrb[0].mxu0
      %v944 = vadd.f32 %v300, %v943
      %945 = vmatprep.mubr.bf16.mxu0 %v382
      %946 = vmatmul.mubr.bf16.gmra.mrb[0].mxu0 %v381
      %v947 = vpop.f32.mrb[0].mxu0
      %v948 = vadd.f32 %v296, %v947
      %v949 = vpop.f32.mrb[0].mxu0
      %v950 = vadd.f32 %v300, %v949
      %v951 = vpop.f32.mrb[0].mxu0
      %v952 = vadd.f32 %v296, %v951
      %v953 = vpop.f32.mrb[0].mxu0
      %v954 = vadd.f32 %v300, %v953
      %955 = vmatprep.mubr.bf16.mxu0 %v388
      %956 = vmatmul.mubr.bf16.gmra.mrb[0].mxu0 %v387
      %v957 = vpop.f32.mrb[0].mxu0
      %v958 = vadd.f32 %v296, %v957
      %v959 = vpop.f32.mrb[0].mxu0
      %v960 = vadd.f32 %v300, %v959
      %v961 = vpop.f32.mrb[0].mxu0
      %v962 = vadd.f32 %v296, %v961
      %v963 = vpop.f32.mrb[0].mxu0
      %v964 = vadd.f32 %v300, %v963
      %965 = vmatprep.mubr.bf16.mxu0 %v394
      %966 = vmatmul.mubr.bf16.gmra.mrb[0].mxu0 %v393
      %v967 = vpop.f32.mrb[0].mxu0
      %v968 = vadd.f32 %v296, %v967
      %v969 = vpop.f32.mrb[0].mxu0
      %v970 = vadd.f32 %v300, %v969
      %v971 = vpop.f32.mrb[0].mxu0
      %v972 = vadd.f32 %v296, %v971
      %v973 = vpop.f32.mrb[0].mxu0
      %v974 = vadd.f32 %v300, %v973
      %975 = vdwg.mxu0
      %976 = vmatprep.subr.bf16.mxu0 %v744
      %977 = vmatpush1.bf16.msra.mxu0 %v743
      %978 = vmatprep.subr.bf16.mxu0 %v746
      %979 = vmatpush1.bf16.msra.mxu0 %v745
      %980 = vmatprep.subr.bf16.mxu0 %v748
      %981 = vmatpush1.bf16.msra.mxu0 %v747
      %982 = vmatprep.subr.bf16.mxu0 %v750
      %983 = vmatpush1.bf16.msra.mxu0 %v749
      %984 = vmatprep.subr.bf16.mxu0 %v752
      %985 = vmatpush1.bf16.msra.mxu0 %v751
      %986 = vmatprep.subr.bf16.mxu0 %v754
      %987 = vmatpush1.bf16.msra.mxu0 %v753
      %988 = vmatprep.subr.bf16.mxu0 %v756
      %989 = vmatpush1.bf16.msra.mxu0 %v755
      %990 = vmatprep.subr.bf16.mxu0 %v758
      %991 = vmatpush1.bf16.msra.mxu0 %v757
      %992 = vmatprep.subr.bf16.mxu0 %v760
      %993 = vmatpush1.bf16.msra.mxu0 %v759
      %994 = vmatprep.subr.bf16.mxu0 %v762
      %995 = vmatpush1.bf16.msra.mxu0 %v761
      %996 = vmatprep.subr.bf16.mxu0 %v764
      %997 = vmatpush1.bf16.msra.mxu0 %v763
      %998 = vmatprep.subr.bf16.mxu0 %v766
      %999 = vmatpush1.bf16.msra.mxu0 %v765
      %1000 = vmatprep.subr.bf16.mxu0 %v768
      %1001 = vmatpush1.bf16.msra.mxu0 %v767
      %1002 = vmatprep.subr.bf16.mxu0 %v770
      %1003 = vmatpush1.bf16.msra.mxu0 %v769
      %1004 = vmatprep.subr.bf16.mxu0 %v772
      %1005 = vmatpush1.bf16.msra.mxu0 %v771
      %1006 = vmatprep.subr.bf16.mxu0 %v774
      %1007 = vmatpush1.bf16.msra.mxu0 %v773
      %1008 = vmatprep.mubr.bf16.mxu0 %v378
      %1009 = vmatmul.mubr.bf16.gmra.mrb[0].mxu0 %v377
      %v1010 = vpop.f32.mrb[0].mxu0
      %v1011 = vadd.f32 %v938, %v1010
      %v1012 = vpop.f32.mrb[0].mxu0
      %v1013 = vadd.f32 %v940, %v1012
      %v1014 = vpop.f32.mrb[0].mxu0
      %v1015 = vadd.f32 %v942, %v1014
      %v1016 = vpop.f32.mrb[0].mxu0
      %v1017 = vadd.f32 %v944, %v1016
      %1018 = vmatprep.mubr.bf16.mxu0 %v384
      %1019 = vmatmul.mubr.bf16.gmra.mrb[0].mxu0 %v383
      %v1020 = vpop.f32.mrb[0].mxu0
      %v1021 = vadd.f32 %v948, %v1020
      %v1022 = vpop.f32.mrb[0].mxu0
      %v1023 = vadd.f32 %v950, %v1022
      %v1024 = vpop.f32.mrb[0].mxu0
      %v1025 = vadd.f32 %v952, %v1024
      %v1026 = vpop.f32.mrb[0].mxu0
      %v1027 = vadd.f32 %v954, %v1026
      %1028 = vmatprep.mubr.bf16.mxu0 %v390
      %1029 = vmatmul.mubr.bf16.gmra.mrb[0].mxu0 %v389
      %v1030 = vpop.f32.mrb[0].mxu0
      %v1031 = vadd.f32 %v958, %v1030
      %v1032 = vpop.f32.mrb[0].mxu0
      %v1033 = vadd.f32 %v960, %v1032
      %v1034 = vpop.f32.mrb[0].mxu0
      %v1035 = vadd.f32 %v962, %v1034
      %v1036 = vpop.f32.mrb[0].mxu0
      %v1037 = vadd.f32 %v964, %v1036
      %1038 = vmatprep.mubr.bf16.mxu0 %v396
      %1039 = vmatmul.mubr.bf16.gmra.mrb[0].mxu0 %v395
      %v1040 = vpop.f32.mrb[0].mxu0
      %v1041 = vadd.f32 %v968, %v1040
      %v1042 = vpop.f32.mrb[0].mxu0
      %v1043 = vadd.f32 %v970, %v1042
      %v1044 = vpop.f32.mrb[0].mxu0
      %v1045 = vadd.f32 %v972, %v1044
      %v1046 = vpop.f32.mrb[0].mxu0
      %v1047 = vadd.f32 %v974, %v1046
      %1048 = vdwg.mxu0
      %1049 = vmatprep.subr.bf16.mxu0 %v776
      %1050 = vmatpush1.bf16.msra.mxu0 %v775
      %1051 = vmatprep.subr.bf16.mxu0 %v778
      %1052 = vmatpush1.bf16.msra.mxu0 %v777
      %1053 = vmatprep.subr.bf16.mxu0 %v780
      %1054 = vmatpush1.bf16.msra.mxu0 %v779
      %1055 = vmatprep.subr.bf16.mxu0 %v782
      %1056 = vmatpush1.bf16.msra.mxu0 %v781
      %1057 = vmatprep.subr.bf16.mxu0 %v784
      %1058 = vmatpush1.bf16.msra.mxu0 %v783
      %1059 = vmatprep.subr.bf16.mxu0 %v786
      %1060 = vmatpush1.bf16.msra.mxu0 %v785
      %1061 = vmatprep.subr.bf16.mxu0 %v788
      %1062 = vmatpush1.bf16.msra.mxu0 %v787
      %1063 = vmatprep.subr.bf16.mxu0 %v790
      %1064 = vmatpush1.bf16.msra.mxu0 %v789
      %1065 = vmatprep.subr.bf16.mxu0 %v792
      %1066 = vmatpush1.bf16.msra.mxu0 %v791
      %1067 = vmatprep.subr.bf16.mxu0 %v794
      %1068 = vmatpush1.bf16.msra.mxu0 %v793
      %1069 = vmatprep.subr.bf16.mxu0 %v796
      %1070 = vmatpush1.bf16.msra.mxu0 %v795
      %1071 = vmatprep.subr.bf16.mxu0 %v798
      %1072 = vmatpush1.bf16.msra.mxu0 %v797
      %1073 = vmatprep.subr.bf16.mxu0 %v800
      %1074 = vmatpush1.bf16.msra.mxu0 %v799
      %1075 = vmatprep.subr.bf16.mxu0 %v802
      %1076 = vmatpush1.bf16.msra.mxu0 %v801
      %1077 = vmatprep.subr.bf16.mxu0 %v804
      %1078 = vmatpush1.bf16.msra.mxu0 %v803
      %1079 = vmatprep.subr.bf16.mxu0 %v806
      %1080 = vmatpush1.bf16.msra.mxu0 %v805
      %1081 = vmatprep.mubr.bf16.mxu0 %v380
      %1082 = vmatmul.mubr.bf16.gmra.mrb[0].mxu0 %v379
      %v1083 = vpop.f32.mrb[0].mxu0
      %v1084 = vadd.f32 %v1011, %v1083
      %v1085 = vpop.f32.mrb[0].mxu0
      %v1086 = vadd.f32 %v1013, %v1085
      %v1087 = vpop.f32.mrb[0].mxu0
      %v1088 = vadd.f32 %v1015, %v1087
      %v1089 = vpop.f32.mrb[0].mxu0
      %v1090 = vadd.f32 %v1017, %v1089
      %1091 = vmatprep.mubr.bf16.mxu0 %v386
      %1092 = vmatmul.mubr.bf16.gmra.mrb[0].mxu0 %v385
      %v1093 = vpop.f32.mrb[0].mxu0
      %v1094 = vadd.f32 %v1021, %v1093
      %v1095 = vpop.f32.mrb[0].mxu0
      %v1096 = vadd.f32 %v1023, %v1095
      %v1097 = vpop.f32.mrb[0].mxu0
      %v1098 = vadd.f32 %v1025, %v1097
      %v1099 = vpop.f32.mrb[0].mxu0
      %v1100 = vadd.f32 %v1027, %v1099
      %1101 = vmatprep.mubr.bf16.mxu0 %v392
      %1102 = vmatmul.mubr.bf16.gmra.mrb[0].mxu0 %v391
      %v1103 = vpop.f32.mrb[0].mxu0
      %v1104 = vadd.f32 %v1031, %v1103
      %v1105 = vpop.f32.mrb[0].mxu0
      %v1106 = vadd.f32 %v1033, %v1105
      %v1107 = vpop.f32.mrb[0].mxu0
      %v1108 = vadd.f32 %v1035, %v1107
      %v1109 = vpop.f32.mrb[0].mxu0
      %v1110 = vadd.f32 %v1037, %v1109
      %1111 = vmatprep.mubr.bf16.mxu0 %v398
      %1112 = vmatmul.mubr.bf16.gmra.mrb[0].mxu0 %v397
      %v1113 = vpop.f32.mrb[0].mxu0
      %v1114 = vadd.f32 %v1041, %v1113
      %v1115 = vpop.f32.mrb[0].mxu0
      %v1116 = vadd.f32 %v1043, %v1115
      %v1117 = vpop.f32.mrb[0].mxu0
      %v1118 = vadd.f32 %v1045, %v1117
      %v1119 = vpop.f32.mrb[0].mxu0
      %v1120 = vadd.f32 %v1047, %v1119
      %1121 = vdwg.mxu0
      %1130 = vrot.lane.b32.xlu0 %v1084, 64
      %v1131 = vpop.permute.xlu0 %1130
      %1132 = vrot.lane.b32.xlu0 %v1088, 64
      %v1133 = vpop.permute.xlu0 %1132
      %1134 = vrot.lane.b32.xlu0 %v1094, 64
      %v1135 = vpop.permute.xlu0 %1134
      %1136 = vrot.lane.b32.xlu0 %v1098, 64
      %v1137 = vpop.permute.xlu0 %1136
      %1138 = vrot.lane.b32.xlu0 %v1104, 64
      %v1139 = vpop.permute.xlu0 %1138
      %1140 = vrot.lane.b32.xlu0 %v1108, 64
      %v1141 = vpop.permute.xlu0 %1140
      %1142 = vrot.lane.b32.xlu0 %v1114, 64
      %v1143 = vpop.permute.xlu0 %1142
      %1144 = vrot.lane.b32.xlu0 %v1118, 64
      %v1145 = vpop.permute.xlu0 %1144
      %v1154 = vmax.f32 %v1084, %v1131
      %v1155 = vmax.f32 %v1088, %v1133
      %v1156 = vmax.f32 %v1094, %v1135
      %v1157 = vmax.f32 %v1098, %v1137
      %v1158 = vmax.f32 %v1104, %v1139
      %v1159 = vmax.f32 %v1108, %v1141
      %v1160 = vmax.f32 %v1114, %v1143
      %v1161 = vmax.f32 %v1118, %v1145
      %v1162 = vmax.f32 %v1154, %v1086
      %v1163 = vmax.f32 %v1155, %v1090
      %v1164 = vmax.f32 %v1156, %v1096
      %v1165 = vmax.f32 %v1157, %v1100
      %v1166 = vmax.f32 %v1158, %v1106
      %v1167 = vmax.f32 %v1159, %v1110
      %v1168 = vmax.f32 %v1160, %v1116
      %v1169 = vmax.f32 %v1161, %v1120
      %v1170 = vmax.f32 %v1162, 0.0
      %v1171 = vmax.f32 %v1163, 0.0
      %v1172 = vmax.f32 %v1164, 0.0
      %v1173 = vmax.f32 %v1165, 0.0
      %v1174 = vmax.f32 %v1166, 0.0
      %v1175 = vmax.f32 %v1167, 0.0
      %v1176 = vmax.f32 %v1168, 0.0
      %v1177 = vmax.f32 %v1169, 0.0
      %vm1178 = vcmask 523264
      %1179 = vst.msk [vmem:[%s170] sm:$0xff] %vm1178, %v1170
      %1180 = vst.msk [vmem:[%s170 + $0x8] sm:$0xff] %vm1178, %v1171
      %1181 = vst.msk [vmem:[%s170 + $0x10] sm:$0xff] %vm1178, %v1172
      %1182 = vst.msk [vmem:[%s170 + $0x18] sm:$0xff] %vm1178, %v1173
      %1183 = vst.msk [vmem:[%s170 + $0x20] sm:$0xff] %vm1178, %v1174
      %1184 = vst.msk [vmem:[%s170 + $0x28] sm:$0xff] %vm1178, %v1175
      %1185 = vst.msk [vmem:[%s170 + $0x30] sm:$0xff] %vm1178, %v1176
      %vm1186 = vcmask 520192
      %1187 = vst.msk [vmem:[%s170 + $0x38] sm:$0x1f] %vm1186, %v1177
      %p1188 = scmp.lt.s32.totalorder %s14, 1
      %s1189 = scalar_select %p1188, %s14, 1
      %s1190 = smul.addr %s1189, 8
      %s1191 = smul.addr %s1190, 8
      %s1192 = scalar_lea.vmem %s3, %s1191
      // Predicated region
      $region33: #{forward.10} parent=31 // pred_check
        %p1193 = pneg %p100
      $region34: #{forward.10} parent=31 // pred_check_branch
        %1195 = sbr.rel (%p1193) target = $region36
      $region35: #{forward.10} parent=31 // pred_region
        _
      $region36: #{forward.10} parent=31 // pred_fallthru
        _
    $region32: #{forward.10} parent=5 // pred_fallthru
      _
    %p1196 = scmp.le.s32.totalorder 2, %s9
    // Predicated region
    $region37: #{forward.10} parent=5 // pred_check
      %p1197 = pneg %p1196
    $region38: #{forward.10} parent=5 // pred_check_branch
      %1199 = sbr.rel (%p1197) target = $region40
    $region39: #{forward.10} parent=5 // pred_region
      %s1200 = ssub.s32 %s9, 2
      // Predicated region
      $region41: #{forward.10} parent=39 // pred_check
        %p1201 = pneg %p106
      $region42: #{forward.10} parent=39 // pred_check_branch
        %1203 = sbr.rel (%p1201) target = $region44
      $region43: #{forward.10} parent=39 // pred_region
        %p1204 = scmp.lt.s32.totalorder %s15, 1
        %s1205 = scalar_select %p1204, %s15, 1
        %s1206 = smul.addr %s1205, 8
        %s1207 = smul.addr %s1206, 8
        %s1208 = scalar_lea.vmem %s3, %s1207
      $region44: #{forward.10} parent=39 // pred_fallthru
        _
    $region40: #{forward.10} parent=5 // pred_fallthru
      _
  $region6: #{forward.10} parent=0 // loop_footer
    %s13 = sadd.s32 1, %s9
  $region7: #{forward.10} parent=0 // loop_footer_branch
    %8 = sbr.rel target = $region3
  $region8: #{forward.10} parent=0 // loop_exit
    _

// kernel: forward.11
$region0: #{forward.11}
  #allocation0 [shape = 'u32[]', space=smem, size = 0x4, offset = 0x4, fixed_abs, tag = 'smem constant byte address 0x4 - core index']
  #allocation1 [shape = 'u32[144,128]{1,0:T(1,128)}', space=vmem, size = 0x12000, scoped, tag = 'internal scratch']
  %s0 = inlined_call_operand.vmem [shape: bf16[2,19,448], index: 0, kind: input, shape index: {}]
  %s1 = inlined_call_operand.vmem [shape: bf16[448,192], index: 1, kind: input, shape index: {}]
  %s2 = inlined_call_operand.vmem [shape: f32[1,192], index: 2, kind: input, shape index: {}]
  %s3 = inlined_call_operand.vmem [shape: f32[2,19,64], index: 3, kind: output, shape index: {}]
  %s4 = sld [smem:[#allocation0]]
  $region45: #{forward.11} parent=0
    _
  %s6 = ssub.s32 1, %s4
  %s7 = scalar_select 0, %s6, %s4
  loop: start=0, step=1, limit=4
  $region2: #{forward.11} parent=0 // loop_pre_header
    _
  $region3: #{forward.11} parent=0 // loop_header
    %s9 = sphi 0, %s13
    %p10 = scmp.ge.s32.totalorder %s9, 4
    %s19 = sphi 0, %s21
    %s22 = sphi 0, %s19
    %s23 = sphi 0, %s22
    %s39 = sphi 0, %s23
    %s43 = sphi 0, %s43
    %s45 = sphi 0, %s43
    %s46 = sphi 0, %s45
    %s60 = sphi 0, %s46
    %s64 = sphi 0, %s64
    %s66 = sphi 0, %s64
    %s67 = sphi 0, %s66
    %s81 = sphi 0, %s67
    %s87 = sphi 0, %s89
    %s90 = sphi 0, %s87
    %s91 = sphi 0, %s90
    %s107 = sphi 0, %s91
  $region4: #{forward.11} parent=0 // loop_header_branch
    %12 = sbr.rel (%p10) target = $region8
  $region5: #{forward.11} parent=0 // loop_body
    %s14 = ssub.s32 %s9, 1
    %s15 = ssub.s32 %s9, 2
    %s16 = sadd.s32 %s9, 1
    %s17 = ssub.s32 %s9, %s16
    %p18 = scmp.eq.s32.totalorder %s17, 0
    %s20 = sadd.s32 %s19, 1
    %s21 = scalar_select %p18, %s19, %s20
    %p24 = pneg %p18
    %p25 = scmp.eq.s32.totalorder %s9, 1
    %p26 = por %p24, %p25
    %p27 = scmp.ne.s32.totalorder %s19, %s22
    %p28 = scmp.eq.s32.totalorder %s9, 0
    %p29 = por %p27, %p28
    %p30 = scmp.ne.s32.totalorder %s19, %s22
    %p31 = scmp.eq.s32.totalorder %s14, 1
    %p32 = por %p30, %p31
    %p33 = scmp.ne.s32.totalorder %s22, %s23
    %p34 = scmp.eq.s32.totalorder %s14, 0
    %p35 = por %p33, %p34
    %p36 = scmp.ne.s32.totalorder %s22, %s23
    %p37 = scmp.eq.s32.totalorder %s15, 1
    %p38 = por %p36, %p37
    %p40 = scmp.ne.s32.totalorder %s23, %s39
    %p41 = scmp.eq.s32.totalorder %s15, 0
    %p42 = por %p40, %p41
    %s44 = sadd.s32 %s43, 1
    %p47 = scmp.eq.s32.totalorder %s9, 1
    %p48 = scmp.ne.s32.totalorder %s43, %s45
    %p49 = scmp.eq.s32.totalorder %s9, 0
    %p50 = por %p48, %p49
    %p51 = scmp.ne.s32.totalorder %s43, %s45
    %p52 = scmp.eq.s32.totalorder %s14, 1
    %p53 = por %p51, %p52
    %p54 = scmp.ne.s32.totalorder %s45, %s46
    %p55 = scmp.eq.s32.totalorder %s14, 0
    %p56 = por %p54, %p55
    %p57 = scmp.ne.s32.totalorder %s45, %s46
    %p58 = scmp.eq.s32.totalorder %s15, 1
    %p59 = por %p57, %p58
    %p61 = scmp.ne.s32.totalorder %s46, %s60
    %p62 = scmp.eq.s32.totalorder %s15, 0
    %p63 = por %p61, %p62
    %s65 = sadd.s32 %s64, 1
    %p68 = scmp.eq.s32.totalorder %s9, 1
    %p69 = scmp.ne.s32.totalorder %s64, %s66
    %p70 = scmp.eq.s32.totalorder %s9, 0
    %p71 = por %p69, %p70
    %p72 = scmp.ne.s32.totalorder %s64, %s66
    %p73 = scmp.eq.s32.totalorder %s14, 1
    %p74 = por %p72, %p73
    %p75 = scmp.ne.s32.totalorder %s66, %s67
    %p76 = scmp.eq.s32.totalorder %s14, 0
    %p77 = por %p75, %p76
    %p78 = scmp.ne.s32.totalorder %s66, %s67
    %p79 = scmp.eq.s32.totalorder %s15, 1
    %p80 = por %p78, %p79
    %p82 = scmp.ne.s32.totalorder %s67, %s81
    %p83 = scmp.eq.s32.totalorder %s15, 0
    %p84 = por %p82, %p83
    %s85 = ssub.s32 %s9, %s16
    %p86 = scmp.eq.s32.totalorder %s85, 0
    %s88 = sadd.s32 %s87, 1
    %s89 = scalar_select %p86, %s87, %s88
    %p92 = pneg %p86
    %p93 = scmp.eq.s32.totalorder %s9, 1
    %p94 = por %p92, %p93
    %p95 = scmp.ne.s32.totalorder %s87, %s90
    %p96 = scmp.eq.s32.totalorder %s9, 0
    %p97 = por %p95, %p96
    %p98 = scmp.ne.s32.totalorder %s87, %s90
    %p99 = scmp.eq.s32.totalorder %s14, 1
    %p100 = por %p98, %p99
    %p101 = scmp.ne.s32.totalorder %s90, %s91
    %p102 = scmp.eq.s32.totalorder %s14, 0
    %p103 = por %p101, %p102
    %p104 = scmp.ne.s32.totalorder %s90, %s91
    %p105 = scmp.eq.s32.totalorder %s15, 1
    %p106 = por %p104, %p105
    %p108 = scmp.ne.s32.totalorder %s91, %s107
    %p109 = scmp.eq.s32.totalorder %s15, 0
    %p110 = por %p108, %p109
    %p111 = scmp.le.s32.totalorder 1, %s9
    %p112 = scmp.lt.s32.totalorder %s9, 3
    %p113 = pnand %p111, %p112
    %p114 = pneg %p113
    // Predicated region
    $region9: #{forward.11} parent=5 // pred_check
      _
    $region10: #{forward.11} parent=5 // pred_check_branch
      %116 = sbr.rel (%p113) target = $region12
    $region11: #{forward.11} parent=5 // pred_region
      %s117 = ssub.s32 %s9, 1
      // Predicated region
      $region13: #{forward.11} parent=11 // pred_check
        %p118 = pneg %p56
      $region14: #{forward.11} parent=11 // pred_check_branch
        %120 = sbr.rel (%p118) target = $region16
      $region15: #{forward.11} parent=11 // pred_region
        _
      $region16: #{forward.11} parent=11 // pred_fallthru
        _
      // Predicated region
      $region17: #{forward.11} parent=11 // pred_check
        %p121 = pneg %p77
      $region18: #{forward.11} parent=11 // pred_check_branch
        %123 = sbr.rel (%p121) target = $region20
      $region19: #{forward.11} parent=11 // pred_region
        _
      $region20: #{forward.11} parent=11 // pred_fallthru
        _
    $region12: #{forward.11} parent=5 // pred_fallthru
      _
    %p124 = scmp.lt.s32.totalorder %s9, 2
    // Predicated region
    $region21: #{forward.11} parent=5 // pred_check
      %p125 = pneg %p124
    $region22: #{forward.11} parent=5 // pred_check_branch
      %127 = sbr.rel (%p125) target = $region24
    $region23: #{forward.11} parent=5 // pred_region
      // Predicated region
      $region25: #{forward.11} parent=23 // pred_check
        %p128 = pneg %p29
      $region26: #{forward.11} parent=23 // pred_check_branch
        %130 = sbr.rel (%p128) target = $region28
      $region27: #{forward.11} parent=23 // pred_region
        %p131 = scmp.lt.s32.totalorder %s9, 1
        %s132 = scalar_select %p131, %s9, 1
        %s133 = smul.addr %s132, 12
        %s134 = smul.addr %s133, 4
        %s135 = scalar_lea.vmem %s0, %s134
      $region28: #{forward.11} parent=23 // pred_fallthru
        _
    $region24: #{forward.11} parent=5 // pred_fallthru
      _
    %p136 = scmp.le.s32.totalorder 1, %s9
    %p137 = scmp.lt.s32.totalorder %s9, 3
    %p138 = pnand %p136, %p137
    %p139 = pneg %p138
    // Predicated region
    $region29: #{forward.11} parent=5 // pred_check
      _
    $region30: #{forward.11} parent=5 // pred_check_branch
      %141 = sbr.rel (%p138) target = $region32
    $region31: #{forward.11} parent=5 // pred_region
      %s142 = ssub.s32 %s9, 1
      %p143 = scmp.lt.s32.totalorder %s14, 1
      %s144 = scalar_select %p143, %s14, 1
      %s145 = smul.addr %s144, 12
      %s146 = smul.addr %s145, 4
      %s147 = scalar_lea.vmem %s0, %s146
      %p148 = pneg %p35
      %p149 = pneg %p32
      %p150 = pneg %p56
      %p151 = pneg %p53
      %p152 = pneg %p77
      %p153 = pneg %p74
      %p154 = pneg %p103
      %p155 = pneg %p100
      %p156 = scmp.lt.s32.totalorder %s14, 1
      %s157 = scalar_select %p156, %s14, 1
      %s158 = smul.addr %s157, 3
      %s159 = smul.addr %s158, 8
      %s160 = scalar_lea.vmem %s3, %s159
      %p161 = scmp.lt.s32.totalorder %s14, 1
      %s162 = scalar_select %p161, %s14, 1
      %s163 = smul.addr %s162, 12
      %s164 = smul.addr %s163, 4
      %s165 = scalar_lea.vmem %s0, %s164
      %p166 = scmp.lt.s32.totalorder %s14, 1
      %s167 = scalar_select %p166, %s14, 1
      %s168 = smul.addr %s167, 3
      %s169 = smul.addr %s168, 8
      %s170 = scalar_lea.vmem %s3, %s169
      %v172 = vld [vmem:[%s165] sm:$0xff]
      %v173 = vld [vmem:[%s165 + $0x8] sm:$0xff]
      %v174 = vld [vmem:[%s165 + $0x10] sm:$0xff]
      %v175 = vld [vmem:[%s165 + $0x18] sm:$0xff]
      %v176 = vld [vmem:[%s165 + $0x20] sm:$0x33]
      %v177 = vld [vmem:[%s165 + $0x28] sm:$0x33]
      %v178 = vld [vmem:[%s1] sm:$0xff]
      %v179 = vld [vmem:[%s1 + $0x8] sm:$0xff]
      %v180 = vld [vmem:[%s1 + $0x10] sm:$0xff]
      %v181 = vld [vmem:[%s1 + $0x18] sm:$0xff]
      %v182 = vld [vmem:[%s1 + $0x20] sm:$0xff]
      %v183 = vld [vmem:[%s1 + $0x28] sm:$0xff]
      %v184 = vld [vmem:[%s1 + $0x30] sm:$0xff]
      %v185 = vld [vmem:[%s1 + $0x38] sm:$0xff]
      %v186 = vld [vmem:[%s1 + $0x40] sm:$0xff]
      %v187 = vld [vmem:[%s1 + $0x48] sm:$0xff]
      %v188 = vld [vmem:[%s1 + $0x50] sm:$0xff]
      %v189 = vld [vmem:[%s1 + $0x58] sm:$0xff]
      %v190 = vld [vmem:[%s1 + $0x60] sm:$0xff]
      %v191 = vld [vmem:[%s1 + $0x68] sm:$0xff]
      %v192 = vld [vmem:[%s1 + $0x70] sm:$0xff]
      %v193 = vld [vmem:[%s1 + $0x78] sm:$0xff]
      %v194 = vld [vmem:[%s1 + $0x80] sm:$0xff]
      %v195 = vld [vmem:[%s1 + $0x88] sm:$0xff]
      %v196 = vld [vmem:[%s1 + $0x90] sm:$0xff]
      %v197 = vld [vmem:[%s1 + $0x98] sm:$0xff]
      %v198 = vld [vmem:[%s1 + $0xa0] sm:$0xff]
      %v199 = vld [vmem:[%s1 + $0xa8] sm:$0xff]
      %v200 = vld [vmem:[%s1 + $0xb0] sm:$0xff]
      %v201 = vld [vmem:[%s1 + $0xb8] sm:$0xff]
      %v202 = vld [vmem:[%s1 + $0xc0] sm:$0xff]
      %v203 = vld [vmem:[%s1 + $0xc8] sm:$0xff]
      %v204 = vld [vmem:[%s1 + $0xd0] sm:$0xff]
      %v205 = vld [vmem:[%s1 + $0xd8] sm:$0xff]
      %v206 = vld [vmem:[%s1 + $0xe0] sm:$0xff]
      %v207 = vld [vmem:[%s1 + $0xe8] sm:$0xff]
      %v208 = vld [vmem:[%s1 + $0xf0] sm:$0xff]
      %v209 = vld [vmem:[%s1 + $0xf8] sm:$0xff]
      %v210 = vld [vmem:[%s1 + $0x100] sm:$0xff]
      %v211 = vld [vmem:[%s1 + $0x108] sm:$0xff]
      %v212 = vld [vmem:[%s1 + $0x110] sm:$0xff]
      %v213 = vld [vmem:[%s1 + $0x118] sm:$0xff]
      %v214 = vld [vmem:[%s1 + $0x120] sm:$0xff]
      %v215 = vld [vmem:[%s1 + $0x128] sm:$0xff]
      %v216 = vld [vmem:[%s1 + $0x130] sm:$0xff]
      %v217 = vld [vmem:[%s1 + $0x138] sm:$0xff]
      %v218 = vld [vmem:[%s1 + $0x140] sm:$0xff]
      %v219 = vld [vmem:[%s1 + $0x148] sm:$0xff]
      %v220 = vld [vmem:[%s1 + $0x150] sm:$0xff]
      %v221 = vld [vmem:[%s1 + $0x158] sm:$0xff]
      %v222 = vld [vmem:[%s1 + $0x160] sm:$0xff]
      %v223 = vld [vmem:[%s1 + $0x168] sm:$0xff]
      %v224 = vld [vmem:[%s1 + $0x170] sm:$0xff]
      %v225 = vld [vmem:[%s1 + $0x178] sm:$0xff]
      %v226 = vld [vmem:[%s1 + $0x180] sm:$0xff]
      %v227 = vld [vmem:[%s1 + $0x188] sm:$0xff]
      %v228 = vld [vmem:[%s1 + $0x190] sm:$0xff]
      %v229 = vld [vmem:[%s1 + $0x198] sm:$0xff]
      %v230 = vld [vmem:[%s1 + $0x1a0] sm:$0xff]
      %v231 = vld [vmem:[%s1 + $0x1a8] sm:$0xff]
      %v232 = vld [vmem:[%s1 + $0x1b0] sm:$0xff]
      %v233 = vld [vmem:[%s1 + $0x1b8] sm:$0xff]
      %v234 = vld [vmem:[%s2] sm:$0x3]
      %v236 = vlaneseq
      %v237 = vshrl.u32 %v236, 7
      %v238 = vsub.s32 0, %v237
      %v239 = vrot.slane %v234, %v238
      %v240 = vlaneseq
      %v241 = vshrl.u32 %v240, 7
      %v242 = vsub.s32 1, %v241
      %v243 = vrot.slane %v234, %v242
      %v252 = vunpack.c.l.b16 %v172
      %v253 = vunpack.c.h.b16 %v172
      %v254 = vunpack.c.l.b16 %v173
      %v255 = vunpack.c.h.b16 %v173
      %v256 = vunpack.c.l.b16 %v174
      %v257 = vunpack.c.h.b16 %v174
      %v258 = vunpack.c.l.b16 %v175
      %v259 = vunpack.c.h.b16 %v175
      %v260 = vunpack.c.l.b16 %v176
      %v261 = vunpack.c.h.b16 %v176
      %v262 = vunpack.c.l.b16 %v177
      %v263 = vunpack.c.h.b16 %v177
      %v264 = vpack.c.b16 %v256, %v252
      %v265 = vpack.c.b16 %v257, %v253
      %v266 = vpack.c.b16 %v258, %v254
      %v267 = vpack.c.b16 %v259, %v255
      %v268 = vpack.c.b16 %v260, %v260
      %v269 = vpack.c.b16 %v261, %v261
      %v270 = vpack.c.b16 %v262, %v262
      %v271 = vpack.c.b16 %v263, %v263
      %v334 = vunpack.c.l.b16 %v178
      %v335 = vunpack.c.h.b16 %v178
      %v336 = vunpack.c.l.b16 %v179
      %v337 = vunpack.c.h.b16 %v179
      %v338 = vunpack.c.l.b16 %v180
      %v339 = vunpack.c.h.b16 %v180
      %v340 = vunpack.c.l.b16 %v181
      %v341 = vunpack.c.h.b16 %v181
      %v342 = vunpack.c.l.b16 %v182
      %v343 = vunpack.c.h.b16 %v182
      %v344 = vunpack.c.l.b16 %v183
      %v345 = vunpack.c.h.b16 %v183
      %v346 = vunpack.c.l.b16 %v184
      %v347 = vunpack.c.h.b16 %v184
      %v348 = vunpack.c.l.b16 %v185
      %v349 = vunpack.c.h.b16 %v185
      %v350 = vunpack.c.l.b16 %v186
      %v351 = vunpack.c.h.b16 %v186
      %v352 = vunpack.c.l.b16 %v187
      %v353 = vunpack.c.h.b16 %v187
      %v354 = vunpack.c.l.b16 %v188
      %v355 = vunpack.c.h.b16 %v188
      %v356 = vunpack.c.l.b16 %v189
      %v357 = vunpack.c.h.b16 %v189
      %v358 = vunpack.c.l.b16 %v190
      %v359 = vunpack.c.h.b16 %v190
      %v360 = vunpack.c.l.b16 %v191
      %v361 = vunpack.c.h.b16 %v191
      %v362 = vunpack.c.l.b16 %v192
      %v363 = vunpack.c.h.b16 %v192
      %v364 = vunpack.c.l.b16 %v193
      %v365 = vunpack.c.h.b16 %v193
      %v366 = vunpack.c.l.b16 %v194
      %v367 = vunpack.c.h.b16 %v194
      %v368 = vunpack.c.l.b16 %v195
      %v369 = vunpack.c.h.b16 %v195
      %v370 = vunpack.c.l.b16 %v196
      %v371 = vunpack.c.h.b16 %v196
      %v372 = vunpack.c.l.b16 %v197
      %v373 = vunpack.c.h.b16 %v197
      %v374 = vunpack.c.l.b16 %v198
      %v375 = vunpack.c.h.b16 %v198
      %v376 = vunpack.c.l.b16 %v199
      %v377 = vunpack.c.h.b16 %v199
      %v378 = vunpack.c.l.b16 %v200
      %v379 = vunpack.c.h.b16 %v200
      %v380 = vunpack.c.l.b16 %v201
      %v381 = vunpack.c.h.b16 %v201
      %v382 = vunpack.c.l.b16 %v202
      %v383 = vunpack.c.h.b16 %v202
      %v384 = vunpack.c.l.b16 %v203
      %v385 = vunpack.c.h.b16 %v203
      %v386 = vunpack.c.l.b16 %v204
      %v387 = vunpack.c.h.b16 %v204
      %v388 = vunpack.c.l.b16 %v205
      %v389 = vunpack.c.h.b16 %v205
      %v390 = vunpack.c.l.b16 %v206
      %v391 = vunpack.c.h.b16 %v206
      %v392 = vunpack.c.l.b16 %v207
      %v393 = vunpack.c.h.b16 %v207
      %v394 = vunpack.c.l.b16 %v208
      %v395 = vunpack.c.h.b16 %v208
      %v396 = vunpack.c.l.b16 %v209
      %v397 = vunpack.c.h.b16 %v209
      %v398 = vunpack.c.l.b16 %v210
      %v399 = vunpack.c.h.b16 %v210
      %v400 = vunpack.c.l.b16 %v211
      %v401 = vunpack.c.h.b16 %v211
      %v402 = vunpack.c.l.b16 %v212
      %v403 = vunpack.c.h.b16 %v212
      %v404 = vunpack.c.l.b16 %v213
      %v405 = vunpack.c.h.b16 %v213
      %v406 = vunpack.c.l.b16 %v214
      %v407 = vunpack.c.h.b16 %v214
      %v408 = vunpack.c.l.b16 %v215
      %v409 = vunpack.c.h.b16 %v215
      %v410 = vunpack.c.l.b16 %v216
      %v411 = vunpack.c.h.b16 %v216
      %v412 = vunpack.c.l.b16 %v217
      %v413 = vunpack.c.h.b16 %v217
      %v414 = vunpack.c.l.b16 %v218
      %v415 = vunpack.c.h.b16 %v218
      %v416 = vunpack.c.l.b16 %v219
      %v417 = vunpack.c.h.b16 %v219
      %v418 = vunpack.c.l.b16 %v220
      %v419 = vunpack.c.h.b16 %v220
      %v420 = vunpack.c.l.b16 %v221
      %v421 = vunpack.c.h.b16 %v221
      %v422 = vunpack.c.l.b16 %v222
      %v423 = vunpack.c.h.b16 %v222
      %v424 = vunpack.c.l.b16 %v223
      %v425 = vunpack.c.h.b16 %v223
      %v426 = vunpack.c.l.b16 %v224
      %v427 = vunpack.c.h.b16 %v224
      %v428 = vunpack.c.l.b16 %v225
      %v429 = vunpack.c.h.b16 %v225
      %v430 = vunpack.c.l.b16 %v226
      %v431 = vunpack.c.h.b16 %v226
      %v432 = vunpack.c.l.b16 %v227
      %v433 = vunpack.c.h.b16 %v227
      %v434 = vunpack.c.l.b16 %v228
      %v435 = vunpack.c.h.b16 %v228
      %v436 = vunpack.c.l.b16 %v229
      %v437 = vunpack.c.h.b16 %v229
      %v438 = vunpack.c.l.b16 %v230
      %v439 = vunpack.c.h.b16 %v230
      %v440 = vunpack.c.l.b16 %v231
      %v441 = vunpack.c.h.b16 %v231
      %v442 = vunpack.c.l.b16 %v232
      %v443 = vunpack.c.h.b16 %v232
      %v444 = vunpack.c.l.b16 %v233
      %v445 = vunpack.c.h.b16 %v233
      %v446 = vpack.c.b16 %v336, %v334
      %v447 = vpack.c.b16 %v337, %v335
      %v448 = vpack.c.b16 %v340, %v338
      %v449 = vpack.c.b16 %v341, %v339
      %v450 = vpack.c.b16 %v344, %v342
      %v451 = vpack.c.b16 %v345, %v343
      %v452 = vpack.c.b16 %v348, %v346
      %v453 = vpack.c.b16 %v349, %v347
      %v454 = vpack.c.b16 %v352, %v350
      %v455 = vpack.c.b16 %v353, %v351
      %v456 = vpack.c.b16 %v356, %v354
      %v457 = vpack.c.b16 %v357, %v355
      %v458 = vpack.c.b16 %v360, %v358
      %v459 = vpack.c.b16 %v361, %v359
      %v460 = vpack.c.b16 %v364, %v362
      %v461 = vpack.c.b16 %v365, %v363
      %v462 = vpack.c.b16 %v368, %v366
      %v463 = vpack.c.b16 %v369, %v367
      %v464 = vpack.c.b16 %v372, %v370
      %v465 = vpack.c.b16 %v373, %v371
      %v466 = vpack.c.b16 %v376, %v374
      %v467 = vpack.c.b16 %v377, %v375
      %v468 = vpack.c.b16 %v380, %v378
      %v469 = vpack.c.b16 %v381, %v379
      %v470 = vpack.c.b16 %v384, %v382
      %v471 = vpack.c.b16 %v385, %v383
      %v472 = vpack.c.b16 %v388, %v386
      %v473 = vpack.c.b16 %v389, %v387
      %v474 = vpack.c.b16 %v392, %v390
      %v475 = vpack.c.b16 %v393, %v391
      %v476 = vpack.c.b16 %v396, %v394
      %v477 = vpack.c.b16 %v397, %v395
      %v478 = vpack.c.b16 %v400, %v398
      %v479 = vpack.c.b16 %v401, %v399
      %v480 = vpack.c.b16 %v404, %v402
      %v481 = vpack.c.b16 %v405, %v403
      %v482 = vpack.c.b16 %v408, %v406
      %v483 = vpack.c.b16 %v409, %v407
      %v484 = vpack.c.b16 %v412, %v410
      %v485 = vpack.c.b16 %v413, %v411
      %v486 = vpack.c.b16 %v416, %v414
      %v487 = vpack.c.b16 %v417, %v415
      %v488 = vpack.c.b16 %v420, %v418
      %v489 = vpack.c.b16 %v421, %v419
      %v490 = vpack.c.b16 %v424, %v422
      %v491 = vpack.c.b16 %v425, %v423
      %v492 = vpack.c.b16 %v428, %v426
      %v493 = vpack.c.b16 %v429, %v427
      %v494 = vpack.c.b16 %v432, %v430
      %v495 = vpack.c.b16 %v433, %v431
      %v496 = vpack.c.b16 %v436, %v434
      %v497 = vpack.c.b16 %v437, %v435
      %v498 = vpack.c.b16 %v440, %v438
      %v499 = vpack.c.b16 %v441, %v439
      %v500 = vpack.c.b16 %v444, %v442
      %v501 = vpack.c.b16 %v445, %v443
      %vm558 = vcmask 523264
      %v560 = vsel %vm558, %v267, 0
      %v563 = vsel %vm558, %v271, 0
      %565 = vmatprep.subr.bf16.mxu0 %v447
      %566 = vmatpush1.bf16.msra.mxu0 %v446
      %567 = vmatprep.subr.bf16.mxu0 %v449
      %568 = vmatpush1.bf16.msra.mxu0 %v448
      %569 = vmatprep.subr.bf16.mxu0 %v451
      %570 = vmatpush1.bf16.msra.mxu0 %v450
      %571 = vmatprep.subr.bf16.mxu0 %v453
      %572 = vmatpush1.bf16.msra.mxu0 %v452
      %573 = vmatprep.subr.bf16.mxu0 %v455
      %574 = vmatpush1.bf16.msra.mxu0 %v454
      %575 = vmatprep.subr.bf16.mxu0 %v457
      %576 = vmatpush1.bf16.msra.mxu0 %v456
      %577 = vmatprep.subr.bf16.mxu0 %v459
      %578 = vmatpush1.bf16.msra.mxu0 %v458
      %579 = vmatprep.subr.bf16.mxu0 %v461
      %580 = vmatpush1.bf16.msra.mxu0 %v460
      %581 = vmatprep.subr.bf16.mxu0 %v463
      %582 = vmatpush1.bf16.msra.mxu0 %v462
      %583 = vmatprep.subr.bf16.mxu0 %v465
      %584 = vmatpush1.bf16.msra.mxu0 %v464
      %585 = vmatprep.subr.bf16.mxu0 %v467
      %586 = vmatpush1.bf16.msra.mxu0 %v466
      %587 = vmatprep.subr.bf16.mxu0 %v469
      %588 = vmatpush1.bf16.msra.mxu0 %v468
      %589 = vmatprep.subr.bf16.mxu0 %v471
      %590 = vmatpush1.bf16.msra.mxu0 %v470
      %591 = vmatprep.subr.bf16.mxu0 %v473
      %592 = vmatpush1.bf16.msra.mxu0 %v472
      %593 = vmatprep.subr.bf16.mxu0 %v475
      %594 = vmatpush1.bf16.msra.mxu0 %v474
      %595 = vmatprep.subr.bf16.mxu0 %v477
      %596 = vmatpush1.bf16.msra.mxu0 %v476
      %597 = vmatprep.mubr.bf16.mxu0 %v265
      %598 = vmatmul.mubr.bf16.gmra.mrb[0].mxu0 %v264
      %v599 = vpop.f32.mrb[0].mxu0
      %v600 = vadd.f32 %v239, %v599
      %v601 = vpop.f32.mrb[0].mxu0
      %v602 = vadd.f32 %v243, %v601
      %v603 = vpop.f32.mrb[0].mxu0
      %v604 = vadd.f32 %v239, %v603
      %v605 = vpop.f32.mrb[0].mxu0
      %v606 = vadd.f32 %v243, %v605
      %607 = vmatprep.mubr.bf16.mxu0 %v269
      %608 = vmatmul.mubr.bf16.gmra.mrb[0].mxu0 %v268
      %v609 = vpop.f32.mrb[0].mxu0
      %v610 = vadd.f32 %v239, %v609
      %v611 = vpop.f32.mrb[0].mxu0
      %v612 = vadd.f32 %v243, %v611
      %v613 = vpop.f32.mrb[0].mxu0
      %v614 = vpop.f32.mrb[0].mxu0
      %615 = vdwg.mxu0
      %616 = vmatprep.subr.bf16.mxu0 %v479
      %617 = vmatpush1.bf16.msra.mxu0 %v478
      %618 = vmatprep.subr.bf16.mxu0 %v481
      %619 = vmatpush1.bf16.msra.mxu0 %v480
      %620 = vmatprep.subr.bf16.mxu0 %v483
      %621 = vmatpush1.bf16.msra.mxu0 %v482
      %622 = vmatprep.subr.bf16.mxu0 %v485
      %623 = vmatpush1.bf16.msra.mxu0 %v484
      %624 = vmatprep.subr.bf16.mxu0 %v487
      %625 = vmatpush1.bf16.msra.mxu0 %v486
      %626 = vmatprep.subr.bf16.mxu0 %v489
      %627 = vmatpush1.bf16.msra.mxu0 %v488
      %628 = vmatprep.subr.bf16.mxu0 %v491
      %629 = vmatpush1.bf16.msra.mxu0 %v490
      %630 = vmatprep.subr.bf16.mxu0 %v493
      %631 = vmatpush1.bf16.msra.mxu0 %v492
      %632 = vmatprep.subr.bf16.mxu0 %v495
      %633 = vmatpush1.bf16.msra.mxu0 %v494
      %634 = vmatprep.subr.bf16.mxu0 %v497
      %635 = vmatpush1.bf16.msra.mxu0 %v496
      %636 = vmatprep.subr.bf16.mxu0 %v499
      %637 = vmatpush1.bf16.msra.mxu0 %v498
      %638 = vmatprep.subr.bf16.mxu0 %v501
      %639 = vmatpush1.bf16.msra.mxu0 %v500
      %640 = vmatprep.subr.bf16.mxu0 0
      %641 = vmatpush1.bf16.msra.mxu0 0
      %642 = vmatprep.subr.bf16.mxu0 0
      %643 = vmatpush1.bf16.msra.mxu0 0
      %644 = vmatprep.subr.bf16.mxu0 0
      %645 = vmatpush1.bf16.msra.mxu0 0
      %646 = vmatprep.subr.bf16.mxu0 0
      %647 = vmatpush1.bf16.msra.mxu0 0
      %648 = vmatprep.mubr.bf16.mxu0 %v560
      %649 = vmatmul.mubr.bf16.gmra.mrb[0].mxu0 %v266
      %v650 = vpop.f32.mrb[0].mxu0
      %v651 = vadd.f32 %v600, %v650
      %v652 = vpop.f32.mrb[0].mxu0
      %v653 = vadd.f32 %v602, %v652
      %v654 = vpop.f32.mrb[0].mxu0
      %v655 = vadd.f32 %v604, %v654
      %v656 = vpop.f32.mrb[0].mxu0
      %v657 = vadd.f32 %v606, %v656
      %658 = vmatprep.mubr.bf16.mxu0 %v563
      %659 = vmatmul.mubr.bf16.gmra.mrb[0].mxu0 %v270
      %v660 = vpop.f32.mrb[0].mxu0
      %v661 = vadd.f32 %v610, %v660
      %v662 = vpop.f32.mrb[0].mxu0
      %v663 = vadd.f32 %v612, %v662
      %v664 = vpop.f32.mrb[0].mxu0
      %v665 = vpop.f32.mrb[0].mxu0
      %666 = vdwg.mxu0
      %670 = vrot.lane.b32.xlu0 %v651, 64
      %v671 = vpop.permute.xlu0 %670
      %672 = vrot.lane.b32.xlu0 %v655, 64
      %v673 = vpop.permute.xlu0 %672
      %674 = vrot.lane.b32.xlu0 %v661, 64
      %v675 = vpop.permute.xlu0 %674
      %v679 = vmax.f32 %v651, %v671
      %v680 = vmax.f32 %v655, %v673
      %v681 = vmax.f32 %v661, %v675
      %v682 = vmax.f32 %v679, %v653
      %v683 = vmax.f32 %v680, %v657
      %v684 = vmax.f32 %v681, %v663
      %v685 = vmax.f32 %v682, 0.0
      %v686 = vmax.f32 %v683, 0.0
      %v687 = vmax.f32 %v684, 0.0
      %688 = vst.msk [vmem:[%s170] sm:$0xff] %vm558, %v685
      %689 = vst.msk [vmem:[%s170 + $0x8] sm:$0xff] %vm558, %v686
      %vm690 = vcmask 518144
      %691 = vst.msk [vmem:[%s170 + $0x10] sm:$0x7] %vm690, %v687
      %p692 = scmp.lt.s32.totalorder %s14, 1
      %s693 = scalar_select %p692, %s14, 1
      %s694 = smul.addr %s693, 3
      %s695 = smul.addr %s694, 8
      %s696 = scalar_lea.vmem %s3, %s695
      // Predicated region
      $region33: #{forward.11} parent=31 // pred_check
        %p697 = pneg %p100
      $region34: #{forward.11} parent=31 // pred_check_branch
        %699 = sbr.rel (%p697) target = $region36
      $region35: #{forward.11} parent=31 // pred_region
        _
      $region36: #{forward.11} parent=31 // pred_fallthru
        _
    $region32: #{forward.11} parent=5 // pred_fallthru
      _
    %p700 = scmp.le.s32.totalorder 2, %s9
    // Predicated region
    $region37: #{forward.11} parent=5 // pred_check
      %p701 = pneg %p700
    $region38: #{forward.11} parent=5 // pred_check_branch
      %703 = sbr.rel (%p701) target = $region40
    $region39: #{forward.11} parent=5 // pred_region
      %s704 = ssub.s32 %s9, 2
      // Predicated region
      $region41: #{forward.11} parent=39 // pred_check
        %p705 = pneg %p106
      $region42: #{forward.11} parent=39 // pred_check_branch
        %707 = sbr.rel (%p705) target = $region44
      $region43: #{forward.11} parent=39 // pred_region
        %p708 = scmp.lt.s32.totalorder %s15, 1
        %s709 = scalar_select %p708, %s15, 1
        %s710 = smul.addr %s709, 3
        %s711 = smul.addr %s710, 8
        %s712 = scalar_lea.vmem %s3, %s711
      $region44: #{forward.11} parent=39 // pred_fallthru
        _
    $region40: #{forward.11} parent=5 // pred_fallthru
      _
  $region6: #{forward.11} parent=0 // loop_footer
    %s13 = sadd.s32 1, %s9
  $region7: #{forward.11} parent=0 // loop_footer_branch
    %8 = sbr.rel target = $region3
  $region8: #{forward.11} parent=0 // loop_exit
    _

// kernel: forward.12
$region0: #{forward.12}
  #allocation0 [shape = 'u32[]', space=smem, size = 0x4, offset = 0x4, fixed_abs, tag = 'smem constant byte address 0x4 - core index']
  #allocation1 [shape = 'u32[144,128]{1,0:T(1,128)}', space=vmem, size = 0x12000, scoped, tag = 'internal scratch']
  %s0 = inlined_call_operand.vmem [shape: bf16[2,5,448], index: 0, kind: input, shape index: {}]
  %s1 = inlined_call_operand.vmem [shape: bf16[448,384], index: 1, kind: input, shape index: {}]
  %s2 = inlined_call_operand.vmem [shape: f32[1,384], index: 2, kind: input, shape index: {}]
  %s3 = inlined_call_operand.vmem [shape: f32[2,5,128], index: 3, kind: output, shape index: {}]
  %s4 = sld [smem:[#allocation0]]
  $region45: #{forward.12} parent=0
    _
  %s6 = ssub.s32 1, %s4
  %s7 = scalar_select 0, %s6, %s4
  loop: start=0, step=1, limit=4
  $region2: #{forward.12} parent=0 // loop_pre_header
    _
  $region3: #{forward.12} parent=0 // loop_header
    %s9 = sphi 0, %s13
    %p10 = scmp.ge.s32.totalorder %s9, 4
    %s19 = sphi 0, %s21
    %s22 = sphi 0, %s19
    %s23 = sphi 0, %s22
    %s39 = sphi 0, %s23
    %s43 = sphi 0, %s43
    %s45 = sphi 0, %s43
    %s46 = sphi 0, %s45
    %s60 = sphi 0, %s46
    %s64 = sphi 0, %s64
    %s66 = sphi 0, %s64
    %s67 = sphi 0, %s66
    %s81 = sphi 0, %s67
    %s87 = sphi 0, %s89
    %s90 = sphi 0, %s87
    %s91 = sphi 0, %s90
    %s107 = sphi 0, %s91
  $region4: #{forward.12} parent=0 // loop_header_branch
    %12 = sbr.rel (%p10) target = $region8
  $region5: #{forward.12} parent=0 // loop_body
    %s14 = ssub.s32 %s9, 1
    %s15 = ssub.s32 %s9, 2
    %s16 = sadd.s32 %s9, 1
    %s17 = ssub.s32 %s9, %s16
    %p18 = scmp.eq.s32.totalorder %s17, 0
    %s20 = sadd.s32 %s19, 1
    %s21 = scalar_select %p18, %s19, %s20
    %p24 = pneg %p18
    %p25 = scmp.eq.s32.totalorder %s9, 1
    %p26 = por %p24, %p25
    %p27 = scmp.ne.s32.totalorder %s19, %s22
    %p28 = scmp.eq.s32.totalorder %s9, 0
    %p29 = por %p27, %p28
    %p30 = scmp.ne.s32.totalorder %s19, %s22
    %p31 = scmp.eq.s32.totalorder %s14, 1
    %p32 = por %p30, %p31
    %p33 = scmp.ne.s32.totalorder %s22, %s23
    %p34 = scmp.eq.s32.totalorder %s14, 0
    %p35 = por %p33, %p34
    %p36 = scmp.ne.s32.totalorder %s22, %s23
    %p37 = scmp.eq.s32.totalorder %s15, 1
    %p38 = por %p36, %p37
    %p40 = scmp.ne.s32.totalorder %s23, %s39
    %p41 = scmp.eq.s32.totalorder %s15, 0
    %p42 = por %p40, %p41
    %s44 = sadd.s32 %s43, 1
    %p47 = scmp.eq.s32.totalorder %s9, 1
    %p48 = scmp.ne.s32.totalorder %s43, %s45
    %p49 = scmp.eq.s32.totalorder %s9, 0
    %p50 = por %p48, %p49
    %p51 = scmp.ne.s32.totalorder %s43, %s45
    %p52 = scmp.eq.s32.totalorder %s14, 1
    %p53 = por %p51, %p52
    %p54 = scmp.ne.s32.totalorder %s45, %s46
    %p55 = scmp.eq.s32.totalorder %s14, 0
    %p56 = por %p54, %p55
    %p57 = scmp.ne.s32.totalorder %s45, %s46
    %p58 = scmp.eq.s32.totalorder %s15, 1
    %p59 = por %p57, %p58
    %p61 = scmp.ne.s32.totalorder %s46, %s60
    %p62 = scmp.eq.s32.totalorder %s15, 0
    %p63 = por %p61, %p62
    %s65 = sadd.s32 %s64, 1
    %p68 = scmp.eq.s32.totalorder %s9, 1
    %p69 = scmp.ne.s32.totalorder %s64, %s66
    %p70 = scmp.eq.s32.totalorder %s9, 0
    %p71 = por %p69, %p70
    %p72 = scmp.ne.s32.totalorder %s64, %s66
    %p73 = scmp.eq.s32.totalorder %s14, 1
    %p74 = por %p72, %p73
    %p75 = scmp.ne.s32.totalorder %s66, %s67
    %p76 = scmp.eq.s32.totalorder %s14, 0
    %p77 = por %p75, %p76
    %p78 = scmp.ne.s32.totalorder %s66, %s67
    %p79 = scmp.eq.s32.totalorder %s15, 1
    %p80 = por %p78, %p79
    %p82 = scmp.ne.s32.totalorder %s67, %s81
    %p83 = scmp.eq.s32.totalorder %s15, 0
    %p84 = por %p82, %p83
    %s85 = ssub.s32 %s9, %s16
    %p86 = scmp.eq.s32.totalorder %s85, 0
    %s88 = sadd.s32 %s87, 1
    %s89 = scalar_select %p86, %s87, %s88
    %p92 = pneg %p86
    %p93 = scmp.eq.s32.totalorder %s9, 1
    %p94 = por %p92, %p93
    %p95 = scmp.ne.s32.totalorder %s87, %s90
    %p96 = scmp.eq.s32.totalorder %s9, 0
    %p97 = por %p95, %p96
    %p98 = scmp.ne.s32.totalorder %s87, %s90
    %p99 = scmp.eq.s32.totalorder %s14, 1
    %p100 = por %p98, %p99
    %p101 = scmp.ne.s32.totalorder %s90, %s91
    %p102 = scmp.eq.s32.totalorder %s14, 0
    %p103 = por %p101, %p102
    %p104 = scmp.ne.s32.totalorder %s90, %s91
    %p105 = scmp.eq.s32.totalorder %s15, 1
    %p106 = por %p104, %p105
    %p108 = scmp.ne.s32.totalorder %s91, %s107
    %p109 = scmp.eq.s32.totalorder %s15, 0
    %p110 = por %p108, %p109
    %p111 = scmp.le.s32.totalorder 1, %s9
    %p112 = scmp.lt.s32.totalorder %s9, 3
    %p113 = pnand %p111, %p112
    %p114 = pneg %p113
    // Predicated region
    $region9: #{forward.12} parent=5 // pred_check
      _
    $region10: #{forward.12} parent=5 // pred_check_branch
      %116 = sbr.rel (%p113) target = $region12
    $region11: #{forward.12} parent=5 // pred_region
      %s117 = ssub.s32 %s9, 1
      // Predicated region
      $region13: #{forward.12} parent=11 // pred_check
        %p118 = pneg %p56
      $region14: #{forward.12} parent=11 // pred_check_branch
        %120 = sbr.rel (%p118) target = $region16
      $region15: #{forward.12} parent=11 // pred_region
        _
      $region16: #{forward.12} parent=11 // pred_fallthru
        _
      // Predicated region
      $region17: #{forward.12} parent=11 // pred_check
        %p121 = pneg %p77
      $region18: #{forward.12} parent=11 // pred_check_branch
        %123 = sbr.rel (%p121) target = $region20
      $region19: #{forward.12} parent=11 // pred_region
        _
      $region20: #{forward.12} parent=11 // pred_fallthru
        _
    $region12: #{forward.12} parent=5 // pred_fallthru
      _
    %p124 = scmp.lt.s32.totalorder %s9, 2
    // Predicated region
    $region21: #{forward.12} parent=5 // pred_check
      %p125 = pneg %p124
    $region22: #{forward.12} parent=5 // pred_check_branch
      %127 = sbr.rel (%p125) target = $region24
    $region23: #{forward.12} parent=5 // pred_region
      // Predicated region
      $region25: #{forward.12} parent=23 // pred_check
        %p128 = pneg %p29
      $region26: #{forward.12} parent=23 // pred_check_branch
        %130 = sbr.rel (%p128) target = $region28
      $region27: #{forward.12} parent=23 // pred_region
        %p131 = scmp.lt.s32.totalorder %s9, 1
        %s132 = scalar_select %p131, %s9, 1
        %s133 = smul.addr %s132, 4
        %s134 = smul.addr %s133, 4
        %s135 = scalar_lea.vmem %s0, %s134
      $region28: #{forward.12} parent=23 // pred_fallthru
        _
    $region24: #{forward.12} parent=5 // pred_fallthru
      _
    %p136 = scmp.le.s32.totalorder 1, %s9
    %p137 = scmp.lt.s32.totalorder %s9, 3
    %p138 = pnand %p136, %p137
    %p139 = pneg %p138
    // Predicated region
    $region29: #{forward.12} parent=5 // pred_check
      _
    $region30: #{forward.12} parent=5 // pred_check_branch
      %141 = sbr.rel (%p138) target = $region32
    $region31: #{forward.12} parent=5 // pred_region
      %s142 = ssub.s32 %s9, 1
      %p143 = scmp.lt.s32.totalorder %s14, 1
      %s144 = scalar_select %p143, %s14, 1
      %s145 = smul.addr %s144, 4
      %s146 = smul.addr %s145, 4
      %s147 = scalar_lea.vmem %s0, %s146
      %p148 = pneg %p35
      %p149 = pneg %p32
      %p150 = pneg %p56
      %p151 = pneg %p53
      %p152 = pneg %p77
      %p153 = pneg %p74
      %p154 = pneg %p103
      %p155 = pneg %p100
      %p156 = scmp.lt.s32.totalorder %s14, 1
      %s157 = scalar_select %p156, %s14, 1
      %s158 = smul.addr %s157, 8
      %s159 = scalar_lea.vmem %s3, %s158
      %p160 = scmp.lt.s32.totalorder %s14, 1
      %s161 = scalar_select %p160, %s14, 1
      %s162 = smul.addr %s161, 4
      %s163 = smul.addr %s162, 4
      %s164 = scalar_lea.vmem %s0, %s163
      %p165 = scmp.lt.s32.totalorder %s14, 1
      %s166 = scalar_select %p165, %s14, 1
      %s167 = smul.addr %s166, 8
      %s168 = scalar_lea.vmem %s3, %s167
      %v170 = vld [vmem:[%s164] sm:$0x77]
      %v171 = vld [vmem:[%s164 + $0x8] sm:$0x77]
      %v172 = vld [vmem:[%s1] sm:$0xff]
      %v173 = vld [vmem:[%s1 + $0x8] sm:$0xf]
      %v174 = vld [vmem:[%s1 + $0xc] sm:$0xff]
      %v175 = vld [vmem:[%s1 + $0x14] sm:$0xf]
      %v176 = vld [vmem:[%s1 + $0x18] sm:$0xff]
      %v177 = vld [vmem:[%s1 + $0x20] sm:$0xf]
      %v178 = vld [vmem:[%s1 + $0x24] sm:$0xff]
      %v179 = vld [vmem:[%s1 + $0x2c] sm:$0xf]
      %v180 = vld [vmem:[%s1 + $0x30] sm:$0xff]
      %v181 = vld [vmem:[%s1 + $0x38] sm:$0xf]
      %v182 = vld [vmem:[%s1 + $0x3c] sm:$0xff]
      %v183 = vld [vmem:[%s1 + $0x44] sm:$0xf]
      %v184 = vld [vmem:[%s1 + $0x48] sm:$0xff]
      %v185 = vld [vmem:[%s1 + $0x50] sm:$0xf]
      %v186 = vld [vmem:[%s1 + $0x54] sm:$0xff]
      %v187 = vld [vmem:[%s1 + $0x5c] sm:$0xf]
      %v188 = vld [vmem:[%s1 + $0x60] sm:$0xff]
      %v189 = vld [vmem:[%s1 + $0x68] sm:$0xf]
      %v190 = vld [vmem:[%s1 + $0x6c] sm:$0xff]
      %v191 = vld [vmem:[%s1 + $0x74] sm:$0xf]
      %v192 = vld [vmem:[%s1 + $0x78] sm:$0xff]
      %v193 = vld [vmem:[%s1 + $0x80] sm:$0xf]
      %v194 = vld [vmem:[%s1 + $0x84] sm:$0xff]
      %v195 = vld [vmem:[%s1 + $0x8c] sm:$0xf]
      %v196 = vld [vmem:[%s1 + $0x90] sm:$0xff]
      %v197 = vld [vmem:[%s1 + $0x98] sm:$0xf]
      %v198 = vld [vmem:[%s1 + $0x9c] sm:$0xff]
      %v199 = vld [vmem:[%s1 + $0xa4] sm:$0xf]
      %v200 = vld [vmem:[%s1 + $0xa8] sm:$0xff]
      %v201 = vld [vmem:[%s1 + $0xb0] sm:$0xf]
      %v202 = vld [vmem:[%s1 + $0xb4] sm:$0xff]
      %v203 = vld [vmem:[%s1 + $0xbc] sm:$0xf]
      %v204 = vld [vmem:[%s1 + $0xc0] sm:$0xff]
      %v205 = vld [vmem:[%s1 + $0xc8] sm:$0xf]
      %v206 = vld [vmem:[%s1 + $0xcc] sm:$0xff]
      %v207 = vld [vmem:[%s1 + $0xd4] sm:$0xf]
      %v208 = vld [vmem:[%s1 + $0xd8] sm:$0xff]
      %v209 = vld [vmem:[%s1 + $0xe0] sm:$0xf]
      %v210 = vld [vmem:[%s1 + $0xe4] sm:$0xff]
      %v211 = vld [vmem:[%s1 + $0xec] sm:$0xf]
      %v212 = vld [vmem:[%s1 + $0xf0] sm:$0xff]
      %v213 = vld [vmem:[%s1 + $0xf8] sm:$0xf]
      %v214 = vld [vmem:[%s1 + $0xfc] sm:$0xff]
      %v215 = vld [vmem:[%s1 + $0x104] sm:$0xf]
      %v216 = vld [vmem:[%s1 + $0x108] sm:$0xff]
      %v217 = vld [vmem:[%s1 + $0x110] sm:$0xf]
      %v218 = vld [vmem:[%s1 + $0x114] sm:$0xff]
      %v219 = vld [vmem:[%s1 + $0x11c] sm:$0xf]
      %v220 = vld [vmem:[%s1 + $0x120] sm:$0xff]
      %v221 = vld [vmem:[%s1 + $0x128] sm:$0xf]
      %v222 = vld [vmem:[%s1 + $0x12c] sm:$0xff]
      %v223 = vld [vmem:[%s1 + $0x134] sm:$0xf]
      %v224 = vld [vmem:[%s1 + $0x138] sm:$0xff]
      %v225 = vld [vmem:[%s1 + $0x140] sm:$0xf]
      %v226 = vld [vmem:[%s1 + $0x144] sm:$0xff]
      %v227 = vld [vmem:[%s1 + $0x14c] sm:$0xf]
      %v228 = vld [vmem:[%s1 + $0x150] sm:$0xff]
      %v229 = vld [vmem:[%s1 + $0x158] sm:$0xf]
      %v230 = vld [vmem:[%s1 + $0x15c] sm:$0xff]
      %v231 = vld [vmem:[%s1 + $0x164] sm:$0xf]
      %v232 = vld [vmem:[%s1 + $0x168] sm:$0xff]
      %v233 = vld [vmem:[%s1 + $0x170] sm:$0xf]
      %v234 = vld [vmem:[%s1 + $0x174] sm:$0xff]
      %v235 = vld [vmem:[%s1 + $0x17c] sm:$0xf]
      %v236 = vld [vmem:[%s1 + $0x180] sm:$0xff]
      %v237 = vld [vmem:[%s1 + $0x188] sm:$0xf]
      %v238 = vld [vmem:[%s1 + $0x18c] sm:$0xff]
      %v239 = vld [vmem:[%s1 + $0x194] sm:$0xf]
      %v240 = vld [vmem:[%s1 + $0x198] sm:$0xff]
      %v241 = vld [vmem:[%s1 + $0x1a0] sm:$0xf]
      %v242 = vld [vmem:[%s1 + $0x1a4] sm:$0xff]
      %v243 = vld [vmem:[%s1 + $0x1ac] sm:$0xf]
      %v244 = vld [vmem:[%s1 + $0x1b0] sm:$0xff]
      %v245 = vld [vmem:[%s1 + $0x1b8] sm:$0xf]
      %v246 = vld [vmem:[%s1 + $0x1bc] sm:$0xff]
      %v247 = vld [vmem:[%s1 + $0x1c4] sm:$0xf]
      %v248 = vld [vmem:[%s1 + $0x1c8] sm:$0xff]
      %v249 = vld [vmem:[%s1 + $0x1d0] sm:$0xf]
      %v250 = vld [vmem:[%s1 + $0x1d4] sm:$0xff]
      %v251 = vld [vmem:[%s1 + $0x1dc] sm:$0xf]
      %v252 = vld [vmem:[%s1 + $0x1e0] sm:$0xff]
      %v253 = vld [vmem:[%s1 + $0x1e8] sm:$0xf]
      %v254 = vld [vmem:[%s1 + $0x1ec] sm:$0xff]
      %v255 = vld [vmem:[%s1 + $0x1f4] sm:$0xf]
      %v256 = vld [vmem:[%s1 + $0x1f8] sm:$0xff]
      %v257 = vld [vmem:[%s1 + $0x200] sm:$0xf]
      %v258 = vld [vmem:[%s1 + $0x204] sm:$0xff]
      %v259 = vld [vmem:[%s1 + $0x20c] sm:$0xf]
      %v260 = vld [vmem:[%s1 + $0x210] sm:$0xff]
      %v261 = vld [vmem:[%s1 + $0x218] sm:$0xf]
      %v262 = vld [vmem:[%s1 + $0x21c] sm:$0xff]
      %v263 = vld [vmem:[%s1 + $0x224] sm:$0xf]
      %v264 = vld [vmem:[%s1 + $0x228] sm:$0xff]
      %v265 = vld [vmem:[%s1 + $0x230] sm:$0xf]
      %v266 = vld [vmem:[%s1 + $0x234] sm:$0xff]
      %v267 = vld [vmem:[%s1 + $0x23c] sm:$0xf]
      %v268 = vld [vmem:[%s1 + $0x240] sm:$0xff]
      %v269 = vld [vmem:[%s1 + $0x248] sm:$0xf]
      %v270 = vld [vmem:[%s1 + $0x24c] sm:$0xff]
      %v271 = vld [vmem:[%s1 + $0x254] sm:$0xf]
      %v272 = vld [vmem:[%s1 + $0x258] sm:$0xff]
      %v273 = vld [vmem:[%s1 + $0x260] sm:$0xf]
      %v274 = vld [vmem:[%s1 + $0x264] sm:$0xff]
      %v275 = vld [vmem:[%s1 + $0x26c] sm:$0xf]
      %v276 = vld [vmem:[%s1 + $0x270] sm:$0xff]
      %v277 = vld [vmem:[%s1 + $0x278] sm:$0xf]
      %v278 = vld [vmem:[%s1 + $0x27c] sm:$0xff]
      %v279 = vld [vmem:[%s1 + $0x284] sm:$0xf]
      %v280 = vld [vmem:[%s1 + $0x288] sm:$0xff]
      %v281 = vld [vmem:[%s1 + $0x290] sm:$0xf]
      %v282 = vld [vmem:[%s1 + $0x294] sm:$0xff]
      %v283 = vld [vmem:[%s1 + $0x29c] sm:$0xf]
      %v284 = vld [vmem:[%s2] sm:$0x7]
      %v286 = vlaneseq
      %v287 = vshrl.u32 %v286, 7
      %v288 = vsub.s32 0, %v287
      %v289 = vrot.slane %v284, %v288
      %v290 = vlaneseq
      %v291 = vshrl.u32 %v290, 7
      %v292 = vsub.s32 1, %v291
      %v293 = vrot.slane %v284, %v292
      %v294 = vlaneseq
      %v295 = vshrl.u32 %v294, 7
      %v296 = vsub.s32 2, %v295
      %v297 = vrot.slane %v284, %v296
      %v303 = vunpack.c.l.b16 %v170
      %v304 = vunpack.c.h.b16 %v170
      %v305 = vunpack.c.l.b16 %v171
      %v306 = vunpack.c.h.b16 %v171
      %v307 = vpack.c.b16 %v303, %v303
      %v308 = vpack.c.b16 %v304, %v304
      %v309 = vpack.c.b16 %v305, %v305
      %v310 = vpack.c.b16 %v306, %v306
      %v426 = vunpack.c.l.b16 %v172
      %v427 = vunpack.c.h.b16 %v172
      %v428 = vunpack.c.l.b16 %v173
      %v429 = vunpack.c.l.b16 %v174
      %v430 = vunpack.c.h.b16 %v174
      %v431 = vunpack.c.l.b16 %v175
      %v432 = vunpack.c.l.b16 %v176
      %v433 = vunpack.c.h.b16 %v176
      %v434 = vunpack.c.l.b16 %v177
      %v435 = vunpack.c.l.b16 %v178
      %v436 = vunpack.c.h.b16 %v178
      %v437 = vunpack.c.l.b16 %v179
      %v438 = vunpack.c.l.b16 %v180
      %v439 = vunpack.c.h.b16 %v180
      %v440 = vunpack.c.l.b16 %v181
      %v441 = vunpack.c.l.b16 %v182
      %v442 = vunpack.c.h.b16 %v182
      %v443 = vunpack.c.l.b16 %v183
      %v444 = vunpack.c.l.b16 %v184
      %v445 = vunpack.c.h.b16 %v184
      %v446 = vunpack.c.l.b16 %v185
      %v447 = vunpack.c.l.b16 %v186
      %v448 = vunpack.c.h.b16 %v186
      %v449 = vunpack.c.l.b16 %v187
      %v450 = vunpack.c.l.b16 %v188
      %v451 = vunpack.c.h.b16 %v188
      %v452 = vunpack.c.l.b16 %v189
      %v453 = vunpack.c.l.b16 %v190
      %v454 = vunpack.c.h.b16 %v190
      %v455 = vunpack.c.l.b16 %v191
      %v456 = vunpack.c.l.b16 %v192
      %v457 = vunpack.c.h.b16 %v192
      %v458 = vunpack.c.l.b16 %v193
      %v459 = vunpack.c.l.b16 %v194
      %v460 = vunpack.c.h.b16 %v194
      %v461 = vunpack.c.l.b16 %v195
      %v462 = vunpack.c.l.b16 %v196
      %v463 = vunpack.c.h.b16 %v196
      %v464 = vunpack.c.l.b16 %v197
      %v465 = vunpack.c.l.b16 %v198
      %v466 = vunpack.c.h.b16 %v198
      %v467 = vunpack.c.l.b16 %v199
      %v468 = vunpack.c.l.b16 %v200
      %v469 = vunpack.c.h.b16 %v200
      %v470 = vunpack.c.l.b16 %v201
      %v471 = vunpack.c.l.b16 %v202
      %v472 = vunpack.c.h.b16 %v202
      %v473 = vunpack.c.l.b16 %v203
      %v474 = vunpack.c.l.b16 %v204
      %v475 = vunpack.c.h.b16 %v204
      %v476 = vunpack.c.l.b16 %v205
      %v477 = vunpack.c.l.b16 %v206
      %v478 = vunpack.c.h.b16 %v206
      %v479 = vunpack.c.l.b16 %v207
      %v480 = vunpack.c.l.b16 %v208
      %v481 = vunpack.c.h.b16 %v208
      %v482 = vunpack.c.l.b16 %v209
      %v483 = vunpack.c.l.b16 %v210
      %v484 = vunpack.c.h.b16 %v210
      %v485 = vunpack.c.l.b16 %v211
      %v486 = vunpack.c.l.b16 %v212
      %v487 = vunpack.c.h.b16 %v212
      %v488 = vunpack.c.l.b16 %v213
      %v489 = vunpack.c.l.b16 %v214
      %v490 = vunpack.c.h.b16 %v214
      %v491 = vunpack.c.l.b16 %v215
      %v492 = vunpack.c.l.b16 %v216
      %v493 = vunpack.c.h.b16 %v216
      %v494 = vunpack.c.l.b16 %v217
      %v495 = vunpack.c.l.b16 %v218
      %v496 = vunpack.c.h.b16 %v218
      %v497 = vunpack.c.l.b16 %v219
      %v498 = vunpack.c.l.b16 %v220
      %v499 = vunpack.c.h.b16 %v220
      %v500 = vunpack.c.l.b16 %v221
      %v501 = vunpack.c.l.b16 %v222
      %v502 = vunpack.c.h.b16 %v222
      %v503 = vunpack.c.l.b16 %v223
      %v504 = vunpack.c.l.b16 %v224
      %v505 = vunpack.c.h.b16 %v224
      %v506 = vunpack.c.l.b16 %v225
      %v507 = vunpack.c.l.b16 %v226
      %v508 = vunpack.c.h.b16 %v226
      %v509 = vunpack.c.l.b16 %v227
      %v510 = vunpack.c.l.b16 %v228
      %v511 = vunpack.c.h.b16 %v228
      %v512 = vunpack.c.l.b16 %v229
      %v513 = vunpack.c.l.b16 %v230
      %v514 = vunpack.c.h.b16 %v230
      %v515 = vunpack.c.l.b16 %v231
      %v516 = vunpack.c.l.b16 %v232
      %v517 = vunpack.c.h.b16 %v232
      %v518 = vunpack.c.l.b16 %v233
      %v519 = vunpack.c.l.b16 %v234
      %v520 = vunpack.c.h.b16 %v234
      %v521 = vunpack.c.l.b16 %v235
      %v522 = vunpack.c.l.b16 %v236
      %v523 = vunpack.c.h.b16 %v236
      %v524 = vunpack.c.l.b16 %v237
      %v525 = vunpack.c.l.b16 %v238
      %v526 = vunpack.c.h.b16 %v238
      %v527 = vunpack.c.l.b16 %v239
      %v528 = vunpack.c.l.b16 %v240
      %v529 = vunpack.c.h.b16 %v240
      %v530 = vunpack.c.l.b16 %v241
      %v531 = vunpack.c.l.b16 %v242
      %v532 = vunpack.c.h.b16 %v242
      %v533 = vunpack.c.l.b16 %v243
      %v534 = vunpack.c.l.b16 %v244
      %v535 = vunpack.c.h.b16 %v244
      %v536 = vunpack.c.l.b16 %v245
      %v537 = vunpack.c.l.b16 %v246
      %v538 = vunpack.c.h.b16 %v246
      %v539 = vunpack.c.l.b16 %v247
      %v540 = vunpack.c.l.b16 %v248
      %v541 = vunpack.c.h.b16 %v248
      %v542 = vunpack.c.l.b16 %v249
      %v543 = vunpack.c.l.b16 %v250
      %v544 = vunpack.c.h.b16 %v250
      %v545 = vunpack.c.l.b16 %v251
      %v546 = vunpack.c.l.b16 %v252
      %v547 = vunpack.c.h.b16 %v252
      %v548 = vunpack.c.l.b16 %v253
      %v549 = vunpack.c.l.b16 %v254
      %v550 = vunpack.c.h.b16 %v254
      %v551 = vunpack.c.l.b16 %v255
      %v552 = vunpack.c.l.b16 %v256
      %v553 = vunpack.c.h.b16 %v256
      %v554 = vunpack.c.l.b16 %v257
      %v555 = vunpack.c.l.b16 %v258
      %v556 = vunpack.c.h.b16 %v258
      %v557 = vunpack.c.l.b16 %v259
      %v558 = vunpack.c.l.b16 %v260
      %v559 = vunpack.c.h.b16 %v260
      %v560 = vunpack.c.l.b16 %v261
      %v561 = vunpack.c.l.b16 %v262
      %v562 = vunpack.c.h.b16 %v262
      %v563 = vunpack.c.l.b16 %v263
      %v564 = vunpack.c.l.b16 %v264
      %v565 = vunpack.c.h.b16 %v264
      %v566 = vunpack.c.l.b16 %v265
      %v567 = vunpack.c.l.b16 %v266
      %v568 = vunpack.c.h.b16 %v266
      %v569 = vunpack.c.l.b16 %v267
      %v570 = vunpack.c.l.b16 %v268
      %v571 = vunpack.c.h.b16 %v268
      %v572 = vunpack.c.l.b16 %v269
      %v573 = vunpack.c.l.b16 %v270
      %v574 = vunpack.c.h.b16 %v270
      %v575 = vunpack.c.l.b16 %v271
      %v576 = vunpack.c.l.b16 %v272
      %v577 = vunpack.c.h.b16 %v272
      %v578 = vunpack.c.l.b16 %v273
      %v579 = vunpack.c.l.b16 %v274
      %v580 = vunpack.c.h.b16 %v274
      %v581 = vunpack.c.l.b16 %v275
      %v582 = vunpack.c.l.b16 %v276
      %v583 = vunpack.c.h.b16 %v276
      %v584 = vunpack.c.l.b16 %v277
      %v585 = vunpack.c.l.b16 %v278
      %v586 = vunpack.c.h.b16 %v278
      %v587 = vunpack.c.l.b16 %v279
      %v588 = vunpack.c.l.b16 %v280
      %v589 = vunpack.c.h.b16 %v280
      %v590 = vunpack.c.l.b16 %v281
      %v591 = vunpack.c.l.b16 %v282
      %v592 = vunpack.c.h.b16 %v282
      %v593 = vunpack.c.l.b16 %v283
      %v594 = vpack.c.b16 %v429, %v426
      %v595 = vpack.c.b16 %v430, %v427
      %v596 = vpack.c.b16 %v431, %v428
      %v597 = vpack.c.b16 %v435, %v432
      %v598 = vpack.c.b16 %v436, %v433
      %v599 = vpack.c.b16 %v437, %v434
      %v600 = vpack.c.b16 %v441, %v438
      %v601 = vpack.c.b16 %v442, %v439
      %v602 = vpack.c.b16 %v443, %v440
      %v603 = vpack.c.b16 %v447, %v444
      %v604 = vpack.c.b16 %v448, %v445
      %v605 = vpack.c.b16 %v449, %v446
      %v606 = vpack.c.b16 %v453, %v450
      %v607 = vpack.c.b16 %v454, %v451
      %v608 = vpack.c.b16 %v455, %v452
      %v609 = vpack.c.b16 %v459, %v456
      %v610 = vpack.c.b16 %v460, %v457
      %v611 = vpack.c.b16 %v461, %v458
      %v612 = vpack.c.b16 %v465, %v462
      %v613 = vpack.c.b16 %v466, %v463
      %v614 = vpack.c.b16 %v467, %v464
      %v615 = vpack.c.b16 %v471, %v468
      %v616 = vpack.c.b16 %v472, %v469
      %v617 = vpack.c.b16 %v473, %v470
      %v618 = vpack.c.b16 %v477, %v474
      %v619 = vpack.c.b16 %v478, %v475
      %v620 = vpack.c.b16 %v479, %v476
      %v621 = vpack.c.b16 %v483, %v480
      %v622 = vpack.c.b16 %v484, %v481
      %v623 = vpack.c.b16 %v485, %v482
      %v624 = vpack.c.b16 %v489, %v486
      %v625 = vpack.c.b16 %v490, %v487
      %v626 = vpack.c.b16 %v491, %v488
      %v627 = vpack.c.b16 %v495, %v492
      %v628 = vpack.c.b16 %v496, %v493
      %v629 = vpack.c.b16 %v497, %v494
      %v630 = vpack.c.b16 %v501, %v498
      %v631 = vpack.c.b16 %v502, %v499
      %v632 = vpack.c.b16 %v503, %v500
      %v633 = vpack.c.b16 %v507, %v504
      %v634 = vpack.c.b16 %v508, %v505
      %v635 = vpack.c.b16 %v509, %v506
      %v636 = vpack.c.b16 %v513, %v510
      %v637 = vpack.c.b16 %v514, %v511
      %v638 = vpack.c.b16 %v515, %v512
      %v639 = vpack.c.b16 %v519, %v516
      %v640 = vpack.c.b16 %v520, %v517
      %v641 = vpack.c.b16 %v521, %v518
      %v642 = vpack.c.b16 %v525, %v522
      %v643 = vpack.c.b16 %v526, %v523
      %v644 = vpack.c.b16 %v527, %v524
      %v645 = vpack.c.b16 %v531, %v528
      %v646 = vpack.c.b16 %v532, %v529
      %v647 = vpack.c.b16 %v533, %v530
      %v648 = vpack.c.b16 %v537, %v534
      %v649 = vpack.c.b16 %v538, %v535
      %v650 = vpack.c.b16 %v539, %v536
      %v651 = vpack.c.b16 %v543, %v540
      %v652 = vpack.c.b16 %v544, %v541
      %v653 = vpack.c.b16 %v545, %v542
      %v654 = vpack.c.b16 %v549, %v546
      %v655 = vpack.c.b16 %v550, %v547
      %v656 = vpack.c.b16 %v551, %v548
      %v657 = vpack.c.b16 %v555, %v552
      %v658 = vpack.c.b16 %v556, %v553
      %v659 = vpack.c.b16 %v557, %v554
      %v660 = vpack.c.b16 %v561, %v558
      %v661 = vpack.c.b16 %v562, %v559
      %v662 = vpack.c.b16 %v563, %v560
      %v663 = vpack.c.b16 %v567, %v564
      %v664 = vpack.c.b16 %v568, %v565
      %v665 = vpack.c.b16 %v569, %v566
      %v666 = vpack.c.b16 %v573, %v570
      %v667 = vpack.c.b16 %v574, %v571
      %v668 = vpack.c.b16 %v575, %v572
      %v669 = vpack.c.b16 %v579, %v576
      %v670 = vpack.c.b16 %v580, %v577
      %v671 = vpack.c.b16 %v581, %v578
      %v672 = vpack.c.b16 %v585, %v582
      %v673 = vpack.c.b16 %v586, %v583
      %v674 = vpack.c.b16 %v587, %v584
      %v675 = vpack.c.b16 %v591, %v588
      %v676 = vpack.c.b16 %v592, %v589
      %v677 = vpack.c.b16 %v593, %v590
      %vm762 = vcmask 523264
      %v764 = vsel %vm762, %v310, 0
      %766 = vmatprep.subr.bf16.mxu0 %v595
      %767 = vmatpush1.bf16.msra.mxu0 %v594
      %768 = vmatprep.subr.bf16.mxu0 %v598
      %769 = vmatpush1.bf16.msra.mxu0 %v597
      %770 = vmatprep.subr.bf16.mxu0 %v601
      %771 = vmatpush1.bf16.msra.mxu0 %v600
      %772 = vmatprep.subr.bf16.mxu0 %v604
      %773 = vmatpush1.bf16.msra.mxu0 %v603
      %774 = vmatprep.subr.bf16.mxu0 %v607
      %775 = vmatpush1.bf16.msra.mxu0 %v606
      %776 = vmatprep.subr.bf16.mxu0 %v610
      %777 = vmatpush1.bf16.msra.mxu0 %v609
      %778 = vmatprep.subr.bf16.mxu0 %v613
      %779 = vmatpush1.bf16.msra.mxu0 %v612
      %780 = vmatprep.subr.bf16.mxu0 %v616
      %781 = vmatpush1.bf16.msra.mxu0 %v615
      %782 = vmatprep.subr.bf16.mxu0 %v619
      %783 = vmatpush1.bf16.msra.mxu0 %v618
      %784 = vmatprep.subr.bf16.mxu0 %v622
      %785 = vmatpush1.bf16.msra.mxu0 %v621
      %786 = vmatprep.subr.bf16.mxu0 %v625
      %787 = vmatpush1.bf16.msra.mxu0 %v624
      %788 = vmatprep.subr.bf16.mxu0 %v628
      %789 = vmatpush1.bf16.msra.mxu0 %v627
      %790 = vmatprep.subr.bf16.mxu0 %v631
      %791 = vmatpush1.bf16.msra.mxu0 %v630
      %792 = vmatprep.subr.bf16.mxu0 %v634
      %793 = vmatpush1.bf16.msra.mxu0 %v633
      %794 = vmatprep.subr.bf16.mxu0 %v637
      %795 = vmatpush1.bf16.msra.mxu0 %v636
      %796 = vmatprep.subr.bf16.mxu0 %v640
      %797 = vmatpush1.bf16.msra.mxu0 %v639
      %798 = vmatprep.mubr.bf16.mxu0 %v308
      %799 = vmatmul.mubr.bf16.gmra.mrb[0].mxu0 %v307
      %v800 = vpop.f32.mrb[0].mxu0
      %v801 = vadd.f32 %v289, %v800
      %v802 = vpop.f32.mrb[0].mxu0
      %v803 = vadd.f32 %v293, %v802
      %v804 = vpop.f32.mrb[0].mxu0
      %v805 = vpop.f32.mrb[0].mxu0
      %806 = vdwg.mxu0
      %807 = vmatprep.subr.bf16.mxu0 %v643
      %808 = vmatpush1.bf16.msra.mxu0 %v642
      %809 = vmatprep.subr.bf16.mxu0 %v646
      %810 = vmatpush1.bf16.msra.mxu0 %v645
      %811 = vmatprep.subr.bf16.mxu0 %v649
      %812 = vmatpush1.bf16.msra.mxu0 %v648
      %813 = vmatprep.subr.bf16.mxu0 %v652
      %814 = vmatpush1.bf16.msra.mxu0 %v651
      %815 = vmatprep.subr.bf16.mxu0 %v655
      %816 = vmatpush1.bf16.msra.mxu0 %v654
      %817 = vmatprep.subr.bf16.mxu0 %v658
      %818 = vmatpush1.bf16.msra.mxu0 %v657
      %819 = vmatprep.subr.bf16.mxu0 %v661
      %820 = vmatpush1.bf16.msra.mxu0 %v660
      %821 = vmatprep.subr.bf16.mxu0 %v664
      %822 = vmatpush1.bf16.msra.mxu0 %v663
      %823 = vmatprep.subr.bf16.mxu0 %v667
      %824 = vmatpush1.bf16.msra.mxu0 %v666
      %825 = vmatprep.subr.bf16.mxu0 %v670
      %826 = vmatpush1.bf16.msra.mxu0 %v669
      %827 = vmatprep.subr.bf16.mxu0 %v673
      %828 = vmatpush1.bf16.msra.mxu0 %v672
      %829 = vmatprep.subr.bf16.mxu0 %v676
      %830 = vmatpush1.bf16.msra.mxu0 %v675
      %831 = vmatprep.subr.bf16.mxu0 0
      %832 = vmatpush1.bf16.msra.mxu0 0
      %833 = vmatprep.subr.bf16.mxu0 0
      %834 = vmatpush1.bf16.msra.mxu0 0
      %835 = vmatprep.subr.bf16.mxu0 0
      %836 = vmatpush1.bf16.msra.mxu0 0
      %837 = vmatprep.subr.bf16.mxu0 0
      %838 = vmatpush1.bf16.msra.mxu0 0
      %839 = vmatprep.mubr.bf16.mxu0 %v764
      %840 = vmatmul.mubr.bf16.gmra.mrb[0].mxu0 %v309
      %v841 = vpop.f32.mrb[0].mxu0
      %v842 = vadd.f32 %v801, %v841
      %v843 = vpop.f32.mrb[0].mxu0
      %v844 = vadd.f32 %v803, %v843
      %v845 = vpop.f32.mrb[0].mxu0
      %v846 = vpop.f32.mrb[0].mxu0
      %847 = vdwg.mxu0
      %848 = vmatprep.subr.bf16.mxu0 0
      %849 = vmatpush1.bf16.msra.mxu0 %v596
      %850 = vmatprep.subr.bf16.mxu0 0
      %851 = vmatpush1.bf16.msra.mxu0 %v599
      %852 = vmatprep.subr.bf16.mxu0 0
      %853 = vmatpush1.bf16.msra.mxu0 %v602
      %854 = vmatprep.subr.bf16.mxu0 0
      %855 = vmatpush1.bf16.msra.mxu0 %v605
      %856 = vmatprep.subr.bf16.mxu0 0
      %857 = vmatpush1.bf16.msra.mxu0 %v608
      %858 = vmatprep.subr.bf16.mxu0 0
      %859 = vmatpush1.bf16.msra.mxu0 %v611
      %860 = vmatprep.subr.bf16.mxu0 0
      %861 = vmatpush1.bf16.msra.mxu0 %v614
      %862 = vmatprep.subr.bf16.mxu0 0
      %863 = vmatpush1.bf16.msra.mxu0 %v617
      %864 = vmatprep.subr.bf16.mxu0 0
      %865 = vmatpush1.bf16.msra.mxu0 %v620
      %866 = vmatprep.subr.bf16.mxu0 0
      %867 = vmatpush1.bf16.msra.mxu0 %v623
      %868 = vmatprep.subr.bf16.mxu0 0
      %869 = vmatpush1.bf16.msra.mxu0 %v626
      %870 = vmatprep.subr.bf16.mxu0 0
      %871 = vmatpush1.bf16.msra.mxu0 %v629
      %872 = vmatprep.subr.bf16.mxu0 0
      %873 = vmatpush1.bf16.msra.mxu0 %v632
      %874 = vmatprep.subr.bf16.mxu0 0
      %875 = vmatpush1.bf16.msra.mxu0 %v635
      %876 = vmatprep.subr.bf16.mxu0 0
      %877 = vmatpush1.bf16.msra.mxu0 %v638
      %878 = vmatprep.subr.bf16.mxu0 0
      %879 = vmatpush1.bf16.msra.mxu0 %v641
      %880 = vmatprep.mubr.bf16.mxu0 %v308
      %881 = vmatmul.mubr.bf16.gmra.mrb[0].mxu0 %v307
      %v882 = vpop.f32.mrb[0].mxu0
      %v883 = vadd.f32 %v297, %v882
      %v884 = vpop.f32.mrb[0].mxu0
      %v885 = vpop.f32.mrb[0].mxu0
      %v886 = vpop.f32.mrb[0].mxu0
      %887 = vdwg.mxu0
      %888 = vmatprep.subr.bf16.mxu0 0
      %889 = vmatpush1.bf16.msra.mxu0 %v644
      %890 = vmatprep.subr.bf16.mxu0 0
      %891 = vmatpush1.bf16.msra.mxu0 %v647
      %892 = vmatprep.subr.bf16.mxu0 0
      %893 = vmatpush1.bf16.msra.mxu0 %v650
      %894 = vmatprep.subr.bf16.mxu0 0
      %895 = vmatpush1.bf16.msra.mxu0 %v653
      %896 = vmatprep.subr.bf16.mxu0 0
      %897 = vmatpush1.bf16.msra.mxu0 %v656
      %898 = vmatprep.subr.bf16.mxu0 0
      %899 = vmatpush1.bf16.msra.mxu0 %v659
      %900 = vmatprep.subr.bf16.mxu0 0
      %901 = vmatpush1.bf16.msra.mxu0 %v662
      %902 = vmatprep.subr.bf16.mxu0 0
      %903 = vmatpush1.bf16.msra.mxu0 %v665
      %904 = vmatprep.subr.bf16.mxu0 0
      %905 = vmatpush1.bf16.msra.mxu0 %v668
      %906 = vmatprep.subr.bf16.mxu0 0
      %907 = vmatpush1.bf16.msra.mxu0 %v671
      %908 = vmatprep.subr.bf16.mxu0 0
      %909 = vmatpush1.bf16.msra.mxu0 %v674
      %910 = vmatprep.subr.bf16.mxu0 0
      %911 = vmatpush1.bf16.msra.mxu0 %v677
      %912 = vmatprep.subr.bf16.mxu0 0
      %913 = vmatpush1.bf16.msra.mxu0 0
      %914 = vmatprep.subr.bf16.mxu0 0
      %915 = vmatpush1.bf16.msra.mxu0 0
      %916 = vmatprep.subr.bf16.mxu0 0
      %917 = vmatpush1.bf16.msra.mxu0 0
      %918 = vmatprep.subr.bf16.mxu0 0
      %919 = vmatpush1.bf16.msra.mxu0 0
      %920 = vmatprep.mubr.bf16.mxu0 %v764
      %921 = vmatmul.mubr.bf16.gmra.mrb[0].mxu0 %v309
      %v922 = vpop.f32.mrb[0].mxu0
      %v923 = vadd.f32 %v883, %v922
      %v924 = vpop.f32.mrb[0].mxu0
      %v925 = vpop.f32.mrb[0].mxu0
      %v926 = vpop.f32.mrb[0].mxu0
      %927 = vdwg.mxu0
      %v928 = vmax.f32 %v842, %v844
      %v929 = vmax.f32 %v928, %v923
      %v930 = vmax.f32 %v929, 0.0
      %931 = vst [vmem:[%s168] sm:$0x1f] %v930
      %p932 = scmp.lt.s32.totalorder %s14, 1
      %s933 = scalar_select %p932, %s14, 1
      %s934 = smul.addr %s933, 8
      %s935 = scalar_lea.vmem %s3, %s934
      // Predicated region
      $region33: #{forward.12} parent=31 // pred_check
        %p936 = pneg %p100
      $region34: #{forward.12} parent=31 // pred_check_branch
        %938 = sbr.rel (%p936) target = $region36
      $region35: #{forward.12} parent=31 // pred_region
        _
      $region36: #{forward.12} parent=31 // pred_fallthru
        _
    $region32: #{forward.12} parent=5 // pred_fallthru
      _
    %p939 = scmp.le.s32.totalorder 2, %s9
    // Predicated region
    $region37: #{forward.12} parent=5 // pred_check
      %p940 = pneg %p939
    $region38: #{forward.12} parent=5 // pred_check_branch
      %942 = sbr.rel (%p940) target = $region40
    $region39: #{forward.12} parent=5 // pred_region
      %s943 = ssub.s32 %s9, 2
      // Predicated region
      $region41: #{forward.12} parent=39 // pred_check
        %p944 = pneg %p106
      $region42: #{forward.12} parent=39 // pred_check_branch
        %946 = sbr.rel (%p944) target = $region44
      $region43: #{forward.12} parent=39 // pred_region
        %p947 = scmp.lt.s32.totalorder %s15, 1
        %s948 = scalar_select %p947, %s15, 1
        %s949 = smul.addr %s948, 8
        %s950 = scalar_lea.vmem %s3, %s949
      $region44: #{forward.12} parent=39 // pred_fallthru
        _
    $region40: #{forward.12} parent=5 // pred_fallthru
      _
  $region6: #{forward.12} parent=0 // loop_footer
    %s13 = sadd.s32 1, %s9
  $region7: #{forward.12} parent=0 // loop_footer_branch
    %8 = sbr.rel target = $region3
  $region8: #{forward.12} parent=0 // loop_exit
    _

// kernel: forward.13
$region0: #{forward.13}
  #allocation0 [shape = 'u32[]', space=smem, size = 0x4, offset = 0x4, fixed_abs, tag = 'smem constant byte address 0x4 - core index']
  #allocation1 [shape = 'u32[144,128]{1,0:T(1,128)}', space=vmem, size = 0x12000, scoped, tag = 'internal scratch']
  %s0 = inlined_call_operand.vmem [shape: bf16[2,1,640], index: 0, kind: input, shape index: {}]
  %s1 = inlined_call_operand.vmem [shape: bf16[640,384], index: 1, kind: input, shape index: {}]
  %s2 = inlined_call_operand.vmem [shape: f32[1,384], index: 2, kind: input, shape index: {}]
  %s3 = inlined_call_operand.vmem [shape: f32[2,1,128], index: 3, kind: output, shape index: {}]
  %s4 = sld [smem:[#allocation0]]
  $region45: #{forward.13} parent=0
    _
  %s6 = ssub.s32 1, %s4
  %s7 = scalar_select 0, %s6, %s4
  loop: start=0, step=1, limit=4
  $region2: #{forward.13} parent=0 // loop_pre_header
    _
  $region3: #{forward.13} parent=0 // loop_header
    %s9 = sphi 0, %s13
    %p10 = scmp.ge.s32.totalorder %s9, 4
    %s19 = sphi 0, %s21
    %s22 = sphi 0, %s19
    %s23 = sphi 0, %s22
    %s39 = sphi 0, %s23
    %s43 = sphi 0, %s43
    %s45 = sphi 0, %s43
    %s46 = sphi 0, %s45
    %s60 = sphi 0, %s46
    %s64 = sphi 0, %s64
    %s66 = sphi 0, %s64
    %s67 = sphi 0, %s66
    %s81 = sphi 0, %s67
    %s87 = sphi 0, %s89
    %s90 = sphi 0, %s87
    %s91 = sphi 0, %s90
    %s107 = sphi 0, %s91
  $region4: #{forward.13} parent=0 // loop_header_branch
    %12 = sbr.rel (%p10) target = $region8
  $region5: #{forward.13} parent=0 // loop_body
    %s14 = ssub.s32 %s9, 1
    %s15 = ssub.s32 %s9, 2
    %s16 = sadd.s32 %s9, 1
    %s17 = ssub.s32 %s9, %s16
    %p18 = scmp.eq.s32.totalorder %s17, 0
    %s20 = sadd.s32 %s19, 1
    %s21 = scalar_select %p18, %s19, %s20
    %p24 = pneg %p18
    %p25 = scmp.eq.s32.totalorder %s9, 1
    %p26 = por %p24, %p25
    %p27 = scmp.ne.s32.totalorder %s19, %s22
    %p28 = scmp.eq.s32.totalorder %s9, 0
    %p29 = por %p27, %p28
    %p30 = scmp.ne.s32.totalorder %s19, %s22
    %p31 = scmp.eq.s32.totalorder %s14, 1
    %p32 = por %p30, %p31
    %p33 = scmp.ne.s32.totalorder %s22, %s23
    %p34 = scmp.eq.s32.totalorder %s14, 0
    %p35 = por %p33, %p34
    %p36 = scmp.ne.s32.totalorder %s22, %s23
    %p37 = scmp.eq.s32.totalorder %s15, 1
    %p38 = por %p36, %p37
    %p40 = scmp.ne.s32.totalorder %s23, %s39
    %p41 = scmp.eq.s32.totalorder %s15, 0
    %p42 = por %p40, %p41
    %s44 = sadd.s32 %s43, 1
    %p47 = scmp.eq.s32.totalorder %s9, 1
    %p48 = scmp.ne.s32.totalorder %s43, %s45
    %p49 = scmp.eq.s32.totalorder %s9, 0
    %p50 = por %p48, %p49
    %p51 = scmp.ne.s32.totalorder %s43, %s45
    %p52 = scmp.eq.s32.totalorder %s14, 1
    %p53 = por %p51, %p52
    %p54 = scmp.ne.s32.totalorder %s45, %s46
    %p55 = scmp.eq.s32.totalorder %s14, 0
    %p56 = por %p54, %p55
    %p57 = scmp.ne.s32.totalorder %s45, %s46
    %p58 = scmp.eq.s32.totalorder %s15, 1
    %p59 = por %p57, %p58
    %p61 = scmp.ne.s32.totalorder %s46, %s60
    %p62 = scmp.eq.s32.totalorder %s15, 0
    %p63 = por %p61, %p62
    %s65 = sadd.s32 %s64, 1
    %p68 = scmp.eq.s32.totalorder %s9, 1
    %p69 = scmp.ne.s32.totalorder %s64, %s66
    %p70 = scmp.eq.s32.totalorder %s9, 0
    %p71 = por %p69, %p70
    %p72 = scmp.ne.s32.totalorder %s64, %s66
    %p73 = scmp.eq.s32.totalorder %s14, 1
    %p74 = por %p72, %p73
    %p75 = scmp.ne.s32.totalorder %s66, %s67
    %p76 = scmp.eq.s32.totalorder %s14, 0
    %p77 = por %p75, %p76
    %p78 = scmp.ne.s32.totalorder %s66, %s67
    %p79 = scmp.eq.s32.totalorder %s15, 1
    %p80 = por %p78, %p79
    %p82 = scmp.ne.s32.totalorder %s67, %s81
    %p83 = scmp.eq.s32.totalorder %s15, 0
    %p84 = por %p82, %p83
    %s85 = ssub.s32 %s9, %s16
    %p86 = scmp.eq.s32.totalorder %s85, 0
    %s88 = sadd.s32 %s87, 1
    %s89 = scalar_select %p86, %s87, %s88
    %p92 = pneg %p86
    %p93 = scmp.eq.s32.totalorder %s9, 1
    %p94 = por %p92, %p93
    %p95 = scmp.ne.s32.totalorder %s87, %s90
    %p96 = scmp.eq.s32.totalorder %s9, 0
    %p97 = por %p95, %p96
    %p98 = scmp.ne.s32.totalorder %s87, %s90
    %p99 = scmp.eq.s32.totalorder %s14, 1
    %p100 = por %p98, %p99
    %p101 = scmp.ne.s32.totalorder %s90, %s91
    %p102 = scmp.eq.s32.totalorder %s14, 0
    %p103 = por %p101, %p102
    %p104 = scmp.ne.s32.totalorder %s90, %s91
    %p105 = scmp.eq.s32.totalorder %s15, 1
    %p106 = por %p104, %p105
    %p108 = scmp.ne.s32.totalorder %s91, %s107
    %p109 = scmp.eq.s32.totalorder %s15, 0
    %p110 = por %p108, %p109
    %p111 = scmp.le.s32.totalorder 1, %s9
    %p112 = scmp.lt.s32.totalorder %s9, 3
    %p113 = pnand %p111, %p112
    %p114 = pneg %p113
    // Predicated region
    $region9: #{forward.13} parent=5 // pred_check
      _
    $region10: #{forward.13} parent=5 // pred_check_branch
      %116 = sbr.rel (%p113) target = $region12
    $region11: #{forward.13} parent=5 // pred_region
      %s117 = ssub.s32 %s9, 1
      // Predicated region
      $region13: #{forward.13} parent=11 // pred_check
        %p118 = pneg %p56
      $region14: #{forward.13} parent=11 // pred_check_branch
        %120 = sbr.rel (%p118) target = $region16
      $region15: #{forward.13} parent=11 // pred_region
        _
      $region16: #{forward.13} parent=11 // pred_fallthru
        _
      // Predicated region
      $region17: #{forward.13} parent=11 // pred_check
        %p121 = pneg %p77
      $region18: #{forward.13} parent=11 // pred_check_branch
        %123 = sbr.rel (%p121) target = $region20
      $region19: #{forward.13} parent=11 // pred_region
        _
      $region20: #{forward.13} parent=11 // pred_fallthru
        _
    $region12: #{forward.13} parent=5 // pred_fallthru
      _
    %p124 = scmp.lt.s32.totalorder %s9, 2
    // Predicated region
    $region21: #{forward.13} parent=5 // pred_check
      %p125 = pneg %p124
    $region22: #{forward.13} parent=5 // pred_check_branch
      %127 = sbr.rel (%p125) target = $region24
    $region23: #{forward.13} parent=5 // pred_region
      // Predicated region
      $region25: #{forward.13} parent=23 // pred_check
        %p128 = pneg %p29
      $region26: #{forward.13} parent=23 // pred_check_branch
        %130 = sbr.rel (%p128) target = $region28
      $region27: #{forward.13} parent=23 // pred_region
        %p131 = scmp.lt.s32.totalorder %s9, 1
        %s132 = scalar_select %p131, %s9, 1
        %s133 = smul.addr %s132, 5
        %s134 = scalar_lea.vmem %s0, %s133
      $region28: #{forward.13} parent=23 // pred_fallthru
        _
    $region24: #{forward.13} parent=5 // pred_fallthru
      _
    %p135 = scmp.le.s32.totalorder 1, %s9
    %p136 = scmp.lt.s32.totalorder %s9, 3
    %p137 = pnand %p135, %p136
    %p138 = pneg %p137
    // Predicated region
    $region29: #{forward.13} parent=5 // pred_check
      _
    $region30: #{forward.13} parent=5 // pred_check_branch
      %140 = sbr.rel (%p137) target = $region32
    $region31: #{forward.13} parent=5 // pred_region
      %s141 = ssub.s32 %s9, 1
      %p142 = scmp.lt.s32.totalorder %s14, 1
      %s143 = scalar_select %p142, %s14, 1
      %s144 = smul.addr %s143, 5
      %s145 = scalar_lea.vmem %s0, %s144
      %p146 = pneg %p35
      %p147 = pneg %p32
      %p148 = pneg %p56
      %p149 = pneg %p53
      %p150 = pneg %p77
      %p151 = pneg %p74
      %p152 = pneg %p103
      %p153 = pneg %p100
      %p154 = scmp.lt.s32.totalorder %s14, 1
      %s155 = scalar_select %p154, %s14, 1
      %s156 = scalar_lea.vmem %s3, %s155
      %p157 = scmp.lt.s32.totalorder %s14, 1
      %s158 = scalar_select %p157, %s14, 1
      %s159 = smul.addr %s158, 5
      %s160 = scalar_lea.vmem %s0, %s159
      %p161 = scmp.lt.s32.totalorder %s14, 1
      %s162 = scalar_select %p161, %s14, 1
      %s163 = scalar_lea.vmem %s3, %s162
      %v165 = vld [vmem:[%s160] sm:$0x1f]
      %v166 = vld [vmem:[%s1] sm:$0xff]
      %v167 = vld [vmem:[%s1 + $0x8] sm:$0xf]
      %v168 = vld [vmem:[%s1 + $0xc] sm:$0xff]
      %v169 = vld [vmem:[%s1 + $0x14] sm:$0xf]
      %v170 = vld [vmem:[%s1 + $0x18] sm:$0xff]
      %v171 = vld [vmem:[%s1 + $0x20] sm:$0xf]
      %v172 = vld [vmem:[%s1 + $0x24] sm:$0xff]
      %v173 = vld [vmem:[%s1 + $0x2c] sm:$0xf]
      %v174 = vld [vmem:[%s1 + $0x30] sm:$0xff]
      %v175 = vld [vmem:[%s1 + $0x38] sm:$0xf]
      %v176 = vld [vmem:[%s1 + $0x3c] sm:$0xff]
      %v177 = vld [vmem:[%s1 + $0x44] sm:$0xf]
      %v178 = vld [vmem:[%s1 + $0x48] sm:$0xff]
      %v179 = vld [vmem:[%s1 + $0x50] sm:$0xf]
      %v180 = vld [vmem:[%s1 + $0x54] sm:$0xff]
      %v181 = vld [vmem:[%s1 + $0x5c] sm:$0xf]
      %v182 = vld [vmem:[%s1 + $0x60] sm:$0xff]
      %v183 = vld [vmem:[%s1 + $0x68] sm:$0xf]
      %v184 = vld [vmem:[%s1 + $0x6c] sm:$0xff]
      %v185 = vld [vmem:[%s1 + $0x74] sm:$0xf]
      %v186 = vld [vmem:[%s1 + $0x78] sm:$0xff]
      %v187 = vld [vmem:[%s1 + $0x80] sm:$0xf]
      %v188 = vld [vmem:[%s1 + $0x84] sm:$0xff]
      %v189 = vld [vmem:[%s1 + $0x8c] sm:$0xf]
      %v190 = vld [vmem:[%s1 + $0x90] sm:$0xff]
      %v191 = vld [vmem:[%s1 + $0x98] sm:$0xf]
      %v192 = vld [vmem:[%s1 + $0x9c] sm:$0xff]
      %v193 = vld [vmem:[%s1 + $0xa4] sm:$0xf]
      %v194 = vld [vmem:[%s1 + $0xa8] sm:$0xff]
      %v195 = vld [vmem:[%s1 + $0xb0] sm:$0xf]
      %v196 = vld [vmem:[%s1 + $0xb4] sm:$0xff]
      %v197 = vld [vmem:[%s1 + $0xbc] sm:$0xf]
      %v198 = vld [vmem:[%s1 + $0xc0] sm:$0xff]
      %v199 = vld [vmem:[%s1 + $0xc8] sm:$0xf]
      %v200 = vld [vmem:[%s1 + $0xcc] sm:$0xff]
      %v201 = vld [vmem:[%s1 + $0xd4] sm:$0xf]
      %v202 = vld [vmem:[%s1 + $0xd8] sm:$0xff]
      %v203 = vld [vmem:[%s1 + $0xe0] sm:$0xf]
      %v204 = vld [vmem:[%s1 + $0xe4] sm:$0xff]
      %v205 = vld [vmem:[%s1 + $0xec] sm:$0xf]
      %v206 = vld [vmem:[%s1 + $0xf0] sm:$0xff]
      %v207 = vld [vmem:[%s1 + $0xf8] sm:$0xf]
      %v208 = vld [vmem:[%s1 + $0xfc] sm:$0xff]
      %v209 = vld [vmem:[%s1 + $0x104] sm:$0xf]
      %v210 = vld [vmem:[%s1 + $0x108] sm:$0xff]
      %v211 = vld [vmem:[%s1 + $0x110] sm:$0xf]
      %v212 = vld [vmem:[%s1 + $0x114] sm:$0xff]
      %v213 = vld [vmem:[%s1 + $0x11c] sm:$0xf]
      %v214 = vld [vmem:[%s1 + $0x120] sm:$0xff]
      %v215 = vld [vmem:[%s1 + $0x128] sm:$0xf]
      %v216 = vld [vmem:[%s1 + $0x12c] sm:$0xff]
      %v217 = vld [vmem:[%s1 + $0x134] sm:$0xf]
      %v218 = vld [vmem:[%s1 + $0x138] sm:$0xff]
      %v219 = vld [vmem:[%s1 + $0x140] sm:$0xf]
      %v220 = vld [vmem:[%s1 + $0x144] sm:$0xff]
      %v221 = vld [vmem:[%s1 + $0x14c] sm:$0xf]
      %v222 = vld [vmem:[%s1 + $0x150] sm:$0xff]
      %v223 = vld [vmem:[%s1 + $0x158] sm:$0xf]
      %v224 = vld [vmem:[%s1 + $0x15c] sm:$0xff]
      %v225 = vld [vmem:[%s1 + $0x164] sm:$0xf]
      %v226 = vld [vmem:[%s1 + $0x168] sm:$0xff]
      %v227 = vld [vmem:[%s1 + $0x170] sm:$0xf]
      %v228 = vld [vmem:[%s1 + $0x174] sm:$0xff]
      %v229 = vld [vmem:[%s1 + $0x17c] sm:$0xf]
      %v230 = vld [vmem:[%s1 + $0x180] sm:$0xff]
      %v231 = vld [vmem:[%s1 + $0x188] sm:$0xf]
      %v232 = vld [vmem:[%s1 + $0x18c] sm:$0xff]
      %v233 = vld [vmem:[%s1 + $0x194] sm:$0xf]
      %v234 = vld [vmem:[%s1 + $0x198] sm:$0xff]
      %v235 = vld [vmem:[%s1 + $0x1a0] sm:$0xf]
      %v236 = vld [vmem:[%s1 + $0x1a4] sm:$0xff]
      %v237 = vld [vmem:[%s1 + $0x1ac] sm:$0xf]
      %v238 = vld [vmem:[%s1 + $0x1b0] sm:$0xff]
      %v239 = vld [vmem:[%s1 + $0x1b8] sm:$0xf]
      %v240 = vld [vmem:[%s1 + $0x1bc] sm:$0xff]
      %v241 = vld [vmem:[%s1 + $0x1c4] sm:$0xf]
      %v242 = vld [vmem:[%s1 + $0x1c8] sm:$0xff]
      %v243 = vld [vmem:[%s1 + $0x1d0] sm:$0xf]
      %v244 = vld [vmem:[%s1 + $0x1d4] sm:$0xff]
      %v245 = vld [vmem:[%s1 + $0x1dc] sm:$0xf]
      %v246 = vld [vmem:[%s1 + $0x1e0] sm:$0xff]
      %v247 = vld [vmem:[%s1 + $0x1e8] sm:$0xf]
      %v248 = vld [vmem:[%s1 + $0x1ec] sm:$0xff]
      %v249 = vld [vmem:[%s1 + $0x1f4] sm:$0xf]
      %v250 = vld [vmem:[%s1 + $0x1f8] sm:$0xff]
      %v251 = vld [vmem:[%s1 + $0x200] sm:$0xf]
      %v252 = vld [vmem:[%s1 + $0x204] sm:$0xff]
      %v253 = vld [vmem:[%s1 + $0x20c] sm:$0xf]
      %v254 = vld [vmem:[%s1 + $0x210] sm:$0xff]
      %v255 = vld [vmem:[%s1 + $0x218] sm:$0xf]
      %v256 = vld [vmem:[%s1 + $0x21c] sm:$0xff]
      %v257 = vld [vmem:[%s1 + $0x224] sm:$0xf]
      %v258 = vld [vmem:[%s1 + $0x228] sm:$0xff]
      %v259 = vld [vmem:[%s1 + $0x230] sm:$0xf]
      %v260 = vld [vmem:[%s1 + $0x234] sm:$0xff]
      %v261 = vld [vmem:[%s1 + $0x23c] sm:$0xf]
      %v262 = vld [vmem:[%s1 + $0x240] sm:$0xff]
      %v263 = vld [vmem:[%s1 + $0x248] sm:$0xf]
      %v264 = vld [vmem:[%s1 + $0x24c] sm:$0xff]
      %v265 = vld [vmem:[%s1 + $0x254] sm:$0xf]
      %v266 = vld [vmem:[%s1 + $0x258] sm:$0xff]
      %v267 = vld [vmem:[%s1 + $0x260] sm:$0xf]
      %v268 = vld [vmem:[%s1 + $0x264] sm:$0xff]
      %v269 = vld [vmem:[%s1 + $0x26c] sm:$0xf]
      %v270 = vld [vmem:[%s1 + $0x270] sm:$0xff]
      %v271 = vld [vmem:[%s1 + $0x278] sm:$0xf]
      %v272 = vld [vmem:[%s1 + $0x27c] sm:$0xff]
      %v273 = vld [vmem:[%s1 + $0x284] sm:$0xf]
      %v274 = vld [vmem:[%s1 + $0x288] sm:$0xff]
      %v275 = vld [vmem:[%s1 + $0x290] sm:$0xf]
      %v276 = vld [vmem:[%s1 + $0x294] sm:$0xff]
      %v277 = vld [vmem:[%s1 + $0x29c] sm:$0xf]
      %v278 = vld [vmem:[%s1 + $0x2a0] sm:$0xff]
      %v279 = vld [vmem:[%s1 + $0x2a8] sm:$0xf]
      %v280 = vld [vmem:[%s1 + $0x2ac] sm:$0xff]
      %v281 = vld [vmem:[%s1 + $0x2b4] sm:$0xf]
      %v282 = vld [vmem:[%s1 + $0x2b8] sm:$0xff]
      %v283 = vld [vmem:[%s1 + $0x2c0] sm:$0xf]
      %v284 = vld [vmem:[%s1 + $0x2c4] sm:$0xff]
      %v285 = vld [vmem:[%s1 + $0x2cc] sm:$0xf]
      %v286 = vld [vmem:[%s1 + $0x2d0] sm:$0xff]
      %v287 = vld [vmem:[%s1 + $0x2d8] sm:$0xf]
      %v288 = vld [vmem:[%s1 + $0x2dc] sm:$0xff]
      %v289 = vld [vmem:[%s1 + $0x2e4] sm:$0xf]
      %v290 = vld [vmem:[%s1 + $0x2e8] sm:$0xff]
      %v291 = vld [vmem:[%s1 + $0x2f0] sm:$0xf]
      %v292 = vld [vmem:[%s1 + $0x2f4] sm:$0xff]
      %v293 = vld [vmem:[%s1 + $0x2fc] sm:$0xf]
      %v294 = vld [vmem:[%s1 + $0x300] sm:$0xff]
      %v295 = vld [vmem:[%s1 + $0x308] sm:$0xf]
      %v296 = vld [vmem:[%s1 + $0x30c] sm:$0xff]
      %v297 = vld [vmem:[%s1 + $0x314] sm:$0xf]
      %v298 = vld [vmem:[%s1 + $0x318] sm:$0xff]
      %v299 = vld [vmem:[%s1 + $0x320] sm:$0xf]
      %v300 = vld [vmem:[%s1 + $0x324] sm:$0xff]
      %v301 = vld [vmem:[%s1 + $0x32c] sm:$0xf]
      %v302 = vld [vmem:[%s1 + $0x330] sm:$0xff]
      %v303 = vld [vmem:[%s1 + $0x338] sm:$0xf]
      %v304 = vld [vmem:[%s1 + $0x33c] sm:$0xff]
      %v305 = vld [vmem:[%s1 + $0x344] sm:$0xf]
      %v306 = vld [vmem:[%s1 + $0x348] sm:$0xff]
      %v307 = vld [vmem:[%s1 + $0x350] sm:$0xf]
      %v308 = vld [vmem:[%s1 + $0x354] sm:$0xff]
      %v309 = vld [vmem:[%s1 + $0x35c] sm:$0xf]
      %v310 = vld [vmem:[%s1 + $0x360] sm:$0xff]
      %v311 = vld [vmem:[%s1 + $0x368] sm:$0xf]
      %v312 = vld [vmem:[%s1 + $0x36c] sm:$0xff]
      %v313 = vld [vmem:[%s1 + $0x374] sm:$0xf]
      %v314 = vld [vmem:[%s1 + $0x378] sm:$0xff]
      %v315 = vld [vmem:[%s1 + $0x380] sm:$0xf]
      %v316 = vld [vmem:[%s1 + $0x384] sm:$0xff]
      %v317 = vld [vmem:[%s1 + $0x38c] sm:$0xf]
      %v318 = vld [vmem:[%s1 + $0x390] sm:$0xff]
      %v319 = vld [vmem:[%s1 + $0x398] sm:$0xf]
      %v320 = vld [vmem:[%s1 + $0x39c] sm:$0xff]
      %v321 = vld [vmem:[%s1 + $0x3a4] sm:$0xf]
      %v322 = vld [vmem:[%s1 + $0x3a8] sm:$0xff]
      %v323 = vld [vmem:[%s1 + $0x3b0] sm:$0xf]
      %v324 = vld [vmem:[%s1 + $0x3b4] sm:$0xff]
      %v325 = vld [vmem:[%s1 + $0x3bc] sm:$0xf]
      %v326 = vld [vmem:[%s2] sm:$0x7]
      %v328 = vcombine.high %v165, %v165
      %v330 = vunpack.c.l.s4 1966171168
      %v331 = vunpack.c.0.s8 %v330
      %v332 = vlaneseq
      %v333 = vshrl.u32 %v332, 7
      %v334 = vsub.s32 %v331, %v333
      %v335 = vrot.slane %v165, %v334
      %v337 = vunpack.c.l.s4 1966171168
      %v338 = vunpack.c.0.s8 %v337
      %v339 = vlaneseq
      %v340 = vshrl.u32 %v339, 7
      %v341 = vsub.s32 %v338, %v340
      %v342 = vrot.slane %v328, %v341
      %v343 = vcombine.high %v335, %v335
      %v345 = vunpack.c.l.s4 1966171168
      %v346 = vunpack.c.0.s8 %v345
      %v347 = vlaneseq
      %v348 = vshrl.u32 %v347, 7
      %v349 = vsub.s32 %v346, %v348
      %v350 = vrot.slane %v335, %v349
      %v352 = vunpack.c.l.s4 1966171168
      %v353 = vunpack.c.0.s8 %v352
      %v354 = vlaneseq
      %v355 = vshrl.u32 %v354, 7
      %v356 = vsub.s32 %v353, %v355
      %v357 = vrot.slane %v342, %v356
      %v359 = vunpack.c.l.s4 1966171168
      %v360 = vunpack.c.0.s8 %v359
      %v361 = vlaneseq
      %v362 = vshrl.u32 %v361, 7
      %v363 = vsub.s32 %v360, %v362
      %v364 = vrot.slane %v343, %v363
      %v365 = vcombine.high %v350, %v350
      %v366 = vcombine.high %v364, %v364
      %v532 = vunpack.c.l.b16 %v166
      %v533 = vunpack.c.h.b16 %v166
      %v534 = vunpack.c.l.b16 %v167
      %v535 = vunpack.c.l.b16 %v168
      %v536 = vunpack.c.h.b16 %v168
      %v537 = vunpack.c.l.b16 %v169
      %v538 = vunpack.c.l.b16 %v170
      %v539 = vunpack.c.h.b16 %v170
      %v540 = vunpack.c.l.b16 %v171
      %v541 = vunpack.c.l.b16 %v172
      %v542 = vunpack.c.h.b16 %v172
      %v543 = vunpack.c.l.b16 %v173
      %v544 = vunpack.c.l.b16 %v174
      %v545 = vunpack.c.h.b16 %v174
      %v546 = vunpack.c.l.b16 %v175
      %v547 = vunpack.c.l.b16 %v176
      %v548 = vunpack.c.h.b16 %v176
      %v549 = vunpack.c.l.b16 %v177
      %v550 = vunpack.c.l.b16 %v178
      %v551 = vunpack.c.h.b16 %v178
      %v552 = vunpack.c.l.b16 %v179
      %v553 = vunpack.c.l.b16 %v180
      %v554 = vunpack.c.h.b16 %v180
      %v555 = vunpack.c.l.b16 %v181
      %v556 = vunpack.c.l.b16 %v182
      %v557 = vunpack.c.h.b16 %v182
      %v558 = vunpack.c.l.b16 %v183
      %v559 = vunpack.c.l.b16 %v184
      %v560 = vunpack.c.h.b16 %v184
      %v561 = vunpack.c.l.b16 %v185
      %v562 = vunpack.c.l.b16 %v186
      %v563 = vunpack.c.h.b16 %v186
      %v564 = vunpack.c.l.b16 %v187
      %v565 = vunpack.c.l.b16 %v188
      %v566 = vunpack.c.h.b16 %v188
      %v567 = vunpack.c.l.b16 %v189
      %v568 = vunpack.c.l.b16 %v190
      %v569 = vunpack.c.h.b16 %v190
      %v570 = vunpack.c.l.b16 %v191
      %v571 = vunpack.c.l.b16 %v192
      %v572 = vunpack.c.h.b16 %v192
      %v573 = vunpack.c.l.b16 %v193
      %v574 = vunpack.c.l.b16 %v194
      %v575 = vunpack.c.h.b16 %v194
      %v576 = vunpack.c.l.b16 %v195
      %v577 = vunpack.c.l.b16 %v196
      %v578 = vunpack.c.h.b16 %v196
      %v579 = vunpack.c.l.b16 %v197
      %v580 = vunpack.c.l.b16 %v198
      %v581 = vunpack.c.h.b16 %v198
      %v582 = vunpack.c.l.b16 %v199
      %v583 = vunpack.c.l.b16 %v200
      %v584 = vunpack.c.h.b16 %v200
      %v585 = vunpack.c.l.b16 %v201
      %v586 = vunpack.c.l.b16 %v202
      %v587 = vunpack.c.h.b16 %v202
      %v588 = vunpack.c.l.b16 %v203
      %v589 = vunpack.c.l.b16 %v204
      %v590 = vunpack.c.h.b16 %v204
      %v591 = vunpack.c.l.b16 %v205
      %v592 = vunpack.c.l.b16 %v206
      %v593 = vunpack.c.h.b16 %v206
      %v594 = vunpack.c.l.b16 %v207
      %v595 = vunpack.c.l.b16 %v208
      %v596 = vunpack.c.h.b16 %v208
      %v597 = vunpack.c.l.b16 %v209
      %v598 = vunpack.c.l.b16 %v210
      %v599 = vunpack.c.h.b16 %v210
      %v600 = vunpack.c.l.b16 %v211
      %v601 = vunpack.c.l.b16 %v212
      %v602 = vunpack.c.h.b16 %v212
      %v603 = vunpack.c.l.b16 %v213
      %v604 = vunpack.c.l.b16 %v214
      %v605 = vunpack.c.h.b16 %v214
      %v606 = vunpack.c.l.b16 %v215
      %v607 = vunpack.c.l.b16 %v216
      %v608 = vunpack.c.h.b16 %v216
      %v609 = vunpack.c.l.b16 %v217
      %v610 = vunpack.c.l.b16 %v218
      %v611 = vunpack.c.h.b16 %v218
      %v612 = vunpack.c.l.b16 %v219
      %v613 = vunpack.c.l.b16 %v220
      %v614 = vunpack.c.h.b16 %v220
      %v615 = vunpack.c.l.b16 %v221
      %v616 = vunpack.c.l.b16 %v222
      %v617 = vunpack.c.h.b16 %v222
      %v618 = vunpack.c.l.b16 %v223
      %v619 = vunpack.c.l.b16 %v224
      %v620 = vunpack.c.h.b16 %v224
      %v621 = vunpack.c.l.b16 %v225
      %v622 = vunpack.c.l.b16 %v226
      %v623 = vunpack.c.h.b16 %v226
      %v624 = vunpack.c.l.b16 %v227
      %v625 = vunpack.c.l.b16 %v228
      %v626 = vunpack.c.h.b16 %v228
      %v627 = vunpack.c.l.b16 %v229
      %v628 = vunpack.c.l.b16 %v230
      %v629 = vunpack.c.h.b16 %v230
      %v630 = vunpack.c.l.b16 %v231
      %v631 = vunpack.c.l.b16 %v232
      %v632 = vunpack.c.h.b16 %v232
      %v633 = vunpack.c.l.b16 %v233
      %v634 = vunpack.c.l.b16 %v234
      %v635 = vunpack.c.h.b16 %v234
      %v636 = vunpack.c.l.b16 %v235
      %v637 = vunpack.c.l.b16 %v236
      %v638 = vunpack.c.h.b16 %v236
      %v639 = vunpack.c.l.b16 %v237
      %v640 = vunpack.c.l.b16 %v238
      %v641 = vunpack.c.h.b16 %v238
      %v642 = vunpack.c.l.b16 %v239
      %v643 = vunpack.c.l.b16 %v240
      %v644 = vunpack.c.h.b16 %v240
      %v645 = vunpack.c.l.b16 %v241
      %v646 = vunpack.c.l.b16 %v242
      %v647 = vunpack.c.h.b16 %v242
      %v648 = vunpack.c.l.b16 %v243
      %v649 = vunpack.c.l.b16 %v244
      %v650 = vunpack.c.h.b16 %v244
      %v651 = vunpack.c.l.b16 %v245
      %v652 = vunpack.c.l.b16 %v246
      %v653 = vunpack.c.h.b16 %v246
      %v654 = vunpack.c.l.b16 %v247
      %v655 = vunpack.c.l.b16 %v248
      %v656 = vunpack.c.h.b16 %v248
      %v657 = vunpack.c.l.b16 %v249
      %v658 = vunpack.c.l.b16 %v250
      %v659 = vunpack.c.h.b16 %v250
      %v660 = vunpack.c.l.b16 %v251
      %v661 = vunpack.c.l.b16 %v252
      %v662 = vunpack.c.h.b16 %v252
      %v663 = vunpack.c.l.b16 %v253
      %v664 = vunpack.c.l.b16 %v254
      %v665 = vunpack.c.h.b16 %v254
      %v666 = vunpack.c.l.b16 %v255
      %v667 = vunpack.c.l.b16 %v256
      %v668 = vunpack.c.h.b16 %v256
      %v669 = vunpack.c.l.b16 %v257
      %v670 = vunpack.c.l.b16 %v258
      %v671 = vunpack.c.h.b16 %v258
      %v672 = vunpack.c.l.b16 %v259
      %v673 = vunpack.c.l.b16 %v260
      %v674 = vunpack.c.h.b16 %v260
      %v675 = vunpack.c.l.b16 %v261
      %v676 = vunpack.c.l.b16 %v262
      %v677 = vunpack.c.h.b16 %v262
      %v678 = vunpack.c.l.b16 %v263
      %v679 = vunpack.c.l.b16 %v264
      %v680 = vunpack.c.h.b16 %v264
      %v681 = vunpack.c.l.b16 %v265
      %v682 = vunpack.c.l.b16 %v266
      %v683 = vunpack.c.h.b16 %v266
      %v684 = vunpack.c.l.b16 %v267
      %v685 = vunpack.c.l.b16 %v268
      %v686 = vunpack.c.h.b16 %v268
      %v687 = vunpack.c.l.b16 %v269
      %v688 = vunpack.c.l.b16 %v270
      %v689 = vunpack.c.h.b16 %v270
      %v690 = vunpack.c.l.b16 %v271
      %v691 = vunpack.c.l.b16 %v272
      %v692 = vunpack.c.h.b16 %v272
      %v693 = vunpack.c.l.b16 %v273
      %v694 = vunpack.c.l.b16 %v274
      %v695 = vunpack.c.h.b16 %v274
      %v696 = vunpack.c.l.b16 %v275
      %v697 = vunpack.c.l.b16 %v276
      %v698 = vunpack.c.h.b16 %v276
      %v699 = vunpack.c.l.b16 %v277
      %v700 = vunpack.c.l.b16 %v278
      %v701 = vunpack.c.h.b16 %v278
      %v702 = vunpack.c.l.b16 %v279
      %v703 = vunpack.c.l.b16 %v280
      %v704 = vunpack.c.h.b16 %v280
      %v705 = vunpack.c.l.b16 %v281
      %v706 = vunpack.c.l.b16 %v282
      %v707 = vunpack.c.h.b16 %v282
      %v708 = vunpack.c.l.b16 %v283
      %v709 = vunpack.c.l.b16 %v284
      %v710 = vunpack.c.h.b16 %v284
      %v711 = vunpack.c.l.b16 %v285
      %v712 = vunpack.c.l.b16 %v286
      %v713 = vunpack.c.h.b16 %v286
      %v714 = vunpack.c.l.b16 %v287
      %v715 = vunpack.c.l.b16 %v288
      %v716 = vunpack.c.h.b16 %v288
      %v717 = vunpack.c.l.b16 %v289
      %v718 = vunpack.c.l.b16 %v290
      %v719 = vunpack.c.h.b16 %v290
      %v720 = vunpack.c.l.b16 %v291
      %v721 = vunpack.c.l.b16 %v292
      %v722 = vunpack.c.h.b16 %v292
      %v723 = vunpack.c.l.b16 %v293
      %v724 = vunpack.c.l.b16 %v294
      %v725 = vunpack.c.h.b16 %v294
      %v726 = vunpack.c.l.b16 %v295
      %v727 = vunpack.c.l.b16 %v296
      %v728 = vunpack.c.h.b16 %v296
      %v729 = vunpack.c.l.b16 %v297
      %v730 = vunpack.c.l.b16 %v298
      %v731 = vunpack.c.h.b16 %v298
      %v732 = vunpack.c.l.b16 %v299
      %v733 = vunpack.c.l.b16 %v300
      %v734 = vunpack.c.h.b16 %v300
      %v735 = vunpack.c.l.b16 %v301
      %v736 = vunpack.c.l.b16 %v302
      %v737 = vunpack.c.h.b16 %v302
      %v738 = vunpack.c.l.b16 %v303
      %v739 = vunpack.c.l.b16 %v304
      %v740 = vunpack.c.h.b16 %v304
      %v741 = vunpack.c.l.b16 %v305
      %v742 = vunpack.c.l.b16 %v306
      %v743 = vunpack.c.h.b16 %v306
      %v744 = vunpack.c.l.b16 %v307
      %v745 = vunpack.c.l.b16 %v308
      %v746 = vunpack.c.h.b16 %v308
      %v747 = vunpack.c.l.b16 %v309
      %v748 = vunpack.c.l.b16 %v310
      %v749 = vunpack.c.h.b16 %v310
      %v750 = vunpack.c.l.b16 %v311
      %v751 = vunpack.c.l.b16 %v312
      %v752 = vunpack.c.h.b16 %v312
      %v753 = vunpack.c.l.b16 %v313
      %v754 = vunpack.c.l.b16 %v314
      %v755 = vunpack.c.h.b16 %v314
      %v756 = vunpack.c.l.b16 %v315
      %v757 = vunpack.c.l.b16 %v316
      %v758 = vunpack.c.h.b16 %v316
      %v759 = vunpack.c.l.b16 %v317
      %v760 = vunpack.c.l.b16 %v318
      %v761 = vunpack.c.h.b16 %v318
      %v762 = vunpack.c.l.b16 %v319
      %v763 = vunpack.c.l.b16 %v320
      %v764 = vunpack.c.h.b16 %v320
      %v765 = vunpack.c.l.b16 %v321
      %v766 = vunpack.c.l.b16 %v322
      %v767 = vunpack.c.h.b16 %v322
      %v768 = vunpack.c.l.b16 %v323
      %v769 = vunpack.c.l.b16 %v324
      %v770 = vunpack.c.h.b16 %v324
      %v771 = vunpack.c.l.b16 %v325
      %v772 = vpack.c.b16 %v535, %v532
      %v773 = vpack.c.b16 %v536, %v533
      %v774 = vpack.c.b16 %v537, %v534
      %v775 = vpack.c.b16 %v541, %v538
      %v776 = vpack.c.b16 %v542, %v539
      %v777 = vpack.c.b16 %v543, %v540
      %v778 = vpack.c.b16 %v547, %v544
      %v779 = vpack.c.b16 %v548, %v545
      %v780 = vpack.c.b16 %v549, %v546
      %v781 = vpack.c.b16 %v553, %v550
      %v782 = vpack.c.b16 %v554, %v551
      %v783 = vpack.c.b16 %v555, %v552
      %v784 = vpack.c.b16 %v559, %v556
      %v785 = vpack.c.b16 %v560, %v557
      %v786 = vpack.c.b16 %v561, %v558
      %v787 = vpack.c.b16 %v565, %v562
      %v788 = vpack.c.b16 %v566, %v563
      %v789 = vpack.c.b16 %v567, %v564
      %v790 = vpack.c.b16 %v571, %v568
      %v791 = vpack.c.b16 %v572, %v569
      %v792 = vpack.c.b16 %v573, %v570
      %v793 = vpack.c.b16 %v577, %v574
      %v794 = vpack.c.b16 %v578, %v575
      %v795 = vpack.c.b16 %v579, %v576
      %v796 = vpack.c.b16 %v583, %v580
      %v797 = vpack.c.b16 %v584, %v581
      %v798 = vpack.c.b16 %v585, %v582
      %v799 = vpack.c.b16 %v589, %v586
      %v800 = vpack.c.b16 %v590, %v587
      %v801 = vpack.c.b16 %v591, %v588
      %v802 = vpack.c.b16 %v595, %v592
      %v803 = vpack.c.b16 %v596, %v593
      %v804 = vpack.c.b16 %v597, %v594
      %v805 = vpack.c.b16 %v601, %v598
      %v806 = vpack.c.b16 %v602, %v599
      %v807 = vpack.c.b16 %v603, %v600
      %v808 = vpack.c.b16 %v607, %v604
      %v809 = vpack.c.b16 %v608, %v605
      %v810 = vpack.c.b16 %v609, %v606
      %v811 = vpack.c.b16 %v613, %v610
      %v812 = vpack.c.b16 %v614, %v611
      %v813 = vpack.c.b16 %v615, %v612
      %v814 = vpack.c.b16 %v619, %v616
      %v815 = vpack.c.b16 %v620, %v617
      %v816 = vpack.c.b16 %v621, %v618
      %v817 = vpack.c.b16 %v625, %v622
      %v818 = vpack.c.b16 %v626, %v623
      %v819 = vpack.c.b16 %v627, %v624
      %v820 = vpack.c.b16 %v631, %v628
      %v821 = vpack.c.b16 %v632, %v629
      %v822 = vpack.c.b16 %v633, %v630
      %v823 = vpack.c.b16 %v637, %v634
      %v824 = vpack.c.b16 %v638, %v635
      %v825 = vpack.c.b16 %v639, %v636
      %v826 = vpack.c.b16 %v643, %v640
      %v827 = vpack.c.b16 %v644, %v641
      %v828 = vpack.c.b16 %v645, %v642
      %v829 = vpack.c.b16 %v649, %v646
      %v830 = vpack.c.b16 %v650, %v647
      %v831 = vpack.c.b16 %v651, %v648
      %v832 = vpack.c.b16 %v655, %v652
      %v833 = vpack.c.b16 %v656, %v653
      %v834 = vpack.c.b16 %v657, %v654
      %v835 = vpack.c.b16 %v661, %v658
      %v836 = vpack.c.b16 %v662, %v659
      %v837 = vpack.c.b16 %v663, %v660
      %v838 = vpack.c.b16 %v667, %v664
      %v839 = vpack.c.b16 %v668, %v665
      %v840 = vpack.c.b16 %v669, %v666
      %v841 = vpack.c.b16 %v673, %v670
      %v842 = vpack.c.b16 %v674, %v671
      %v843 = vpack.c.b16 %v675, %v672
      %v844 = vpack.c.b16 %v679, %v676
      %v845 = vpack.c.b16 %v680, %v677
      %v846 = vpack.c.b16 %v681, %v678
      %v847 = vpack.c.b16 %v685, %v682
      %v848 = vpack.c.b16 %v686, %v683
      %v849 = vpack.c.b16 %v687, %v684
      %v850 = vpack.c.b16 %v691, %v688
      %v851 = vpack.c.b16 %v692, %v689
      %v852 = vpack.c.b16 %v693, %v690
      %v853 = vpack.c.b16 %v697, %v694
      %v854 = vpack.c.b16 %v698, %v695
      %v855 = vpack.c.b16 %v699, %v696
      %v856 = vpack.c.b16 %v703, %v700
      %v857 = vpack.c.b16 %v704, %v701
      %v858 = vpack.c.b16 %v705, %v702
      %v859 = vpack.c.b16 %v709, %v706
      %v860 = vpack.c.b16 %v710, %v707
      %v861 = vpack.c.b16 %v711, %v708
      %v862 = vpack.c.b16 %v715, %v712
      %v863 = vpack.c.b16 %v716, %v713
      %v864 = vpack.c.b16 %v717, %v714
      %v865 = vpack.c.b16 %v721, %v718
      %v866 = vpack.c.b16 %v722, %v719
      %v867 = vpack.c.b16 %v723, %v720
      %v868 = vpack.c.b16 %v727, %v724
      %v869 = vpack.c.b16 %v728, %v725
      %v870 = vpack.c.b16 %v729, %v726
      %v871 = vpack.c.b16 %v733, %v730
      %v872 = vpack.c.b16 %v734, %v731
      %v873 = vpack.c.b16 %v735, %v732
      %v874 = vpack.c.b16 %v739, %v736
      %v875 = vpack.c.b16 %v740, %v737
      %v876 = vpack.c.b16 %v741, %v738
      %v877 = vpack.c.b16 %v745, %v742
      %v878 = vpack.c.b16 %v746, %v743
      %v879 = vpack.c.b16 %v747, %v744
      %v880 = vpack.c.b16 %v751, %v748
      %v881 = vpack.c.b16 %v752, %v749
      %v882 = vpack.c.b16 %v753, %v750
      %v883 = vpack.c.b16 %v757, %v754
      %v884 = vpack.c.b16 %v758, %v755
      %v885 = vpack.c.b16 %v759, %v756
      %v886 = vpack.c.b16 %v763, %v760
      %v887 = vpack.c.b16 %v764, %v761
      %v888 = vpack.c.b16 %v765, %v762
      %v889 = vpack.c.b16 %v769, %v766
      %v890 = vpack.c.b16 %v770, %v767
      %v891 = vpack.c.b16 %v771, %v768
      %v1013 = vlaneseq
      %v1014 = vshrl.u32 %v1013, 7
      %v1015 = vsub.s32 0, %v1014
      %v1016 = vrot.slane %v326, %v1015
      %v1017 = vlaneseq
      %v1018 = vshrl.u32 %v1017, 7
      %v1019 = vsub.s32 1, %v1018
      %v1020 = vrot.slane %v326, %v1019
      %v1021 = vlaneseq
      %v1022 = vshrl.u32 %v1021, 7
      %v1023 = vsub.s32 2, %v1022
      %v1024 = vrot.slane %v326, %v1023
      %1028 = vmatprep.subr.bf16.mxu0 %v773
      %1029 = vmatpush1.bf16.msra.mxu0 %v772
      %1030 = vmatprep.subr.bf16.mxu0 %v776
      %1031 = vmatpush1.bf16.msra.mxu0 %v775
      %1032 = vmatprep.subr.bf16.mxu0 %v779
      %1033 = vmatpush1.bf16.msra.mxu0 %v778
      %1034 = vmatprep.subr.bf16.mxu0 %v782
      %1035 = vmatpush1.bf16.msra.mxu0 %v781
      %1036 = vmatprep.subr.bf16.mxu0 %v785
      %1037 = vmatpush1.bf16.msra.mxu0 %v784
      %1038 = vmatprep.subr.bf16.mxu0 %v788
      %1039 = vmatpush1.bf16.msra.mxu0 %v787
      %1040 = vmatprep.subr.bf16.mxu0 %v791
      %1041 = vmatpush1.bf16.msra.mxu0 %v790
      %1042 = vmatprep.subr.bf16.mxu0 %v794
      %1043 = vmatpush1.bf16.msra.mxu0 %v793
      %1044 = vmatprep.subr.bf16.mxu0 %v797
      %1045 = vmatpush1.bf16.msra.mxu0 %v796
      %1046 = vmatprep.subr.bf16.mxu0 %v800
      %1047 = vmatpush1.bf16.msra.mxu0 %v799
      %1048 = vmatprep.subr.bf16.mxu0 %v803
      %1049 = vmatpush1.bf16.msra.mxu0 %v802
      %1050 = vmatprep.subr.bf16.mxu0 %v806
      %1051 = vmatpush1.bf16.msra.mxu0 %v805
      %1052 = vmatprep.subr.bf16.mxu0 %v809
      %1053 = vmatpush1.bf16.msra.mxu0 %v808
      %1054 = vmatprep.subr.bf16.mxu0 %v812
      %1055 = vmatpush1.bf16.msra.mxu0 %v811
      %1056 = vmatprep.subr.bf16.mxu0 %v815
      %1057 = vmatpush1.bf16.msra.mxu0 %v814
      %1058 = vmatprep.subr.bf16.mxu0 %v818
      %1059 = vmatpush1.bf16.msra.mxu0 %v817
      %1060 = vmatprep.mubr.bf16.mxu0 %v364
      %1061 = vmatmul.mubr.bf16.gmra.mrb[0].mxu0 %v350
      %v1062 = vpop.f32.mrb[0].mxu0
      %v1063 = vadd.f32 %v1016, %v1062
      %v1064 = vpop.f32.mrb[0].mxu0
      %v1065 = vadd.f32 %v1020, %v1064
      %v1066 = vpop.f32.mrb[0].mxu0
      %v1067 = vpop.f32.mrb[0].mxu0
      %1068 = vdwg.mxu0
      %1069 = vmatprep.subr.bf16.mxu0 %v821
      %1070 = vmatpush1.bf16.msra.mxu0 %v820
      %1071 = vmatprep.subr.bf16.mxu0 %v824
      %1072 = vmatpush1.bf16.msra.mxu0 %v823
      %1073 = vmatprep.subr.bf16.mxu0 %v827
      %1074 = vmatpush1.bf16.msra.mxu0 %v826
      %1075 = vmatprep.subr.bf16.mxu0 %v830
      %1076 = vmatpush1.bf16.msra.mxu0 %v829
      %1077 = vmatprep.subr.bf16.mxu0 %v833
      %1078 = vmatpush1.bf16.msra.mxu0 %v832
      %1079 = vmatprep.subr.bf16.mxu0 %v836
      %1080 = vmatpush1.bf16.msra.mxu0 %v835
      %1081 = vmatprep.subr.bf16.mxu0 %v839
      %1082 = vmatpush1.bf16.msra.mxu0 %v838
      %1083 = vmatprep.subr.bf16.mxu0 %v842
      %1084 = vmatpush1.bf16.msra.mxu0 %v841
      %1085 = vmatprep.subr.bf16.mxu0 %v845
      %1086 = vmatpush1.bf16.msra.mxu0 %v844
      %1087 = vmatprep.subr.bf16.mxu0 %v848
      %1088 = vmatpush1.bf16.msra.mxu0 %v847
      %1089 = vmatprep.subr.bf16.mxu0 %v851
      %1090 = vmatpush1.bf16.msra.mxu0 %v850
      %1091 = vmatprep.subr.bf16.mxu0 %v854
      %1092 = vmatpush1.bf16.msra.mxu0 %v853
      %1093 = vmatprep.subr.bf16.mxu0 %v857
      %1094 = vmatpush1.bf16.msra.mxu0 %v856
      %1095 = vmatprep.subr.bf16.mxu0 %v860
      %1096 = vmatpush1.bf16.msra.mxu0 %v859
      %1097 = vmatprep.subr.bf16.mxu0 %v863
      %1098 = vmatpush1.bf16.msra.mxu0 %v862
      %1099 = vmatprep.subr.bf16.mxu0 %v866
      %1100 = vmatpush1.bf16.msra.mxu0 %v865
      %1101 = vmatprep.mubr.bf16.mxu0 %v366
      %1102 = vmatmul.mubr.bf16.gmra.mrb[0].mxu0 %v365
      %v1103 = vpop.f32.mrb[0].mxu0
      %v1104 = vadd.f32 %v1063, %v1103
      %v1105 = vpop.f32.mrb[0].mxu0
      %v1106 = vadd.f32 %v1065, %v1105
      %v1107 = vpop.f32.mrb[0].mxu0
      %v1108 = vpop.f32.mrb[0].mxu0
      %1109 = vdwg.mxu0
      %1110 = vmatprep.subr.bf16.mxu0 %v869
      %1111 = vmatpush1.bf16.msra.mxu0 %v868
      %1112 = vmatprep.subr.bf16.mxu0 %v872
      %1113 = vmatpush1.bf16.msra.mxu0 %v871
      %1114 = vmatprep.subr.bf16.mxu0 %v875
      %1115 = vmatpush1.bf16.msra.mxu0 %v874
      %1116 = vmatprep.subr.bf16.mxu0 %v878
      %1117 = vmatpush1.bf16.msra.mxu0 %v877
      %1118 = vmatprep.subr.bf16.mxu0 %v881
      %1119 = vmatpush1.bf16.msra.mxu0 %v880
      %1120 = vmatprep.subr.bf16.mxu0 %v884
      %1121 = vmatpush1.bf16.msra.mxu0 %v883
      %1122 = vmatprep.subr.bf16.mxu0 %v887
      %1123 = vmatpush1.bf16.msra.mxu0 %v886
      %1124 = vmatprep.subr.bf16.mxu0 %v890
      %1125 = vmatpush1.bf16.msra.mxu0 %v889
      %1126 = vmatprep.subr.bf16.mxu0 0
      %1127 = vmatpush1.bf16.msra.mxu0 0
      %1128 = vmatprep.subr.bf16.mxu0 0
      %1129 = vmatpush1.bf16.msra.mxu0 0
      %1130 = vmatprep.subr.bf16.mxu0 0
      %1131 = vmatpush1.bf16.msra.mxu0 0
      %1132 = vmatprep.subr.bf16.mxu0 0
      %1133 = vmatpush1.bf16.msra.mxu0 0
      %1134 = vmatprep.subr.bf16.mxu0 0
      %1135 = vmatpush1.bf16.msra.mxu0 0
      %1136 = vmatprep.subr.bf16.mxu0 0
      %1137 = vmatpush1.bf16.msra.mxu0 0
      %1138 = vmatprep.subr.bf16.mxu0 0
      %1139 = vmatpush1.bf16.msra.mxu0 0
      %1140 = vmatprep.subr.bf16.mxu0 0
      %1141 = vmatpush1.bf16.msra.mxu0 0
      %1142 = vmatprep.mubr.bf16.mxu0 0
      %1143 = vmatmul.mubr.bf16.gmra.mrb[0].mxu0 %v357
      %v1144 = vpop.f32.mrb[0].mxu0
      %v1145 = vadd.f32 %v1104, %v1144
      %v1146 = vpop.f32.mrb[0].mxu0
      %v1147 = vadd.f32 %v1106, %v1146
      %v1148 = vpop.f32.mrb[0].mxu0
      %v1149 = vpop.f32.mrb[0].mxu0
      %1150 = vdwg.mxu0
      %1151 = vmatprep.subr.bf16.mxu0 0
      %1152 = vmatpush1.bf16.msra.mxu0 %v774
      %1153 = vmatprep.subr.bf16.mxu0 0
      %1154 = vmatpush1.bf16.msra.mxu0 %v777
      %1155 = vmatprep.subr.bf16.mxu0 0
      %1156 = vmatpush1.bf16.msra.mxu0 %v780
      %1157 = vmatprep.subr.bf16.mxu0 0
      %1158 = vmatpush1.bf16.msra.mxu0 %v783
      %1159 = vmatprep.subr.bf16.mxu0 0
      %1160 = vmatpush1.bf16.msra.mxu0 %v786
      %1161 = vmatprep.subr.bf16.mxu0 0
      %1162 = vmatpush1.bf16.msra.mxu0 %v789
      %1163 = vmatprep.subr.bf16.mxu0 0
      %1164 = vmatpush1.bf16.msra.mxu0 %v792
      %1165 = vmatprep.subr.bf16.mxu0 0
      %1166 = vmatpush1.bf16.msra.mxu0 %v795
      %1167 = vmatprep.subr.bf16.mxu0 0
      %1168 = vmatpush1.bf16.msra.mxu0 %v798
      %1169 = vmatprep.subr.bf16.mxu0 0
      %1170 = vmatpush1.bf16.msra.mxu0 %v801
      %1171 = vmatprep.subr.bf16.mxu0 0
      %1172 = vmatpush1.bf16.msra.mxu0 %v804
      %1173 = vmatprep.subr.bf16.mxu0 0
      %1174 = vmatpush1.bf16.msra.mxu0 %v807
      %1175 = vmatprep.subr.bf16.mxu0 0
      %1176 = vmatpush1.bf16.msra.mxu0 %v810
      %1177 = vmatprep.subr.bf16.mxu0 0
      %1178 = vmatpush1.bf16.msra.mxu0 %v813
      %1179 = vmatprep.subr.bf16.mxu0 0
      %1180 = vmatpush1.bf16.msra.mxu0 %v816
      %1181 = vmatprep.subr.bf16.mxu0 0
      %1182 = vmatpush1.bf16.msra.mxu0 %v819
      %1183 = vmatprep.mubr.bf16.mxu0 %v364
      %1184 = vmatmul.mubr.bf16.gmra.mrb[0].mxu0 %v350
      %v1185 = vpop.f32.mrb[0].mxu0
      %v1186 = vadd.f32 %v1024, %v1185
      %v1187 = vpop.f32.mrb[0].mxu0
      %v1188 = vpop.f32.mrb[0].mxu0
      %v1189 = vpop.f32.mrb[0].mxu0
      %1190 = vdwg.mxu0
      %1191 = vmatprep.subr.bf16.mxu0 0
      %1192 = vmatpush1.bf16.msra.mxu0 %v822
      %1193 = vmatprep.subr.bf16.mxu0 0
      %1194 = vmatpush1.bf16.msra.mxu0 %v825
      %1195 = vmatprep.subr.bf16.mxu0 0
      %1196 = vmatpush1.bf16.msra.mxu0 %v828
      %1197 = vmatprep.subr.bf16.mxu0 0
      %1198 = vmatpush1.bf16.msra.mxu0 %v831
      %1199 = vmatprep.subr.bf16.mxu0 0
      %1200 = vmatpush1.bf16.msra.mxu0 %v834
      %1201 = vmatprep.subr.bf16.mxu0 0
      %1202 = vmatpush1.bf16.msra.mxu0 %v837
      %1203 = vmatprep.subr.bf16.mxu0 0
      %1204 = vmatpush1.bf16.msra.mxu0 %v840
      %1205 = vmatprep.subr.bf16.mxu0 0
      %1206 = vmatpush1.bf16.msra.mxu0 %v843
      %1207 = vmatprep.subr.bf16.mxu0 0
      %1208 = vmatpush1.bf16.msra.mxu0 %v846
      %1209 = vmatprep.subr.bf16.mxu0 0
      %1210 = vmatpush1.bf16.msra.mxu0 %v849
      %1211 = vmatprep.subr.bf16.mxu0 0
      %1212 = vmatpush1.bf16.msra.mxu0 %v852
      %1213 = vmatprep.subr.bf16.mxu0 0
      %1214 = vmatpush1.bf16.msra.mxu0 %v855
      %1215 = vmatprep.subr.bf16.mxu0 0
      %1216 = vmatpush1.bf16.msra.mxu0 %v858
      %1217 = vmatprep.subr.bf16.mxu0 0
      %1218 = vmatpush1.bf16.msra.mxu0 %v861
      %1219 = vmatprep.subr.bf16.mxu0 0
      %1220 = vmatpush1.bf16.msra.mxu0 %v864
      %1221 = vmatprep.subr.bf16.mxu0 0
      %1222 = vmatpush1.bf16.msra.mxu0 %v867
      %1223 = vmatprep.mubr.bf16.mxu0 %v366
      %1224 = vmatmul.mubr.bf16.gmra.mrb[0].mxu0 %v365
      %v1225 = vpop.f32.mrb[0].mxu0
      %v1226 = vadd.f32 %v1186, %v1225
      %v1227 = vpop.f32.mrb[0].mxu0
      %v1228 = vpop.f32.mrb[0].mxu0
      %v1229 = vpop.f32.mrb[0].mxu0
      %1230 = vdwg.mxu0
      %1231 = vmatprep.subr.bf16.mxu0 0
      %1232 = vmatpush1.bf16.msra.mxu0 %v870
      %1233 = vmatprep.subr.bf16.mxu0 0
      %1234 = vmatpush1.bf16.msra.mxu0 %v873
      %1235 = vmatprep.subr.bf16.mxu0 0
      %1236 = vmatpush1.bf16.msra.mxu0 %v876
      %1237 = vmatprep.subr.bf16.mxu0 0
      %1238 = vmatpush1.bf16.msra.mxu0 %v879
      %1239 = vmatprep.subr.bf16.mxu0 0
      %1240 = vmatpush1.bf16.msra.mxu0 %v882
      %1241 = vmatprep.subr.bf16.mxu0 0
      %1242 = vmatpush1.bf16.msra.mxu0 %v885
      %1243 = vmatprep.subr.bf16.mxu0 0
      %1244 = vmatpush1.bf16.msra.mxu0 %v888
      %1245 = vmatprep.subr.bf16.mxu0 0
      %1246 = vmatpush1.bf16.msra.mxu0 %v891
      %1247 = vmatprep.subr.bf16.mxu0 0
      %1248 = vmatpush1.bf16.msra.mxu0 0
      %1249 = vmatprep.subr.bf16.mxu0 0
      %1250 = vmatpush1.bf16.msra.mxu0 0
      %1251 = vmatprep.subr.bf16.mxu0 0
      %1252 = vmatpush1.bf16.msra.mxu0 0
      %1253 = vmatprep.subr.bf16.mxu0 0
      %1254 = vmatpush1.bf16.msra.mxu0 0
      %1255 = vmatprep.subr.bf16.mxu0 0
      %1256 = vmatpush1.bf16.msra.mxu0 0
      %1257 = vmatprep.subr.bf16.mxu0 0
      %1258 = vmatpush1.bf16.msra.mxu0 0
      %1259 = vmatprep.subr.bf16.mxu0 0
      %1260 = vmatpush1.bf16.msra.mxu0 0
      %1261 = vmatprep.subr.bf16.mxu0 0
      %1262 = vmatpush1.bf16.msra.mxu0 0
      %1263 = vmatprep.mubr.bf16.mxu0 0
      %1264 = vmatmul.mubr.bf16.gmra.mrb[0].mxu0 %v357
      %v1265 = vpop.f32.mrb[0].mxu0
      %v1266 = vadd.f32 %v1226, %v1265
      %v1267 = vpop.f32.mrb[0].mxu0
      %v1268 = vpop.f32.mrb[0].mxu0
      %v1269 = vpop.f32.mrb[0].mxu0
      %1270 = vdwg.mxu0
      %v1271 = vmax.f32 %v1145, %v1147
      %v1272 = vmax.f32 %v1271, %v1266
      %v1273 = vmax.f32 %v1272, 0.0
      %1274 = vst [vmem:[%s163] sm:$0x1] %v1273
      %p1275 = scmp.lt.s32.totalorder %s14, 1
      %s1276 = scalar_select %p1275, %s14, 1
      %s1277 = scalar_lea.vmem %s3, %s1276
      // Predicated region
      $region33: #{forward.13} parent=31 // pred_check
        %p1278 = pneg %p100
      $region34: #{forward.13} parent=31 // pred_check_branch
        %1280 = sbr.rel (%p1278) target = $region36
      $region35: #{forward.13} parent=31 // pred_region
        _
      $region36: #{forward.13} parent=31 // pred_fallthru
        _
    $region32: #{forward.13} parent=5 // pred_fallthru
      _
    %p1281 = scmp.le.s32.totalorder 2, %s9
    // Predicated region
    $region37: #{forward.13} parent=5 // pred_check
      %p1282 = pneg %p1281
    $region38: #{forward.13} parent=5 // pred_check_branch
      %1284 = sbr.rel (%p1282) target = $region40
    $region39: #{forward.13} parent=5 // pred_region
      %s1285 = ssub.s32 %s9, 2
      // Predicated region
      $region41: #{forward.13} parent=39 // pred_check
        %p1286 = pneg %p106
      $region42: #{forward.13} parent=39 // pred_check_branch
        %1288 = sbr.rel (%p1286) target = $region44
      $region43: #{forward.13} parent=39 // pred_region
        %p1289 = scmp.lt.s32.totalorder %s15, 1
        %s1290 = scalar_select %p1289, %s15, 1
        %s1291 = scalar_lea.vmem %s3, %s1290
      $region44: #{forward.13} parent=39 // pred_fallthru
        _
    $region40: #{forward.13} parent=5 // pred_fallthru
      _
  $region6: #{forward.13} parent=0 // loop_footer
    %s13 = sadd.s32 1, %s9
  $region7: #{forward.13} parent=0 // loop_footer_branch
    %8 = sbr.rel target = $region3
  $region8: #{forward.13} parent=0 // loop_exit
    _

// kernel: forward.14
$region0: #{forward.14}
  #allocation0 [shape = 'u32[]', space=smem, size = 0x4, offset = 0x4, fixed_abs, tag = 'smem constant byte address 0x4 - core index']
  #allocation1 [shape = 'u32[144,128]{1,0:T(1,128)}', space=vmem, size = 0x12000, scoped, tag = 'internal scratch']
  #allocation2 [shape = 'f32[2,2048]{1,0:T(2,128)}', space=vmem, size = 0x4000, scoped, tag = 'scratch operand']
  %s0 = inlined_call_operand.vmem [shape: f32[2,128], index: 0, kind: input, shape index: {}]
  %s1 = inlined_call_operand.vmem [shape: f32[128,2048], index: 1, kind: input, shape index: {}]
  %s2 = inlined_call_operand.vmem [shape: f32[1,2048], index: 2, kind: input, shape index: {}]
  %s3 = inlined_call_operand.vmem [shape: f32[256,1024], index: 3, kind: input, shape index: {}]
  %s4 = inlined_call_operand.vmem [shape: f32[256,1024], index: 4, kind: input, shape index: {}]
  %s5 = inlined_call_operand.vmem [shape: f32[2,512], index: 5, kind: output, shape index: {}]
  %s6 = sld [smem:[#allocation0]]
  $region30: #{forward.14} parent=0
    _
  %s8 = ssub.s32 1, %s6
  %s9 = scalar_select 0, %s8, %s6
  // Predicated region
  $region2: #{forward.14} parent=0 // pred_check
    _
  $region3: #{forward.14} parent=0 // pred_check_branch
    %11 = sbr.rel (0) target = $region5
  $region4: #{forward.14} parent=0 // pred_region
    _
  $region5: #{forward.14} parent=0 // pred_fallthru
    _
  // Predicated region
  $region6: #{forward.14} parent=0 // pred_check
    _
  $region7: #{forward.14} parent=0 // pred_check_branch
    %13 = sbr.rel (0) target = $region9
  $region8: #{forward.14} parent=0 // pred_region
    _
  $region9: #{forward.14} parent=0 // pred_fallthru
    _
  // Predicated region
  $region10: #{forward.14} parent=0 // pred_check
    _
  $region11: #{forward.14} parent=0 // pred_check_branch
    %15 = sbr.rel (0) target = $region13
  $region12: #{forward.14} parent=0 // pred_region
    _
  $region13: #{forward.14} parent=0 // pred_fallthru
    _
  // Predicated region
  $region14: #{forward.14} parent=0 // pred_check
    _
  $region15: #{forward.14} parent=0 // pred_check_branch
    %17 = sbr.rel (0) target = $region17
  $region16: #{forward.14} parent=0 // pred_region
    _
  $region17: #{forward.14} parent=0 // pred_fallthru
    _
  // Predicated region
  $region18: #{forward.14} parent=0 // pred_check
    _
  $region19: #{forward.14} parent=0 // pred_check_branch
    %19 = sbr.rel (0) target = $region21
  $region20: #{forward.14} parent=0 // pred_region
    _
  $region21: #{forward.14} parent=0 // pred_fallthru
    _
  %v20 = vld [vmem:[%s0] sm:$0x3]
  %v21 = vld [vmem:[%s1] sm:$0xff]
  %v22 = vld [vmem:[%s1 + $0x8] sm:$0xff]
  %v23 = vld [vmem:[%s1 + $0x10] sm:$0xff]
  %v24 = vld [vmem:[%s1 + $0x18] sm:$0xff]
  %v25 = vld [vmem:[%s1 + $0x20] sm:$0xff]
  %v26 = vld [vmem:[%s1 + $0x28] sm:$0xff]
  %v27 = vld [vmem:[%s1 + $0x30] sm:$0xff]
  %v28 = vld [vmem:[%s1 + $0x38] sm:$0xff]
  %v29 = vld [vmem:[%s1 + $0x40] sm:$0xff]
  %v30 = vld [vmem:[%s1 + $0x48] sm:$0xff]
  %v31 = vld [vmem:[%s1 + $0x50] sm:$0xff]
  %v32 = vld [vmem:[%s1 + $0x58] sm:$0xff]
  %v33 = vld [vmem:[%s1 + $0x60] sm:$0xff]
  %v34 = vld [vmem:[%s1 + $0x68] sm:$0xff]
  %v35 = vld [vmem:[%s1 + $0x70] sm:$0xff]
  %v36 = vld [vmem:[%s1 + $0x78] sm:$0xff]
  %v37 = vld [vmem:[%s1 + $0x80] sm:$0xff]
  %v38 = vld [vmem:[%s1 + $0x88] sm:$0xff]
  %v39 = vld [vmem:[%s1 + $0x90] sm:$0xff]
  %v40 = vld [vmem:[%s1 + $0x98] sm:$0xff]
  %v41 = vld [vmem:[%s1 + $0xa0] sm:$0xff]
  %v42 = vld [vmem:[%s1 + $0xa8] sm:$0xff]
  %v43 = vld [vmem:[%s1 + $0xb0] sm:$0xff]
  %v44 = vld [vmem:[%s1 + $0xb8] sm:$0xff]
  %v45 = vld [vmem:[%s1 + $0xc0] sm:$0xff]
  %v46 = vld [vmem:[%s1 + $0xc8] sm:$0xff]
  %v47 = vld [vmem:[%s1 + $0xd0] sm:$0xff]
  %v48 = vld [vmem:[%s1 + $0xd8] sm:$0xff]
  %v49 = vld [vmem:[%s1 + $0xe0] sm:$0xff]
  %v50 = vld [vmem:[%s1 + $0xe8] sm:$0xff]
  %v51 = vld [vmem:[%s1 + $0xf0] sm:$0xff]
  %v52 = vld [vmem:[%s1 + $0xf8] sm:$0xff]
  %v53 = vld [vmem:[%s1 + $0x100] sm:$0xff]
  %v54 = vld [vmem:[%s1 + $0x108] sm:$0xff]
  %v55 = vld [vmem:[%s1 + $0x110] sm:$0xff]
  %v56 = vld [vmem:[%s1 + $0x118] sm:$0xff]
  %v57 = vld [vmem:[%s1 + $0x120] sm:$0xff]
  %v58 = vld [vmem:[%s1 + $0x128] sm:$0xff]
  %v59 = vld [vmem:[%s1 + $0x130] sm:$0xff]
  %v60 = vld [vmem:[%s1 + $0x138] sm:$0xff]
  %v61 = vld [vmem:[%s1 + $0x140] sm:$0xff]
  %v62 = vld [vmem:[%s1 + $0x148] sm:$0xff]
  %v63 = vld [vmem:[%s1 + $0x150] sm:$0xff]
  %v64 = vld [vmem:[%s1 + $0x158] sm:$0xff]
  %v65 = vld [vmem:[%s1 + $0x160] sm:$0xff]
  %v66 = vld [vmem:[%s1 + $0x168] sm:$0xff]
  %v67 = vld [vmem:[%s1 + $0x170] sm:$0xff]
  %v68 = vld [vmem:[%s1 + $0x178] sm:$0xff]
  %v69 = vld [vmem:[%s1 + $0x180] sm:$0xff]
  %v70 = vld [vmem:[%s1 + $0x188] sm:$0xff]
  %v71 = vld [vmem:[%s1 + $0x190] sm:$0xff]
  %v72 = vld [vmem:[%s1 + $0x198] sm:$0xff]
  %v73 = vld [vmem:[%s1 + $0x1a0] sm:$0xff]
  %v74 = vld [vmem:[%s1 + $0x1a8] sm:$0xff]
  %v75 = vld [vmem:[%s1 + $0x1b0] sm:$0xff]
  %v76 = vld [vmem:[%s1 + $0x1b8] sm:$0xff]
  %v77 = vld [vmem:[%s1 + $0x1c0] sm:$0xff]
  %v78 = vld [vmem:[%s1 + $0x1c8] sm:$0xff]
  %v79 = vld [vmem:[%s1 + $0x1d0] sm:$0xff]
  %v80 = vld [vmem:[%s1 + $0x1d8] sm:$0xff]
  %v81 = vld [vmem:[%s1 + $0x1e0] sm:$0xff]
  %v82 = vld [vmem:[%s1 + $0x1e8] sm:$0xff]
  %v83 = vld [vmem:[%s1 + $0x1f0] sm:$0xff]
  %v84 = vld [vmem:[%s1 + $0x1f8] sm:$0xff]
  %v85 = vld [vmem:[%s1 + $0x200] sm:$0xff]
  %v86 = vld [vmem:[%s1 + $0x208] sm:$0xff]
  %v87 = vld [vmem:[%s1 + $0x210] sm:$0xff]
  %v88 = vld [vmem:[%s1 + $0x218] sm:$0xff]
  %v89 = vld [vmem:[%s1 + $0x220] sm:$0xff]
  %v90 = vld [vmem:[%s1 + $0x228] sm:$0xff]
  %v91 = vld [vmem:[%s1 + $0x230] sm:$0xff]
  %v92 = vld [vmem:[%s1 + $0x238] sm:$0xff]
  %v93 = vld [vmem:[%s1 + $0x240] sm:$0xff]
  %v94 = vld [vmem:[%s1 + $0x248] sm:$0xff]
  %v95 = vld [vmem:[%s1 + $0x250] sm:$0xff]
  %v96 = vld [vmem:[%s1 + $0x258] sm:$0xff]
  %v97 = vld [vmem:[%s1 + $0x260] sm:$0xff]
  %v98 = vld [vmem:[%s1 + $0x268] sm:$0xff]
  %v99 = vld [vmem:[%s1 + $0x270] sm:$0xff]
  %v100 = vld [vmem:[%s1 + $0x278] sm:$0xff]
  %v101 = vld [vmem:[%s1 + $0x280] sm:$0xff]
  %v102 = vld [vmem:[%s1 + $0x288] sm:$0xff]
  %v103 = vld [vmem:[%s1 + $0x290] sm:$0xff]
  %v104 = vld [vmem:[%s1 + $0x298] sm:$0xff]
  %v105 = vld [vmem:[%s1 + $0x2a0] sm:$0xff]
  %v106 = vld [vmem:[%s1 + $0x2a8] sm:$0xff]
  %v107 = vld [vmem:[%s1 + $0x2b0] sm:$0xff]
  %v108 = vld [vmem:[%s1 + $0x2b8] sm:$0xff]
  %v109 = vld [vmem:[%s1 + $0x2c0] sm:$0xff]
  %v110 = vld [vmem:[%s1 + $0x2c8] sm:$0xff]
  %v111 = vld [vmem:[%s1 + $0x2d0] sm:$0xff]
  %v112 = vld [vmem:[%s1 + $0x2d8] sm:$0xff]
  %v113 = vld [vmem:[%s1 + $0x2e0] sm:$0xff]
  %v114 = vld [vmem:[%s1 + $0x2e8] sm:$0xff]
  %v115 = vld [vmem:[%s1 + $0x2f0] sm:$0xff]
  %v116 = vld [vmem:[%s1 + $0x2f8] sm:$0xff]
  %v117 = vld [vmem:[%s1 + $0x300] sm:$0xff]
  %v118 = vld [vmem:[%s1 + $0x308] sm:$0xff]
  %v119 = vld [vmem:[%s1 + $0x310] sm:$0xff]
  %v120 = vld [vmem:[%s1 + $0x318] sm:$0xff]
  %v121 = vld [vmem:[%s1 + $0x320] sm:$0xff]
  %v122 = vld [vmem:[%s1 + $0x328] sm:$0xff]
  %v123 = vld [vmem:[%s1 + $0x330] sm:$0xff]
  %v124 = vld [vmem:[%s1 + $0x338] sm:$0xff]
  %v125 = vld [vmem:[%s1 + $0x340] sm:$0xff]
  %v126 = vld [vmem:[%s1 + $0x348] sm:$0xff]
  %v127 = vld [vmem:[%s1 + $0x350] sm:$0xff]
  %v128 = vld [vmem:[%s1 + $0x358] sm:$0xff]
  %v129 = vld [vmem:[%s1 + $0x360] sm:$0xff]
  %v130 = vld [vmem:[%s1 + $0x368] sm:$0xff]
  %v131 = vld [vmem:[%s1 + $0x370] sm:$0xff]
  %v132 = vld [vmem:[%s1 + $0x378] sm:$0xff]
  %v133 = vld [vmem:[%s1 + $0x380] sm:$0xff]
  %v134 = vld [vmem:[%s1 + $0x388] sm:$0xff]
  %v135 = vld [vmem:[%s1 + $0x390] sm:$0xff]
  %v136 = vld [vmem:[%s1 + $0x398] sm:$0xff]
  %v137 = vld [vmem:[%s1 + $0x3a0] sm:$0xff]
  %v138 = vld [vmem:[%s1 + $0x3a8] sm:$0xff]
  %v139 = vld [vmem:[%s1 + $0x3b0] sm:$0xff]
  %v140 = vld [vmem:[%s1 + $0x3b8] sm:$0xff]
  %v141 = vld [vmem:[%s1 + $0x3c0] sm:$0xff]
  %v142 = vld [vmem:[%s1 + $0x3c8] sm:$0xff]
  %v143 = vld [vmem:[%s1 + $0x3d0] sm:$0xff]
  %v144 = vld [vmem:[%s1 + $0x3d8] sm:$0xff]
  %v145 = vld [vmem:[%s1 + $0x3e0] sm:$0xff]
  %v146 = vld [vmem:[%s1 + $0x3e8] sm:$0xff]
  %v147 = vld [vmem:[%s1 + $0x3f0] sm:$0xff]
  %v148 = vld [vmem:[%s1 + $0x3f8] sm:$0xff]
  %v149 = vld [vmem:[%s1 + $0x400] sm:$0xff]
  %v150 = vld [vmem:[%s1 + $0x408] sm:$0xff]
  %v151 = vld [vmem:[%s1 + $0x410] sm:$0xff]
  %v152 = vld [vmem:[%s1 + $0x418] sm:$0xff]
  %v153 = vld [vmem:[%s1 + $0x420] sm:$0xff]
  %v154 = vld [vmem:[%s1 + $0x428] sm:$0xff]
  %v155 = vld [vmem:[%s1 + $0x430] sm:$0xff]
  %v156 = vld [vmem:[%s1 + $0x438] sm:$0xff]
  %v157 = vld [vmem:[%s1 + $0x440] sm:$0xff]
  %v158 = vld [vmem:[%s1 + $0x448] sm:$0xff]
  %v159 = vld [vmem:[%s1 + $0x450] sm:$0xff]
  %v160 = vld [vmem:[%s1 + $0x458] sm:$0xff]
  %v161 = vld [vmem:[%s1 + $0x460] sm:$0xff]
  %v162 = vld [vmem:[%s1 + $0x468] sm:$0xff]
  %v163 = vld [vmem:[%s1 + $0x470] sm:$0xff]
  %v164 = vld [vmem:[%s1 + $0x478] sm:$0xff]
  %v165 = vld [vmem:[%s1 + $0x480] sm:$0xff]
  %v166 = vld [vmem:[%s1 + $0x488] sm:$0xff]
  %v167 = vld [vmem:[%s1 + $0x490] sm:$0xff]
  %v168 = vld [vmem:[%s1 + $0x498] sm:$0xff]
  %v169 = vld [vmem:[%s1 + $0x4a0] sm:$0xff]
  %v170 = vld [vmem:[%s1 + $0x4a8] sm:$0xff]
  %v171 = vld [vmem:[%s1 + $0x4b0] sm:$0xff]
  %v172 = vld [vmem:[%s1 + $0x4b8] sm:$0xff]
  %v173 = vld [vmem:[%s1 + $0x4c0] sm:$0xff]
  %v174 = vld [vmem:[%s1 + $0x4c8] sm:$0xff]
  %v175 = vld [vmem:[%s1 + $0x4d0] sm:$0xff]
  %v176 = vld [vmem:[%s1 + $0x4d8] sm:$0xff]
  %v177 = vld [vmem:[%s1 + $0x4e0] sm:$0xff]
  %v178 = vld [vmem:[%s1 + $0x4e8] sm:$0xff]
  %v179 = vld [vmem:[%s1 + $0x4f0] sm:$0xff]
  %v180 = vld [vmem:[%s1 + $0x4f8] sm:$0xff]
  %v181 = vld [vmem:[%s1 + $0x500] sm:$0xff]
  %v182 = vld [vmem:[%s1 + $0x508] sm:$0xff]
  %v183 = vld [vmem:[%s1 + $0x510] sm:$0xff]
  %v184 = vld [vmem:[%s1 + $0x518] sm:$0xff]
  %v185 = vld [vmem:[%s1 + $0x520] sm:$0xff]
  %v186 = vld [vmem:[%s1 + $0x528] sm:$0xff]
  %v187 = vld [vmem:[%s1 + $0x530] sm:$0xff]
  %v188 = vld [vmem:[%s1 + $0x538] sm:$0xff]
  %v189 = vld [vmem:[%s1 + $0x540] sm:$0xff]
  %v190 = vld [vmem:[%s1 + $0x548] sm:$0xff]
  %v191 = vld [vmem:[%s1 + $0x550] sm:$0xff]
  %v192 = vld [vmem:[%s1 + $0x558] sm:$0xff]
  %v193 = vld [vmem:[%s1 + $0x560] sm:$0xff]
  %v194 = vld [vmem:[%s1 + $0x568] sm:$0xff]
  %v195 = vld [vmem:[%s1 + $0x570] sm:$0xff]
  %v196 = vld [vmem:[%s1 + $0x578] sm:$0xff]
  %v197 = vld [vmem:[%s1 + $0x580] sm:$0xff]
  %v198 = vld [vmem:[%s1 + $0x588] sm:$0xff]
  %v199 = vld [vmem:[%s1 + $0x590] sm:$0xff]
  %v200 = vld [vmem:[%s1 + $0x598] sm:$0xff]
  %v201 = vld [vmem:[%s1 + $0x5a0] sm:$0xff]
  %v202 = vld [vmem:[%s1 + $0x5a8] sm:$0xff]
  %v203 = vld [vmem:[%s1 + $0x5b0] sm:$0xff]
  %v204 = vld [vmem:[%s1 + $0x5b8] sm:$0xff]
  %v205 = vld [vmem:[%s1 + $0x5c0] sm:$0xff]
  %v206 = vld [vmem:[%s1 + $0x5c8] sm:$0xff]
  %v207 = vld [vmem:[%s1 + $0x5d0] sm:$0xff]
  %v208 = vld [vmem:[%s1 + $0x5d8] sm:$0xff]
  %v209 = vld [vmem:[%s1 + $0x5e0] sm:$0xff]
  %v210 = vld [vmem:[%s1 + $0x5e8] sm:$0xff]
  %v211 = vld [vmem:[%s1 + $0x5f0] sm:$0xff]
  %v212 = vld [vmem:[%s1 + $0x5f8] sm:$0xff]
  %v213 = vld [vmem:[%s1 + $0x600] sm:$0xff]
  %v214 = vld [vmem:[%s1 + $0x608] sm:$0xff]
  %v215 = vld [vmem:[%s1 + $0x610] sm:$0xff]
  %v216 = vld [vmem:[%s1 + $0x618] sm:$0xff]
  %v217 = vld [vmem:[%s1 + $0x620] sm:$0xff]
  %v218 = vld [vmem:[%s1 + $0x628] sm:$0xff]
  %v219 = vld [vmem:[%s1 + $0x630] sm:$0xff]
  %v220 = vld [vmem:[%s1 + $0x638] sm:$0xff]
  %v221 = vld [vmem:[%s1 + $0x640] sm:$0xff]
  %v222 = vld [vmem:[%s1 + $0x648] sm:$0xff]
  %v223 = vld [vmem:[%s1 + $0x650] sm:$0xff]
  %v224 = vld [vmem:[%s1 + $0x658] sm:$0xff]
  %v225 = vld [vmem:[%s1 + $0x660] sm:$0xff]
  %v226 = vld [vmem:[%s1 + $0x668] sm:$0xff]
  %v227 = vld [vmem:[%s1 + $0x670] sm:$0xff]
  %v228 = vld [vmem:[%s1 + $0x678] sm:$0xff]
  %v229 = vld [vmem:[%s1 + $0x680] sm:$0xff]
  %v230 = vld [vmem:[%s1 + $0x688] sm:$0xff]
  %v231 = vld [vmem:[%s1 + $0x690] sm:$0xff]
  %v232 = vld [vmem:[%s1 + $0x698] sm:$0xff]
  %v233 = vld [vmem:[%s1 + $0x6a0] sm:$0xff]
  %v234 = vld [vmem:[%s1 + $0x6a8] sm:$0xff]
  %v235 = vld [vmem:[%s1 + $0x6b0] sm:$0xff]
  %v236 = vld [vmem:[%s1 + $0x6b8] sm:$0xff]
  %v237 = vld [vmem:[%s1 + $0x6c0] sm:$0xff]
  %v238 = vld [vmem:[%s1 + $0x6c8] sm:$0xff]
  %v239 = vld [vmem:[%s1 + $0x6d0] sm:$0xff]
  %v240 = vld [vmem:[%s1 + $0x6d8] sm:$0xff]
  %v241 = vld [vmem:[%s1 + $0x6e0] sm:$0xff]
  %v242 = vld [vmem:[%s1 + $0x6e8] sm:$0xff]
  %v243 = vld [vmem:[%s1 + $0x6f0] sm:$0xff]
  %v244 = vld [vmem:[%s1 + $0x6f8] sm:$0xff]
  %v245 = vld [vmem:[%s1 + $0x700] sm:$0xff]
  %v246 = vld [vmem:[%s1 + $0x708] sm:$0xff]
  %v247 = vld [vmem:[%s1 + $0x710] sm:$0xff]
  %v248 = vld [vmem:[%s1 + $0x718] sm:$0xff]
  %v249 = vld [vmem:[%s1 + $0x720] sm:$0xff]
  %v250 = vld [vmem:[%s1 + $0x728] sm:$0xff]
  %v251 = vld [vmem:[%s1 + $0x730] sm:$0xff]
  %v252 = vld [vmem:[%s1 + $0x738] sm:$0xff]
  %v253 = vld [vmem:[%s1 + $0x740] sm:$0xff]
  %v254 = vld [vmem:[%s1 + $0x748] sm:$0xff]
  %v255 = vld [vmem:[%s1 + $0x750] sm:$0xff]
  %v256 = vld [vmem:[%s1 + $0x758] sm:$0xff]
  %v257 = vld [vmem:[%s1 + $0x760] sm:$0xff]
  %v258 = vld [vmem:[%s1 + $0x768] sm:$0xff]
  %v259 = vld [vmem:[%s1 + $0x770] sm:$0xff]
  %v260 = vld [vmem:[%s1 + $0x778] sm:$0xff]
  %v261 = vld [vmem:[%s1 + $0x780] sm:$0xff]
  %v262 = vld [vmem:[%s1 + $0x788] sm:$0xff]
  %v263 = vld [vmem:[%s1 + $0x790] sm:$0xff]
  %v264 = vld [vmem:[%s1 + $0x798] sm:$0xff]
  %v265 = vld [vmem:[%s1 + $0x7a0] sm:$0xff]
  %v266 = vld [vmem:[%s1 + $0x7a8] sm:$0xff]
  %v267 = vld [vmem:[%s1 + $0x7b0] sm:$0xff]
  %v268 = vld [vmem:[%s1 + $0x7b8] sm:$0xff]
  %v269 = vld [vmem:[%s1 + $0x7c0] sm:$0xff]
  %v270 = vld [vmem:[%s1 + $0x7c8] sm:$0xff]
  %v271 = vld [vmem:[%s1 + $0x7d0] sm:$0xff]
  %v272 = vld [vmem:[%s1 + $0x7d8] sm:$0xff]
  %v273 = vld [vmem:[%s1 + $0x7e0] sm:$0xff]
  %v274 = vld [vmem:[%s1 + $0x7e8] sm:$0xff]
  %v275 = vld [vmem:[%s1 + $0x7f0] sm:$0xff]
  %v276 = vld [vmem:[%s1 + $0x7f8] sm:$0xff]
  %v277 = vld [vmem:[%s2] sm:$0xff]
  %v278 = vld [vmem:[%s2 + $0x8] sm:$0xff]
  %v281 = vlaneseq
  %v282 = vshrl.u32 %v281, 7
  %v283 = vsub.s32 0, %v282
  %v284 = vrot.slane %v277, %v283
  %v285 = vlaneseq
  %v286 = vshrl.u32 %v285, 7
  %v287 = vsub.s32 1, %v286
  %v288 = vrot.slane %v277, %v287
  %v289 = vlaneseq
  %v290 = vshrl.u32 %v289, 7
  %v291 = vsub.s32 2, %v290
  %v292 = vrot.slane %v277, %v291
  %v293 = vlaneseq
  %v294 = vshrl.u32 %v293, 7
  %v295 = vsub.s32 3, %v294
  %v296 = vrot.slane %v277, %v295
  %v297 = vlaneseq
  %v298 = vshrl.u32 %v297, 7
  %v299 = vsub.s32 4, %v298
  %v300 = vrot.slane %v277, %v299
  %v301 = vlaneseq
  %v302 = vshrl.u32 %v301, 7
  %v303 = vsub.s32 5, %v302
  %v304 = vrot.slane %v277, %v303
  %v305 = vlaneseq
  %v306 = vshrl.u32 %v305, 7
  %v307 = vsub.s32 6, %v306
  %v308 = vrot.slane %v277, %v307
  %v309 = vlaneseq
  %v310 = vshrl.u32 %v309, 7
  %v311 = vsub.s32 7, %v310
  %v312 = vrot.slane %v277, %v311
  %v313 = vlaneseq
  %v314 = vshrl.u32 %v313, 7
  %v315 = vsub.s32 0, %v314
  %v316 = vrot.slane %v278, %v315
  %v317 = vlaneseq
  %v318 = vshrl.u32 %v317, 7
  %v319 = vsub.s32 1, %v318
  %v320 = vrot.slane %v278, %v319
  %v321 = vlaneseq
  %v322 = vshrl.u32 %v321, 7
  %v323 = vsub.s32 2, %v322
  %v324 = vrot.slane %v278, %v323
  %v325 = vlaneseq
  %v326 = vshrl.u32 %v325, 7
  %v327 = vsub.s32 3, %v326
  %v328 = vrot.slane %v278, %v327
  %v329 = vlaneseq
  %v330 = vshrl.u32 %v329, 7
  %v331 = vsub.s32 4, %v330
  %v332 = vrot.slane %v278, %v331
  %v333 = vlaneseq
  %v334 = vshrl.u32 %v333, 7
  %v335 = vsub.s32 5, %v334
  %v336 = vrot.slane %v278, %v335
  %v337 = vlaneseq
  %v338 = vshrl.u32 %v337, 7
  %v339 = vsub.s32 6, %v338
  %v340 = vrot.slane %v278, %v339
  %v341 = vlaneseq
  %v342 = vshrl.u32 %v341, 7
  %v343 = vsub.s32 7, %v342
  %v344 = vrot.slane %v278, %v343
  %361 = vmatprep.subr.mxu0 %v22
  %362 = vmatpush1.msra.mxu0 %v21
  %363 = vmatprep.subr.mxu0 %v38
  %364 = vmatpush1.msra.mxu0 %v37
  %365 = vmatprep.subr.mxu0 %v54
  %366 = vmatpush1.msra.mxu0 %v53
  %367 = vmatprep.subr.mxu0 %v70
  %368 = vmatpush1.msra.mxu0 %v69
  %369 = vmatprep.subr.mxu0 %v86
  %370 = vmatpush1.msra.mxu0 %v85
  %371 = vmatprep.subr.mxu0 %v102
  %372 = vmatpush1.msra.mxu0 %v101
  %373 = vmatprep.subr.mxu0 %v118
  %374 = vmatpush1.msra.mxu0 %v117
  %375 = vmatprep.subr.mxu0 %v134
  %376 = vmatpush1.msra.mxu0 %v133
  %377 = vmatprep.subr.mxu0 %v150
  %378 = vmatpush1.msra.mxu0 %v149
  %379 = vmatprep.subr.mxu0 %v166
  %380 = vmatpush1.msra.mxu0 %v165
  %381 = vmatprep.subr.mxu0 %v182
  %382 = vmatpush1.msra.mxu0 %v181
  %383 = vmatprep.subr.mxu0 %v198
  %384 = vmatpush1.msra.mxu0 %v197
  %385 = vmatprep.subr.mxu0 %v214
  %386 = vmatpush1.msra.mxu0 %v213
  %387 = vmatprep.subr.mxu0 %v230
  %388 = vmatpush1.msra.mxu0 %v229
  %389 = vmatprep.subr.mxu0 %v246
  %390 = vmatpush1.msra.mxu0 %v245
  %391 = vmatprep.subr.mxu0 %v262
  %392 = vmatpush1.msra.mxu0 %v261
  %393 = vmatprep.subr.mxu0 0.0
  %394 = vmatpush1.msra.mxu0 0.0
  %395 = vmatprep.subr.mxu0 0.0
  %396 = vmatpush1.msra.mxu0 0.0
  %397 = vmatprep.subr.mxu0 0.0
  %398 = vmatpush1.msra.mxu0 0.0
  %399 = vmatprep.subr.mxu0 0.0
  %400 = vmatpush1.msra.mxu0 0.0
  %401 = vmatprep.subr.mxu0 0.0
  %402 = vmatpush1.msra.mxu0 0.0
  %403 = vmatprep.subr.mxu0 0.0
  %404 = vmatpush1.msra.mxu0 0.0
  %405 = vmatprep.subr.mxu0 0.0
  %406 = vmatpush1.msra.mxu0 0.0
  %407 = vmatprep.subr.mxu0 0.0
  %408 = vmatpush1.msra.mxu0 0.0
  %409 = vmatprep.subr.mxu0 0.0
  %410 = vmatpush1.msra.mxu0 0.0
  %411 = vmatprep.subr.mxu0 0.0
  %412 = vmatpush1.msra.mxu0 0.0
  %413 = vmatprep.subr.mxu0 0.0
  %414 = vmatpush1.msra.mxu0 0.0
  %415 = vmatprep.subr.mxu0 0.0
  %416 = vmatpush1.msra.mxu0 0.0
  %417 = vmatprep.subr.mxu0 0.0
  %418 = vmatpush1.msra.mxu0 0.0
  %419 = vmatprep.subr.mxu0 0.0
  %420 = vmatpush1.msra.mxu0 0.0
  %421 = vmatprep.subr.mxu0 0.0
  %422 = vmatpush1.msra.mxu0 0.0
  %423 = vmatprep.subr.mxu0 0.0
  %424 = vmatpush1.msra.mxu0 0.0
  %425 = vmatprep.mubr.f32.mxu0 0.0
  %426 = vmatmul.mubr.f32.gmra.mrb[0].mxu0 %v20
  %v427 = vpop.f32.mrb[0].mxu0
  %v428 = vadd.f32 %v284, %v427
  %v429 = vpop.f32.mrb[0].mxu0
  %v430 = vadd.f32 %v288, %v429
  %431 = vdwg.mxu0
  %432 = vmatprep.subr.mxu0 %v24
  %433 = vmatpush1.msra.mxu0 %v23
  %434 = vmatprep.subr.mxu0 %v40
  %435 = vmatpush1.msra.mxu0 %v39
  %436 = vmatprep.subr.mxu0 %v56
  %437 = vmatpush1.msra.mxu0 %v55
  %438 = vmatprep.subr.mxu0 %v72
  %439 = vmatpush1.msra.mxu0 %v71
  %440 = vmatprep.subr.mxu0 %v88
  %441 = vmatpush1.msra.mxu0 %v87
  %442 = vmatprep.subr.mxu0 %v104
  %443 = vmatpush1.msra.mxu0 %v103
  %444 = vmatprep.subr.mxu0 %v120
  %445 = vmatpush1.msra.mxu0 %v119
  %446 = vmatprep.subr.mxu0 %v136
  %447 = vmatpush1.msra.mxu0 %v135
  %448 = vmatprep.subr.mxu0 %v152
  %449 = vmatpush1.msra.mxu0 %v151
  %450 = vmatprep.subr.mxu0 %v168
  %451 = vmatpush1.msra.mxu0 %v167
  %452 = vmatprep.subr.mxu0 %v184
  %453 = vmatpush1.msra.mxu0 %v183
  %454 = vmatprep.subr.mxu0 %v200
  %455 = vmatpush1.msra.mxu0 %v199
  %456 = vmatprep.subr.mxu0 %v216
  %457 = vmatpush1.msra.mxu0 %v215
  %458 = vmatprep.subr.mxu0 %v232
  %459 = vmatpush1.msra.mxu0 %v231
  %460 = vmatprep.subr.mxu0 %v248
  %461 = vmatpush1.msra.mxu0 %v247
  %462 = vmatprep.subr.mxu0 %v264
  %463 = vmatpush1.msra.mxu0 %v263
  %464 = vmatprep.subr.mxu0 0.0
  %465 = vmatpush1.msra.mxu0 0.0
  %466 = vmatprep.subr.mxu0 0.0
  %467 = vmatpush1.msra.mxu0 0.0
  %468 = vmatprep.subr.mxu0 0.0
  %469 = vmatpush1.msra.mxu0 0.0
  %470 = vmatprep.subr.mxu0 0.0
  %471 = vmatpush1.msra.mxu0 0.0
  %472 = vmatprep.subr.mxu0 0.0
  %473 = vmatpush1.msra.mxu0 0.0
  %474 = vmatprep.subr.mxu0 0.0
  %475 = vmatpush1.msra.mxu0 0.0
  %476 = vmatprep.subr.mxu0 0.0
  %477 = vmatpush1.msra.mxu0 0.0
  %478 = vmatprep.subr.mxu0 0.0
  %479 = vmatpush1.msra.mxu0 0.0
  %480 = vmatprep.subr.mxu0 0.0
  %481 = vmatpush1.msra.mxu0 0.0
  %482 = vmatprep.subr.mxu0 0.0
  %483 = vmatpush1.msra.mxu0 0.0
  %484 = vmatprep.subr.mxu0 0.0
  %485 = vmatpush1.msra.mxu0 0.0
  %486 = vmatprep.subr.mxu0 0.0
  %487 = vmatpush1.msra.mxu0 0.0
  %488 = vmatprep.subr.mxu0 0.0
  %489 = vmatpush1.msra.mxu0 0.0
  %490 = vmatprep.subr.mxu0 0.0
  %491 = vmatpush1.msra.mxu0 0.0
  %492 = vmatprep.subr.mxu0 0.0
  %493 = vmatpush1.msra.mxu0 0.0
  %494 = vmatprep.subr.mxu0 0.0
  %495 = vmatpush1.msra.mxu0 0.0
  %496 = vmatprep.mubr.f32.mxu0 0.0
  %497 = vmatmul.mubr.f32.gmra.mrb[0].mxu0 %v20
  %v498 = vpop.f32.mrb[0].mxu0
  %v499 = vadd.f32 %v292, %v498
  %v500 = vpop.f32.mrb[0].mxu0
  %v501 = vadd.f32 %v296, %v500
  %502 = vdwg.mxu0
  %503 = vmatprep.subr.mxu0 %v26
  %504 = vmatpush1.msra.mxu0 %v25
  %505 = vmatprep.subr.mxu0 %v42
  %506 = vmatpush1.msra.mxu0 %v41
  %507 = vmatprep.subr.mxu0 %v58
  %508 = vmatpush1.msra.mxu0 %v57
  %509 = vmatprep.subr.mxu0 %v74
  %510 = vmatpush1.msra.mxu0 %v73
  %511 = vmatprep.subr.mxu0 %v90
  %512 = vmatpush1.msra.mxu0 %v89
  %513 = vmatprep.subr.mxu0 %v106
  %514 = vmatpush1.msra.mxu0 %v105
  %515 = vmatprep.subr.mxu0 %v122
  %516 = vmatpush1.msra.mxu0 %v121
  %517 = vmatprep.subr.mxu0 %v138
  %518 = vmatpush1.msra.mxu0 %v137
  %519 = vmatprep.subr.mxu0 %v154
  %520 = vmatpush1.msra.mxu0 %v153
  %521 = vmatprep.subr.mxu0 %v170
  %522 = vmatpush1.msra.mxu0 %v169
  %523 = vmatprep.subr.mxu0 %v186
  %524 = vmatpush1.msra.mxu0 %v185
  %525 = vmatprep.subr.mxu0 %v202
  %526 = vmatpush1.msra.mxu0 %v201
  %527 = vmatprep.subr.mxu0 %v218
  %528 = vmatpush1.msra.mxu0 %v217
  %529 = vmatprep.subr.mxu0 %v234
  %530 = vmatpush1.msra.mxu0 %v233
  %531 = vmatprep.subr.mxu0 %v250
  %532 = vmatpush1.msra.mxu0 %v249
  %533 = vmatprep.subr.mxu0 %v266
  %534 = vmatpush1.msra.mxu0 %v265
  %535 = vmatprep.subr.mxu0 0.0
  %536 = vmatpush1.msra.mxu0 0.0
  %537 = vmatprep.subr.mxu0 0.0
  %538 = vmatpush1.msra.mxu0 0.0
  %539 = vmatprep.subr.mxu0 0.0
  %540 = vmatpush1.msra.mxu0 0.0
  %541 = vmatprep.subr.mxu0 0.0
  %542 = vmatpush1.msra.mxu0 0.0
  %543 = vmatprep.subr.mxu0 0.0
  %544 = vmatpush1.msra.mxu0 0.0
  %545 = vmatprep.subr.mxu0 0.0
  %546 = vmatpush1.msra.mxu0 0.0
  %547 = vmatprep.subr.mxu0 0.0
  %548 = vmatpush1.msra.mxu0 0.0
  %549 = vmatprep.subr.mxu0 0.0
  %550 = vmatpush1.msra.mxu0 0.0
  %551 = vmatprep.subr.mxu0 0.0
  %552 = vmatpush1.msra.mxu0 0.0
  %553 = vmatprep.subr.mxu0 0.0
  %554 = vmatpush1.msra.mxu0 0.0
  %555 = vmatprep.subr.mxu0 0.0
  %556 = vmatpush1.msra.mxu0 0.0
  %557 = vmatprep.subr.mxu0 0.0
  %558 = vmatpush1.msra.mxu0 0.0
  %559 = vmatprep.subr.mxu0 0.0
  %560 = vmatpush1.msra.mxu0 0.0
  %561 = vmatprep.subr.mxu0 0.0
  %562 = vmatpush1.msra.mxu0 0.0
  %563 = vmatprep.subr.mxu0 0.0
  %564 = vmatpush1.msra.mxu0 0.0
  %565 = vmatprep.subr.mxu0 0.0
  %566 = vmatpush1.msra.mxu0 0.0
  %567 = vmatprep.mubr.f32.mxu0 0.0
  %568 = vmatmul.mubr.f32.gmra.mrb[0].mxu0 %v20
  %v569 = vpop.f32.mrb[0].mxu0
  %v570 = vadd.f32 %v300, %v569
  %v571 = vpop.f32.mrb[0].mxu0
  %v572 = vadd.f32 %v304, %v571
  %573 = vdwg.mxu0
  %574 = vmatprep.subr.mxu0 %v28
  %575 = vmatpush1.msra.mxu0 %v27
  %576 = vmatprep.subr.mxu0 %v44
  %577 = vmatpush1.msra.mxu0 %v43
  %578 = vmatprep.subr.mxu0 %v60
  %579 = vmatpush1.msra.mxu0 %v59
  %580 = vmatprep.subr.mxu0 %v76
  %581 = vmatpush1.msra.mxu0 %v75
  %582 = vmatprep.subr.mxu0 %v92
  %583 = vmatpush1.msra.mxu0 %v91
  %584 = vmatprep.subr.mxu0 %v108
  %585 = vmatpush1.msra.mxu0 %v107
  %586 = vmatprep.subr.mxu0 %v124
  %587 = vmatpush1.msra.mxu0 %v123
  %588 = vmatprep.subr.mxu0 %v140
  %589 = vmatpush1.msra.mxu0 %v139
  %590 = vmatprep.subr.mxu0 %v156
  %591 = vmatpush1.msra.mxu0 %v155
  %592 = vmatprep.subr.mxu0 %v172
  %593 = vmatpush1.msra.mxu0 %v171
  %594 = vmatprep.subr.mxu0 %v188
  %595 = vmatpush1.msra.mxu0 %v187
  %596 = vmatprep.subr.mxu0 %v204
  %597 = vmatpush1.msra.mxu0 %v203
  %598 = vmatprep.subr.mxu0 %v220
  %599 = vmatpush1.msra.mxu0 %v219
  %600 = vmatprep.subr.mxu0 %v236
  %601 = vmatpush1.msra.mxu0 %v235
  %602 = vmatprep.subr.mxu0 %v252
  %603 = vmatpush1.msra.mxu0 %v251
  %604 = vmatprep.subr.mxu0 %v268
  %605 = vmatpush1.msra.mxu0 %v267
  %606 = vmatprep.subr.mxu0 0.0
  %607 = vmatpush1.msra.mxu0 0.0
  %608 = vmatprep.subr.mxu0 0.0
  %609 = vmatpush1.msra.mxu0 0.0
  %610 = vmatprep.subr.mxu0 0.0
  %611 = vmatpush1.msra.mxu0 0.0
  %612 = vmatprep.subr.mxu0 0.0
  %613 = vmatpush1.msra.mxu0 0.0
  %614 = vmatprep.subr.mxu0 0.0
  %615 = vmatpush1.msra.mxu0 0.0
  %616 = vmatprep.subr.mxu0 0.0
  %617 = vmatpush1.msra.mxu0 0.0
  %618 = vmatprep.subr.mxu0 0.0
  %619 = vmatpush1.msra.mxu0 0.0
  %620 = vmatprep.subr.mxu0 0.0
  %621 = vmatpush1.msra.mxu0 0.0
  %622 = vmatprep.subr.mxu0 0.0
  %623 = vmatpush1.msra.mxu0 0.0
  %624 = vmatprep.subr.mxu0 0.0
  %625 = vmatpush1.msra.mxu0 0.0
  %626 = vmatprep.subr.mxu0 0.0
  %627 = vmatpush1.msra.mxu0 0.0
  %628 = vmatprep.subr.mxu0 0.0
  %629 = vmatpush1.msra.mxu0 0.0
  %630 = vmatprep.subr.mxu0 0.0
  %631 = vmatpush1.msra.mxu0 0.0
  %632 = vmatprep.subr.mxu0 0.0
  %633 = vmatpush1.msra.mxu0 0.0
  %634 = vmatprep.subr.mxu0 0.0
  %635 = vmatpush1.msra.mxu0 0.0
  %636 = vmatprep.subr.mxu0 0.0
  %637 = vmatpush1.msra.mxu0 0.0
  %638 = vmatprep.mubr.f32.mxu0 0.0
  %639 = vmatmul.mubr.f32.gmra.mrb[0].mxu0 %v20
  %v640 = vpop.f32.mrb[0].mxu0
  %v641 = vadd.f32 %v308, %v640
  %v642 = vpop.f32.mrb[0].mxu0
  %v643 = vadd.f32 %v312, %v642
  %644 = vdwg.mxu0
  %645 = vmatprep.subr.mxu0 %v30
  %646 = vmatpush1.msra.mxu0 %v29
  %647 = vmatprep.subr.mxu0 %v46
  %648 = vmatpush1.msra.mxu0 %v45
  %649 = vmatprep.subr.mxu0 %v62
  %650 = vmatpush1.msra.mxu0 %v61
  %651 = vmatprep.subr.mxu0 %v78
  %652 = vmatpush1.msra.mxu0 %v77
  %653 = vmatprep.subr.mxu0 %v94
  %654 = vmatpush1.msra.mxu0 %v93
  %655 = vmatprep.subr.mxu0 %v110
  %656 = vmatpush1.msra.mxu0 %v109
  %657 = vmatprep.subr.mxu0 %v126
  %658 = vmatpush1.msra.mxu0 %v125
  %659 = vmatprep.subr.mxu0 %v142
  %660 = vmatpush1.msra.mxu0 %v141
  %661 = vmatprep.subr.mxu0 %v158
  %662 = vmatpush1.msra.mxu0 %v157
  %663 = vmatprep.subr.mxu0 %v174
  %664 = vmatpush1.msra.mxu0 %v173
  %665 = vmatprep.subr.mxu0 %v190
  %666 = vmatpush1.msra.mxu0 %v189
  %667 = vmatprep.subr.mxu0 %v206
  %668 = vmatpush1.msra.mxu0 %v205
  %669 = vmatprep.subr.mxu0 %v222
  %670 = vmatpush1.msra.mxu0 %v221
  %671 = vmatprep.subr.mxu0 %v238
  %672 = vmatpush1.msra.mxu0 %v237
  %673 = vmatprep.subr.mxu0 %v254
  %674 = vmatpush1.msra.mxu0 %v253
  %675 = vmatprep.subr.mxu0 %v270
  %676 = vmatpush1.msra.mxu0 %v269
  %677 = vmatprep.subr.mxu0 0.0
  %678 = vmatpush1.msra.mxu0 0.0
  %679 = vmatprep.subr.mxu0 0.0
  %680 = vmatpush1.msra.mxu0 0.0
  %681 = vmatprep.subr.mxu0 0.0
  %682 = vmatpush1.msra.mxu0 0.0
  %683 = vmatprep.subr.mxu0 0.0
  %684 = vmatpush1.msra.mxu0 0.0
  %685 = vmatprep.subr.mxu0 0.0
  %686 = vmatpush1.msra.mxu0 0.0
  %687 = vmatprep.subr.mxu0 0.0
  %688 = vmatpush1.msra.mxu0 0.0
  %689 = vmatprep.subr.mxu0 0.0
  %690 = vmatpush1.msra.mxu0 0.0
  %691 = vmatprep.subr.mxu0 0.0
  %692 = vmatpush1.msra.mxu0 0.0
  %693 = vmatprep.subr.mxu0 0.0
  %694 = vmatpush1.msra.mxu0 0.0
  %695 = vmatprep.subr.mxu0 0.0
  %696 = vmatpush1.msra.mxu0 0.0
  %697 = vmatprep.subr.mxu0 0.0
  %698 = vmatpush1.msra.mxu0 0.0
  %699 = vmatprep.subr.mxu0 0.0
  %700 = vmatpush1.msra.mxu0 0.0
  %701 = vmatprep.subr.mxu0 0.0
  %702 = vmatpush1.msra.mxu0 0.0
  %703 = vmatprep.subr.mxu0 0.0
  %704 = vmatpush1.msra.mxu0 0.0
  %705 = vmatprep.subr.mxu0 0.0
  %706 = vmatpush1.msra.mxu0 0.0
  %707 = vmatprep.subr.mxu0 0.0
  %708 = vmatpush1.msra.mxu0 0.0
  %709 = vmatprep.mubr.f32.mxu0 0.0
  %710 = vmatmul.mubr.f32.gmra.mrb[0].mxu0 %v20
  %v711 = vpop.f32.mrb[0].mxu0
  %v712 = vadd.f32 %v316, %v711
  %v713 = vpop.f32.mrb[0].mxu0
  %v714 = vadd.f32 %v320, %v713
  %715 = vdwg.mxu0
  %716 = vmatprep.subr.mxu0 %v32
  %717 = vmatpush1.msra.mxu0 %v31
  %718 = vmatprep.subr.mxu0 %v48
  %719 = vmatpush1.msra.mxu0 %v47
  %720 = vmatprep.subr.mxu0 %v64
  %721 = vmatpush1.msra.mxu0 %v63
  %722 = vmatprep.subr.mxu0 %v80
  %723 = vmatpush1.msra.mxu0 %v79
  %724 = vmatprep.subr.mxu0 %v96
  %725 = vmatpush1.msra.mxu0 %v95
  %726 = vmatprep.subr.mxu0 %v112
  %727 = vmatpush1.msra.mxu0 %v111
  %728 = vmatprep.subr.mxu0 %v128
  %729 = vmatpush1.msra.mxu0 %v127
  %730 = vmatprep.subr.mxu0 %v144
  %731 = vmatpush1.msra.mxu0 %v143
  %732 = vmatprep.subr.mxu0 %v160
  %733 = vmatpush1.msra.mxu0 %v159
  %734 = vmatprep.subr.mxu0 %v176
  %735 = vmatpush1.msra.mxu0 %v175
  %736 = vmatprep.subr.mxu0 %v192
  %737 = vmatpush1.msra.mxu0 %v191
  %738 = vmatprep.subr.mxu0 %v208
  %739 = vmatpush1.msra.mxu0 %v207
  %740 = vmatprep.subr.mxu0 %v224
  %741 = vmatpush1.msra.mxu0 %v223
  %742 = vmatprep.subr.mxu0 %v240
  %743 = vmatpush1.msra.mxu0 %v239
  %744 = vmatprep.subr.mxu0 %v256
  %745 = vmatpush1.msra.mxu0 %v255
  %746 = vmatprep.subr.mxu0 %v272
  %747 = vmatpush1.msra.mxu0 %v271
  %748 = vmatprep.subr.mxu0 0.0
  %749 = vmatpush1.msra.mxu0 0.0
  %750 = vmatprep.subr.mxu0 0.0
  %751 = vmatpush1.msra.mxu0 0.0
  %752 = vmatprep.subr.mxu0 0.0
  %753 = vmatpush1.msra.mxu0 0.0
  %754 = vmatprep.subr.mxu0 0.0
  %755 = vmatpush1.msra.mxu0 0.0
  %756 = vmatprep.subr.mxu0 0.0
  %757 = vmatpush1.msra.mxu0 0.0
  %758 = vmatprep.subr.mxu0 0.0
  %759 = vmatpush1.msra.mxu0 0.0
  %760 = vmatprep.subr.mxu0 0.0
  %761 = vmatpush1.msra.mxu0 0.0
  %762 = vmatprep.subr.mxu0 0.0
  %763 = vmatpush1.msra.mxu0 0.0
  %764 = vmatprep.subr.mxu0 0.0
  %765 = vmatpush1.msra.mxu0 0.0
  %766 = vmatprep.subr.mxu0 0.0
  %767 = vmatpush1.msra.mxu0 0.0
  %768 = vmatprep.subr.mxu0 0.0
  %769 = vmatpush1.msra.mxu0 0.0
  %770 = vmatprep.subr.mxu0 0.0
  %771 = vmatpush1.msra.mxu0 0.0
  %772 = vmatprep.subr.mxu0 0.0
  %773 = vmatpush1.msra.mxu0 0.0
  %774 = vmatprep.subr.mxu0 0.0
  %775 = vmatpush1.msra.mxu0 0.0
  %776 = vmatprep.subr.mxu0 0.0
  %777 = vmatpush1.msra.mxu0 0.0
  %778 = vmatprep.subr.mxu0 0.0
  %779 = vmatpush1.msra.mxu0 0.0
  %780 = vmatprep.mubr.f32.mxu0 0.0
  %781 = vmatmul.mubr.f32.gmra.mrb[0].mxu0 %v20
  %v782 = vpop.f32.mrb[0].mxu0
  %v783 = vadd.f32 %v324, %v782
  %v784 = vpop.f32.mrb[0].mxu0
  %v785 = vadd.f32 %v328, %v784
  %786 = vdwg.mxu0
  %787 = vmatprep.subr.mxu0 %v34
  %788 = vmatpush1.msra.mxu0 %v33
  %789 = vmatprep.subr.mxu0 %v50
  %790 = vmatpush1.msra.mxu0 %v49
  %791 = vmatprep.subr.mxu0 %v66
  %792 = vmatpush1.msra.mxu0 %v65
  %793 = vmatprep.subr.mxu0 %v82
  %794 = vmatpush1.msra.mxu0 %v81
  %795 = vmatprep.subr.mxu0 %v98
  %796 = vmatpush1.msra.mxu0 %v97
  %797 = vmatprep.subr.mxu0 %v114
  %798 = vmatpush1.msra.mxu0 %v113
  %799 = vmatprep.subr.mxu0 %v130
  %800 = vmatpush1.msra.mxu0 %v129
  %801 = vmatprep.subr.mxu0 %v146
  %802 = vmatpush1.msra.mxu0 %v145
  %803 = vmatprep.subr.mxu0 %v162
  %804 = vmatpush1.msra.mxu0 %v161
  %805 = vmatprep.subr.mxu0 %v178
  %806 = vmatpush1.msra.mxu0 %v177
  %807 = vmatprep.subr.mxu0 %v194
  %808 = vmatpush1.msra.mxu0 %v193
  %809 = vmatprep.subr.mxu0 %v210
  %810 = vmatpush1.msra.mxu0 %v209
  %811 = vmatprep.subr.mxu0 %v226
  %812 = vmatpush1.msra.mxu0 %v225
  %813 = vmatprep.subr.mxu0 %v242
  %814 = vmatpush1.msra.mxu0 %v241
  %815 = vmatprep.subr.mxu0 %v258
  %816 = vmatpush1.msra.mxu0 %v257
  %817 = vmatprep.subr.mxu0 %v274
  %818 = vmatpush1.msra.mxu0 %v273
  %819 = vmatprep.subr.mxu0 0.0
  %820 = vmatpush1.msra.mxu0 0.0
  %821 = vmatprep.subr.mxu0 0.0
  %822 = vmatpush1.msra.mxu0 0.0
  %823 = vmatprep.subr.mxu0 0.0
  %824 = vmatpush1.msra.mxu0 0.0
  %825 = vmatprep.subr.mxu0 0.0
  %826 = vmatpush1.msra.mxu0 0.0
  %827 = vmatprep.subr.mxu0 0.0
  %828 = vmatpush1.msra.mxu0 0.0
  %829 = vmatprep.subr.mxu0 0.0
  %830 = vmatpush1.msra.mxu0 0.0
  %831 = vmatprep.subr.mxu0 0.0
  %832 = vmatpush1.msra.mxu0 0.0
  %833 = vmatprep.subr.mxu0 0.0
  %834 = vmatpush1.msra.mxu0 0.0
  %835 = vmatprep.subr.mxu0 0.0
  %836 = vmatpush1.msra.mxu0 0.0
  %837 = vmatprep.subr.mxu0 0.0
  %838 = vmatpush1.msra.mxu0 0.0
  %839 = vmatprep.subr.mxu0 0.0
  %840 = vmatpush1.msra.mxu0 0.0
  %841 = vmatprep.subr.mxu0 0.0
  %842 = vmatpush1.msra.mxu0 0.0
  %843 = vmatprep.subr.mxu0 0.0
  %844 = vmatpush1.msra.mxu0 0.0
  %845 = vmatprep.subr.mxu0 0.0
  %846 = vmatpush1.msra.mxu0 0.0
  %847 = vmatprep.subr.mxu0 0.0
  %848 = vmatpush1.msra.mxu0 0.0
  %849 = vmatprep.subr.mxu0 0.0
  %850 = vmatpush1.msra.mxu0 0.0
  %851 = vmatprep.mubr.f32.mxu0 0.0
  %852 = vmatmul.mubr.f32.gmra.mrb[0].mxu0 %v20
  %v853 = vpop.f32.mrb[0].mxu0
  %v854 = vadd.f32 %v332, %v853
  %v855 = vpop.f32.mrb[0].mxu0
  %v856 = vadd.f32 %v336, %v855
  %857 = vdwg.mxu0
  %858 = vmatprep.subr.mxu0 %v36
  %859 = vmatpush1.msra.mxu0 %v35
  %860 = vmatprep.subr.mxu0 %v52
  %861 = vmatpush1.msra.mxu0 %v51
  %862 = vmatprep.subr.mxu0 %v68
  %863 = vmatpush1.msra.mxu0 %v67
  %864 = vmatprep.subr.mxu0 %v84
  %865 = vmatpush1.msra.mxu0 %v83
  %866 = vmatprep.subr.mxu0 %v100
  %867 = vmatpush1.msra.mxu0 %v99
  %868 = vmatprep.subr.mxu0 %v116
  %869 = vmatpush1.msra.mxu0 %v115
  %870 = vmatprep.subr.mxu0 %v132
  %871 = vmatpush1.msra.mxu0 %v131
  %872 = vmatprep.subr.mxu0 %v148
  %873 = vmatpush1.msra.mxu0 %v147
  %874 = vmatprep.subr.mxu0 %v164
  %875 = vmatpush1.msra.mxu0 %v163
  %876 = vmatprep.subr.mxu0 %v180
  %877 = vmatpush1.msra.mxu0 %v179
  %878 = vmatprep.subr.mxu0 %v196
  %879 = vmatpush1.msra.mxu0 %v195
  %880 = vmatprep.subr.mxu0 %v212
  %881 = vmatpush1.msra.mxu0 %v211
  %882 = vmatprep.subr.mxu0 %v228
  %883 = vmatpush1.msra.mxu0 %v227
  %884 = vmatprep.subr.mxu0 %v244
  %885 = vmatpush1.msra.mxu0 %v243
  %886 = vmatprep.subr.mxu0 %v260
  %887 = vmatpush1.msra.mxu0 %v259
  %888 = vmatprep.subr.mxu0 %v276
  %889 = vmatpush1.msra.mxu0 %v275
  %890 = vmatprep.subr.mxu0 0.0
  %891 = vmatpush1.msra.mxu0 0.0
  %892 = vmatprep.subr.mxu0 0.0
  %893 = vmatpush1.msra.mxu0 0.0
  %894 = vmatprep.subr.mxu0 0.0
  %895 = vmatpush1.msra.mxu0 0.0
  %896 = vmatprep.subr.mxu0 0.0
  %897 = vmatpush1.msra.mxu0 0.0
  %898 = vmatprep.subr.mxu0 0.0
  %899 = vmatpush1.msra.mxu0 0.0
  %900 = vmatprep.subr.mxu0 0.0
  %901 = vmatpush1.msra.mxu0 0.0
  %902 = vmatprep.subr.mxu0 0.0
  %903 = vmatpush1.msra.mxu0 0.0
  %904 = vmatprep.subr.mxu0 0.0
  %905 = vmatpush1.msra.mxu0 0.0
  %906 = vmatprep.subr.mxu0 0.0
  %907 = vmatpush1.msra.mxu0 0.0
  %908 = vmatprep.subr.mxu0 0.0
  %909 = vmatpush1.msra.mxu0 0.0
  %910 = vmatprep.subr.mxu0 0.0
  %911 = vmatpush1.msra.mxu0 0.0
  %912 = vmatprep.subr.mxu0 0.0
  %913 = vmatpush1.msra.mxu0 0.0
  %914 = vmatprep.subr.mxu0 0.0
  %915 = vmatpush1.msra.mxu0 0.0
  %916 = vmatprep.subr.mxu0 0.0
  %917 = vmatpush1.msra.mxu0 0.0
  %918 = vmatprep.subr.mxu0 0.0
  %919 = vmatpush1.msra.mxu0 0.0
  %920 = vmatprep.subr.mxu0 0.0
  %921 = vmatpush1.msra.mxu0 0.0
  %922 = vmatprep.mubr.f32.mxu0 0.0
  %923 = vmatmul.mubr.f32.gmra.mrb[0].mxu0 %v20
  %v924 = vpop.f32.mrb[0].mxu0
  %v925 = vadd.f32 %v340, %v924
  %v926 = vpop.f32.mrb[0].mxu0
  %v927 = vadd.f32 %v344, %v926
  %928 = vdwg.mxu0
  %v945 = vcombine.low %v428, %v430
  %v946 = vcombine.low %v499, %v501
  %v948 = vunpack.c.l.s4 1983009808
  %v949 = vunpack.c.0.s8 %v948
  %v950 = vlaneseq
  %v951 = vshrl.u32 %v950, 7
  %v952 = vsub.s32 %v949, %v951
  %v953 = vrot.slane %v945, %v952
  %v955 = vunpack.c.l.s4 1983009808
  %v956 = vunpack.c.0.s8 %v955
  %v957 = vlaneseq
  %v958 = vshrl.u32 %v957, 7
  %v959 = vsub.s32 %v956, %v958
  %v960 = vrot.slane %v946, %v959
  %v961 = vcombine.low %v953, %v960
  %v962 = vcombine.low %v570, %v572
  %v963 = vcombine.low %v641, %v643
  %v965 = vunpack.c.l.s4 1983009808
  %v966 = vunpack.c.0.s8 %v965
  %v967 = vlaneseq
  %v968 = vshrl.u32 %v967, 7
  %v969 = vsub.s32 %v966, %v968
  %v970 = vrot.slane %v962, %v969
  %v972 = vunpack.c.l.s4 1983009808
  %v973 = vunpack.c.0.s8 %v972
  %v974 = vlaneseq
  %v975 = vshrl.u32 %v974, 7
  %v976 = vsub.s32 %v973, %v975
  %v977 = vrot.slane %v963, %v976
  %v978 = vcombine.low %v970, %v977
  %v979 = vcombine.low %v712, %v714
  %v980 = vcombine.low %v783, %v785
  %v982 = vunpack.c.l.s4 1983009808
  %v983 = vunpack.c.0.s8 %v982
  %v984 = vlaneseq
  %v985 = vshrl.u32 %v984, 7
  %v986 = vsub.s32 %v983, %v985
  %v987 = vrot.slane %v979, %v986
  %v989 = vunpack.c.l.s4 1983009808
  %v990 = vunpack.c.0.s8 %v989
  %v991 = vlaneseq
  %v992 = vshrl.u32 %v991, 7
  %v993 = vsub.s32 %v990, %v992
  %v994 = vrot.slane %v980, %v993
  %v995 = vcombine.low %v987, %v994
  %v996 = vcombine.low %v854, %v856
  %v997 = vcombine.low %v925, %v927
  %v999 = vunpack.c.l.s4 1983009808
  %v1000 = vunpack.c.0.s8 %v999
  %v1001 = vlaneseq
  %v1002 = vshrl.u32 %v1001, 7
  %v1003 = vsub.s32 %v1000, %v1002
  %v1004 = vrot.slane %v996, %v1003
  %v1006 = vunpack.c.l.s4 1983009808
  %v1007 = vunpack.c.0.s8 %v1006
  %v1008 = vlaneseq
  %v1009 = vshrl.u32 %v1008, 7
  %v1010 = vsub.s32 %v1007, %v1009
  %v1011 = vrot.slane %v997, %v1010
  %v1012 = vcombine.low %v1004, %v1011
  %1017 = vst [vmem:[#allocation2] sm:$0xff] %v961
  %1018 = vst [vmem:[#allocation2 + $0x8] sm:$0xff] %v978
  %1019 = vst [vmem:[#allocation2 + $0x10] sm:$0xff] %v995
  %1020 = vst [vmem:[#allocation2 + $0x18] sm:$0xff] %v1012
  %v1021 = vld [vmem:[#allocation2] sm:$0xff]
  %v1022 = vld [vmem:[#allocation2 + $0x8] sm:$0xff]
  %v1023 = vld [vmem:[#allocation2 + $0x10] sm:$0xff]
  %v1024 = vld [vmem:[#allocation2 + $0x18] sm:$0xff]
  %v1025 = vld [vmem:[%s3] sm:$0xff]
  %v1026 = vld [vmem:[%s3 + $0x8] sm:$0xff]
  %v1027 = vld [vmem:[%s3 + $0x10] sm:$0xff]
  %v1028 = vld [vmem:[%s3 + $0x18] sm:$0xff]
  %v1029 = vld [vmem:[%s3 + $0x20] sm:$0xff]
  %v1030 = vld [vmem:[%s3 + $0x28] sm:$0xff]
  %v1031 = vld [vmem:[%s3 + $0x30] sm:$0xff]
  %v1032 = vld [vmem:[%s3 + $0x38] sm:$0xff]
  %v1033 = vld [vmem:[%s3 + $0x40] sm:$0xff]
  %v1034 = vld [vmem:[%s3 + $0x48] sm:$0xff]
  %v1035 = vld [vmem:[%s3 + $0x50] sm:$0xff]
  %v1036 = vld [vmem:[%s3 + $0x58] sm:$0xff]
  %v1037 = vld [vmem:[%s3 + $0x60] sm:$0xff]
  %v1038 = vld [vmem:[%s3 + $0x68] sm:$0xff]
  %v1039 = vld [vmem:[%s3 + $0x70] sm:$0xff]
  %v1040 = vld [vmem:[%s3 + $0x78] sm:$0xff]
  %v1041 = vld [vmem:[%s3 + $0x80] sm:$0xff]
  %v1042 = vld [vmem:[%s3 + $0x88] sm:$0xff]
  %v1043 = vld [vmem:[%s3 + $0x90] sm:$0xff]
  %v1044 = vld [vmem:[%s3 + $0x98] sm:$0xff]
  %v1045 = vld [vmem:[%s3 + $0xa0] sm:$0xff]
  %v1046 = vld [vmem:[%s3 + $0xa8] sm:$0xff]
  %v1047 = vld [vmem:[%s3 + $0xb0] sm:$0xff]
  %v1048 = vld [vmem:[%s3 + $0xb8] sm:$0xff]
  %v1049 = vld [vmem:[%s3 + $0xc0] sm:$0xff]
  %v1050 = vld [vmem:[%s3 + $0xc8] sm:$0xff]
  %v1051 = vld [vmem:[%s3 + $0xd0] sm:$0xff]
  %v1052 = vld [vmem:[%s3 + $0xd8] sm:$0xff]
  %v1053 = vld [vmem:[%s3 + $0xe0] sm:$0xff]
  %v1054 = vld [vmem:[%s3 + $0xe8] sm:$0xff]
  %v1055 = vld [vmem:[%s3 + $0xf0] sm:$0xff]
  %v1056 = vld [vmem:[%s3 + $0xf8] sm:$0xff]
  %v1057 = vld [vmem:[%s3 + $0x100] sm:$0xff]
  %v1058 = vld [vmem:[%s3 + $0x108] sm:$0xff]
  %v1059 = vld [vmem:[%s3 + $0x110] sm:$0xff]
  %v1060 = vld [vmem:[%s3 + $0x118] sm:$0xff]
  %v1061 = vld [vmem:[%s3 + $0x120] sm:$0xff]
  %v1062 = vld [vmem:[%s3 + $0x128] sm:$0xff]
  %v1063 = vld [vmem:[%s3 + $0x130] sm:$0xff]
  %v1064 = vld [vmem:[%s3 + $0x138] sm:$0xff]
  %v1065 = vld [vmem:[%s3 + $0x140] sm:$0xff]
  %v1066 = vld [vmem:[%s3 + $0x148] sm:$0xff]
  %v1067 = vld [vmem:[%s3 + $0x150] sm:$0xff]
  %v1068 = vld [vmem:[%s3 + $0x158] sm:$0xff]
  %v1069 = vld [vmem:[%s3 + $0x160] sm:$0xff]
  %v1070 = vld [vmem:[%s3 + $0x168] sm:$0xff]
  %v1071 = vld [vmem:[%s3 + $0x170] sm:$0xff]
  %v1072 = vld [vmem:[%s3 + $0x178] sm:$0xff]
  %v1073 = vld [vmem:[%s3 + $0x180] sm:$0xff]
  %v1074 = vld [vmem:[%s3 + $0x188] sm:$0xff]
  %v1075 = vld [vmem:[%s3 + $0x190] sm:$0xff]
  %v1076 = vld [vmem:[%s3 + $0x198] sm:$0xff]
  %v1077 = vld [vmem:[%s3 + $0x1a0] sm:$0xff]
  %v1078 = vld [vmem:[%s3 + $0x1a8] sm:$0xff]
  %v1079 = vld [vmem:[%s3 + $0x1b0] sm:$0xff]
  %v1080 = vld [vmem:[%s3 + $0x1b8] sm:$0xff]
  %v1081 = vld [vmem:[%s3 + $0x1c0] sm:$0xff]
  %v1082 = vld [vmem:[%s3 + $0x1c8] sm:$0xff]
  %v1083 = vld [vmem:[%s3 + $0x1d0] sm:$0xff]
  %v1084 = vld [vmem:[%s3 + $0x1d8] sm:$0xff]
  %v1085 = vld [vmem:[%s3 + $0x1e0] sm:$0xff]
  %v1086 = vld [vmem:[%s3 + $0x1e8] sm:$0xff]
  %v1087 = vld [vmem:[%s3 + $0x1f0] sm:$0xff]
  %v1088 = vld [vmem:[%s3 + $0x1f8] sm:$0xff]
  %v1089 = vld [vmem:[%s3 + $0x200] sm:$0xff]
  %v1090 = vld [vmem:[%s3 + $0x208] sm:$0xff]
  %v1091 = vld [vmem:[%s3 + $0x210] sm:$0xff]
  %v1092 = vld [vmem:[%s3 + $0x218] sm:$0xff]
  %v1093 = vld [vmem:[%s3 + $0x220] sm:$0xff]
  %v1094 = vld [vmem:[%s3 + $0x228] sm:$0xff]
  %v1095 = vld [vmem:[%s3 + $0x230] sm:$0xff]
  %v1096 = vld [vmem:[%s3 + $0x238] sm:$0xff]
  %v1097 = vld [vmem:[%s3 + $0x240] sm:$0xff]
  %v1098 = vld [vmem:[%s3 + $0x248] sm:$0xff]
  %v1099 = vld [vmem:[%s3 + $0x250] sm:$0xff]
  %v1100 = vld [vmem:[%s3 + $0x258] sm:$0xff]
  %v1101 = vld [vmem:[%s3 + $0x260] sm:$0xff]
  %v1102 = vld [vmem:[%s3 + $0x268] sm:$0xff]
  %v1103 = vld [vmem:[%s3 + $0x270] sm:$0xff]
  %v1104 = vld [vmem:[%s3 + $0x278] sm:$0xff]
  %v1105 = vld [vmem:[%s3 + $0x280] sm:$0xff]
  %v1106 = vld [vmem:[%s3 + $0x288] sm:$0xff]
  %v1107 = vld [vmem:[%s3 + $0x290] sm:$0xff]
  %v1108 = vld [vmem:[%s3 + $0x298] sm:$0xff]
  %v1109 = vld [vmem:[%s3 + $0x2a0] sm:$0xff]
  %v1110 = vld [vmem:[%s3 + $0x2a8] sm:$0xff]
  %v1111 = vld [vmem:[%s3 + $0x2b0] sm:$0xff]
  %v1112 = vld [vmem:[%s3 + $0x2b8] sm:$0xff]
  %v1113 = vld [vmem:[%s3 + $0x2c0] sm:$0xff]
  %v1114 = vld [vmem:[%s3 + $0x2c8] sm:$0xff]
  %v1115 = vld [vmem:[%s3 + $0x2d0] sm:$0xff]
  %v1116 = vld [vmem:[%s3 + $0x2d8] sm:$0xff]
  %v1117 = vld [vmem:[%s3 + $0x2e0] sm:$0xff]
  %v1118 = vld [vmem:[%s3 + $0x2e8] sm:$0xff]
  %v1119 = vld [vmem:[%s3 + $0x2f0] sm:$0xff]
  %v1120 = vld [vmem:[%s3 + $0x2f8] sm:$0xff]
  %v1121 = vld [vmem:[%s3 + $0x300] sm:$0xff]
  %v1122 = vld [vmem:[%s3 + $0x308] sm:$0xff]
  %v1123 = vld [vmem:[%s3 + $0x310] sm:$0xff]
  %v1124 = vld [vmem:[%s3 + $0x318] sm:$0xff]
  %v1125 = vld [vmem:[%s3 + $0x320] sm:$0xff]
  %v1126 = vld [vmem:[%s3 + $0x328] sm:$0xff]
  %v1127 = vld [vmem:[%s3 + $0x330] sm:$0xff]
  %v1128 = vld [vmem:[%s3 + $0x338] sm:$0xff]
  %v1129 = vld [vmem:[%s3 + $0x340] sm:$0xff]
  %v1130 = vld [vmem:[%s3 + $0x348] sm:$0xff]
  %v1131 = vld [vmem:[%s3 + $0x350] sm:$0xff]
  %v1132 = vld [vmem:[%s3 + $0x358] sm:$0xff]
  %v1133 = vld [vmem:[%s3 + $0x360] sm:$0xff]
  %v1134 = vld [vmem:[%s3 + $0x368] sm:$0xff]
  %v1135 = vld [vmem:[%s3 + $0x370] sm:$0xff]
  %v1136 = vld [vmem:[%s3 + $0x378] sm:$0xff]
  %v1137 = vld [vmem:[%s3 + $0x380] sm:$0xff]
  %v1138 = vld [vmem:[%s3 + $0x388] sm:$0xff]
  %v1139 = vld [vmem:[%s3 + $0x390] sm:$0xff]
  %v1140 = vld [vmem:[%s3 + $0x398] sm:$0xff]
  %v1141 = vld [vmem:[%s3 + $0x3a0] sm:$0xff]
  %v1142 = vld [vmem:[%s3 + $0x3a8] sm:$0xff]
  %v1143 = vld [vmem:[%s3 + $0x3b0] sm:$0xff]
  %v1144 = vld [vmem:[%s3 + $0x3b8] sm:$0xff]
  %v1145 = vld [vmem:[%s3 + $0x3c0] sm:$0xff]
  %v1146 = vld [vmem:[%s3 + $0x3c8] sm:$0xff]
  %v1147 = vld [vmem:[%s3 + $0x3d0] sm:$0xff]
  %v1148 = vld [vmem:[%s3 + $0x3d8] sm:$0xff]
  %v1149 = vld [vmem:[%s3 + $0x3e0] sm:$0xff]
  %v1150 = vld [vmem:[%s3 + $0x3e8] sm:$0xff]
  %v1151 = vld [vmem:[%s3 + $0x3f0] sm:$0xff]
  %v1152 = vld [vmem:[%s3 + $0x3f8] sm:$0xff]
  %v1153 = vld [vmem:[%s3 + $0x400] sm:$0xff]
  %v1154 = vld [vmem:[%s3 + $0x408] sm:$0xff]
  %v1155 = vld [vmem:[%s3 + $0x410] sm:$0xff]
  %v1156 = vld [vmem:[%s3 + $0x418] sm:$0xff]
  %v1157 = vld [vmem:[%s3 + $0x420] sm:$0xff]
  %v1158 = vld [vmem:[%s3 + $0x428] sm:$0xff]
  %v1159 = vld [vmem:[%s3 + $0x430] sm:$0xff]
  %v1160 = vld [vmem:[%s3 + $0x438] sm:$0xff]
  %v1161 = vld [vmem:[%s3 + $0x440] sm:$0xff]
  %v1162 = vld [vmem:[%s3 + $0x448] sm:$0xff]
  %v1163 = vld [vmem:[%s3 + $0x450] sm:$0xff]
  %v1164 = vld [vmem:[%s3 + $0x458] sm:$0xff]
  %v1165 = vld [vmem:[%s3 + $0x460] sm:$0xff]
  %v1166 = vld [vmem:[%s3 + $0x468] sm:$0xff]
  %v1167 = vld [vmem:[%s3 + $0x470] sm:$0xff]
  %v1168 = vld [vmem:[%s3 + $0x478] sm:$0xff]
  %v1169 = vld [vmem:[%s3 + $0x480] sm:$0xff]
  %v1170 = vld [vmem:[%s3 + $0x488] sm:$0xff]
  %v1171 = vld [vmem:[%s3 + $0x490] sm:$0xff]
  %v1172 = vld [vmem:[%s3 + $0x498] sm:$0xff]
  %v1173 = vld [vmem:[%s3 + $0x4a0] sm:$0xff]
  %v1174 = vld [vmem:[%s3 + $0x4a8] sm:$0xff]
  %v1175 = vld [vmem:[%s3 + $0x4b0] sm:$0xff]
  %v1176 = vld [vmem:[%s3 + $0x4b8] sm:$0xff]
  %v1177 = vld [vmem:[%s3 + $0x4c0] sm:$0xff]
  %v1178 = vld [vmem:[%s3 + $0x4c8] sm:$0xff]
  %v1179 = vld [vmem:[%s3 + $0x4d0] sm:$0xff]
  %v1180 = vld [vmem:[%s3 + $0x4d8] sm:$0xff]
  %v1181 = vld [vmem:[%s3 + $0x4e0] sm:$0xff]
  %v1182 = vld [vmem:[%s3 + $0x4e8] sm:$0xff]
  %v1183 = vld [vmem:[%s3 + $0x4f0] sm:$0xff]
  %v1184 = vld [vmem:[%s3 + $0x4f8] sm:$0xff]
  %v1185 = vld [vmem:[%s3 + $0x500] sm:$0xff]
  %v1186 = vld [vmem:[%s3 + $0x508] sm:$0xff]
  %v1187 = vld [vmem:[%s3 + $0x510] sm:$0xff]
  %v1188 = vld [vmem:[%s3 + $0x518] sm:$0xff]
  %v1189 = vld [vmem:[%s3 + $0x520] sm:$0xff]
  %v1190 = vld [vmem:[%s3 + $0x528] sm:$0xff]
  %v1191 = vld [vmem:[%s3 + $0x530] sm:$0xff]
  %v1192 = vld [vmem:[%s3 + $0x538] sm:$0xff]
  %v1193 = vld [vmem:[%s3 + $0x540] sm:$0xff]
  %v1194 = vld [vmem:[%s3 + $0x548] sm:$0xff]
  %v1195 = vld [vmem:[%s3 + $0x550] sm:$0xff]
  %v1196 = vld [vmem:[%s3 + $0x558] sm:$0xff]
  %v1197 = vld [vmem:[%s3 + $0x560] sm:$0xff]
  %v1198 = vld [vmem:[%s3 + $0x568] sm:$0xff]
  %v1199 = vld [vmem:[%s3 + $0x570] sm:$0xff]
  %v1200 = vld [vmem:[%s3 + $0x578] sm:$0xff]
  %v1201 = vld [vmem:[%s3 + $0x580] sm:$0xff]
  %v1202 = vld [vmem:[%s3 + $0x588] sm:$0xff]
  %v1203 = vld [vmem:[%s3 + $0x590] sm:$0xff]
  %v1204 = vld [vmem:[%s3 + $0x598] sm:$0xff]
  %v1205 = vld [vmem:[%s3 + $0x5a0] sm:$0xff]
  %v1206 = vld [vmem:[%s3 + $0x5a8] sm:$0xff]
  %v1207 = vld [vmem:[%s3 + $0x5b0] sm:$0xff]
  %v1208 = vld [vmem:[%s3 + $0x5b8] sm:$0xff]
  %v1209 = vld [vmem:[%s3 + $0x5c0] sm:$0xff]
  %v1210 = vld [vmem:[%s3 + $0x5c8] sm:$0xff]
  %v1211 = vld [vmem:[%s3 + $0x5d0] sm:$0xff]
  %v1212 = vld [vmem:[%s3 + $0x5d8] sm:$0xff]
  %v1213 = vld [vmem:[%s3 + $0x5e0] sm:$0xff]
  %v1214 = vld [vmem:[%s3 + $0x5e8] sm:$0xff]
  %v1215 = vld [vmem:[%s3 + $0x5f0] sm:$0xff]
  %v1216 = vld [vmem:[%s3 + $0x5f8] sm:$0xff]
  %v1217 = vld [vmem:[%s3 + $0x600] sm:$0xff]
  %v1218 = vld [vmem:[%s3 + $0x608] sm:$0xff]
  %v1219 = vld [vmem:[%s3 + $0x610] sm:$0xff]
  %v1220 = vld [vmem:[%s3 + $0x618] sm:$0xff]
  %v1221 = vld [vmem:[%s3 + $0x620] sm:$0xff]
  %v1222 = vld [vmem:[%s3 + $0x628] sm:$0xff]
  %v1223 = vld [vmem:[%s3 + $0x630] sm:$0xff]
  %v1224 = vld [vmem:[%s3 + $0x638] sm:$0xff]
  %v1225 = vld [vmem:[%s3 + $0x640] sm:$0xff]
  %v1226 = vld [vmem:[%s3 + $0x648] sm:$0xff]
  %v1227 = vld [vmem:[%s3 + $0x650] sm:$0xff]
  %v1228 = vld [vmem:[%s3 + $0x658] sm:$0xff]
  %v1229 = vld [vmem:[%s3 + $0x660] sm:$0xff]
  %v1230 = vld [vmem:[%s3 + $0x668] sm:$0xff]
  %v1231 = vld [vmem:[%s3 + $0x670] sm:$0xff]
  %v1232 = vld [vmem:[%s3 + $0x678] sm:$0xff]
  %v1233 = vld [vmem:[%s3 + $0x680] sm:$0xff]
  %v1234 = vld [vmem:[%s3 + $0x688] sm:$0xff]
  %v1235 = vld [vmem:[%s3 + $0x690] sm:$0xff]
  %v1236 = vld [vmem:[%s3 + $0x698] sm:$0xff]
  %v1237 = vld [vmem:[%s3 + $0x6a0] sm:$0xff]
  %v1238 = vld [vmem:[%s3 + $0x6a8] sm:$0xff]
  %v1239 = vld [vmem:[%s3 + $0x6b0] sm:$0xff]
  %v1240 = vld [vmem:[%s3 + $0x6b8] sm:$0xff]
  %v1241 = vld [vmem:[%s3 + $0x6c0] sm:$0xff]
  %v1242 = vld [vmem:[%s3 + $0x6c8] sm:$0xff]
  %v1243 = vld [vmem:[%s3 + $0x6d0] sm:$0xff]
  %v1244 = vld [vmem:[%s3 + $0x6d8] sm:$0xff]
  %v1245 = vld [vmem:[%s3 + $0x6e0] sm:$0xff]
  %v1246 = vld [vmem:[%s3 + $0x6e8] sm:$0xff]
  %v1247 = vld [vmem:[%s3 + $0x6f0] sm:$0xff]
  %v1248 = vld [vmem:[%s3 + $0x6f8] sm:$0xff]
  %v1249 = vld [vmem:[%s3 + $0x700] sm:$0xff]
  %v1250 = vld [vmem:[%s3 + $0x708] sm:$0xff]
  %v1251 = vld [vmem:[%s3 + $0x710] sm:$0xff]
  %v1252 = vld [vmem:[%s3 + $0x718] sm:$0xff]
  %v1253 = vld [vmem:[%s3 + $0x720] sm:$0xff]
  %v1254 = vld [vmem:[%s3 + $0x728] sm:$0xff]
  %v1255 = vld [vmem:[%s3 + $0x730] sm:$0xff]
  %v1256 = vld [vmem:[%s3 + $0x738] sm:$0xff]
  %v1257 = vld [vmem:[%s3 + $0x740] sm:$0xff]
  %v1258 = vld [vmem:[%s3 + $0x748] sm:$0xff]
  %v1259 = vld [vmem:[%s3 + $0x750] sm:$0xff]
  %v1260 = vld [vmem:[%s3 + $0x758] sm:$0xff]
  %v1261 = vld [vmem:[%s3 + $0x760] sm:$0xff]
  %v1262 = vld [vmem:[%s3 + $0x768] sm:$0xff]
  %v1263 = vld [vmem:[%s3 + $0x770] sm:$0xff]
  %v1264 = vld [vmem:[%s3 + $0x778] sm:$0xff]
  %v1265 = vld [vmem:[%s3 + $0x780] sm:$0xff]
  %v1266 = vld [vmem:[%s3 + $0x788] sm:$0xff]
  %v1267 = vld [vmem:[%s3 + $0x790] sm:$0xff]
  %v1268 = vld [vmem:[%s3 + $0x798] sm:$0xff]
  %v1269 = vld [vmem:[%s3 + $0x7a0] sm:$0xff]
  %v1270 = vld [vmem:[%s3 + $0x7a8] sm:$0xff]
  %v1271 = vld [vmem:[%s3 + $0x7b0] sm:$0xff]
  %v1272 = vld [vmem:[%s3 + $0x7b8] sm:$0xff]
  %v1273 = vld [vmem:[%s3 + $0x7c0] sm:$0xff]
  %v1274 = vld [vmem:[%s3 + $0x7c8] sm:$0xff]
  %v1275 = vld [vmem:[%s3 + $0x7d0] sm:$0xff]
  %v1276 = vld [vmem:[%s3 + $0x7d8] sm:$0xff]
  %v1277 = vld [vmem:[%s3 + $0x7e0] sm:$0xff]
  %v1278 = vld [vmem:[%s3 + $0x7e8] sm:$0xff]
  %v1279 = vld [vmem:[%s3 + $0x7f0] sm:$0xff]
  %v1280 = vld [vmem:[%s3 + $0x7f8] sm:$0xff]
  %1281 = vmatprep.subr.mxu0 %v1026
  %1282 = vmatpush1.msra.mxu0 %v1025
  %1283 = vmatprep.subr.mxu0 %v1034
  %1284 = vmatpush1.msra.mxu0 %v1033
  %1285 = vmatprep.subr.mxu0 %v1042
  %1286 = vmatpush1.msra.mxu0 %v1041
  %1287 = vmatprep.subr.mxu0 %v1050
  %1288 = vmatpush1.msra.mxu0 %v1049
  %1289 = vmatprep.subr.mxu0 %v1058
  %1290 = vmatpush1.msra.mxu0 %v1057
  %1291 = vmatprep.subr.mxu0 %v1066
  %1292 = vmatpush1.msra.mxu0 %v1065
  %1293 = vmatprep.subr.mxu0 %v1074
  %1294 = vmatpush1.msra.mxu0 %v1073
  %1295 = vmatprep.subr.mxu0 %v1082
  %1296 = vmatpush1.msra.mxu0 %v1081
  %1297 = vmatprep.subr.mxu0 %v1090
  %1298 = vmatpush1.msra.mxu0 %v1089
  %1299 = vmatprep.subr.mxu0 %v1098
  %1300 = vmatpush1.msra.mxu0 %v1097
  %1301 = vmatprep.subr.mxu0 %v1106
  %1302 = vmatpush1.msra.mxu0 %v1105
  %1303 = vmatprep.subr.mxu0 %v1114
  %1304 = vmatpush1.msra.mxu0 %v1113
  %1305 = vmatprep.subr.mxu0 %v1122
  %1306 = vmatpush1.msra.mxu0 %v1121
  %1307 = vmatprep.subr.mxu0 %v1130
  %1308 = vmatpush1.msra.mxu0 %v1129
  %1309 = vmatprep.subr.mxu0 %v1138
  %1310 = vmatpush1.msra.mxu0 %v1137
  %1311 = vmatprep.subr.mxu0 %v1146
  %1312 = vmatpush1.msra.mxu0 %v1145
  %1313 = vmatprep.subr.mxu0 %v1154
  %1314 = vmatpush1.msra.mxu0 %v1153
  %1315 = vmatprep.subr.mxu0 %v1162
  %1316 = vmatpush1.msra.mxu0 %v1161
  %1317 = vmatprep.subr.mxu0 %v1170
  %1318 = vmatpush1.msra.mxu0 %v1169
  %1319 = vmatprep.subr.mxu0 %v1178
  %1320 = vmatpush1.msra.mxu0 %v1177
  %1321 = vmatprep.subr.mxu0 %v1186
  %1322 = vmatpush1.msra.mxu0 %v1185
  %1323 = vmatprep.subr.mxu0 %v1194
  %1324 = vmatpush1.msra.mxu0 %v1193
  %1325 = vmatprep.subr.mxu0 %v1202
  %1326 = vmatpush1.msra.mxu0 %v1201
  %1327 = vmatprep.subr.mxu0 %v1210
  %1328 = vmatpush1.msra.mxu0 %v1209
  %1329 = vmatprep.subr.mxu0 %v1218
  %1330 = vmatpush1.msra.mxu0 %v1217
  %1331 = vmatprep.subr.mxu0 %v1226
  %1332 = vmatpush1.msra.mxu0 %v1225
  %1333 = vmatprep.subr.mxu0 %v1234
  %1334 = vmatpush1.msra.mxu0 %v1233
  %1335 = vmatprep.subr.mxu0 %v1242
  %1336 = vmatpush1.msra.mxu0 %v1241
  %1337 = vmatprep.subr.mxu0 %v1250
  %1338 = vmatpush1.msra.mxu0 %v1249
  %1339 = vmatprep.subr.mxu0 %v1258
  %1340 = vmatpush1.msra.mxu0 %v1257
  %1341 = vmatprep.subr.mxu0 %v1266
  %1342 = vmatpush1.msra.mxu0 %v1265
  %1343 = vmatprep.subr.mxu0 %v1274
  %1344 = vmatpush1.msra.mxu0 %v1273
  %1345 = vmatprep.mubr.f32.mxu0 0.0
  %1346 = vmatmul.mubr.f32.gmra.mrb[0].mxu0 0.0
  %v1347 = vpop.f32.mrb[0].mxu0
  %v1348 = vadd.f32 0.0, %v1347
  %v1349 = vpop.f32.mrb[0].mxu0
  %v1350 = vadd.f32 0.0, %v1349
  %1351 = vdwg.mxu0
  %1352 = vmatprep.subr.mxu0 %v1028
  %1353 = vmatpush1.msra.mxu0 %v1027
  %1354 = vmatprep.subr.mxu0 %v1036
  %1355 = vmatpush1.msra.mxu0 %v1035
  %1356 = vmatprep.subr.mxu0 %v1044
  %1357 = vmatpush1.msra.mxu0 %v1043
  %1358 = vmatprep.subr.mxu0 %v1052
  %1359 = vmatpush1.msra.mxu0 %v1051
  %1360 = vmatprep.subr.mxu0 %v1060
  %1361 = vmatpush1.msra.mxu0 %v1059
  %1362 = vmatprep.subr.mxu0 %v1068
  %1363 = vmatpush1.msra.mxu0 %v1067
  %1364 = vmatprep.subr.mxu0 %v1076
  %1365 = vmatpush1.msra.mxu0 %v1075
  %1366 = vmatprep.subr.mxu0 %v1084
  %1367 = vmatpush1.msra.mxu0 %v1083
  %1368 = vmatprep.subr.mxu0 %v1092
  %1369 = vmatpush1.msra.mxu0 %v1091
  %1370 = vmatprep.subr.mxu0 %v1100
  %1371 = vmatpush1.msra.mxu0 %v1099
  %1372 = vmatprep.subr.mxu0 %v1108
  %1373 = vmatpush1.msra.mxu0 %v1107
  %1374 = vmatprep.subr.mxu0 %v1116
  %1375 = vmatpush1.msra.mxu0 %v1115
  %1376 = vmatprep.subr.mxu0 %v1124
  %1377 = vmatpush1.msra.mxu0 %v1123
  %1378 = vmatprep.subr.mxu0 %v1132
  %1379 = vmatpush1.msra.mxu0 %v1131
  %1380 = vmatprep.subr.mxu0 %v1140
  %1381 = vmatpush1.msra.mxu0 %v1139
  %1382 = vmatprep.subr.mxu0 %v1148
  %1383 = vmatpush1.msra.mxu0 %v1147
  %1384 = vmatprep.subr.mxu0 %v1156
  %1385 = vmatpush1.msra.mxu0 %v1155
  %1386 = vmatprep.subr.mxu0 %v1164
  %1387 = vmatpush1.msra.mxu0 %v1163
  %1388 = vmatprep.subr.mxu0 %v1172
  %1389 = vmatpush1.msra.mxu0 %v1171
  %1390 = vmatprep.subr.mxu0 %v1180
  %1391 = vmatpush1.msra.mxu0 %v1179
  %1392 = vmatprep.subr.mxu0 %v1188
  %1393 = vmatpush1.msra.mxu0 %v1187
  %1394 = vmatprep.subr.mxu0 %v1196
  %1395 = vmatpush1.msra.mxu0 %v1195
  %1396 = vmatprep.subr.mxu0 %v1204
  %1397 = vmatpush1.msra.mxu0 %v1203
  %1398 = vmatprep.subr.mxu0 %v1212
  %1399 = vmatpush1.msra.mxu0 %v1211
  %1400 = vmatprep.subr.mxu0 %v1220
  %1401 = vmatpush1.msra.mxu0 %v1219
  %1402 = vmatprep.subr.mxu0 %v1228
  %1403 = vmatpush1.msra.mxu0 %v1227
  %1404 = vmatprep.subr.mxu0 %v1236
  %1405 = vmatpush1.msra.mxu0 %v1235
  %1406 = vmatprep.subr.mxu0 %v1244
  %1407 = vmatpush1.msra.mxu0 %v1243
  %1408 = vmatprep.subr.mxu0 %v1252
  %1409 = vmatpush1.msra.mxu0 %v1251
  %1410 = vmatprep.subr.mxu0 %v1260
  %1411 = vmatpush1.msra.mxu0 %v1259
  %1412 = vmatprep.subr.mxu0 %v1268
  %1413 = vmatpush1.msra.mxu0 %v1267
  %1414 = vmatprep.subr.mxu0 %v1276
  %1415 = vmatpush1.msra.mxu0 %v1275
  %1416 = vmatprep.mubr.f32.mxu0 0.0
  %1417 = vmatmul.mubr.f32.gmra.mrb[0].mxu0 0.0
  %v1418 = vpop.f32.mrb[0].mxu0
  %v1419 = vadd.f32 0.0, %v1418
  %v1420 = vpop.f32.mrb[0].mxu0
  %v1421 = vadd.f32 0.0, %v1420
  %1422 = vdwg.mxu0
  %1423 = vmatprep.subr.mxu0 %v1030
  %1424 = vmatpush1.msra.mxu0 %v1029
  %1425 = vmatprep.subr.mxu0 %v1038
  %1426 = vmatpush1.msra.mxu0 %v1037
  %1427 = vmatprep.subr.mxu0 %v1046
  %1428 = vmatpush1.msra.mxu0 %v1045
  %1429 = vmatprep.subr.mxu0 %v1054
  %1430 = vmatpush1.msra.mxu0 %v1053
  %1431 = vmatprep.subr.mxu0 %v1062
  %1432 = vmatpush1.msra.mxu0 %v1061
  %1433 = vmatprep.subr.mxu0 %v1070
  %1434 = vmatpush1.msra.mxu0 %v1069
  %1435 = vmatprep.subr.mxu0 %v1078
  %1436 = vmatpush1.msra.mxu0 %v1077
  %1437 = vmatprep.subr.mxu0 %v1086
  %1438 = vmatpush1.msra.mxu0 %v1085
  %1439 = vmatprep.subr.mxu0 %v1094
  %1440 = vmatpush1.msra.mxu0 %v1093
  %1441 = vmatprep.subr.mxu0 %v1102
  %1442 = vmatpush1.msra.mxu0 %v1101
  %1443 = vmatprep.subr.mxu0 %v1110
  %1444 = vmatpush1.msra.mxu0 %v1109
  %1445 = vmatprep.subr.mxu0 %v1118
  %1446 = vmatpush1.msra.mxu0 %v1117
  %1447 = vmatprep.subr.mxu0 %v1126
  %1448 = vmatpush1.msra.mxu0 %v1125
  %1449 = vmatprep.subr.mxu0 %v1134
  %1450 = vmatpush1.msra.mxu0 %v1133
  %1451 = vmatprep.subr.mxu0 %v1142
  %1452 = vmatpush1.msra.mxu0 %v1141
  %1453 = vmatprep.subr.mxu0 %v1150
  %1454 = vmatpush1.msra.mxu0 %v1149
  %1455 = vmatprep.subr.mxu0 %v1158
  %1456 = vmatpush1.msra.mxu0 %v1157
  %1457 = vmatprep.subr.mxu0 %v1166
  %1458 = vmatpush1.msra.mxu0 %v1165
  %1459 = vmatprep.subr.mxu0 %v1174
  %1460 = vmatpush1.msra.mxu0 %v1173
  %1461 = vmatprep.subr.mxu0 %v1182
  %1462 = vmatpush1.msra.mxu0 %v1181
  %1463 = vmatprep.subr.mxu0 %v1190
  %1464 = vmatpush1.msra.mxu0 %v1189
  %1465 = vmatprep.subr.mxu0 %v1198
  %1466 = vmatpush1.msra.mxu0 %v1197
  %1467 = vmatprep.subr.mxu0 %v1206
  %1468 = vmatpush1.msra.mxu0 %v1205
  %1469 = vmatprep.subr.mxu0 %v1214
  %1470 = vmatpush1.msra.mxu0 %v1213
  %1471 = vmatprep.subr.mxu0 %v1222
  %1472 = vmatpush1.msra.mxu0 %v1221
  %1473 = vmatprep.subr.mxu0 %v1230
  %1474 = vmatpush1.msra.mxu0 %v1229
  %1475 = vmatprep.subr.mxu0 %v1238
  %1476 = vmatpush1.msra.mxu0 %v1237
  %1477 = vmatprep.subr.mxu0 %v1246
  %1478 = vmatpush1.msra.mxu0 %v1245
  %1479 = vmatprep.subr.mxu0 %v1254
  %1480 = vmatpush1.msra.mxu0 %v1253
  %1481 = vmatprep.subr.mxu0 %v1262
  %1482 = vmatpush1.msra.mxu0 %v1261
  %1483 = vmatprep.subr.mxu0 %v1270
  %1484 = vmatpush1.msra.mxu0 %v1269
  %1485 = vmatprep.subr.mxu0 %v1278
  %1486 = vmatpush1.msra.mxu0 %v1277
  %1487 = vmatprep.mubr.f32.mxu0 0.0
  %1488 = vmatmul.mubr.f32.gmra.mrb[0].mxu0 0.0
  %v1489 = vpop.f32.mrb[0].mxu0
  %v1490 = vadd.f32 0.0, %v1489
  %v1491 = vpop.f32.mrb[0].mxu0
  %v1492 = vadd.f32 0.0, %v1491
  %1493 = vdwg.mxu0
  %1494 = vmatprep.subr.mxu0 %v1032
  %1495 = vmatpush1.msra.mxu0 %v1031
  %1496 = vmatprep.subr.mxu0 %v1040
  %1497 = vmatpush1.msra.mxu0 %v1039
  %1498 = vmatprep.subr.mxu0 %v1048
  %1499 = vmatpush1.msra.mxu0 %v1047
  %1500 = vmatprep.subr.mxu0 %v1056
  %1501 = vmatpush1.msra.mxu0 %v1055
  %1502 = vmatprep.subr.mxu0 %v1064
  %1503 = vmatpush1.msra.mxu0 %v1063
  %1504 = vmatprep.subr.mxu0 %v1072
  %1505 = vmatpush1.msra.mxu0 %v1071
  %1506 = vmatprep.subr.mxu0 %v1080
  %1507 = vmatpush1.msra.mxu0 %v1079
  %1508 = vmatprep.subr.mxu0 %v1088
  %1509 = vmatpush1.msra.mxu0 %v1087
  %1510 = vmatprep.subr.mxu0 %v1096
  %1511 = vmatpush1.msra.mxu0 %v1095
  %1512 = vmatprep.subr.mxu0 %v1104
  %1513 = vmatpush1.msra.mxu0 %v1103
  %1514 = vmatprep.subr.mxu0 %v1112
  %1515 = vmatpush1.msra.mxu0 %v1111
  %1516 = vmatprep.subr.mxu0 %v1120
  %1517 = vmatpush1.msra.mxu0 %v1119
  %1518 = vmatprep.subr.mxu0 %v1128
  %1519 = vmatpush1.msra.mxu0 %v1127
  %1520 = vmatprep.subr.mxu0 %v1136
  %1521 = vmatpush1.msra.mxu0 %v1135
  %1522 = vmatprep.subr.mxu0 %v1144
  %1523 = vmatpush1.msra.mxu0 %v1143
  %1524 = vmatprep.subr.mxu0 %v1152
  %1525 = vmatpush1.msra.mxu0 %v1151
  %1526 = vmatprep.subr.mxu0 %v1160
  %1527 = vmatpush1.msra.mxu0 %v1159
  %1528 = vmatprep.subr.mxu0 %v1168
  %1529 = vmatpush1.msra.mxu0 %v1167
  %1530 = vmatprep.subr.mxu0 %v1176
  %1531 = vmatpush1.msra.mxu0 %v1175
  %1532 = vmatprep.subr.mxu0 %v1184
  %1533 = vmatpush1.msra.mxu0 %v1183
  %1534 = vmatprep.subr.mxu0 %v1192
  %1535 = vmatpush1.msra.mxu0 %v1191
  %1536 = vmatprep.subr.mxu0 %v1200
  %1537 = vmatpush1.msra.mxu0 %v1199
  %1538 = vmatprep.subr.mxu0 %v1208
  %1539 = vmatpush1.msra.mxu0 %v1207
  %1540 = vmatprep.subr.mxu0 %v1216
  %1541 = vmatpush1.msra.mxu0 %v1215
  %1542 = vmatprep.subr.mxu0 %v1224
  %1543 = vmatpush1.msra.mxu0 %v1223
  %1544 = vmatprep.subr.mxu0 %v1232
  %1545 = vmatpush1.msra.mxu0 %v1231
  %1546 = vmatprep.subr.mxu0 %v1240
  %1547 = vmatpush1.msra.mxu0 %v1239
  %1548 = vmatprep.subr.mxu0 %v1248
  %1549 = vmatpush1.msra.mxu0 %v1247
  %1550 = vmatprep.subr.mxu0 %v1256
  %1551 = vmatpush1.msra.mxu0 %v1255
  %1552 = vmatprep.subr.mxu0 %v1264
  %1553 = vmatpush1.msra.mxu0 %v1263
  %1554 = vmatprep.subr.mxu0 %v1272
  %1555 = vmatpush1.msra.mxu0 %v1271
  %1556 = vmatprep.subr.mxu0 %v1280
  %1557 = vmatpush1.msra.mxu0 %v1279
  %1558 = vmatprep.mubr.f32.mxu0 0.0
  %1559 = vmatmul.mubr.f32.gmra.mrb[0].mxu0 0.0
  %v1560 = vpop.f32.mrb[0].mxu0
  %v1561 = vadd.f32 0.0, %v1560
  %v1562 = vpop.f32.mrb[0].mxu0
  %v1563 = vadd.f32 0.0, %v1562
  %1564 = vdwg.mxu0
  %v1573 = vcombine.low %v1348, %v1350
  %v1574 = vcombine.low %v1419, %v1421
  %v1576 = vunpack.c.l.s4 1983009808
  %v1577 = vunpack.c.0.s8 %v1576
  %v1578 = vlaneseq
  %v1579 = vshrl.u32 %v1578, 7
  %v1580 = vsub.s32 %v1577, %v1579
  %v1581 = vrot.slane %v1573, %v1580
  %v1583 = vunpack.c.l.s4 1983009808
  %v1584 = vunpack.c.0.s8 %v1583
  %v1585 = vlaneseq
  %v1586 = vshrl.u32 %v1585, 7
  %v1587 = vsub.s32 %v1584, %v1586
  %v1588 = vrot.slane %v1574, %v1587
  %v1589 = vcombine.low %v1581, %v1588
  %v1590 = vcombine.low %v1490, %v1492
  %v1591 = vcombine.low %v1561, %v1563
  %v1593 = vunpack.c.l.s4 1983009808
  %v1594 = vunpack.c.0.s8 %v1593
  %v1595 = vlaneseq
  %v1596 = vshrl.u32 %v1595, 7
  %v1597 = vsub.s32 %v1594, %v1596
  %v1598 = vrot.slane %v1590, %v1597
  %v1600 = vunpack.c.l.s4 1983009808
  %v1601 = vunpack.c.0.s8 %v1600
  %v1602 = vlaneseq
  %v1603 = vshrl.u32 %v1602, 7
  %v1604 = vsub.s32 %v1601, %v1603
  %v1605 = vrot.slane %v1591, %v1604
  %v1606 = vcombine.low %v1598, %v1605
  %v1609 = vadd.f32 %v1021, %v1589
  %v1610 = vadd.f32 %v1022, %v1606
  %v1611 = vld [vmem:[%s4] sm:$0xff]
  %v1612 = vld [vmem:[%s4 + $0x8] sm:$0xff]
  %v1613 = vld [vmem:[%s4 + $0x10] sm:$0xff]
  %v1614 = vld [vmem:[%s4 + $0x18] sm:$0xff]
  %v1615 = vld [vmem:[%s4 + $0x20] sm:$0xff]
  %v1616 = vld [vmem:[%s4 + $0x28] sm:$0xff]
  %v1617 = vld [vmem:[%s4 + $0x30] sm:$0xff]
  %v1618 = vld [vmem:[%s4 + $0x38] sm:$0xff]
  %v1619 = vld [vmem:[%s4 + $0x40] sm:$0xff]
  %v1620 = vld [vmem:[%s4 + $0x48] sm:$0xff]
  %v1621 = vld [vmem:[%s4 + $0x50] sm:$0xff]
  %v1622 = vld [vmem:[%s4 + $0x58] sm:$0xff]
  %v1623 = vld [vmem:[%s4 + $0x60] sm:$0xff]
  %v1624 = vld [vmem:[%s4 + $0x68] sm:$0xff]
  %v1625 = vld [vmem:[%s4 + $0x70] sm:$0xff]
  %v1626 = vld [vmem:[%s4 + $0x78] sm:$0xff]
  %v1627 = vld [vmem:[%s4 + $0x80] sm:$0xff]
  %v1628 = vld [vmem:[%s4 + $0x88] sm:$0xff]
  %v1629 = vld [vmem:[%s4 + $0x90] sm:$0xff]
  %v1630 = vld [vmem:[%s4 + $0x98] sm:$0xff]
  %v1631 = vld [vmem:[%s4 + $0xa0] sm:$0xff]
  %v1632 = vld [vmem:[%s4 + $0xa8] sm:$0xff]
  %v1633 = vld [vmem:[%s4 + $0xb0] sm:$0xff]
  %v1634 = vld [vmem:[%s4 + $0xb8] sm:$0xff]
  %v1635 = vld [vmem:[%s4 + $0xc0] sm:$0xff]
  %v1636 = vld [vmem:[%s4 + $0xc8] sm:$0xff]
  %v1637 = vld [vmem:[%s4 + $0xd0] sm:$0xff]
  %v1638 = vld [vmem:[%s4 + $0xd8] sm:$0xff]
  %v1639 = vld [vmem:[%s4 + $0xe0] sm:$0xff]
  %v1640 = vld [vmem:[%s4 + $0xe8] sm:$0xff]
  %v1641 = vld [vmem:[%s4 + $0xf0] sm:$0xff]
  %v1642 = vld [vmem:[%s4 + $0xf8] sm:$0xff]
  %v1643 = vld [vmem:[%s4 + $0x100] sm:$0xff]
  %v1644 = vld [vmem:[%s4 + $0x108] sm:$0xff]
  %v1645 = vld [vmem:[%s4 + $0x110] sm:$0xff]
  %v1646 = vld [vmem:[%s4 + $0x118] sm:$0xff]
  %v1647 = vld [vmem:[%s4 + $0x120] sm:$0xff]
  %v1648 = vld [vmem:[%s4 + $0x128] sm:$0xff]
  %v1649 = vld [vmem:[%s4 + $0x130] sm:$0xff]
  %v1650 = vld [vmem:[%s4 + $0x138] sm:$0xff]
  %v1651 = vld [vmem:[%s4 + $0x140] sm:$0xff]
  %v1652 = vld [vmem:[%s4 + $0x148] sm:$0xff]
  %v1653 = vld [vmem:[%s4 + $0x150] sm:$0xff]
  %v1654 = vld [vmem:[%s4 + $0x158] sm:$0xff]
  %v1655 = vld [vmem:[%s4 + $0x160] sm:$0xff]
  %v1656 = vld [vmem:[%s4 + $0x168] sm:$0xff]
  %v1657 = vld [vmem:[%s4 + $0x170] sm:$0xff]
  %v1658 = vld [vmem:[%s4 + $0x178] sm:$0xff]
  %v1659 = vld [vmem:[%s4 + $0x180] sm:$0xff]
  %v1660 = vld [vmem:[%s4 + $0x188] sm:$0xff]
  %v1661 = vld [vmem:[%s4 + $0x190] sm:$0xff]
  %v1662 = vld [vmem:[%s4 + $0x198] sm:$0xff]
  %v1663 = vld [vmem:[%s4 + $0x1a0] sm:$0xff]
  %v1664 = vld [vmem:[%s4 + $0x1a8] sm:$0xff]
  %v1665 = vld [vmem:[%s4 + $0x1b0] sm:$0xff]
  %v1666 = vld [vmem:[%s4 + $0x1b8] sm:$0xff]
  %v1667 = vld [vmem:[%s4 + $0x1c0] sm:$0xff]
  %v1668 = vld [vmem:[%s4 + $0x1c8] sm:$0xff]
  %v1669 = vld [vmem:[%s4 + $0x1d0] sm:$0xff]
  %v1670 = vld [vmem:[%s4 + $0x1d8] sm:$0xff]
  %v1671 = vld [vmem:[%s4 + $0x1e0] sm:$0xff]
  %v1672 = vld [vmem:[%s4 + $0x1e8] sm:$0xff]
  %v1673 = vld [vmem:[%s4 + $0x1f0] sm:$0xff]
  %v1674 = vld [vmem:[%s4 + $0x1f8] sm:$0xff]
  %v1675 = vld [vmem:[%s4 + $0x200] sm:$0xff]
  %v1676 = vld [vmem:[%s4 + $0x208] sm:$0xff]
  %v1677 = vld [vmem:[%s4 + $0x210] sm:$0xff]
  %v1678 = vld [vmem:[%s4 + $0x218] sm:$0xff]
  %v1679 = vld [vmem:[%s4 + $0x220] sm:$0xff]
  %v1680 = vld [vmem:[%s4 + $0x228] sm:$0xff]
  %v1681 = vld [vmem:[%s4 + $0x230] sm:$0xff]
  %v1682 = vld [vmem:[%s4 + $0x238] sm:$0xff]
  %v1683 = vld [vmem:[%s4 + $0x240] sm:$0xff]
  %v1684 = vld [vmem:[%s4 + $0x248] sm:$0xff]
  %v1685 = vld [vmem:[%s4 + $0x250] sm:$0xff]
  %v1686 = vld [vmem:[%s4 + $0x258] sm:$0xff]
  %v1687 = vld [vmem:[%s4 + $0x260] sm:$0xff]
  %v1688 = vld [vmem:[%s4 + $0x268] sm:$0xff]
  %v1689 = vld [vmem:[%s4 + $0x270] sm:$0xff]
  %v1690 = vld [vmem:[%s4 + $0x278] sm:$0xff]
  %v1691 = vld [vmem:[%s4 + $0x280] sm:$0xff]
  %v1692 = vld [vmem:[%s4 + $0x288] sm:$0xff]
  %v1693 = vld [vmem:[%s4 + $0x290] sm:$0xff]
  %v1694 = vld [vmem:[%s4 + $0x298] sm:$0xff]
  %v1695 = vld [vmem:[%s4 + $0x2a0] sm:$0xff]
  %v1696 = vld [vmem:[%s4 + $0x2a8] sm:$0xff]
  %v1697 = vld [vmem:[%s4 + $0x2b0] sm:$0xff]
  %v1698 = vld [vmem:[%s4 + $0x2b8] sm:$0xff]
  %v1699 = vld [vmem:[%s4 + $0x2c0] sm:$0xff]
  %v1700 = vld [vmem:[%s4 + $0x2c8] sm:$0xff]
  %v1701 = vld [vmem:[%s4 + $0x2d0] sm:$0xff]
  %v1702 = vld [vmem:[%s4 + $0x2d8] sm:$0xff]
  %v1703 = vld [vmem:[%s4 + $0x2e0] sm:$0xff]
  %v1704 = vld [vmem:[%s4 + $0x2e8] sm:$0xff]
  %v1705 = vld [vmem:[%s4 + $0x2f0] sm:$0xff]
  %v1706 = vld [vmem:[%s4 + $0x2f8] sm:$0xff]
  %v1707 = vld [vmem:[%s4 + $0x300] sm:$0xff]
  %v1708 = vld [vmem:[%s4 + $0x308] sm:$0xff]
  %v1709 = vld [vmem:[%s4 + $0x310] sm:$0xff]
  %v1710 = vld [vmem:[%s4 + $0x318] sm:$0xff]
  %v1711 = vld [vmem:[%s4 + $0x320] sm:$0xff]
  %v1712 = vld [vmem:[%s4 + $0x328] sm:$0xff]
  %v1713 = vld [vmem:[%s4 + $0x330] sm:$0xff]
  %v1714 = vld [vmem:[%s4 + $0x338] sm:$0xff]
  %v1715 = vld [vmem:[%s4 + $0x340] sm:$0xff]
  %v1716 = vld [vmem:[%s4 + $0x348] sm:$0xff]
  %v1717 = vld [vmem:[%s4 + $0x350] sm:$0xff]
  %v1718 = vld [vmem:[%s4 + $0x358] sm:$0xff]
  %v1719 = vld [vmem:[%s4 + $0x360] sm:$0xff]
  %v1720 = vld [vmem:[%s4 + $0x368] sm:$0xff]
  %v1721 = vld [vmem:[%s4 + $0x370] sm:$0xff]
  %v1722 = vld [vmem:[%s4 + $0x378] sm:$0xff]
  %v1723 = vld [vmem:[%s4 + $0x380] sm:$0xff]
  %v1724 = vld [vmem:[%s4 + $0x388] sm:$0xff]
  %v1725 = vld [vmem:[%s4 + $0x390] sm:$0xff]
  %v1726 = vld [vmem:[%s4 + $0x398] sm:$0xff]
  %v1727 = vld [vmem:[%s4 + $0x3a0] sm:$0xff]
  %v1728 = vld [vmem:[%s4 + $0x3a8] sm:$0xff]
  %v1729 = vld [vmem:[%s4 + $0x3b0] sm:$0xff]
  %v1730 = vld [vmem:[%s4 + $0x3b8] sm:$0xff]
  %v1731 = vld [vmem:[%s4 + $0x3c0] sm:$0xff]
  %v1732 = vld [vmem:[%s4 + $0x3c8] sm:$0xff]
  %v1733 = vld [vmem:[%s4 + $0x3d0] sm:$0xff]
  %v1734 = vld [vmem:[%s4 + $0x3d8] sm:$0xff]
  %v1735 = vld [vmem:[%s4 + $0x3e0] sm:$0xff]
  %v1736 = vld [vmem:[%s4 + $0x3e8] sm:$0xff]
  %v1737 = vld [vmem:[%s4 + $0x3f0] sm:$0xff]
  %v1738 = vld [vmem:[%s4 + $0x3f8] sm:$0xff]
  %v1739 = vld [vmem:[%s4 + $0x400] sm:$0xff]
  %v1740 = vld [vmem:[%s4 + $0x408] sm:$0xff]
  %v1741 = vld [vmem:[%s4 + $0x410] sm:$0xff]
  %v1742 = vld [vmem:[%s4 + $0x418] sm:$0xff]
  %v1743 = vld [vmem:[%s4 + $0x420] sm:$0xff]
  %v1744 = vld [vmem:[%s4 + $0x428] sm:$0xff]
  %v1745 = vld [vmem:[%s4 + $0x430] sm:$0xff]
  %v1746 = vld [vmem:[%s4 + $0x438] sm:$0xff]
  %v1747 = vld [vmem:[%s4 + $0x440] sm:$0xff]
  %v1748 = vld [vmem:[%s4 + $0x448] sm:$0xff]
  %v1749 = vld [vmem:[%s4 + $0x450] sm:$0xff]
  %v1750 = vld [vmem:[%s4 + $0x458] sm:$0xff]
  %v1751 = vld [vmem:[%s4 + $0x460] sm:$0xff]
  %v1752 = vld [vmem:[%s4 + $0x468] sm:$0xff]
  %v1753 = vld [vmem:[%s4 + $0x470] sm:$0xff]
  %v1754 = vld [vmem:[%s4 + $0x478] sm:$0xff]
  %v1755 = vld [vmem:[%s4 + $0x480] sm:$0xff]
  %v1756 = vld [vmem:[%s4 + $0x488] sm:$0xff]
  %v1757 = vld [vmem:[%s4 + $0x490] sm:$0xff]
  %v1758 = vld [vmem:[%s4 + $0x498] sm:$0xff]
  %v1759 = vld [vmem:[%s4 + $0x4a0] sm:$0xff]
  %v1760 = vld [vmem:[%s4 + $0x4a8] sm:$0xff]
  %v1761 = vld [vmem:[%s4 + $0x4b0] sm:$0xff]
  %v1762 = vld [vmem:[%s4 + $0x4b8] sm:$0xff]
  %v1763 = vld [vmem:[%s4 + $0x4c0] sm:$0xff]
  %v1764 = vld [vmem:[%s4 + $0x4c8] sm:$0xff]
  %v1765 = vld [vmem:[%s4 + $0x4d0] sm:$0xff]
  %v1766 = vld [vmem:[%s4 + $0x4d8] sm:$0xff]
  %v1767 = vld [vmem:[%s4 + $0x4e0] sm:$0xff]
  %v1768 = vld [vmem:[%s4 + $0x4e8] sm:$0xff]
  %v1769 = vld [vmem:[%s4 + $0x4f0] sm:$0xff]
  %v1770 = vld [vmem:[%s4 + $0x4f8] sm:$0xff]
  %v1771 = vld [vmem:[%s4 + $0x500] sm:$0xff]
  %v1772 = vld [vmem:[%s4 + $0x508] sm:$0xff]
  %v1773 = vld [vmem:[%s4 + $0x510] sm:$0xff]
  %v1774 = vld [vmem:[%s4 + $0x518] sm:$0xff]
  %v1775 = vld [vmem:[%s4 + $0x520] sm:$0xff]
  %v1776 = vld [vmem:[%s4 + $0x528] sm:$0xff]
  %v1777 = vld [vmem:[%s4 + $0x530] sm:$0xff]
  %v1778 = vld [vmem:[%s4 + $0x538] sm:$0xff]
  %v1779 = vld [vmem:[%s4 + $0x540] sm:$0xff]
  %v1780 = vld [vmem:[%s4 + $0x548] sm:$0xff]
  %v1781 = vld [vmem:[%s4 + $0x550] sm:$0xff]
  %v1782 = vld [vmem:[%s4 + $0x558] sm:$0xff]
  %v1783 = vld [vmem:[%s4 + $0x560] sm:$0xff]
  %v1784 = vld [vmem:[%s4 + $0x568] sm:$0xff]
  %v1785 = vld [vmem:[%s4 + $0x570] sm:$0xff]
  %v1786 = vld [vmem:[%s4 + $0x578] sm:$0xff]
  %v1787 = vld [vmem:[%s4 + $0x580] sm:$0xff]
  %v1788 = vld [vmem:[%s4 + $0x588] sm:$0xff]
  %v1789 = vld [vmem:[%s4 + $0x590] sm:$0xff]
  %v1790 = vld [vmem:[%s4 + $0x598] sm:$0xff]
  %v1791 = vld [vmem:[%s4 + $0x5a0] sm:$0xff]
  %v1792 = vld [vmem:[%s4 + $0x5a8] sm:$0xff]
  %v1793 = vld [vmem:[%s4 + $0x5b0] sm:$0xff]
  %v1794 = vld [vmem:[%s4 + $0x5b8] sm:$0xff]
  %v1795 = vld [vmem:[%s4 + $0x5c0] sm:$0xff]
  %v1796 = vld [vmem:[%s4 + $0x5c8] sm:$0xff]
  %v1797 = vld [vmem:[%s4 + $0x5d0] sm:$0xff]
  %v1798 = vld [vmem:[%s4 + $0x5d8] sm:$0xff]
  %v1799 = vld [vmem:[%s4 + $0x5e0] sm:$0xff]
  %v1800 = vld [vmem:[%s4 + $0x5e8] sm:$0xff]
  %v1801 = vld [vmem:[%s4 + $0x5f0] sm:$0xff]
  %v1802 = vld [vmem:[%s4 + $0x5f8] sm:$0xff]
  %v1803 = vld [vmem:[%s4 + $0x600] sm:$0xff]
  %v1804 = vld [vmem:[%s4 + $0x608] sm:$0xff]
  %v1805 = vld [vmem:[%s4 + $0x610] sm:$0xff]
  %v1806 = vld [vmem:[%s4 + $0x618] sm:$0xff]
  %v1807 = vld [vmem:[%s4 + $0x620] sm:$0xff]
  %v1808 = vld [vmem:[%s4 + $0x628] sm:$0xff]
  %v1809 = vld [vmem:[%s4 + $0x630] sm:$0xff]
  %v1810 = vld [vmem:[%s4 + $0x638] sm:$0xff]
  %v1811 = vld [vmem:[%s4 + $0x640] sm:$0xff]
  %v1812 = vld [vmem:[%s4 + $0x648] sm:$0xff]
  %v1813 = vld [vmem:[%s4 + $0x650] sm:$0xff]
  %v1814 = vld [vmem:[%s4 + $0x658] sm:$0xff]
  %v1815 = vld [vmem:[%s4 + $0x660] sm:$0xff]
  %v1816 = vld [vmem:[%s4 + $0x668] sm:$0xff]
  %v1817 = vld [vmem:[%s4 + $0x670] sm:$0xff]
  %v1818 = vld [vmem:[%s4 + $0x678] sm:$0xff]
  %v1819 = vld [vmem:[%s4 + $0x680] sm:$0xff]
  %v1820 = vld [vmem:[%s4 + $0x688] sm:$0xff]
  %v1821 = vld [vmem:[%s4 + $0x690] sm:$0xff]
  %v1822 = vld [vmem:[%s4 + $0x698] sm:$0xff]
  %v1823 = vld [vmem:[%s4 + $0x6a0] sm:$0xff]
  %v1824 = vld [vmem:[%s4 + $0x6a8] sm:$0xff]
  %v1825 = vld [vmem:[%s4 + $0x6b0] sm:$0xff]
  %v1826 = vld [vmem:[%s4 + $0x6b8] sm:$0xff]
  %v1827 = vld [vmem:[%s4 + $0x6c0] sm:$0xff]
  %v1828 = vld [vmem:[%s4 + $0x6c8] sm:$0xff]
  %v1829 = vld [vmem:[%s4 + $0x6d0] sm:$0xff]
  %v1830 = vld [vmem:[%s4 + $0x6d8] sm:$0xff]
  %v1831 = vld [vmem:[%s4 + $0x6e0] sm:$0xff]
  %v1832 = vld [vmem:[%s4 + $0x6e8] sm:$0xff]
  %v1833 = vld [vmem:[%s4 + $0x6f0] sm:$0xff]
  %v1834 = vld [vmem:[%s4 + $0x6f8] sm:$0xff]
  %v1835 = vld [vmem:[%s4 + $0x700] sm:$0xff]
  %v1836 = vld [vmem:[%s4 + $0x708] sm:$0xff]
  %v1837 = vld [vmem:[%s4 + $0x710] sm:$0xff]
  %v1838 = vld [vmem:[%s4 + $0x718] sm:$0xff]
  %v1839 = vld [vmem:[%s4 + $0x720] sm:$0xff]
  %v1840 = vld [vmem:[%s4 + $0x728] sm:$0xff]
  %v1841 = vld [vmem:[%s4 + $0x730] sm:$0xff]
  %v1842 = vld [vmem:[%s4 + $0x738] sm:$0xff]
  %v1843 = vld [vmem:[%s4 + $0x740] sm:$0xff]
  %v1844 = vld [vmem:[%s4 + $0x748] sm:$0xff]
  %v1845 = vld [vmem:[%s4 + $0x750] sm:$0xff]
  %v1846 = vld [vmem:[%s4 + $0x758] sm:$0xff]
  %v1847 = vld [vmem:[%s4 + $0x760] sm:$0xff]
  %v1848 = vld [vmem:[%s4 + $0x768] sm:$0xff]
  %v1849 = vld [vmem:[%s4 + $0x770] sm:$0xff]
  %v1850 = vld [vmem:[%s4 + $0x778] sm:$0xff]
  %v1851 = vld [vmem:[%s4 + $0x780] sm:$0xff]
  %v1852 = vld [vmem:[%s4 + $0x788] sm:$0xff]
  %v1853 = vld [vmem:[%s4 + $0x790] sm:$0xff]
  %v1854 = vld [vmem:[%s4 + $0x798] sm:$0xff]
  %v1855 = vld [vmem:[%s4 + $0x7a0] sm:$0xff]
  %v1856 = vld [vmem:[%s4 + $0x7a8] sm:$0xff]
  %v1857 = vld [vmem:[%s4 + $0x7b0] sm:$0xff]
  %v1858 = vld [vmem:[%s4 + $0x7b8] sm:$0xff]
  %v1859 = vld [vmem:[%s4 + $0x7c0] sm:$0xff]
  %v1860 = vld [vmem:[%s4 + $0x7c8] sm:$0xff]
  %v1861 = vld [vmem:[%s4 + $0x7d0] sm:$0xff]
  %v1862 = vld [vmem:[%s4 + $0x7d8] sm:$0xff]
  %v1863 = vld [vmem:[%s4 + $0x7e0] sm:$0xff]
  %v1864 = vld [vmem:[%s4 + $0x7e8] sm:$0xff]
  %v1865 = vld [vmem:[%s4 + $0x7f0] sm:$0xff]
  %v1866 = vld [vmem:[%s4 + $0x7f8] sm:$0xff]
  %1867 = vmatprep.subr.mxu0 %v1612
  %1868 = vmatpush1.msra.mxu0 %v1611
  %1869 = vmatprep.subr.mxu0 %v1620
  %1870 = vmatpush1.msra.mxu0 %v1619
  %1871 = vmatprep.subr.mxu0 %v1628
  %1872 = vmatpush1.msra.mxu0 %v1627
  %1873 = vmatprep.subr.mxu0 %v1636
  %1874 = vmatpush1.msra.mxu0 %v1635
  %1875 = vmatprep.subr.mxu0 %v1644
  %1876 = vmatpush1.msra.mxu0 %v1643
  %1877 = vmatprep.subr.mxu0 %v1652
  %1878 = vmatpush1.msra.mxu0 %v1651
  %1879 = vmatprep.subr.mxu0 %v1660
  %1880 = vmatpush1.msra.mxu0 %v1659
  %1881 = vmatprep.subr.mxu0 %v1668
  %1882 = vmatpush1.msra.mxu0 %v1667
  %1883 = vmatprep.subr.mxu0 %v1676
  %1884 = vmatpush1.msra.mxu0 %v1675
  %1885 = vmatprep.subr.mxu0 %v1684
  %1886 = vmatpush1.msra.mxu0 %v1683
  %1887 = vmatprep.subr.mxu0 %v1692
  %1888 = vmatpush1.msra.mxu0 %v1691
  %1889 = vmatprep.subr.mxu0 %v1700
  %1890 = vmatpush1.msra.mxu0 %v1699
  %1891 = vmatprep.subr.mxu0 %v1708
  %1892 = vmatpush1.msra.mxu0 %v1707
  %1893 = vmatprep.subr.mxu0 %v1716
  %1894 = vmatpush1.msra.mxu0 %v1715
  %1895 = vmatprep.subr.mxu0 %v1724
  %1896 = vmatpush1.msra.mxu0 %v1723
  %1897 = vmatprep.subr.mxu0 %v1732
  %1898 = vmatpush1.msra.mxu0 %v1731
  %1899 = vmatprep.subr.mxu0 %v1740
  %1900 = vmatpush1.msra.mxu0 %v1739
  %1901 = vmatprep.subr.mxu0 %v1748
  %1902 = vmatpush1.msra.mxu0 %v1747
  %1903 = vmatprep.subr.mxu0 %v1756
  %1904 = vmatpush1.msra.mxu0 %v1755
  %1905 = vmatprep.subr.mxu0 %v1764
  %1906 = vmatpush1.msra.mxu0 %v1763
  %1907 = vmatprep.subr.mxu0 %v1772
  %1908 = vmatpush1.msra.mxu0 %v1771
  %1909 = vmatprep.subr.mxu0 %v1780
  %1910 = vmatpush1.msra.mxu0 %v1779
  %1911 = vmatprep.subr.mxu0 %v1788
  %1912 = vmatpush1.msra.mxu0 %v1787
  %1913 = vmatprep.subr.mxu0 %v1796
  %1914 = vmatpush1.msra.mxu0 %v1795
  %1915 = vmatprep.subr.mxu0 %v1804
  %1916 = vmatpush1.msra.mxu0 %v1803
  %1917 = vmatprep.subr.mxu0 %v1812
  %1918 = vmatpush1.msra.mxu0 %v1811
  %1919 = vmatprep.subr.mxu0 %v1820
  %1920 = vmatpush1.msra.mxu0 %v1819
  %1921 = vmatprep.subr.mxu0 %v1828
  %1922 = vmatpush1.msra.mxu0 %v1827
  %1923 = vmatprep.subr.mxu0 %v1836
  %1924 = vmatpush1.msra.mxu0 %v1835
  %1925 = vmatprep.subr.mxu0 %v1844
  %1926 = vmatpush1.msra.mxu0 %v1843
  %1927 = vmatprep.subr.mxu0 %v1852
  %1928 = vmatpush1.msra.mxu0 %v1851
  %1929 = vmatprep.subr.mxu0 %v1860
  %1930 = vmatpush1.msra.mxu0 %v1859
  %1931 = vmatprep.mubr.f32.mxu0 0.0
  %1932 = vmatmul.mubr.f32.gmra.mrb[0].mxu0 0.0
  %v1933 = vpop.f32.mrb[0].mxu0
  %v1934 = vadd.f32 0.0, %v1933
  %v1935 = vpop.f32.mrb[0].mxu0
  %v1936 = vadd.f32 0.0, %v1935
  %1937 = vdwg.mxu0
  %1938 = vmatprep.subr.mxu0 %v1614
  %1939 = vmatpush1.msra.mxu0 %v1613
  %1940 = vmatprep.subr.mxu0 %v1622
  %1941 = vmatpush1.msra.mxu0 %v1621
  %1942 = vmatprep.subr.mxu0 %v1630
  %1943 = vmatpush1.msra.mxu0 %v1629
  %1944 = vmatprep.subr.mxu0 %v1638
  %1945 = vmatpush1.msra.mxu0 %v1637
  %1946 = vmatprep.subr.mxu0 %v1646
  %1947 = vmatpush1.msra.mxu0 %v1645
  %1948 = vmatprep.subr.mxu0 %v1654
  %1949 = vmatpush1.msra.mxu0 %v1653
  %1950 = vmatprep.subr.mxu0 %v1662
  %1951 = vmatpush1.msra.mxu0 %v1661
  %1952 = vmatprep.subr.mxu0 %v1670
  %1953 = vmatpush1.msra.mxu0 %v1669
  %1954 = vmatprep.subr.mxu0 %v1678
  %1955 = vmatpush1.msra.mxu0 %v1677
  %1956 = vmatprep.subr.mxu0 %v1686
  %1957 = vmatpush1.msra.mxu0 %v1685
  %1958 = vmatprep.subr.mxu0 %v1694
  %1959 = vmatpush1.msra.mxu0 %v1693
  %1960 = vmatprep.subr.mxu0 %v1702
  %1961 = vmatpush1.msra.mxu0 %v1701
  %1962 = vmatprep.subr.mxu0 %v1710
  %1963 = vmatpush1.msra.mxu0 %v1709
  %1964 = vmatprep.subr.mxu0 %v1718
  %1965 = vmatpush1.msra.mxu0 %v1717
  %1966 = vmatprep.subr.mxu0 %v1726
  %1967 = vmatpush1.msra.mxu0 %v1725
  %1968 = vmatprep.subr.mxu0 %v1734
  %1969 = vmatpush1.msra.mxu0 %v1733
  %1970 = vmatprep.subr.mxu0 %v1742
  %1971 = vmatpush1.msra.mxu0 %v1741
  %1972 = vmatprep.subr.mxu0 %v1750
  %1973 = vmatpush1.msra.mxu0 %v1749
  %1974 = vmatprep.subr.mxu0 %v1758
  %1975 = vmatpush1.msra.mxu0 %v1757
  %1976 = vmatprep.subr.mxu0 %v1766
  %1977 = vmatpush1.msra.mxu0 %v1765
  %1978 = vmatprep.subr.mxu0 %v1774
  %1979 = vmatpush1.msra.mxu0 %v1773
  %1980 = vmatprep.subr.mxu0 %v1782
  %1981 = vmatpush1.msra.mxu0 %v1781
  %1982 = vmatprep.subr.mxu0 %v1790
  %1983 = vmatpush1.msra.mxu0 %v1789
  %1984 = vmatprep.subr.mxu0 %v1798
  %1985 = vmatpush1.msra.mxu0 %v1797
  %1986 = vmatprep.subr.mxu0 %v1806
  %1987 = vmatpush1.msra.mxu0 %v1805
  %1988 = vmatprep.subr.mxu0 %v1814
  %1989 = vmatpush1.msra.mxu0 %v1813
  %1990 = vmatprep.subr.mxu0 %v1822
  %1991 = vmatpush1.msra.mxu0 %v1821
  %1992 = vmatprep.subr.mxu0 %v1830
  %1993 = vmatpush1.msra.mxu0 %v1829
  %1994 = vmatprep.subr.mxu0 %v1838
  %1995 = vmatpush1.msra.mxu0 %v1837
  %1996 = vmatprep.subr.mxu0 %v1846
  %1997 = vmatpush1.msra.mxu0 %v1845
  %1998 = vmatprep.subr.mxu0 %v1854
  %1999 = vmatpush1.msra.mxu0 %v1853
  %2000 = vmatprep.subr.mxu0 %v1862
  %2001 = vmatpush1.msra.mxu0 %v1861
  %2002 = vmatprep.mubr.f32.mxu0 0.0
  %2003 = vmatmul.mubr.f32.gmra.mrb[0].mxu0 0.0
  %v2004 = vpop.f32.mrb[0].mxu0
  %v2005 = vadd.f32 0.0, %v2004
  %v2006 = vpop.f32.mrb[0].mxu0
  %v2007 = vadd.f32 0.0, %v2006
  %2008 = vdwg.mxu0
  %2009 = vmatprep.subr.mxu0 %v1616
  %2010 = vmatpush1.msra.mxu0 %v1615
  %2011 = vmatprep.subr.mxu0 %v1624
  %2012 = vmatpush1.msra.mxu0 %v1623
  %2013 = vmatprep.subr.mxu0 %v1632
  %2014 = vmatpush1.msra.mxu0 %v1631
  %2015 = vmatprep.subr.mxu0 %v1640
  %2016 = vmatpush1.msra.mxu0 %v1639
  %2017 = vmatprep.subr.mxu0 %v1648
  %2018 = vmatpush1.msra.mxu0 %v1647
  %2019 = vmatprep.subr.mxu0 %v1656
  %2020 = vmatpush1.msra.mxu0 %v1655
  %2021 = vmatprep.subr.mxu0 %v1664
  %2022 = vmatpush1.msra.mxu0 %v1663
  %2023 = vmatprep.subr.mxu0 %v1672
  %2024 = vmatpush1.msra.mxu0 %v1671
  %2025 = vmatprep.subr.mxu0 %v1680
  %2026 = vmatpush1.msra.mxu0 %v1679
  %2027 = vmatprep.subr.mxu0 %v1688
  %2028 = vmatpush1.msra.mxu0 %v1687
  %2029 = vmatprep.subr.mxu0 %v1696
  %2030 = vmatpush1.msra.mxu0 %v1695
  %2031 = vmatprep.subr.mxu0 %v1704
  %2032 = vmatpush1.msra.mxu0 %v1703
  %2033 = vmatprep.subr.mxu0 %v1712
  %2034 = vmatpush1.msra.mxu0 %v1711
  %2035 = vmatprep.subr.mxu0 %v1720
  %2036 = vmatpush1.msra.mxu0 %v1719
  %2037 = vmatprep.subr.mxu0 %v1728
  %2038 = vmatpush1.msra.mxu0 %v1727
  %2039 = vmatprep.subr.mxu0 %v1736
  %2040 = vmatpush1.msra.mxu0 %v1735
  %2041 = vmatprep.subr.mxu0 %v1744
  %2042 = vmatpush1.msra.mxu0 %v1743
  %2043 = vmatprep.subr.mxu0 %v1752
  %2044 = vmatpush1.msra.mxu0 %v1751
  %2045 = vmatprep.subr.mxu0 %v1760
  %2046 = vmatpush1.msra.mxu0 %v1759
  %2047 = vmatprep.subr.mxu0 %v1768
  %2048 = vmatpush1.msra.mxu0 %v1767
  %2049 = vmatprep.subr.mxu0 %v1776
  %2050 = vmatpush1.msra.mxu0 %v1775
  %2051 = vmatprep.subr.mxu0 %v1784
  %2052 = vmatpush1.msra.mxu0 %v1783
  %2053 = vmatprep.subr.mxu0 %v1792
  %2054 = vmatpush1.msra.mxu0 %v1791
  %2055 = vmatprep.subr.mxu0 %v1800
  %2056 = vmatpush1.msra.mxu0 %v1799
  %2057 = vmatprep.subr.mxu0 %v1808
  %2058 = vmatpush1.msra.mxu0 %v1807
  %2059 = vmatprep.subr.mxu0 %v1816
  %2060 = vmatpush1.msra.mxu0 %v1815
  %2061 = vmatprep.subr.mxu0 %v1824
  %2062 = vmatpush1.msra.mxu0 %v1823
  %2063 = vmatprep.subr.mxu0 %v1832
  %2064 = vmatpush1.msra.mxu0 %v1831
  %2065 = vmatprep.subr.mxu0 %v1840
  %2066 = vmatpush1.msra.mxu0 %v1839
  %2067 = vmatprep.subr.mxu0 %v1848
  %2068 = vmatpush1.msra.mxu0 %v1847
  %2069 = vmatprep.subr.mxu0 %v1856
  %2070 = vmatpush1.msra.mxu0 %v1855
  %2071 = vmatprep.subr.mxu0 %v1864
  %2072 = vmatpush1.msra.mxu0 %v1863
  %2073 = vmatprep.mubr.f32.mxu0 0.0
  %2074 = vmatmul.mubr.f32.gmra.mrb[0].mxu0 0.0
  %v2075 = vpop.f32.mrb[0].mxu0
  %v2076 = vadd.f32 0.0, %v2075
  %v2077 = vpop.f32.mrb[0].mxu0
  %v2078 = vadd.f32 0.0, %v2077
  %2079 = vdwg.mxu0
  %2080 = vmatprep.subr.mxu0 %v1618
  %2081 = vmatpush1.msra.mxu0 %v1617
  %2082 = vmatprep.subr.mxu0 %v1626
  %2083 = vmatpush1.msra.mxu0 %v1625
  %2084 = vmatprep.subr.mxu0 %v1634
  %2085 = vmatpush1.msra.mxu0 %v1633
  %2086 = vmatprep.subr.mxu0 %v1642
  %2087 = vmatpush1.msra.mxu0 %v1641
  %2088 = vmatprep.subr.mxu0 %v1650
  %2089 = vmatpush1.msra.mxu0 %v1649
  %2090 = vmatprep.subr.mxu0 %v1658
  %2091 = vmatpush1.msra.mxu0 %v1657
  %2092 = vmatprep.subr.mxu0 %v1666
  %2093 = vmatpush1.msra.mxu0 %v1665
  %2094 = vmatprep.subr.mxu0 %v1674
  %2095 = vmatpush1.msra.mxu0 %v1673
  %2096 = vmatprep.subr.mxu0 %v1682
  %2097 = vmatpush1.msra.mxu0 %v1681
  %2098 = vmatprep.subr.mxu0 %v1690
  %2099 = vmatpush1.msra.mxu0 %v1689
  %2100 = vmatprep.subr.mxu0 %v1698
  %2101 = vmatpush1.msra.mxu0 %v1697
  %2102 = vmatprep.subr.mxu0 %v1706
  %2103 = vmatpush1.msra.mxu0 %v1705
  %2104 = vmatprep.subr.mxu0 %v1714
  %2105 = vmatpush1.msra.mxu0 %v1713
  %2106 = vmatprep.subr.mxu0 %v1722
  %2107 = vmatpush1.msra.mxu0 %v1721
  %2108 = vmatprep.subr.mxu0 %v1730
  %2109 = vmatpush1.msra.mxu0 %v1729
  %2110 = vmatprep.subr.mxu0 %v1738
  %2111 = vmatpush1.msra.mxu0 %v1737
  %2112 = vmatprep.subr.mxu0 %v1746
  %2113 = vmatpush1.msra.mxu0 %v1745
  %2114 = vmatprep.subr.mxu0 %v1754
  %2115 = vmatpush1.msra.mxu0 %v1753
  %2116 = vmatprep.subr.mxu0 %v1762
  %2117 = vmatpush1.msra.mxu0 %v1761
  %2118 = vmatprep.subr.mxu0 %v1770
  %2119 = vmatpush1.msra.mxu0 %v1769
  %2120 = vmatprep.subr.mxu0 %v1778
  %2121 = vmatpush1.msra.mxu0 %v1777
  %2122 = vmatprep.subr.mxu0 %v1786
  %2123 = vmatpush1.msra.mxu0 %v1785
  %2124 = vmatprep.subr.mxu0 %v1794
  %2125 = vmatpush1.msra.mxu0 %v1793
  %2126 = vmatprep.subr.mxu0 %v1802
  %2127 = vmatpush1.msra.mxu0 %v1801
  %2128 = vmatprep.subr.mxu0 %v1810
  %2129 = vmatpush1.msra.mxu0 %v1809
  %2130 = vmatprep.subr.mxu0 %v1818
  %2131 = vmatpush1.msra.mxu0 %v1817
  %2132 = vmatprep.subr.mxu0 %v1826
  %2133 = vmatpush1.msra.mxu0 %v1825
  %2134 = vmatprep.subr.mxu0 %v1834
  %2135 = vmatpush1.msra.mxu0 %v1833
  %2136 = vmatprep.subr.mxu0 %v1842
  %2137 = vmatpush1.msra.mxu0 %v1841
  %2138 = vmatprep.subr.mxu0 %v1850
  %2139 = vmatpush1.msra.mxu0 %v1849
  %2140 = vmatprep.subr.mxu0 %v1858
  %2141 = vmatpush1.msra.mxu0 %v1857
  %2142 = vmatprep.subr.mxu0 %v1866
  %2143 = vmatpush1.msra.mxu0 %v1865
  %2144 = vmatprep.mubr.f32.mxu0 0.0
  %2145 = vmatmul.mubr.f32.gmra.mrb[0].mxu0 0.0
  %v2146 = vpop.f32.mrb[0].mxu0
  %v2147 = vadd.f32 0.0, %v2146
  %v2148 = vpop.f32.mrb[0].mxu0
  %v2149 = vadd.f32 0.0, %v2148
  %2150 = vdwg.mxu0
  %v2159 = vcombine.low %v1934, %v1936
  %v2160 = vcombine.low %v2005, %v2007
  %v2162 = vunpack.c.l.s4 1983009808
  %v2163 = vunpack.c.0.s8 %v2162
  %v2164 = vlaneseq
  %v2165 = vshrl.u32 %v2164, 7
  %v2166 = vsub.s32 %v2163, %v2165
  %v2167 = vrot.slane %v2159, %v2166
  %v2169 = vunpack.c.l.s4 1983009808
  %v2170 = vunpack.c.0.s8 %v2169
  %v2171 = vlaneseq
  %v2172 = vshrl.u32 %v2171, 7
  %v2173 = vsub.s32 %v2170, %v2172
  %v2174 = vrot.slane %v2160, %v2173
  %v2175 = vcombine.low %v2167, %v2174
  %v2176 = vcombine.low %v2076, %v2078
  %v2177 = vcombine.low %v2147, %v2149
  %v2179 = vunpack.c.l.s4 1983009808
  %v2180 = vunpack.c.0.s8 %v2179
  %v2181 = vlaneseq
  %v2182 = vshrl.u32 %v2181, 7
  %v2183 = vsub.s32 %v2180, %v2182
  %v2184 = vrot.slane %v2176, %v2183
  %v2186 = vunpack.c.l.s4 1983009808
  %v2187 = vunpack.c.0.s8 %v2186
  %v2188 = vlaneseq
  %v2189 = vshrl.u32 %v2188, 7
  %v2190 = vsub.s32 %v2187, %v2189
  %v2191 = vrot.slane %v2177, %v2190
  %v2192 = vcombine.low %v2184, %v2191
  %v2195 = vadd.f32 %v1023, %v2175
  %v2196 = vadd.f32 %v1024, %v2192
  %v2197 = vxor.u32 %v1609, 2147483648
  %v2198 = vmul.f32 %v2197, 1.442695
  %v2199 = vpow.pop %v2198
  %v2200 = vadd.f32 %v2199, 1.0
  %v2201 = vrcp.pop %v2200
  %v2202 = vmul.f32 1.0, %v2201
  %v2204 = vrot.slane %v1609, 4
  %v2206 = vxor.u32 %v2204, 2147483648
  %v2207 = vmul.f32 %v2206, 1.442695
  %v2208 = vpow.pop %v2207
  %v2209 = vadd.f32 %v2208, 1.0
  %v2210 = vrcp.pop %v2209
  %v2211 = vmul.f32 1.0, %v2210
  %v2212 = vtanh.pop %v1610
  %v2214 = vrot.slane %v1610, 4
  %v2216 = vxor.u32 %v2214, 2147483648
  %v2217 = vmul.f32 %v2216, 1.442695
  %v2218 = vpow.pop %v2217
  %v2219 = vadd.f32 %v2218, 1.0
  %v2220 = vrcp.pop %v2219
  %v2221 = vmul.f32 1.0, %v2220
  %v2222 = vmul.f32 %v2211, 0.0
  %v2223 = vmul.f32 %v2202, %v2212
  %v2224 = vadd.f32 %v2222, %v2223
  %v2225 = vtanh.pop %v2224
  %v2226 = vmul.f32 %v2221, %v2225
  %v2227 = vxor.u32 %v2195, 2147483648
  %v2228 = vmul.f32 %v2227, 1.442695
  %v2229 = vpow.pop %v2228
  %v2230 = vadd.f32 %v2229, 1.0
  %v2231 = vrcp.pop %v2230
  %v2232 = vmul.f32 1.0, %v2231
  %v2234 = vrot.slane %v2195, 4
  %v2236 = vxor.u32 %v2234, 2147483648
  %v2237 = vmul.f32 %v2236, 1.442695
  %v2238 = vpow.pop %v2237
  %v2239 = vadd.f32 %v2238, 1.0
  %v2240 = vrcp.pop %v2239
  %v2241 = vmul.f32 1.0, %v2240
  %v2242 = vtanh.pop %v2196
  %v2244 = vrot.slane %v2196, 4
  %v2246 = vxor.u32 %v2244, 2147483648
  %v2247 = vmul.f32 %v2246, 1.442695
  %v2248 = vpow.pop %v2247
  %v2249 = vadd.f32 %v2248, 1.0
  %v2250 = vrcp.pop %v2249
  %v2251 = vmul.f32 1.0, %v2250
  %v2252 = vmul.f32 %v2241, 0.0
  %v2253 = vmul.f32 %v2232, %v2242
  %v2254 = vadd.f32 %v2252, %v2253
  %v2255 = vtanh.pop %v2254
  %v2256 = vmul.f32 %v2251, %v2255
  %v2259 = vunpack.c.l.s4 1983009808
  %v2260 = vunpack.c.0.s8 %v2259
  %v2261 = vlaneseq
  %v2262 = vshrl.u32 %v2261, 7
  %v2263 = vsub.s32 %v2260, %v2262
  %v2264 = vrot.slane %v2226, %v2263
  %v2265 = vcombine.high %v2264, %v2264
  %v2268 = vunpack.c.l.s4 1983009808
  %v2269 = vunpack.c.0.s8 %v2268
  %v2270 = vlaneseq
  %v2271 = vshrl.u32 %v2270, 7
  %v2272 = vsub.s32 %v2269, %v2271
  %v2273 = vrot.slane %v2256, %v2272
  %v2274 = vcombine.high %v2273, %v2273
  %v2275 = vcombine.low %v2264, %v2265
  %v2276 = vcombine.low %v2273, %v2274
  %v2278 = vunpack.c.l.s4 1983009808
  %v2279 = vunpack.c.0.s8 %v2278
  %v2280 = vlaneseq
  %v2281 = vshrl.u32 %v2280, 7
  %v2282 = vsub.s32 %v2279, %v2281
  %v2283 = vrot.slane %v2275, %v2282
  %v2285 = vunpack.c.l.s4 1983009808
  %v2286 = vunpack.c.0.s8 %v2285
  %v2287 = vlaneseq
  %v2288 = vshrl.u32 %v2287, 7
  %v2289 = vsub.s32 %v2286, %v2288
  %v2290 = vrot.slane %v2276, %v2289
  %v2291 = vcombine.low %v2283, %v2290
  %2293 = vst [vmem:[%s5] sm:$0xff] %v2291
  // Predicated region
  $region22: #{forward.14} parent=0 // pred_check
    _
  $region23: #{forward.14} parent=0 // pred_check_branch
    %2295 = sbr.rel (0) target = $region25
  $region24: #{forward.14} parent=0 // pred_region
    _
  $region25: #{forward.14} parent=0 // pred_fallthru
    _
  // Predicated region
  $region26: #{forward.14} parent=0 // pred_check
    _
  $region27: #{forward.14} parent=0 // pred_check_branch
    %2297 = sbr.rel (0) target = $region29
  $region28: #{forward.14} parent=0 // pred_region
    _
  $region29: #{forward.14} parent=0 // pred_fallthru
    _

// kernel: forward.15
$region0: #{forward.15}
  #allocation0 [shape = 'u32[]', space=smem, size = 0x4, offset = 0x4, fixed_abs, tag = 'smem constant byte address 0x4 - core index']
  #allocation1 [shape = 'u32[144,128]{1,0:T(1,128)}', space=vmem, size = 0x12000, scoped, tag = 'internal scratch']
  #allocation2 [shape = 'f32[2,512]{1,0:T(2,128)}', space=vmem, size = 0x1000, scoped, tag = 'scratch operand']
  %s0 = inlined_call_operand.vmem [shape: f32[2,512], index: 0, kind: input, shape index: {}]
  %s1 = inlined_call_operand.vmem [shape: f32[512,100], index: 1, kind: input, shape index: {}]
  %s2 = inlined_call_operand.vmem [shape: f32[1,100], index: 2, kind: input, shape index: {}]
  %s3 = inlined_call_operand.vmem [shape: f32[100,60], index: 3, kind: input, shape index: {}]
  %s4 = inlined_call_operand.vmem [shape: f32[1,60], index: 4, kind: input, shape index: {}]
  %s5 = inlined_call_operand.vmem [shape: f32[60,16], index: 5, kind: input, shape index: {}]
  %s6 = inlined_call_operand.vmem [shape: f32[1,16], index: 6, kind: input, shape index: {}]
  %s7 = inlined_call_operand.vmem [shape: f32[16,512], index: 7, kind: input, shape index: {}]
  %s8 = inlined_call_operand.vmem [shape: f32[1,512], index: 8, kind: input, shape index: {}]
  %s9 = inlined_call_operand.vmem [shape: f32[64,256], index: 9, kind: input, shape index: {}]
  %s10 = inlined_call_operand.vmem [shape: f32[64,256], index: 10, kind: input, shape index: {}]
  %s11 = inlined_call_operand.vmem [shape: f32[128,64], index: 11, kind: input, shape index: {}]
  %s12 = inlined_call_operand.vmem [shape: f32[1,64], index: 12, kind: input, shape index: {}]
  %s13 = inlined_call_operand.vmem [shape: f32[64,9], index: 13, kind: input, shape index: {}]
  %s14 = inlined_call_operand.vmem [shape: f32[1,9], index: 14, kind: input, shape index: {}]
  %s15 = inlined_call_operand.hbm [shape: f32[1,9], index: 15, kind: output, shape index: {}]
  %s16 = sld [smem:[#allocation0]]
  $region70: #{forward.15} parent=0
    _
  %s18 = ssub.s32 1, %s16
  %s19 = scalar_select 0, %s18, %s16
  $region1: #{forward.15} parent=0
    #allocation3 [shape = 'u8[512]{0}', space=vmem, size = 0x400, scoped, tag = 'output window, operand 0, single buffered']
    #allocation4 [shape = 's32[1]{0}', space=sflag, size = 0x4, scoped, tag = 'scoped memory for forward.15']
    %20 = vsyncpa [#allocation4], 0
    // Predicated region
    $region2: #{forward.15} parent=1 // pred_check
      _
    $region3: #{forward.15} parent=1 // pred_check_branch
      %22 = sbr.rel (0) target = $region5
    $region4: #{forward.15} parent=1 // pred_region
      _
    $region5: #{forward.15} parent=1 // pred_fallthru
      _
    // Predicated region
    $region6: #{forward.15} parent=1 // pred_check
      _
    $region7: #{forward.15} parent=1 // pred_check_branch
      %24 = sbr.rel (0) target = $region9
    $region8: #{forward.15} parent=1 // pred_region
      _
    $region9: #{forward.15} parent=1 // pred_fallthru
      _
    // Predicated region
    $region10: #{forward.15} parent=1 // pred_check
      _
    $region11: #{forward.15} parent=1 // pred_check_branch
      %26 = sbr.rel (0) target = $region13
    $region12: #{forward.15} parent=1 // pred_region
      _
    $region13: #{forward.15} parent=1 // pred_fallthru
      _
    // Predicated region
    $region14: #{forward.15} parent=1 // pred_check
      _
    $region15: #{forward.15} parent=1 // pred_check_branch
      %28 = sbr.rel (0) target = $region17
    $region16: #{forward.15} parent=1 // pred_region
      _
    $region17: #{forward.15} parent=1 // pred_fallthru
      _
    // Predicated region
    $region18: #{forward.15} parent=1 // pred_check
      _
    $region19: #{forward.15} parent=1 // pred_check_branch
      %30 = sbr.rel (0) target = $region21
    $region20: #{forward.15} parent=1 // pred_region
      _
    $region21: #{forward.15} parent=1 // pred_fallthru
      _
    // Predicated region
    $region22: #{forward.15} parent=1 // pred_check
      _
    $region23: #{forward.15} parent=1 // pred_check_branch
      %32 = sbr.rel (0) target = $region25
    $region24: #{forward.15} parent=1 // pred_region
      _
    $region25: #{forward.15} parent=1 // pred_fallthru
      _
    // Predicated region
    $region26: #{forward.15} parent=1 // pred_check
      _
    $region27: #{forward.15} parent=1 // pred_check_branch
      %34 = sbr.rel (0) target = $region29
    $region28: #{forward.15} parent=1 // pred_region
      _
    $region29: #{forward.15} parent=1 // pred_fallthru
      _
    // Predicated region
    $region30: #{forward.15} parent=1 // pred_check
      _
    $region31: #{forward.15} parent=1 // pred_check_branch
      %36 = sbr.rel (0) target = $region33
    $region32: #{forward.15} parent=1 // pred_region
      _
    $region33: #{forward.15} parent=1 // pred_fallthru
      _
    // Predicated region
    $region34: #{forward.15} parent=1 // pred_check
      _
    $region35: #{forward.15} parent=1 // pred_check_branch
      %38 = sbr.rel (0) target = $region37
    $region36: #{forward.15} parent=1 // pred_region
      _
    $region37: #{forward.15} parent=1 // pred_fallthru
      _
    // Predicated region
    $region38: #{forward.15} parent=1 // pred_check
      _
    $region39: #{forward.15} parent=1 // pred_check_branch
      %40 = sbr.rel (0) target = $region41
    $region40: #{forward.15} parent=1 // pred_region
      _
    $region41: #{forward.15} parent=1 // pred_fallthru
      _
    // Predicated region
    $region42: #{forward.15} parent=1 // pred_check
      _
    $region43: #{forward.15} parent=1 // pred_check_branch
      %42 = sbr.rel (0) target = $region45
    $region44: #{forward.15} parent=1 // pred_region
      _
    $region45: #{forward.15} parent=1 // pred_fallthru
      _
    // Predicated region
    $region46: #{forward.15} parent=1 // pred_check
      _
    $region47: #{forward.15} parent=1 // pred_check_branch
      %44 = sbr.rel (0) target = $region49
    $region48: #{forward.15} parent=1 // pred_region
      _
    $region49: #{forward.15} parent=1 // pred_fallthru
      _
    // Predicated region
    $region50: #{forward.15} parent=1 // pred_check
      _
    $region51: #{forward.15} parent=1 // pred_check_branch
      %46 = sbr.rel (0) target = $region53
    $region52: #{forward.15} parent=1 // pred_region
      _
    $region53: #{forward.15} parent=1 // pred_fallthru
      _
    // Predicated region
    $region54: #{forward.15} parent=1 // pred_check
      _
    $region55: #{forward.15} parent=1 // pred_check_branch
      %48 = sbr.rel (0) target = $region57
    $region56: #{forward.15} parent=1 // pred_region
      _
    $region57: #{forward.15} parent=1 // pred_fallthru
      _
    // Predicated region
    $region58: #{forward.15} parent=1 // pred_check
      _
    $region59: #{forward.15} parent=1 // pred_check_branch
      %50 = sbr.rel (0) target = $region61
    $region60: #{forward.15} parent=1 // pred_region
      _
    $region61: #{forward.15} parent=1 // pred_fallthru
      _
    %v51 = vld [vmem:[%s0] sm:$0xff]
    %v52 = vld [vmem:[%s1] sm:$0xff]
    %v53 = vld [vmem:[%s1 + $0x8] sm:$0xff]
    %v54 = vld [vmem:[%s1 + $0x10] sm:$0xff]
    %v55 = vld [vmem:[%s1 + $0x18] sm:$0xff]
    %v56 = vld [vmem:[%s1 + $0x20] sm:$0xff]
    %v57 = vld [vmem:[%s1 + $0x28] sm:$0xff]
    %v58 = vld [vmem:[%s1 + $0x30] sm:$0xff]
    %v59 = vld [vmem:[%s1 + $0x38] sm:$0xff]
    %v60 = vld [vmem:[%s1 + $0x40] sm:$0xff]
    %v61 = vld [vmem:[%s1 + $0x48] sm:$0xff]
    %v62 = vld [vmem:[%s1 + $0x50] sm:$0xff]
    %v63 = vld [vmem:[%s1 + $0x58] sm:$0xff]
    %v64 = vld [vmem:[%s1 + $0x60] sm:$0xff]
    %v65 = vld [vmem:[%s1 + $0x68] sm:$0xff]
    %v66 = vld [vmem:[%s1 + $0x70] sm:$0xff]
    %v67 = vld [vmem:[%s1 + $0x78] sm:$0xff]
    %v68 = vld [vmem:[%s1 + $0x80] sm:$0xff]
    %v69 = vld [vmem:[%s1 + $0x88] sm:$0xff]
    %v70 = vld [vmem:[%s1 + $0x90] sm:$0xff]
    %v71 = vld [vmem:[%s1 + $0x98] sm:$0xff]
    %v72 = vld [vmem:[%s1 + $0xa0] sm:$0xff]
    %v73 = vld [vmem:[%s1 + $0xa8] sm:$0xff]
    %v74 = vld [vmem:[%s1 + $0xb0] sm:$0xff]
    %v75 = vld [vmem:[%s1 + $0xb8] sm:$0xff]
    %v76 = vld [vmem:[%s1 + $0xc0] sm:$0xff]
    %v77 = vld [vmem:[%s1 + $0xc8] sm:$0xff]
    %v78 = vld [vmem:[%s1 + $0xd0] sm:$0xff]
    %v79 = vld [vmem:[%s1 + $0xd8] sm:$0xff]
    %v80 = vld [vmem:[%s1 + $0xe0] sm:$0xff]
    %v81 = vld [vmem:[%s1 + $0xe8] sm:$0xff]
    %v82 = vld [vmem:[%s1 + $0xf0] sm:$0xff]
    %v83 = vld [vmem:[%s1 + $0xf8] sm:$0xff]
    %v84 = vld [vmem:[%s1 + $0x100] sm:$0xff]
    %v85 = vld [vmem:[%s1 + $0x108] sm:$0xff]
    %v86 = vld [vmem:[%s1 + $0x110] sm:$0xff]
    %v87 = vld [vmem:[%s1 + $0x118] sm:$0xff]
    %v88 = vld [vmem:[%s1 + $0x120] sm:$0xff]
    %v89 = vld [vmem:[%s1 + $0x128] sm:$0xff]
    %v90 = vld [vmem:[%s1 + $0x130] sm:$0xff]
    %v91 = vld [vmem:[%s1 + $0x138] sm:$0xff]
    %v92 = vld [vmem:[%s1 + $0x140] sm:$0xff]
    %v93 = vld [vmem:[%s1 + $0x148] sm:$0xff]
    %v94 = vld [vmem:[%s1 + $0x150] sm:$0xff]
    %v95 = vld [vmem:[%s1 + $0x158] sm:$0xff]
    %v96 = vld [vmem:[%s1 + $0x160] sm:$0xff]
    %v97 = vld [vmem:[%s1 + $0x168] sm:$0xff]
    %v98 = vld [vmem:[%s1 + $0x170] sm:$0xff]
    %v99 = vld [vmem:[%s1 + $0x178] sm:$0xff]
    %v100 = vld [vmem:[%s1 + $0x180] sm:$0xff]
    %v101 = vld [vmem:[%s1 + $0x188] sm:$0xff]
    %v102 = vld [vmem:[%s1 + $0x190] sm:$0xff]
    %v103 = vld [vmem:[%s1 + $0x198] sm:$0xff]
    %v104 = vld [vmem:[%s1 + $0x1a0] sm:$0xff]
    %v105 = vld [vmem:[%s1 + $0x1a8] sm:$0xff]
    %v106 = vld [vmem:[%s1 + $0x1b0] sm:$0xff]
    %v107 = vld [vmem:[%s1 + $0x1b8] sm:$0xff]
    %v108 = vld [vmem:[%s1 + $0x1c0] sm:$0xff]
    %v109 = vld [vmem:[%s1 + $0x1c8] sm:$0xff]
    %v110 = vld [vmem:[%s1 + $0x1d0] sm:$0xff]
    %v111 = vld [vmem:[%s1 + $0x1d8] sm:$0xff]
    %v112 = vld [vmem:[%s1 + $0x1e0] sm:$0xff]
    %v113 = vld [vmem:[%s1 + $0x1e8] sm:$0xff]
    %v114 = vld [vmem:[%s1 + $0x1f0] sm:$0xff]
    %v115 = vld [vmem:[%s1 + $0x1f8] sm:$0xff]
    %v116 = vld [vmem:[%s2] sm:$0x1]
    %v118 = vlaneseq
    %v119 = vshrl.u32 %v118, 7
    %v120 = vsub.s32 0, %v119
    %v121 = vrot.slane %v116, %v120
    %v124 = vcombine.high %v51, %v51
    %v126 = vunpack.c.l.s4 1983009808
    %v127 = vunpack.c.0.s8 %v126
    %v128 = vlaneseq
    %v129 = vshrl.u32 %v128, 7
    %v130 = vsub.s32 %v127, %v129
    %v131 = vrot.slane %v51, %v130
    %v133 = vunpack.c.l.s4 1983009808
    %v134 = vunpack.c.0.s8 %v133
    %v135 = vlaneseq
    %v136 = vshrl.u32 %v135, 7
    %v137 = vsub.s32 %v134, %v136
    %v138 = vrot.slane %v124, %v137
    %v139 = vcombine.high %v131, %v131
    %v140 = vcombine.high %v138, %v138
    %145 = vmatprep.subr.mxu0 0.0
    %146 = vmatpush1.msra.mxu0 %v52
    %147 = vmatprep.subr.mxu0 0.0
    %148 = vmatpush1.msra.mxu0 %v53
    %149 = vmatprep.subr.mxu0 0.0
    %150 = vmatpush1.msra.mxu0 %v54
    %151 = vmatprep.subr.mxu0 0.0
    %152 = vmatpush1.msra.mxu0 %v55
    %153 = vmatprep.subr.mxu0 0.0
    %154 = vmatpush1.msra.mxu0 %v56
    %155 = vmatprep.subr.mxu0 0.0
    %156 = vmatpush1.msra.mxu0 %v57
    %157 = vmatprep.subr.mxu0 0.0
    %158 = vmatpush1.msra.mxu0 %v58
    %159 = vmatprep.subr.mxu0 0.0
    %160 = vmatpush1.msra.mxu0 %v59
    %161 = vmatprep.subr.mxu0 0.0
    %162 = vmatpush1.msra.mxu0 %v60
    %163 = vmatprep.subr.mxu0 0.0
    %164 = vmatpush1.msra.mxu0 %v61
    %165 = vmatprep.subr.mxu0 0.0
    %166 = vmatpush1.msra.mxu0 %v62
    %167 = vmatprep.subr.mxu0 0.0
    %168 = vmatpush1.msra.mxu0 %v63
    %169 = vmatprep.subr.mxu0 0.0
    %170 = vmatpush1.msra.mxu0 %v64
    %171 = vmatprep.subr.mxu0 0.0
    %172 = vmatpush1.msra.mxu0 %v65
    %173 = vmatprep.subr.mxu0 0.0
    %174 = vmatpush1.msra.mxu0 %v66
    %175 = vmatprep.subr.mxu0 0.0
    %176 = vmatpush1.msra.mxu0 %v67
    %177 = vmatprep.subr.mxu0 0.0
    %178 = vmatpush1.msra.mxu0 %v68
    %179 = vmatprep.subr.mxu0 0.0
    %180 = vmatpush1.msra.mxu0 %v69
    %181 = vmatprep.subr.mxu0 0.0
    %182 = vmatpush1.msra.mxu0 %v70
    %183 = vmatprep.subr.mxu0 0.0
    %184 = vmatpush1.msra.mxu0 %v71
    %185 = vmatprep.subr.mxu0 0.0
    %186 = vmatpush1.msra.mxu0 %v72
    %187 = vmatprep.subr.mxu0 0.0
    %188 = vmatpush1.msra.mxu0 %v73
    %189 = vmatprep.subr.mxu0 0.0
    %190 = vmatpush1.msra.mxu0 %v74
    %191 = vmatprep.subr.mxu0 0.0
    %192 = vmatpush1.msra.mxu0 %v75
    %193 = vmatprep.subr.mxu0 0.0
    %194 = vmatpush1.msra.mxu0 %v76
    %195 = vmatprep.subr.mxu0 0.0
    %196 = vmatpush1.msra.mxu0 %v77
    %197 = vmatprep.subr.mxu0 0.0
    %198 = vmatpush1.msra.mxu0 %v78
    %199 = vmatprep.subr.mxu0 0.0
    %200 = vmatpush1.msra.mxu0 %v79
    %201 = vmatprep.subr.mxu0 0.0
    %202 = vmatpush1.msra.mxu0 %v80
    %203 = vmatprep.subr.mxu0 0.0
    %204 = vmatpush1.msra.mxu0 %v81
    %205 = vmatprep.subr.mxu0 0.0
    %206 = vmatpush1.msra.mxu0 %v82
    %207 = vmatprep.subr.mxu0 0.0
    %208 = vmatpush1.msra.mxu0 %v83
    %209 = vmatprep.mubr.f32.mxu0 %v139
    %210 = vmatmul.mubr.f32.gmra.mrb[0].mxu0 %v131
    %v211 = vpop.f32.mrb[0].mxu0
    %v212 = vadd.f32 %v121, %v211
    %v213 = vpop.f32.mrb[0].mxu0
    %214 = vdwg.mxu0
    %215 = vmatprep.subr.mxu0 0.0
    %216 = vmatpush1.msra.mxu0 %v84
    %217 = vmatprep.subr.mxu0 0.0
    %218 = vmatpush1.msra.mxu0 %v85
    %219 = vmatprep.subr.mxu0 0.0
    %220 = vmatpush1.msra.mxu0 %v86
    %221 = vmatprep.subr.mxu0 0.0
    %222 = vmatpush1.msra.mxu0 %v87
    %223 = vmatprep.subr.mxu0 0.0
    %224 = vmatpush1.msra.mxu0 %v88
    %225 = vmatprep.subr.mxu0 0.0
    %226 = vmatpush1.msra.mxu0 %v89
    %227 = vmatprep.subr.mxu0 0.0
    %228 = vmatpush1.msra.mxu0 %v90
    %229 = vmatprep.subr.mxu0 0.0
    %230 = vmatpush1.msra.mxu0 %v91
    %231 = vmatprep.subr.mxu0 0.0
    %232 = vmatpush1.msra.mxu0 %v92
    %233 = vmatprep.subr.mxu0 0.0
    %234 = vmatpush1.msra.mxu0 %v93
    %235 = vmatprep.subr.mxu0 0.0
    %236 = vmatpush1.msra.mxu0 %v94
    %237 = vmatprep.subr.mxu0 0.0
    %238 = vmatpush1.msra.mxu0 %v95
    %239 = vmatprep.subr.mxu0 0.0
    %240 = vmatpush1.msra.mxu0 %v96
    %241 = vmatprep.subr.mxu0 0.0
    %242 = vmatpush1.msra.mxu0 %v97
    %243 = vmatprep.subr.mxu0 0.0
    %244 = vmatpush1.msra.mxu0 %v98
    %245 = vmatprep.subr.mxu0 0.0
    %246 = vmatpush1.msra.mxu0 %v99
    %247 = vmatprep.subr.mxu0 0.0
    %248 = vmatpush1.msra.mxu0 %v100
    %249 = vmatprep.subr.mxu0 0.0
    %250 = vmatpush1.msra.mxu0 %v101
    %251 = vmatprep.subr.mxu0 0.0
    %252 = vmatpush1.msra.mxu0 %v102
    %253 = vmatprep.subr.mxu0 0.0
    %254 = vmatpush1.msra.mxu0 %v103
    %255 = vmatprep.subr.mxu0 0.0
    %256 = vmatpush1.msra.mxu0 %v104
    %257 = vmatprep.subr.mxu0 0.0
    %258 = vmatpush1.msra.mxu0 %v105
    %259 = vmatprep.subr.mxu0 0.0
    %260 = vmatpush1.msra.mxu0 %v106
    %261 = vmatprep.subr.mxu0 0.0
    %262 = vmatpush1.msra.mxu0 %v107
    %263 = vmatprep.subr.mxu0 0.0
    %264 = vmatpush1.msra.mxu0 %v108
    %265 = vmatprep.subr.mxu0 0.0
    %266 = vmatpush1.msra.mxu0 %v109
    %267 = vmatprep.subr.mxu0 0.0
    %268 = vmatpush1.msra.mxu0 %v110
    %269 = vmatprep.subr.mxu0 0.0
    %270 = vmatpush1.msra.mxu0 %v111
    %271 = vmatprep.subr.mxu0 0.0
    %272 = vmatpush1.msra.mxu0 %v112
    %273 = vmatprep.subr.mxu0 0.0
    %274 = vmatpush1.msra.mxu0 %v113
    %275 = vmatprep.subr.mxu0 0.0
    %276 = vmatpush1.msra.mxu0 %v114
    %277 = vmatprep.subr.mxu0 0.0
    %278 = vmatpush1.msra.mxu0 %v115
    %279 = vmatprep.mubr.f32.mxu0 %v140
    %280 = vmatmul.mubr.f32.gmra.mrb[0].mxu0 %v138
    %v281 = vpop.f32.mrb[0].mxu0
    %v282 = vadd.f32 %v212, %v281
    %v283 = vpop.f32.mrb[0].mxu0
    %284 = vdwg.mxu0
    %v285 = vld [vmem:[%s3] sm:$0xff]
    %v286 = vld [vmem:[%s3 + $0x8] sm:$0xff]
    %v287 = vld [vmem:[%s3 + $0x10] sm:$0xff]
    %v288 = vld [vmem:[%s3 + $0x18] sm:$0xff]
    %v289 = vld [vmem:[%s3 + $0x20] sm:$0xff]
    %v290 = vld [vmem:[%s3 + $0x28] sm:$0xff]
    %v291 = vld [vmem:[%s3 + $0x30] sm:$0xff]
    %v292 = vld [vmem:[%s3 + $0x38] sm:$0xff]
    %v293 = vld [vmem:[%s3 + $0x40] sm:$0xff]
    %v294 = vld [vmem:[%s3 + $0x48] sm:$0xff]
    %v295 = vld [vmem:[%s3 + $0x50] sm:$0xff]
    %v296 = vld [vmem:[%s3 + $0x58] sm:$0xff]
    %v297 = vld [vmem:[%s3 + $0x60] sm:$0xf]
    %v298 = vld [vmem:[%s4] sm:$0x1]
    %v300 = vlaneseq
    %v301 = vshrl.u32 %v300, 7
    %v302 = vsub.s32 0, %v301
    %v303 = vrot.slane %v298, %v302
    %vm305 = vcmask 818176
    %v307 = vsel %vm305, %v282, 0
    %vm309 = vcmask 1043456
    %v311 = vsel %vm309, %v297, 0
    %313 = vmatprep.subr.mxu0 0.0
    %314 = vmatpush1.msra.mxu0 %v285
    %315 = vmatprep.subr.mxu0 0.0
    %316 = vmatpush1.msra.mxu0 %v286
    %317 = vmatprep.subr.mxu0 0.0
    %318 = vmatpush1.msra.mxu0 %v287
    %319 = vmatprep.subr.mxu0 0.0
    %320 = vmatpush1.msra.mxu0 %v288
    %321 = vmatprep.subr.mxu0 0.0
    %322 = vmatpush1.msra.mxu0 %v289
    %323 = vmatprep.subr.mxu0 0.0
    %324 = vmatpush1.msra.mxu0 %v290
    %325 = vmatprep.subr.mxu0 0.0
    %326 = vmatpush1.msra.mxu0 %v291
    %327 = vmatprep.subr.mxu0 0.0
    %328 = vmatpush1.msra.mxu0 %v292
    %329 = vmatprep.subr.mxu0 0.0
    %330 = vmatpush1.msra.mxu0 %v293
    %331 = vmatprep.subr.mxu0 0.0
    %332 = vmatpush1.msra.mxu0 %v294
    %333 = vmatprep.subr.mxu0 0.0
    %334 = vmatpush1.msra.mxu0 %v295
    %335 = vmatprep.subr.mxu0 0.0
    %336 = vmatpush1.msra.mxu0 %v296
    %337 = vmatprep.subr.mxu0 0.0
    %338 = vmatpush1.msra.mxu0 %v311
    %339 = vmatprep.subr.mxu0 0.0
    %340 = vmatpush1.msra.mxu0 0.0
    %341 = vmatprep.subr.mxu0 0.0
    %342 = vmatpush1.msra.mxu0 0.0
    %343 = vmatprep.subr.mxu0 0.0
    %344 = vmatpush1.msra.mxu0 0.0
    %345 = vmatprep.subr.mxu0 0.0
    %346 = vmatpush1.msra.mxu0 0.0
    %347 = vmatprep.subr.mxu0 0.0
    %348 = vmatpush1.msra.mxu0 0.0
    %349 = vmatprep.subr.mxu0 0.0
    %350 = vmatpush1.msra.mxu0 0.0
    %351 = vmatprep.subr.mxu0 0.0
    %352 = vmatpush1.msra.mxu0 0.0
    %353 = vmatprep.subr.mxu0 0.0
    %354 = vmatpush1.msra.mxu0 0.0
    %355 = vmatprep.subr.mxu0 0.0
    %356 = vmatpush1.msra.mxu0 0.0
    %357 = vmatprep.subr.mxu0 0.0
    %358 = vmatpush1.msra.mxu0 0.0
    %359 = vmatprep.subr.mxu0 0.0
    %360 = vmatpush1.msra.mxu0 0.0
    %361 = vmatprep.subr.mxu0 0.0
    %362 = vmatpush1.msra.mxu0 0.0
    %363 = vmatprep.subr.mxu0 0.0
    %364 = vmatpush1.msra.mxu0 0.0
    %365 = vmatprep.subr.mxu0 0.0
    %366 = vmatpush1.msra.mxu0 0.0
    %367 = vmatprep.subr.mxu0 0.0
    %368 = vmatpush1.msra.mxu0 0.0
    %369 = vmatprep.subr.mxu0 0.0
    %370 = vmatpush1.msra.mxu0 0.0
    %371 = vmatprep.subr.mxu0 0.0
    %372 = vmatpush1.msra.mxu0 0.0
    %373 = vmatprep.subr.mxu0 0.0
    %374 = vmatpush1.msra.mxu0 0.0
    %375 = vmatprep.subr.mxu0 0.0
    %376 = vmatpush1.msra.mxu0 0.0
    %377 = vmatprep.mubr.f32.mxu0 0.0
    %378 = vmatmul.mubr.f32.gmra.mrb[0].mxu0 %v307
    %v379 = vpop.f32.mrb[0].mxu0
    %v380 = vadd.f32 %v303, %v379
    %v381 = vpop.f32.mrb[0].mxu0
    %382 = vdwg.mxu0
    %v383 = vld [vmem:[%s5] sm:$0xff]
    %v384 = vld [vmem:[%s5 + $0x8] sm:$0xff]
    %v385 = vld [vmem:[%s5 + $0x10] sm:$0xff]
    %v386 = vld [vmem:[%s5 + $0x18] sm:$0xff]
    %v387 = vld [vmem:[%s5 + $0x20] sm:$0xff]
    %v388 = vld [vmem:[%s5 + $0x28] sm:$0xff]
    %v389 = vld [vmem:[%s5 + $0x30] sm:$0xff]
    %v390 = vld [vmem:[%s5 + $0x38] sm:$0xf]
    %v391 = vld [vmem:[%s6] sm:$0x1]
    %v393 = vlaneseq
    %v394 = vshrl.u32 %v393, 7
    %v395 = vsub.s32 0, %v394
    %v396 = vrot.slane %v391, %v395
    %vm398 = vcmask 490496
    %v400 = vsel %vm398, %v380, 0
    %v403 = vsel %vm309, %v390, 0
    %405 = vmatprep.subr.mxu0 0.0
    %406 = vmatpush1.msra.mxu0 %v383
    %407 = vmatprep.subr.mxu0 0.0
    %408 = vmatpush1.msra.mxu0 %v384
    %409 = vmatprep.subr.mxu0 0.0
    %410 = vmatpush1.msra.mxu0 %v385
    %411 = vmatprep.subr.mxu0 0.0
    %412 = vmatpush1.msra.mxu0 %v386
    %413 = vmatprep.subr.mxu0 0.0
    %414 = vmatpush1.msra.mxu0 %v387
    %415 = vmatprep.subr.mxu0 0.0
    %416 = vmatpush1.msra.mxu0 %v388
    %417 = vmatprep.subr.mxu0 0.0
    %418 = vmatpush1.msra.mxu0 %v389
    %419 = vmatprep.subr.mxu0 0.0
    %420 = vmatpush1.msra.mxu0 %v403
    %421 = vmatprep.subr.mxu0 0.0
    %422 = vmatpush1.msra.mxu0 0.0
    %423 = vmatprep.subr.mxu0 0.0
    %424 = vmatpush1.msra.mxu0 0.0
    %425 = vmatprep.subr.mxu0 0.0
    %426 = vmatpush1.msra.mxu0 0.0
    %427 = vmatprep.subr.mxu0 0.0
    %428 = vmatpush1.msra.mxu0 0.0
    %429 = vmatprep.subr.mxu0 0.0
    %430 = vmatpush1.msra.mxu0 0.0
    %431 = vmatprep.subr.mxu0 0.0
    %432 = vmatpush1.msra.mxu0 0.0
    %433 = vmatprep.subr.mxu0 0.0
    %434 = vmatpush1.msra.mxu0 0.0
    %435 = vmatprep.subr.mxu0 0.0
    %436 = vmatpush1.msra.mxu0 0.0
    %437 = vmatprep.subr.mxu0 0.0
    %438 = vmatpush1.msra.mxu0 0.0
    %439 = vmatprep.subr.mxu0 0.0
    %440 = vmatpush1.msra.mxu0 0.0
    %441 = vmatprep.subr.mxu0 0.0
    %442 = vmatpush1.msra.mxu0 0.0
    %443 = vmatprep.subr.mxu0 0.0
    %444 = vmatpush1.msra.mxu0 0.0
    %445 = vmatprep.subr.mxu0 0.0
    %446 = vmatpush1.msra.mxu0 0.0
    %447 = vmatprep.subr.mxu0 0.0
    %448 = vmatpush1.msra.mxu0 0.0
    %449 = vmatprep.subr.mxu0 0.0
    %450 = vmatpush1.msra.mxu0 0.0
    %451 = vmatprep.subr.mxu0 0.0
    %452 = vmatpush1.msra.mxu0 0.0
    %453 = vmatprep.subr.mxu0 0.0
    %454 = vmatpush1.msra.mxu0 0.0
    %455 = vmatprep.subr.mxu0 0.0
    %456 = vmatpush1.msra.mxu0 0.0
    %457 = vmatprep.subr.mxu0 0.0
    %458 = vmatpush1.msra.mxu0 0.0
    %459 = vmatprep.subr.mxu0 0.0
    %460 = vmatpush1.msra.mxu0 0.0
    %461 = vmatprep.subr.mxu0 0.0
    %462 = vmatpush1.msra.mxu0 0.0
    %463 = vmatprep.subr.mxu0 0.0
    %464 = vmatpush1.msra.mxu0 0.0
    %465 = vmatprep.subr.mxu0 0.0
    %466 = vmatpush1.msra.mxu0 0.0
    %467 = vmatprep.subr.mxu0 0.0
    %468 = vmatpush1.msra.mxu0 0.0
    %469 = vmatprep.mubr.f32.mxu0 0.0
    %470 = vmatmul.mubr.f32.gmra.mrb[0].mxu0 %v400
    %v471 = vpop.f32.mrb[0].mxu0
    %v472 = vadd.f32 %v396, %v471
    %v473 = vpop.f32.mrb[0].mxu0
    %474 = vdwg.mxu0
    %v475 = vmax.f32 %v472, 0.0
    %v476 = vld [vmem:[%s7] sm:$0xff]
    %v477 = vld [vmem:[%s7 + $0x8] sm:$0xff]
    %v478 = vld [vmem:[%s7 + $0x10] sm:$0xff]
    %v479 = vld [vmem:[%s7 + $0x18] sm:$0xff]
    %v480 = vld [vmem:[%s7 + $0x20] sm:$0xff]
    %v481 = vld [vmem:[%s7 + $0x28] sm:$0xff]
    %v482 = vld [vmem:[%s7 + $0x30] sm:$0xff]
    %v483 = vld [vmem:[%s7 + $0x38] sm:$0xff]
    %v484 = vld [vmem:[%s8] sm:$0xf]
    %v486 = vlaneseq
    %v487 = vshrl.u32 %v486, 7
    %v488 = vsub.s32 0, %v487
    %v489 = vrot.slane %v484, %v488
    %v490 = vlaneseq
    %v491 = vshrl.u32 %v490, 7
    %v492 = vsub.s32 1, %v491
    %v493 = vrot.slane %v484, %v492
    %v494 = vlaneseq
    %v495 = vshrl.u32 %v494, 7
    %v496 = vsub.s32 2, %v495
    %v497 = vrot.slane %v484, %v496
    %v498 = vlaneseq
    %v499 = vshrl.u32 %v498, 7
    %v500 = vsub.s32 3, %v499
    %v501 = vrot.slane %v484, %v500
    %vm506 = vcmask 130048
    %v508 = vsel %vm506, %v475, 0
    %510 = vmatprep.subr.mxu0 %v477
    %511 = vmatpush1.msra.mxu0 %v476
    %512 = vmatprep.subr.mxu0 %v481
    %513 = vmatpush1.msra.mxu0 %v480
    %514 = vmatprep.subr.mxu0 0.0
    %515 = vmatpush1.msra.mxu0 0.0
    %516 = vmatprep.subr.mxu0 0.0
    %517 = vmatpush1.msra.mxu0 0.0
    %518 = vmatprep.subr.mxu0 0.0
    %519 = vmatpush1.msra.mxu0 0.0
    %520 = vmatprep.subr.mxu0 0.0
    %521 = vmatpush1.msra.mxu0 0.0
    %522 = vmatprep.subr.mxu0 0.0
    %523 = vmatpush1.msra.mxu0 0.0
    %524 = vmatprep.subr.mxu0 0.0
    %525 = vmatpush1.msra.mxu0 0.0
    %526 = vmatprep.subr.mxu0 0.0
    %527 = vmatpush1.msra.mxu0 0.0
    %528 = vmatprep.subr.mxu0 0.0
    %529 = vmatpush1.msra.mxu0 0.0
    %530 = vmatprep.subr.mxu0 0.0
    %531 = vmatpush1.msra.mxu0 0.0
    %532 = vmatprep.subr.mxu0 0.0
    %533 = vmatpush1.msra.mxu0 0.0
    %534 = vmatprep.subr.mxu0 0.0
    %535 = vmatpush1.msra.mxu0 0.0
    %536 = vmatprep.subr.mxu0 0.0
    %537 = vmatpush1.msra.mxu0 0.0
    %538 = vmatprep.subr.mxu0 0.0
    %539 = vmatpush1.msra.mxu0 0.0
    %540 = vmatprep.subr.mxu0 0.0
    %541 = vmatpush1.msra.mxu0 0.0
    %542 = vmatprep.subr.mxu0 0.0
    %543 = vmatpush1.msra.mxu0 0.0
    %544 = vmatprep.subr.mxu0 0.0
    %545 = vmatpush1.msra.mxu0 0.0
    %546 = vmatprep.subr.mxu0 0.0
    %547 = vmatpush1.msra.mxu0 0.0
    %548 = vmatprep.subr.mxu0 0.0
    %549 = vmatpush1.msra.mxu0 0.0
    %550 = vmatprep.subr.mxu0 0.0
    %551 = vmatpush1.msra.mxu0 0.0
    %552 = vmatprep.subr.mxu0 0.0
    %553 = vmatpush1.msra.mxu0 0.0
    %554 = vmatprep.subr.mxu0 0.0
    %555 = vmatpush1.msra.mxu0 0.0
    %556 = vmatprep.subr.mxu0 0.0
    %557 = vmatpush1.msra.mxu0 0.0
    %558 = vmatprep.subr.mxu0 0.0
    %559 = vmatpush1.msra.mxu0 0.0
    %560 = vmatprep.subr.mxu0 0.0
    %561 = vmatpush1.msra.mxu0 0.0
    %562 = vmatprep.subr.mxu0 0.0
    %563 = vmatpush1.msra.mxu0 0.0
    %564 = vmatprep.subr.mxu0 0.0
    %565 = vmatpush1.msra.mxu0 0.0
    %566 = vmatprep.subr.mxu0 0.0
    %567 = vmatpush1.msra.mxu0 0.0
    %568 = vmatprep.subr.mxu0 0.0
    %569 = vmatpush1.msra.mxu0 0.0
    %570 = vmatprep.subr.mxu0 0.0
    %571 = vmatpush1.msra.mxu0 0.0
    %572 = vmatprep.subr.mxu0 0.0
    %573 = vmatpush1.msra.mxu0 0.0
    %574 = vmatprep.mubr.f32.mxu0 0.0
    %575 = vmatmul.mubr.f32.gmra.mrb[0].mxu0 %v508
    %v576 = vpop.f32.mrb[0].mxu0
    %v577 = vadd.f32 %v489, %v576
    %v578 = vpop.f32.mrb[0].mxu0
    %v579 = vadd.f32 %v493, %v578
    %580 = vdwg.mxu0
    %581 = vmatprep.subr.mxu0 %v479
    %582 = vmatpush1.msra.mxu0 %v478
    %583 = vmatprep.subr.mxu0 %v483
    %584 = vmatpush1.msra.mxu0 %v482
    %585 = vmatprep.subr.mxu0 0.0
    %586 = vmatpush1.msra.mxu0 0.0
    %587 = vmatprep.subr.mxu0 0.0
    %588 = vmatpush1.msra.mxu0 0.0
    %589 = vmatprep.subr.mxu0 0.0
    %590 = vmatpush1.msra.mxu0 0.0
    %591 = vmatprep.subr.mxu0 0.0
    %592 = vmatpush1.msra.mxu0 0.0
    %593 = vmatprep.subr.mxu0 0.0
    %594 = vmatpush1.msra.mxu0 0.0
    %595 = vmatprep.subr.mxu0 0.0
    %596 = vmatpush1.msra.mxu0 0.0
    %597 = vmatprep.subr.mxu0 0.0
    %598 = vmatpush1.msra.mxu0 0.0
    %599 = vmatprep.subr.mxu0 0.0
    %600 = vmatpush1.msra.mxu0 0.0
    %601 = vmatprep.subr.mxu0 0.0
    %602 = vmatpush1.msra.mxu0 0.0
    %603 = vmatprep.subr.mxu0 0.0
    %604 = vmatpush1.msra.mxu0 0.0
    %605 = vmatprep.subr.mxu0 0.0
    %606 = vmatpush1.msra.mxu0 0.0
    %607 = vmatprep.subr.mxu0 0.0
    %608 = vmatpush1.msra.mxu0 0.0
    %609 = vmatprep.subr.mxu0 0.0
    %610 = vmatpush1.msra.mxu0 0.0
    %611 = vmatprep.subr.mxu0 0.0
    %612 = vmatpush1.msra.mxu0 0.0
    %613 = vmatprep.subr.mxu0 0.0
    %614 = vmatpush1.msra.mxu0 0.0
    %615 = vmatprep.subr.mxu0 0.0
    %616 = vmatpush1.msra.mxu0 0.0
    %617 = vmatprep.subr.mxu0 0.0
    %618 = vmatpush1.msra.mxu0 0.0
    %619 = vmatprep.subr.mxu0 0.0
    %620 = vmatpush1.msra.mxu0 0.0
    %621 = vmatprep.subr.mxu0 0.0
    %622 = vmatpush1.msra.mxu0 0.0
    %623 = vmatprep.subr.mxu0 0.0
    %624 = vmatpush1.msra.mxu0 0.0
    %625 = vmatprep.subr.mxu0 0.0
    %626 = vmatpush1.msra.mxu0 0.0
    %627 = vmatprep.subr.mxu0 0.0
    %628 = vmatpush1.msra.mxu0 0.0
    %629 = vmatprep.subr.mxu0 0.0
    %630 = vmatpush1.msra.mxu0 0.0
    %631 = vmatprep.subr.mxu0 0.0
    %632 = vmatpush1.msra.mxu0 0.0
    %633 = vmatprep.subr.mxu0 0.0
    %634 = vmatpush1.msra.mxu0 0.0
    %635 = vmatprep.subr.mxu0 0.0
    %636 = vmatpush1.msra.mxu0 0.0
    %637 = vmatprep.subr.mxu0 0.0
    %638 = vmatpush1.msra.mxu0 0.0
    %639 = vmatprep.subr.mxu0 0.0
    %640 = vmatpush1.msra.mxu0 0.0
    %641 = vmatprep.subr.mxu0 0.0
    %642 = vmatpush1.msra.mxu0 0.0
    %643 = vmatprep.subr.mxu0 0.0
    %644 = vmatpush1.msra.mxu0 0.0
    %645 = vmatprep.mubr.f32.mxu0 0.0
    %646 = vmatmul.mubr.f32.gmra.mrb[0].mxu0 %v508
    %v647 = vpop.f32.mrb[0].mxu0
    %v648 = vadd.f32 %v497, %v647
    %v649 = vpop.f32.mrb[0].mxu0
    %v650 = vadd.f32 %v501, %v649
    %651 = vdwg.mxu0
    %v656 = vcombine.low %v577, %v579
    %v657 = vcombine.low %v648, %v650
    %v659 = vunpack.c.l.s4 1983009808
    %v660 = vunpack.c.0.s8 %v659
    %v661 = vlaneseq
    %v662 = vshrl.u32 %v661, 7
    %v663 = vsub.s32 %v660, %v662
    %v664 = vrot.slane %v656, %v663
    %v666 = vunpack.c.l.s4 1983009808
    %v667 = vunpack.c.0.s8 %v666
    %v668 = vlaneseq
    %v669 = vshrl.u32 %v668, 7
    %v670 = vsub.s32 %v667, %v669
    %v671 = vrot.slane %v657, %v670
    %v672 = vcombine.low %v664, %v671
    %674 = vst [vmem:[#allocation2] sm:$0xff] %v672
    %v675 = vld [vmem:[#allocation2] ss:$2 sm:$0xf]
    %s676 = scalar_lea.vmem [#allocation2], 1
    %v677 = vld [vmem:[%s676] ss:$2 sm:$0xf]
    %v678 = vld [vmem:[%s9] sm:$0xff]
    %v679 = vld [vmem:[%s9 + $0x8] sm:$0xff]
    %v680 = vld [vmem:[%s9 + $0x10] sm:$0xff]
    %v681 = vld [vmem:[%s9 + $0x18] sm:$0xff]
    %v682 = vld [vmem:[%s9 + $0x20] sm:$0xff]
    %v683 = vld [vmem:[%s9 + $0x28] sm:$0xff]
    %v684 = vld [vmem:[%s9 + $0x30] sm:$0xff]
    %v685 = vld [vmem:[%s9 + $0x38] sm:$0xff]
    %v686 = vld [vmem:[%s9 + $0x40] sm:$0xff]
    %v687 = vld [vmem:[%s9 + $0x48] sm:$0xff]
    %v688 = vld [vmem:[%s9 + $0x50] sm:$0xff]
    %v689 = vld [vmem:[%s9 + $0x58] sm:$0xff]
    %v690 = vld [vmem:[%s9 + $0x60] sm:$0xff]
    %v691 = vld [vmem:[%s9 + $0x68] sm:$0xff]
    %v692 = vld [vmem:[%s9 + $0x70] sm:$0xff]
    %v693 = vld [vmem:[%s9 + $0x78] sm:$0xff]
    %vm694 = vcmask 523264
    %v696 = vsel %vm694, 0.0, 0
    %698 = vmatprep.subr.mxu0 %v679
    %699 = vmatpush1.msra.mxu0 %v678
    %700 = vmatprep.subr.mxu0 %v681
    %701 = vmatpush1.msra.mxu0 %v680
    %702 = vmatprep.subr.mxu0 %v683
    %703 = vmatpush1.msra.mxu0 %v682
    %704 = vmatprep.subr.mxu0 %v685
    %705 = vmatpush1.msra.mxu0 %v684
    %706 = vmatprep.subr.mxu0 %v687
    %707 = vmatpush1.msra.mxu0 %v686
    %708 = vmatprep.subr.mxu0 %v689
    %709 = vmatpush1.msra.mxu0 %v688
    %710 = vmatprep.subr.mxu0 %v691
    %711 = vmatpush1.msra.mxu0 %v690
    %712 = vmatprep.subr.mxu0 %v693
    %713 = vmatpush1.msra.mxu0 %v692
    %714 = vmatprep.subr.mxu0 0.0
    %715 = vmatpush1.msra.mxu0 0.0
    %716 = vmatprep.subr.mxu0 0.0
    %717 = vmatpush1.msra.mxu0 0.0
    %718 = vmatprep.subr.mxu0 0.0
    %719 = vmatpush1.msra.mxu0 0.0
    %720 = vmatprep.subr.mxu0 0.0
    %721 = vmatpush1.msra.mxu0 0.0
    %722 = vmatprep.subr.mxu0 0.0
    %723 = vmatpush1.msra.mxu0 0.0
    %724 = vmatprep.subr.mxu0 0.0
    %725 = vmatpush1.msra.mxu0 0.0
    %726 = vmatprep.subr.mxu0 0.0
    %727 = vmatpush1.msra.mxu0 0.0
    %728 = vmatprep.subr.mxu0 0.0
    %729 = vmatpush1.msra.mxu0 0.0
    %730 = vmatprep.subr.mxu0 0.0
    %731 = vmatpush1.msra.mxu0 0.0
    %732 = vmatprep.subr.mxu0 0.0
    %733 = vmatpush1.msra.mxu0 0.0
    %734 = vmatprep.subr.mxu0 0.0
    %735 = vmatpush1.msra.mxu0 0.0
    %736 = vmatprep.subr.mxu0 0.0
    %737 = vmatpush1.msra.mxu0 0.0
    %738 = vmatprep.subr.mxu0 0.0
    %739 = vmatpush1.msra.mxu0 0.0
    %740 = vmatprep.subr.mxu0 0.0
    %741 = vmatpush1.msra.mxu0 0.0
    %742 = vmatprep.subr.mxu0 0.0
    %743 = vmatpush1.msra.mxu0 0.0
    %744 = vmatprep.subr.mxu0 0.0
    %745 = vmatpush1.msra.mxu0 0.0
    %746 = vmatprep.subr.mxu0 0.0
    %747 = vmatpush1.msra.mxu0 0.0
    %748 = vmatprep.subr.mxu0 0.0
    %749 = vmatpush1.msra.mxu0 0.0
    %750 = vmatprep.subr.mxu0 0.0
    %751 = vmatpush1.msra.mxu0 0.0
    %752 = vmatprep.subr.mxu0 0.0
    %753 = vmatpush1.msra.mxu0 0.0
    %754 = vmatprep.subr.mxu0 0.0
    %755 = vmatpush1.msra.mxu0 0.0
    %756 = vmatprep.subr.mxu0 0.0
    %757 = vmatpush1.msra.mxu0 0.0
    %758 = vmatprep.subr.mxu0 0.0
    %759 = vmatpush1.msra.mxu0 0.0
    %760 = vmatprep.subr.mxu0 0.0
    %761 = vmatpush1.msra.mxu0 0.0
    %762 = vmatprep.mubr.f32.mxu0 0.0
    %763 = vmatmul.mubr.f32.gmra.mrb[0].mxu0 %v696
    %v764 = vpop.f32.mrb[0].mxu0
    %v765 = vadd.f32 0.0, %v764
    %v766 = vpop.f32.mrb[0].mxu0
    %v767 = vadd.f32 0.0, %v766
    %768 = vdwg.mxu0
    %v771 = vcombine.low %v765, %v767
    %v773 = vunpack.c.l.s4 1966171168
    %v774 = vunpack.c.0.s8 %v773
    %v775 = vlaneseq
    %v776 = vshrl.u32 %v775, 7
    %v777 = vsub.s32 %v774, %v776
    %v778 = vrot.slane %v771, %v777
    %v780 = vunpack.c.l.s4 1966171168
    %v781 = vunpack.c.0.s8 %v780
    %v782 = vlaneseq
    %v783 = vshrl.u32 %v782, 7
    %v784 = vsub.s32 %v781, %v783
    %v785 = vrot.slane %v778, %v784
    %v787 = vadd.f32 %v675, %v785
    %v788 = vld [vmem:[%s10] sm:$0xff]
    %v789 = vld [vmem:[%s10 + $0x8] sm:$0xff]
    %v790 = vld [vmem:[%s10 + $0x10] sm:$0xff]
    %v791 = vld [vmem:[%s10 + $0x18] sm:$0xff]
    %v792 = vld [vmem:[%s10 + $0x20] sm:$0xff]
    %v793 = vld [vmem:[%s10 + $0x28] sm:$0xff]
    %v794 = vld [vmem:[%s10 + $0x30] sm:$0xff]
    %v795 = vld [vmem:[%s10 + $0x38] sm:$0xff]
    %v796 = vld [vmem:[%s10 + $0x40] sm:$0xff]
    %v797 = vld [vmem:[%s10 + $0x48] sm:$0xff]
    %v798 = vld [vmem:[%s10 + $0x50] sm:$0xff]
    %v799 = vld [vmem:[%s10 + $0x58] sm:$0xff]
    %v800 = vld [vmem:[%s10 + $0x60] sm:$0xff]
    %v801 = vld [vmem:[%s10 + $0x68] sm:$0xff]
    %v802 = vld [vmem:[%s10 + $0x70] sm:$0xff]
    %v803 = vld [vmem:[%s10 + $0x78] sm:$0xff]
    %804 = vmatprep.subr.mxu0 %v789
    %805 = vmatpush1.msra.mxu0 %v788
    %806 = vmatprep.subr.mxu0 %v791
    %807 = vmatpush1.msra.mxu0 %v790
    %808 = vmatprep.subr.mxu0 %v793
    %809 = vmatpush1.msra.mxu0 %v792
    %810 = vmatprep.subr.mxu0 %v795
    %811 = vmatpush1.msra.mxu0 %v794
    %812 = vmatprep.subr.mxu0 %v797
    %813 = vmatpush1.msra.mxu0 %v796
    %814 = vmatprep.subr.mxu0 %v799
    %815 = vmatpush1.msra.mxu0 %v798
    %816 = vmatprep.subr.mxu0 %v801
    %817 = vmatpush1.msra.mxu0 %v800
    %818 = vmatprep.subr.mxu0 %v803
    %819 = vmatpush1.msra.mxu0 %v802
    %820 = vmatprep.subr.mxu0 0.0
    %821 = vmatpush1.msra.mxu0 0.0
    %822 = vmatprep.subr.mxu0 0.0
    %823 = vmatpush1.msra.mxu0 0.0
    %824 = vmatprep.subr.mxu0 0.0
    %825 = vmatpush1.msra.mxu0 0.0
    %826 = vmatprep.subr.mxu0 0.0
    %827 = vmatpush1.msra.mxu0 0.0
    %828 = vmatprep.subr.mxu0 0.0
    %829 = vmatpush1.msra.mxu0 0.0
    %830 = vmatprep.subr.mxu0 0.0
    %831 = vmatpush1.msra.mxu0 0.0
    %832 = vmatprep.subr.mxu0 0.0
    %833 = vmatpush1.msra.mxu0 0.0
    %834 = vmatprep.subr.mxu0 0.0
    %835 = vmatpush1.msra.mxu0 0.0
    %836 = vmatprep.subr.mxu0 0.0
    %837 = vmatpush1.msra.mxu0 0.0
    %838 = vmatprep.subr.mxu0 0.0
    %839 = vmatpush1.msra.mxu0 0.0
    %840 = vmatprep.subr.mxu0 0.0
    %841 = vmatpush1.msra.mxu0 0.0
    %842 = vmatprep.subr.mxu0 0.0
    %843 = vmatpush1.msra.mxu0 0.0
    %844 = vmatprep.subr.mxu0 0.0
    %845 = vmatpush1.msra.mxu0 0.0
    %846 = vmatprep.subr.mxu0 0.0
    %847 = vmatpush1.msra.mxu0 0.0
    %848 = vmatprep.subr.mxu0 0.0
    %849 = vmatpush1.msra.mxu0 0.0
    %850 = vmatprep.subr.mxu0 0.0
    %851 = vmatpush1.msra.mxu0 0.0
    %852 = vmatprep.subr.mxu0 0.0
    %853 = vmatpush1.msra.mxu0 0.0
    %854 = vmatprep.subr.mxu0 0.0
    %855 = vmatpush1.msra.mxu0 0.0
    %856 = vmatprep.subr.mxu0 0.0
    %857 = vmatpush1.msra.mxu0 0.0
    %858 = vmatprep.subr.mxu0 0.0
    %859 = vmatpush1.msra.mxu0 0.0
    %860 = vmatprep.subr.mxu0 0.0
    %861 = vmatpush1.msra.mxu0 0.0
    %862 = vmatprep.subr.mxu0 0.0
    %863 = vmatpush1.msra.mxu0 0.0
    %864 = vmatprep.subr.mxu0 0.0
    %865 = vmatpush1.msra.mxu0 0.0
    %866 = vmatprep.subr.mxu0 0.0
    %867 = vmatpush1.msra.mxu0 0.0
    %868 = vmatprep.mubr.f32.mxu0 0.0
    %869 = vmatmul.mubr.f32.gmra.mrb[0].mxu0 %v696
    %v870 = vpop.f32.mrb[0].mxu0
    %v871 = vadd.f32 0.0, %v870
    %v872 = vpop.f32.mrb[0].mxu0
    %v873 = vadd.f32 0.0, %v872
    %874 = vdwg.mxu0
    %v876 = vrot.slane %v677, 2
    %v880 = vcombine.low %v871, %v873
    %v882 = vunpack.c.l.s4 1966171168
    %v883 = vunpack.c.0.s8 %v882
    %v884 = vlaneseq
    %v885 = vshrl.u32 %v884, 7
    %v886 = vsub.s32 %v883, %v885
    %v887 = vrot.slane %v880, %v886
    %v889 = vunpack.c.l.s4 1966171168
    %v890 = vunpack.c.0.s8 %v889
    %v891 = vlaneseq
    %v892 = vshrl.u32 %v891, 7
    %v893 = vsub.s32 %v890, %v892
    %v894 = vrot.slane %v887, %v893
    %v896 = vadd.f32 %v876, %v894
    %v897 = vxor.u32 %v787, 2147483648
    %v898 = vmul.f32 %v897, 1.442695
    %v899 = vpow.pop %v898
    %v900 = vadd.f32 %v899, 1.0
    %v901 = vrcp.pop %v900
    %v902 = vmul.f32 1.0, %v901
    %v904 = vrot.slane %v787, 1
    %v906 = vtanh.pop %v904
    %907 = vrot.lane.b32.xlu0 %v787, 64
    %v908 = vpop.permute.xlu0 %907
    %v909 = vrot.slane %v908, 1
    %v911 = vxor.u32 %v909, 2147483648
    %v912 = vmul.f32 %v911, 1.442695
    %v913 = vpow.pop %v912
    %v914 = vadd.f32 %v913, 1.0
    %v915 = vrcp.pop %v914
    %v916 = vmul.f32 1.0, %v915
    %v917 = vmul.f32 %v902, 0.0
    %v918 = vmul.f32 %v902, %v906
    %920 = vrot.lane.b32.xlu0 %v918, 64
    %v921 = vpop.permute.xlu0 %920
    %v923 = vadd.f32 %v917, %v921
    %v924 = vtanh.pop %v923
    %926 = vrot.lane.b32.xlu0 %v924, 64
    %v927 = vpop.permute.xlu0 %926
    %v929 = vmul.f32 %v916, %v927
    %v930 = vxor.u32 %v896, 2147483648
    %v931 = vmul.f32 %v930, 1.442695
    %v932 = vpow.pop %v931
    %v933 = vadd.f32 %v932, 1.0
    %v934 = vrcp.pop %v933
    %v935 = vmul.f32 1.0, %v934
    %v937 = vrot.slane %v896, 1
    %v939 = vtanh.pop %v937
    %940 = vrot.lane.b32.xlu0 %v896, 64
    %v941 = vpop.permute.xlu0 %940
    %v942 = vrot.slane %v941, 1
    %v944 = vxor.u32 %v942, 2147483648
    %v945 = vmul.f32 %v944, 1.442695
    %v946 = vpow.pop %v945
    %v947 = vadd.f32 %v946, 1.0
    %v948 = vrcp.pop %v947
    %v949 = vmul.f32 1.0, %v948
    %v950 = vmul.f32 %v935, 0.0
    %v951 = vmul.f32 %v935, %v939
    %953 = vrot.lane.b32.xlu0 %v951, 64
    %v954 = vpop.permute.xlu0 %953
    %v956 = vadd.f32 %v950, %v954
    %v957 = vtanh.pop %v956
    %959 = vrot.lane.b32.xlu0 %v957, 64
    %v960 = vpop.permute.xlu0 %959
    %v962 = vmul.f32 %v949, %v960
    %v964 = vsel %vm694, %v929, 0
    %966 = vmatprep.subr.mxu0 %v679
    %967 = vmatpush1.msra.mxu0 %v678
    %968 = vmatprep.subr.mxu0 %v681
    %969 = vmatpush1.msra.mxu0 %v680
    %970 = vmatprep.subr.mxu0 %v683
    %971 = vmatpush1.msra.mxu0 %v682
    %972 = vmatprep.subr.mxu0 %v685
    %973 = vmatpush1.msra.mxu0 %v684
    %974 = vmatprep.subr.mxu0 %v687
    %975 = vmatpush1.msra.mxu0 %v686
    %976 = vmatprep.subr.mxu0 %v689
    %977 = vmatpush1.msra.mxu0 %v688
    %978 = vmatprep.subr.mxu0 %v691
    %979 = vmatpush1.msra.mxu0 %v690
    %980 = vmatprep.subr.mxu0 %v693
    %981 = vmatpush1.msra.mxu0 %v692
    %982 = vmatprep.subr.mxu0 0.0
    %983 = vmatpush1.msra.mxu0 0.0
    %984 = vmatprep.subr.mxu0 0.0
    %985 = vmatpush1.msra.mxu0 0.0
    %986 = vmatprep.subr.mxu0 0.0
    %987 = vmatpush1.msra.mxu0 0.0
    %988 = vmatprep.subr.mxu0 0.0
    %989 = vmatpush1.msra.mxu0 0.0
    %990 = vmatprep.subr.mxu0 0.0
    %991 = vmatpush1.msra.mxu0 0.0
    %992 = vmatprep.subr.mxu0 0.0
    %993 = vmatpush1.msra.mxu0 0.0
    %994 = vmatprep.subr.mxu0 0.0
    %995 = vmatpush1.msra.mxu0 0.0
    %996 = vmatprep.subr.mxu0 0.0
    %997 = vmatpush1.msra.mxu0 0.0
    %998 = vmatprep.subr.mxu0 0.0
    %999 = vmatpush1.msra.mxu0 0.0
    %1000 = vmatprep.subr.mxu0 0.0
    %1001 = vmatpush1.msra.mxu0 0.0
    %1002 = vmatprep.subr.mxu0 0.0
    %1003 = vmatpush1.msra.mxu0 0.0
    %1004 = vmatprep.subr.mxu0 0.0
    %1005 = vmatpush1.msra.mxu0 0.0
    %1006 = vmatprep.subr.mxu0 0.0
    %1007 = vmatpush1.msra.mxu0 0.0
    %1008 = vmatprep.subr.mxu0 0.0
    %1009 = vmatpush1.msra.mxu0 0.0
    %1010 = vmatprep.subr.mxu0 0.0
    %1011 = vmatpush1.msra.mxu0 0.0
    %1012 = vmatprep.subr.mxu0 0.0
    %1013 = vmatpush1.msra.mxu0 0.0
    %1014 = vmatprep.subr.mxu0 0.0
    %1015 = vmatpush1.msra.mxu0 0.0
    %1016 = vmatprep.subr.mxu0 0.0
    %1017 = vmatpush1.msra.mxu0 0.0
    %1018 = vmatprep.subr.mxu0 0.0
    %1019 = vmatpush1.msra.mxu0 0.0
    %1020 = vmatprep.subr.mxu0 0.0
    %1021 = vmatpush1.msra.mxu0 0.0
    %1022 = vmatprep.subr.mxu0 0.0
    %1023 = vmatpush1.msra.mxu0 0.0
    %1024 = vmatprep.subr.mxu0 0.0
    %1025 = vmatpush1.msra.mxu0 0.0
    %1026 = vmatprep.subr.mxu0 0.0
    %1027 = vmatpush1.msra.mxu0 0.0
    %1028 = vmatprep.subr.mxu0 0.0
    %1029 = vmatpush1.msra.mxu0 0.0
    %1030 = vmatprep.mubr.f32.mxu0 0.0
    %1031 = vmatmul.mubr.f32.gmra.mrb[0].mxu0 %v964
    %v1032 = vpop.f32.mrb[0].mxu0
    %v1033 = vadd.f32 0.0, %v1032
    %v1034 = vpop.f32.mrb[0].mxu0
    %v1035 = vadd.f32 0.0, %v1034
    %1036 = vdwg.mxu0
    %v1039 = vcombine.low %v1033, %v1035
    %v1041 = vunpack.c.l.s4 1966171168
    %v1042 = vunpack.c.0.s8 %v1041
    %v1043 = vlaneseq
    %v1044 = vshrl.u32 %v1043, 7
    %v1045 = vsub.s32 %v1042, %v1044
    %v1046 = vrot.slane %v1039, %v1045
    %v1048 = vunpack.c.l.s4 1966171168
    %v1049 = vunpack.c.0.s8 %v1048
    %v1050 = vlaneseq
    %v1051 = vshrl.u32 %v1050, 7
    %v1052 = vsub.s32 %v1049, %v1051
    %v1053 = vrot.slane %v1046, %v1052
    %v1055 = vadd.f32 %v677, %v1053
    %v1057 = vsel %vm694, %v962, 0
    %1059 = vmatprep.subr.mxu0 %v789
    %1060 = vmatpush1.msra.mxu0 %v788
    %1061 = vmatprep.subr.mxu0 %v791
    %1062 = vmatpush1.msra.mxu0 %v790
    %1063 = vmatprep.subr.mxu0 %v793
    %1064 = vmatpush1.msra.mxu0 %v792
    %1065 = vmatprep.subr.mxu0 %v795
    %1066 = vmatpush1.msra.mxu0 %v794
    %1067 = vmatprep.subr.mxu0 %v797
    %1068 = vmatpush1.msra.mxu0 %v796
    %1069 = vmatprep.subr.mxu0 %v799
    %1070 = vmatpush1.msra.mxu0 %v798
    %1071 = vmatprep.subr.mxu0 %v801
    %1072 = vmatpush1.msra.mxu0 %v800
    %1073 = vmatprep.subr.mxu0 %v803
    %1074 = vmatpush1.msra.mxu0 %v802
    %1075 = vmatprep.subr.mxu0 0.0
    %1076 = vmatpush1.msra.mxu0 0.0
    %1077 = vmatprep.subr.mxu0 0.0
    %1078 = vmatpush1.msra.mxu0 0.0
    %1079 = vmatprep.subr.mxu0 0.0
    %1080 = vmatpush1.msra.mxu0 0.0
    %1081 = vmatprep.subr.mxu0 0.0
    %1082 = vmatpush1.msra.mxu0 0.0
    %1083 = vmatprep.subr.mxu0 0.0
    %1084 = vmatpush1.msra.mxu0 0.0
    %1085 = vmatprep.subr.mxu0 0.0
    %1086 = vmatpush1.msra.mxu0 0.0
    %1087 = vmatprep.subr.mxu0 0.0
    %1088 = vmatpush1.msra.mxu0 0.0
    %1089 = vmatprep.subr.mxu0 0.0
    %1090 = vmatpush1.msra.mxu0 0.0
    %1091 = vmatprep.subr.mxu0 0.0
    %1092 = vmatpush1.msra.mxu0 0.0
    %1093 = vmatprep.subr.mxu0 0.0
    %1094 = vmatpush1.msra.mxu0 0.0
    %1095 = vmatprep.subr.mxu0 0.0
    %1096 = vmatpush1.msra.mxu0 0.0
    %1097 = vmatprep.subr.mxu0 0.0
    %1098 = vmatpush1.msra.mxu0 0.0
    %1099 = vmatprep.subr.mxu0 0.0
    %1100 = vmatpush1.msra.mxu0 0.0
    %1101 = vmatprep.subr.mxu0 0.0
    %1102 = vmatpush1.msra.mxu0 0.0
    %1103 = vmatprep.subr.mxu0 0.0
    %1104 = vmatpush1.msra.mxu0 0.0
    %1105 = vmatprep.subr.mxu0 0.0
    %1106 = vmatpush1.msra.mxu0 0.0
    %1107 = vmatprep.subr.mxu0 0.0
    %1108 = vmatpush1.msra.mxu0 0.0
    %1109 = vmatprep.subr.mxu0 0.0
    %1110 = vmatpush1.msra.mxu0 0.0
    %1111 = vmatprep.subr.mxu0 0.0
    %1112 = vmatpush1.msra.mxu0 0.0
    %1113 = vmatprep.subr.mxu0 0.0
    %1114 = vmatpush1.msra.mxu0 0.0
    %1115 = vmatprep.subr.mxu0 0.0
    %1116 = vmatpush1.msra.mxu0 0.0
    %1117 = vmatprep.subr.mxu0 0.0
    %1118 = vmatpush1.msra.mxu0 0.0
    %1119 = vmatprep.subr.mxu0 0.0
    %1120 = vmatpush1.msra.mxu0 0.0
    %1121 = vmatprep.subr.mxu0 0.0
    %1122 = vmatpush1.msra.mxu0 0.0
    %1123 = vmatprep.mubr.f32.mxu0 0.0
    %1124 = vmatmul.mubr.f32.gmra.mrb[0].mxu0 %v1057
    %v1125 = vpop.f32.mrb[0].mxu0
    %v1126 = vadd.f32 0.0, %v1125
    %v1127 = vpop.f32.mrb[0].mxu0
    %v1128 = vadd.f32 0.0, %v1127
    %1129 = vdwg.mxu0
    %v1131 = vrot.slane %v675, 2
    %v1135 = vcombine.low %v1126, %v1128
    %v1137 = vunpack.c.l.s4 1966171168
    %v1138 = vunpack.c.0.s8 %v1137
    %v1139 = vlaneseq
    %v1140 = vshrl.u32 %v1139, 7
    %v1141 = vsub.s32 %v1138, %v1140
    %v1142 = vrot.slane %v1135, %v1141
    %v1144 = vunpack.c.l.s4 1966171168
    %v1145 = vunpack.c.0.s8 %v1144
    %v1146 = vlaneseq
    %v1147 = vshrl.u32 %v1146, 7
    %v1148 = vsub.s32 %v1145, %v1147
    %v1149 = vrot.slane %v1142, %v1148
    %v1151 = vadd.f32 %v1131, %v1149
    %v1152 = vxor.u32 %v1055, 2147483648
    %v1153 = vmul.f32 %v1152, 1.442695
    %v1154 = vpow.pop %v1153
    %v1155 = vadd.f32 %v1154, 1.0
    %v1156 = vrcp.pop %v1155
    %v1157 = vmul.f32 1.0, %v1156
    %v1159 = vrot.slane %v1055, 1
    %v1161 = vtanh.pop %v1159
    %1162 = vrot.lane.b32.xlu0 %v1055, 64
    %v1163 = vpop.permute.xlu0 %1162
    %v1164 = vrot.slane %v1163, 1
    %v1166 = vxor.u32 %v1164, 2147483648
    %v1167 = vmul.f32 %v1166, 1.442695
    %v1168 = vpow.pop %v1167
    %v1169 = vadd.f32 %v1168, 1.0
    %v1170 = vrcp.pop %v1169
    %v1171 = vmul.f32 1.0, %v1170
    %v1172 = vmul.f32 %v1157, %v923
    %v1173 = vmul.f32 %v1157, %v1161
    %1175 = vrot.lane.b32.xlu0 %v1173, 64
    %v1176 = vpop.permute.xlu0 %1175
    %v1178 = vadd.f32 %v1172, %v1176
    %v1179 = vtanh.pop %v1178
    %1181 = vrot.lane.b32.xlu0 %v1179, 64
    %v1182 = vpop.permute.xlu0 %1181
    %v1184 = vmul.f32 %v1171, %v1182
    %v1185 = vxor.u32 %v1151, 2147483648
    %v1186 = vmul.f32 %v1185, 1.442695
    %v1187 = vpow.pop %v1186
    %v1188 = vadd.f32 %v1187, 1.0
    %v1189 = vrcp.pop %v1188
    %v1190 = vmul.f32 1.0, %v1189
    %v1192 = vrot.slane %v1151, 1
    %v1194 = vtanh.pop %v1192
    %1195 = vrot.lane.b32.xlu0 %v1151, 64
    %v1196 = vpop.permute.xlu0 %1195
    %v1197 = vrot.slane %v1196, 1
    %v1199 = vxor.u32 %v1197, 2147483648
    %v1200 = vmul.f32 %v1199, 1.442695
    %v1201 = vpow.pop %v1200
    %v1202 = vadd.f32 %v1201, 1.0
    %v1203 = vrcp.pop %v1202
    %v1204 = vmul.f32 1.0, %v1203
    %v1205 = vmul.f32 %v1190, %v956
    %v1206 = vmul.f32 %v1190, %v1194
    %1208 = vrot.lane.b32.xlu0 %v1206, 64
    %v1209 = vpop.permute.xlu0 %1208
    %v1211 = vadd.f32 %v1205, %v1209
    %v1212 = vtanh.pop %v1211
    %1214 = vrot.lane.b32.xlu0 %v1212, 64
    %v1215 = vpop.permute.xlu0 %1214
    %v1217 = vmul.f32 %v1204, %v1215
    %v1219 = vlaneseq
    %v1220 = vshrl.u32 %v1219, 7
    %v1221 = vsub.s32 0, %v1220
    %v1222 = vrot.slane %v1217, %v1221
    %1223 = vrot.lane.b32.xlu0 %v1222, 64
    %v1224 = vpop.permute.xlu0 %1223
    %v1226 = vsel %vm694, %v1184, %v1224
    %v1227 = vmax.f32 %v1226, 0.0
    %v1228 = vld [vmem:[%s11] sm:$0xff]
    %v1229 = vld [vmem:[%s11 + $0x8] sm:$0xff]
    %v1230 = vld [vmem:[%s11 + $0x10] sm:$0xff]
    %v1231 = vld [vmem:[%s11 + $0x18] sm:$0xff]
    %v1232 = vld [vmem:[%s11 + $0x20] sm:$0xff]
    %v1233 = vld [vmem:[%s11 + $0x28] sm:$0xff]
    %v1234 = vld [vmem:[%s11 + $0x30] sm:$0xff]
    %v1235 = vld [vmem:[%s11 + $0x38] sm:$0xff]
    %v1236 = vld [vmem:[%s11 + $0x40] sm:$0xff]
    %v1237 = vld [vmem:[%s11 + $0x48] sm:$0xff]
    %v1238 = vld [vmem:[%s11 + $0x50] sm:$0xff]
    %v1239 = vld [vmem:[%s11 + $0x58] sm:$0xff]
    %v1240 = vld [vmem:[%s11 + $0x60] sm:$0xff]
    %v1241 = vld [vmem:[%s11 + $0x68] sm:$0xff]
    %v1242 = vld [vmem:[%s11 + $0x70] sm:$0xff]
    %v1243 = vld [vmem:[%s11 + $0x78] sm:$0xff]
    %v1244 = vld [vmem:[%s12] sm:$0x1]
    %1245 = vmatprep.subr.mxu0 0.0
    %1246 = vmatpush1.msra.mxu0 %v1228
    %1247 = vmatprep.subr.mxu0 0.0
    %1248 = vmatpush1.msra.mxu0 %v1229
    %1249 = vmatprep.subr.mxu0 0.0
    %1250 = vmatpush1.msra.mxu0 %v1230
    %1251 = vmatprep.subr.mxu0 0.0
    %1252 = vmatpush1.msra.mxu0 %v1231
    %1253 = vmatprep.subr.mxu0 0.0
    %1254 = vmatpush1.msra.mxu0 %v1232
    %1255 = vmatprep.subr.mxu0 0.0
    %1256 = vmatpush1.msra.mxu0 %v1233
    %1257 = vmatprep.subr.mxu0 0.0
    %1258 = vmatpush1.msra.mxu0 %v1234
    %1259 = vmatprep.subr.mxu0 0.0
    %1260 = vmatpush1.msra.mxu0 %v1235
    %1261 = vmatprep.subr.mxu0 0.0
    %1262 = vmatpush1.msra.mxu0 %v1236
    %1263 = vmatprep.subr.mxu0 0.0
    %1264 = vmatpush1.msra.mxu0 %v1237
    %1265 = vmatprep.subr.mxu0 0.0
    %1266 = vmatpush1.msra.mxu0 %v1238
    %1267 = vmatprep.subr.mxu0 0.0
    %1268 = vmatpush1.msra.mxu0 %v1239
    %1269 = vmatprep.subr.mxu0 0.0
    %1270 = vmatpush1.msra.mxu0 %v1240
    %1271 = vmatprep.subr.mxu0 0.0
    %1272 = vmatpush1.msra.mxu0 %v1241
    %1273 = vmatprep.subr.mxu0 0.0
    %1274 = vmatpush1.msra.mxu0 %v1242
    %1275 = vmatprep.subr.mxu0 0.0
    %1276 = vmatpush1.msra.mxu0 %v1243
    %1277 = vmatprep.subr.mxu0 0.0
    %1278 = vmatpush1.msra.mxu0 0.0
    %1279 = vmatprep.subr.mxu0 0.0
    %1280 = vmatpush1.msra.mxu0 0.0
    %1281 = vmatprep.subr.mxu0 0.0
    %1282 = vmatpush1.msra.mxu0 0.0
    %1283 = vmatprep.subr.mxu0 0.0
    %1284 = vmatpush1.msra.mxu0 0.0
    %1285 = vmatprep.subr.mxu0 0.0
    %1286 = vmatpush1.msra.mxu0 0.0
    %1287 = vmatprep.subr.mxu0 0.0
    %1288 = vmatpush1.msra.mxu0 0.0
    %1289 = vmatprep.subr.mxu0 0.0
    %1290 = vmatpush1.msra.mxu0 0.0
    %1291 = vmatprep.subr.mxu0 0.0
    %1292 = vmatpush1.msra.mxu0 0.0
    %1293 = vmatprep.subr.mxu0 0.0
    %1294 = vmatpush1.msra.mxu0 0.0
    %1295 = vmatprep.subr.mxu0 0.0
    %1296 = vmatpush1.msra.mxu0 0.0
    %1297 = vmatprep.subr.mxu0 0.0
    %1298 = vmatpush1.msra.mxu0 0.0
    %1299 = vmatprep.subr.mxu0 0.0
    %1300 = vmatpush1.msra.mxu0 0.0
    %1301 = vmatprep.subr.mxu0 0.0
    %1302 = vmatpush1.msra.mxu0 0.0
    %1303 = vmatprep.subr.mxu0 0.0
    %1304 = vmatpush1.msra.mxu0 0.0
    %1305 = vmatprep.subr.mxu0 0.0
    %1306 = vmatpush1.msra.mxu0 0.0
    %1307 = vmatprep.subr.mxu0 0.0
    %1308 = vmatpush1.msra.mxu0 0.0
    %1309 = vmatprep.mubr.f32.mxu0 0.0
    %1310 = vmatmul.mubr.f32.gmra.mrb[0].mxu0 %v1227
    %v1311 = vpop.f32.mrb[0].mxu0
    %v1312 = vadd.f32 %v1244, %v1311
    %v1313 = vpop.f32.mrb[0].mxu0
    %1314 = vdwg.mxu0
    %v1315 = vld [vmem:[%s13] sm:$0xff]
    %v1316 = vld [vmem:[%s13 + $0x8] sm:$0xff]
    %v1317 = vld [vmem:[%s13 + $0x10] sm:$0xff]
    %v1318 = vld [vmem:[%s13 + $0x18] sm:$0xff]
    %v1319 = vld [vmem:[%s13 + $0x20] sm:$0xff]
    %v1320 = vld [vmem:[%s13 + $0x28] sm:$0xff]
    %v1321 = vld [vmem:[%s13 + $0x30] sm:$0xff]
    %v1322 = vld [vmem:[%s13 + $0x38] sm:$0xff]
    %v1323 = vld [vmem:[%s14] sm:$0x1]
    %v1325 = vsel %vm694, %v1312, 0
    %1327 = vmatprep.subr.mxu0 0.0
    %1328 = vmatpush1.msra.mxu0 %v1315
    %1329 = vmatprep.subr.mxu0 0.0
    %1330 = vmatpush1.msra.mxu0 %v1316
    %1331 = vmatprep.subr.mxu0 0.0
    %1332 = vmatpush1.msra.mxu0 %v1317
    %1333 = vmatprep.subr.mxu0 0.0
    %1334 = vmatpush1.msra.mxu0 %v1318
    %1335 = vmatprep.subr.mxu0 0.0
    %1336 = vmatpush1.msra.mxu0 %v1319
    %1337 = vmatprep.subr.mxu0 0.0
    %1338 = vmatpush1.msra.mxu0 %v1320
    %1339 = vmatprep.subr.mxu0 0.0
    %1340 = vmatpush1.msra.mxu0 %v1321
    %1341 = vmatprep.subr.mxu0 0.0
    %1342 = vmatpush1.msra.mxu0 %v1322
    %1343 = vmatprep.subr.mxu0 0.0
    %1344 = vmatpush1.msra.mxu0 0.0
    %1345 = vmatprep.subr.mxu0 0.0
    %1346 = vmatpush1.msra.mxu0 0.0
    %1347 = vmatprep.subr.mxu0 0.0
    %1348 = vmatpush1.msra.mxu0 0.0
    %1349 = vmatprep.subr.mxu0 0.0
    %1350 = vmatpush1.msra.mxu0 0.0
    %1351 = vmatprep.subr.mxu0 0.0
    %1352 = vmatpush1.msra.mxu0 0.0
    %1353 = vmatprep.subr.mxu0 0.0
    %1354 = vmatpush1.msra.mxu0 0.0
    %1355 = vmatprep.subr.mxu0 0.0
    %1356 = vmatpush1.msra.mxu0 0.0
    %1357 = vmatprep.subr.mxu0 0.0
    %1358 = vmatpush1.msra.mxu0 0.0
    %1359 = vmatprep.subr.mxu0 0.0
    %1360 = vmatpush1.msra.mxu0 0.0
    %1361 = vmatprep.subr.mxu0 0.0
    %1362 = vmatpush1.msra.mxu0 0.0
    %1363 = vmatprep.subr.mxu0 0.0
    %1364 = vmatpush1.msra.mxu0 0.0
    %1365 = vmatprep.subr.mxu0 0.0
    %1366 = vmatpush1.msra.mxu0 0.0
    %1367 = vmatprep.subr.mxu0 0.0
    %1368 = vmatpush1.msra.mxu0 0.0
    %1369 = vmatprep.subr.mxu0 0.0
    %1370 = vmatpush1.msra.mxu0 0.0
    %1371 = vmatprep.subr.mxu0 0.0
    %1372 = vmatpush1.msra.mxu0 0.0
    %1373 = vmatprep.subr.mxu0 0.0
    %1374 = vmatpush1.msra.mxu0 0.0
    %1375 = vmatprep.subr.mxu0 0.0
    %1376 = vmatpush1.msra.mxu0 0.0
    %1377 = vmatprep.subr.mxu0 0.0
    %1378 = vmatpush1.msra.mxu0 0.0
    %1379 = vmatprep.subr.mxu0 0.0
    %1380 = vmatpush1.msra.mxu0 0.0
    %1381 = vmatprep.subr.mxu0 0.0
    %1382 = vmatpush1.msra.mxu0 0.0
    %1383 = vmatprep.subr.mxu0 0.0
    %1384 = vmatpush1.msra.mxu0 0.0
    %1385 = vmatprep.subr.mxu0 0.0
    %1386 = vmatpush1.msra.mxu0 0.0
    %1387 = vmatprep.subr.mxu0 0.0
    %1388 = vmatpush1.msra.mxu0 0.0
    %1389 = vmatprep.subr.mxu0 0.0
    %1390 = vmatpush1.msra.mxu0 0.0
    %1391 = vmatprep.mubr.f32.mxu0 0.0
    %1392 = vmatmul.mubr.f32.gmra.mrb[0].mxu0 %v1325
    %v1393 = vpop.f32.mrb[0].mxu0
    %v1394 = vadd.f32 %v1323, %v1393
    %v1395 = vpop.f32.mrb[0].mxu0
    %1396 = vdwg.mxu0
    %vm1397 = vcmask 65536
    %1398 = vst.msk [vmem:[#allocation3] sm:$0x1] %vm1397, %v1394
    // Predicated region
    $region62: #{forward.15} parent=1 // pred_check
      _
    $region63: #{forward.15} parent=1 // pred_check_branch
      %1400 = sbr.rel (0) target = $region65
    $region64: #{forward.15} parent=1 // pred_region
      %s1402 = ssub.s32 16, 16
      %1403 = vsyncadd [#allocation4], %s1402
      %s1405 = sshll.u32 [#allocation3], 4
      %s1406 = int_to_ptr.vmem [resolvable:$true] %s1405
      %1408 = dma.vmem_to_hbm [thread:$0]  %s1406, 16, %s15, [#allocation4]
    $region65: #{forward.15} parent=1 // pred_fallthru
      _
    // Predicated region
    $region66: #{forward.15} parent=1 // pred_check
      _
    $region67: #{forward.15} parent=1 // pred_check_branch
      %1410 = sbr.rel (0) target = $region69
    $region68: #{forward.15} parent=1 // pred_region
      %1411 = dma.done [#allocation4], 16
    $region69: #{forward.15} parent=1 // pred_fallthru
      _
    %1412 = vsyncpa [#allocation4], 1

</llo_original>
